<compile_context>
chip_gen: v7x
topology: tpu7x:2x2x1
jax: 0.10.0
libtpu: 0.0.40
codegen_flags: <defaults>
</compile_context>

<pallas_src>
import math

import jax
import jax.numpy as jnp
from jax import lax
from jax.experimental import pallas as pl
from jax.experimental.pallas import tpu as pltpu


# ----------------------- module config (PyTorch defaults) --------------------
SAMPLE_RATE = 22050
N_FFT = 1024
WIN_LENGTH = 1024
HOP_LENGTH = 256
N_MELS = 80
MEL_FMIN = 0.0
MEL_FMAX = 8000.0
LOG_CLAMP = 1e-5

_LANE = 128
_FREQ_CHUNK = 128


def _round_up(x, m):
    return (x + m - 1) // m * m


# ----------------------- constant matrices (built once) ----------------------
def _hz_to_mel_slaney(f):
    if f >= 1000.0:
        return 15.0 + math.log(f / 1000.0) / (math.log(6.4) / 27.0)
    return 3.0 * f / 200.0


def _mel_to_hz_slaney(m):
    logstep = math.log(6.4) / 27.0
    return jnp.where(m >= 15.0,
                     1000.0 * jnp.exp(logstep * (m - 15.0)),
                     200.0 * m / 3.0)


def _slaney_mel_filterbank(n_freqs, n_mels, sample_rate, f_min, f_max):
    # matches torchaudio.functional.melscale_fbanks(norm='slaney', mel_scale='slaney')
    all_freqs = jnp.linspace(0.0, sample_rate // 2, n_freqs)            # (n_freqs,)
    m_pts = jnp.linspace(_hz_to_mel_slaney(f_min), _hz_to_mel_slaney(f_max),
                         n_mels + 2)
    f_pts = _mel_to_hz_slaney(m_pts)                                    # (n_mels+2,)
    f_diff = f_pts[1:] - f_pts[:-1]                                     # (n_mels+1,)
    slopes = f_pts[None, :] - all_freqs[:, None]                        # (n_freqs, n_mels+2)
    down = -slopes[:, :-2] / f_diff[:-1]
    up = slopes[:, 2:] / f_diff[1:]
    fb = jnp.maximum(0.0, jnp.minimum(down, up))                        # (n_freqs, n_mels)
    enorm = 2.0 / (f_pts[2:n_mels + 2] - f_pts[:n_mels])                # slaney norm
    return fb * enorm[None, :]


def _windowed_dft_matrices(n_fft, win_length, n_freq, n_freq_pad):
    # periodic Hann window, center-padded to n_fft (torch.stft semantics),
    # folded directly into the DFT basis so the kernel needs no extra VPU pass.
    n = jnp.arange(win_length, dtype=jnp.float32)
    win = 0.5 * (1.0 - jnp.cos(2.0 * math.pi * n / win_length))
    lpad = (n_fft - win_length) // 2
    win = jnp.pad(win, (lpad, n_fft - win_length - lpad))
    k = jnp.arange(n_fft, dtype=jnp.int32)[:, None]
    f = jnp.arange(n_freq_pad, dtype=jnp.int32)[None, :]
    ang = (2.0 * math.pi / n_fft) * ((k * f) % n_fft).astype(jnp.float32)
    valid = (jnp.arange(n_freq_pad) < n_freq).astype(jnp.float32)[None, :]
    cw = win[:, None] * jnp.cos(ang) * valid                            # (n_fft, n_freq_pad)
    sw = win[:, None] * jnp.sin(ang) * valid
    return cw, sw


def build_mel_constants():
    n_freq = N_FFT // 2 + 1                                             # 513
    n_freq_pad = _round_up(n_freq, _LANE)                               # 640
    n_mels_pad = _round_up(N_MELS, _LANE)                               # 128
    cw, sw = _windowed_dft_matrices(N_FFT, WIN_LENGTH, n_freq, n_freq_pad)
    fb = _slaney_mel_filterbank(n_freq, N_MELS, SAMPLE_RATE, MEL_FMIN, MEL_FMAX)
    fb_pad = jnp.zeros((n_freq_pad, n_mels_pad), jnp.float32)
    fb_pad = fb_pad.at[:n_freq, :N_MELS].set(fb)
    return {"cw": cw, "sw": sw, "fb": fb_pad}


# ----------------------- framing glue (center=True, reflect) -----------------
def _frame_audio(audio, n_fft, hop, dtype=jnp.float32):
    # audio: (B, 1, T) -> (B, n_frames, n_fft)
    B = audio.shape[0]
    a = audio[:, 0, :]
    T = a.shape[1]
    pad = n_fft // 2
    ap = jnp.pad(a, ((0, 0), (pad, pad)), mode="reflect").astype(dtype)
    n_frames = T // hop + 1
    if n_fft % hop == 0:
        n_chunks = ap.shape[1] // hop
        ch = ap[:, : n_chunks * hop].reshape(B, n_chunks, hop)
        frames = jnp.concatenate(
            [ch[:, i: i + n_frames] for i in range(n_fft // hop)], axis=-1)
    else:
        idx = jnp.arange(n_frames)[:, None] * hop + jnp.arange(n_fft)[None, :]
        frames = ap[:, idx]
    return frames


# ----------------------- Pallas kernel ---------------------------------------
def _melspec_kernel(frames_ref, cw_ref, sw_ref, fb_ref, o_ref):
    # frames_ref: (tile_f, n_fft) bf16
    # cw_ref/sw_ref: (n_fft, n_freq_pad) bf16   fb_ref: (n_freq_pad, n_mels_pad) bf16
    # o_ref: (tile_f, n_mels_pad) f32
    x = frames_ref[...]
    tile_f = x.shape[0]
    n_freq_pad = cw_ref.shape[1]
    n_mels_pad = fb_ref.shape[1]

    acc = jnp.zeros((tile_f, n_mels_pad), jnp.float32)
    # Static 128-wide frequency chunks keep re/im/mag at <= 16 vregs each
    # (no spills) while every matmul stays a full MXU-sized tile.
    for c in range(n_freq_pad // _FREQ_CHUNK):
        lo = c * _FREQ_CHUNK
        hi = lo + _FREQ_CHUNK
        re = jnp.dot(x, cw_ref[:, lo:hi], preferred_element_type=jnp.float32)
        im = jnp.dot(x, sw_ref[:, lo:hi], preferred_element_type=jnp.float32)
        mag = jnp.sqrt(re * re + im * im)                     # |STFT|, power=1.0
        acc = acc + jnp.dot(mag.astype(jnp.bfloat16), fb_ref[lo:hi, :],
                            preferred_element_type=jnp.float32)

    o_ref[...] = jnp.log(jnp.maximum(acc, LOG_CLAMP))


def _log_mel_pallas(frames_bf16, cw_bf16, sw_bf16, fb_bf16, *, frame_tile):
    B, n_frames_pad, n_fft = frames_bf16.shape
    n_mels_pad = fb_bf16.shape[1]
    grid = (B, n_frames_pad // frame_tile)
    return pl.pallas_call(
        _melspec_kernel,
        out_shape=jax.ShapeDtypeStruct((B, n_frames_pad, n_mels_pad), jnp.float32),
        grid_spec=pltpu.PrefetchScalarGridSpec(
            num_scalar_prefetch=0,
            grid=grid,
            in_specs=[
                pl.BlockSpec((None, frame_tile, n_fft), lambda b, t: (b, t, 0)),
                # Constant block indices: DFT / mel matrices are DMA'd into VMEM
                # once and stay resident for the whole grid.
                pl.BlockSpec(cw_bf16.shape, lambda b, t: (0, 0)),
                pl.BlockSpec(sw_bf16.shape, lambda b, t: (0, 0)),
                pl.BlockSpec(fb_bf16.shape, lambda b, t: (0, 0)),
            ],
            out_specs=pl.BlockSpec((None, frame_tile, n_mels_pad),
                                   lambda b, t: (b, t, 0)),
        ),
        compiler_params=pltpu.CompilerParams(
            dimension_semantics=("parallel", "parallel"),
            vmem_limit_bytes=32 * 1024 * 1024,
        ),
    )(frames_bf16, cw_bf16, sw_bf16, fb_bf16)


# ----------------------- full forward -----------------------------------------
def mel_spectrogram_forward(audio, consts):
    """audio: (B, 1, T) float32 -> log-mel (B, n_mels, T//hop + 1) float32."""
    frames = _frame_audio(audio, N_FFT, HOP_LENGTH, dtype=jnp.bfloat16)  # (B,F,n_fft)
    n_frames = frames.shape[1]
    frame_tile = min(128, _round_up(n_frames, 16))        # 16-aligned for bf16 sublanes
    n_frames_pad = _round_up(n_frames, frame_tile)
    frames_p = jnp.pad(frames, ((0, 0), (0, n_frames_pad - n_frames), (0, 0)))
    mel = _log_mel_pallas(
        frames_p,
        consts["cw"].astype(jnp.bfloat16),
        consts["sw"].astype(jnp.bfloat16),
        consts["fb"].astype(jnp.bfloat16),
        frame_tile=frame_tile,
    )
    # (B, n_frames_pad, n_mels_pad) -> (B, n_mels, n_frames)
    return jnp.transpose(mel[:, :n_frames, :N_MELS], (0, 2, 1))


# ----------------------- pure-JAX reference (f32, HIGHEST) ---------------------
def ref_mel_spectrogram(audio, consts):
    frames = _frame_audio(audio, N_FFT, HOP_LENGTH, dtype=jnp.float32)
    hp = lax.Precision.HIGHEST
    re = jnp.einsum("btk,kf->btf", frames, consts["cw"], precision=hp)
    im = jnp.einsum("btk,kf->btf", frames, consts["sw"], precision=hp)
    mag = jnp.sqrt(re * re + im * im)
    mel = jnp.einsum("btf,fm->btm", mag, consts["fb"], precision=hp)
    logmel = jnp.log(jnp.maximum(mel, LOG_CLAMP))
    return jnp.transpose(logmel[:, :, :N_MELS], (0, 2, 1))


if __name__ == "__main__":
    key = jax.random.PRNGKey(0)
    B, T = 2, 2048                       # small test; T >= n_fft//2 for reflect pad
    audio = jax.random.normal(key, (B, 1, T), jnp.float32)

    consts = build_mel_constants()

    fwd = jax.jit(mel_spectrogram_forward)
    out = fwd(audio, consts)
    jax.block_until_ready(out)

    ref = ref_mel_spectrogram(audio, consts)
    assert out.shape == (B, N_MELS, T // HOP_LENGTH + 1), out.shape
    assert out.shape == ref.shape, (out.shape, ref.shape)
    assert bool(jnp.all(jnp.isfinite(out))), "non-finite log-mel values"
    max_err = float(jnp.max(jnp.abs(out - ref)))
    # bf16 MXU operands vs f32 HIGHEST reference: expected max |err| ~ 1e-2 in log space
    assert max_err < 0.15, f"log-mel mismatch, max abs err = {max_err}"
    print("KERNEL_OK")
</pallas_src>

<mosaic_0001>
module attributes {stable_mosaic.version = 11 : i64} {
  func.func @_melspec_kernel(%arg0: i32, %arg1: i32, %arg2: memref<1x16x1024xbf16, #tpu.memory_space<vmem>>, %arg3: memref<1024x640xbf16, #tpu.memory_space<vmem>>, %arg4: memref<1024x640xbf16, #tpu.memory_space<vmem>>, %arg5: memref<640x128xbf16, #tpu.memory_space<vmem>>, %arg6: memref<1x16x128xf32, #tpu.memory_space<vmem>>) attributes {dimension_semantics = [#tpu.dimension_semantics<parallel>, #tpu.dimension_semantics<parallel>], iteration_bounds = array<i64: 2, 1>, scalar_prefetch = 0 : i64, scratch_operands = 0 : i64, tpu.core_type = #tpu.core_type<tc>, window_params = [{transform_indices = @transform_0, window_bounds = array<i64: 1, 16, 1024>}, {pipeline_mode = #tpu.pipeline_mode<synchronous>, transform_indices = @transform_1, window_bounds = array<i64: 1024, 640>}, {pipeline_mode = #tpu.pipeline_mode<synchronous>, transform_indices = @transform_2, window_bounds = array<i64: 1024, 640>}, {pipeline_mode = #tpu.pipeline_mode<synchronous>, transform_indices = @transform_3, window_bounds = array<i64: 640, 128>}, {transform_indices = @transform_4, window_bounds = array<i64: 1, 16, 128>}]} {
    %c0 = arith.constant 0 : index
    %c0_0 = arith.constant 0 : index
    %c0_1 = arith.constant 0 : index
    %0 = vector.load %arg2[%c0, %c0_0, %c0_1] : memref<1x16x1024xbf16, #tpu.memory_space<vmem>>, vector<1x16x1024xbf16>
    %1 = vector.shape_cast %0 : vector<1x16x1024xbf16> to vector<16x1024xbf16>
    %cst = arith.constant 0.000000e+00 : f32
    %2 = vector.broadcast %cst : f32 to vector<16x128xf32>
    %c0_2 = arith.constant 0 : index
    %c0_3 = arith.constant 0 : index
    %3 = vector.load %arg3[%c0_2, %c0_3] : memref<1024x640xbf16, #tpu.memory_space<vmem>>, vector<1024x128xbf16>
    %cst_4 = arith.constant dense<0.000000e+00> : vector<16x128xf32>
    %4 = tpu.matmul %1, %3, %cst_4 {dimension_numbers = #tpu.dot_dimension_numbers<[1], [0], [0], [1], [0, 0, 1, 1], [], []>} : vector<16x1024xbf16>, vector<1024x128xbf16>, vector<16x128xf32> -> vector<16x128xf32>
    %c0_5 = arith.constant 0 : index
    %c0_6 = arith.constant 0 : index
    %5 = vector.load %arg4[%c0_5, %c0_6] : memref<1024x640xbf16, #tpu.memory_space<vmem>>, vector<1024x128xbf16>
    %cst_7 = arith.constant dense<0.000000e+00> : vector<16x128xf32>
    %6 = tpu.matmul %1, %5, %cst_7 {dimension_numbers = #tpu.dot_dimension_numbers<[1], [0], [0], [1], [0, 0, 1, 1], [], []>} : vector<16x1024xbf16>, vector<1024x128xbf16>, vector<16x128xf32> -> vector<16x128xf32>
    %7 = arith.mulf %4, %4 : vector<16x128xf32>
    %8 = arith.mulf %6, %6 : vector<16x128xf32>
    %9 = arith.addf %7, %8 : vector<16x128xf32>
    %10 = math.sqrt %9 : vector<16x128xf32>
    %11 = arith.truncf %10 : vector<16x128xf32> to vector<16x128xbf16>
    %c0_8 = arith.constant 0 : index
    %c0_9 = arith.constant 0 : index
    %12 = vector.load %arg5[%c0_8, %c0_9] : memref<640x128xbf16, #tpu.memory_space<vmem>>, vector<128x128xbf16>
    %cst_10 = arith.constant dense<0.000000e+00> : vector<16x128xf32>
    %13 = tpu.matmul %11, %12, %cst_10 {dimension_numbers = #tpu.dot_dimension_numbers<[1], [0], [0], [1], [0, 0, 1, 1], [], []>} : vector<16x128xbf16>, vector<128x128xbf16>, vector<16x128xf32> -> vector<16x128xf32>
    %14 = arith.addf %2, %13 : vector<16x128xf32>
    %c0_11 = arith.constant 0 : index
    %c128 = arith.constant 128 : index
    %15 = vector.load %arg3[%c0_11, %c128] : memref<1024x640xbf16, #tpu.memory_space<vmem>>, vector<1024x128xbf16>
    %cst_12 = arith.constant dense<0.000000e+00> : vector<16x128xf32>
    %16 = tpu.matmul %1, %15, %cst_12 {dimension_numbers = #tpu.dot_dimension_numbers<[1], [0], [0], [1], [0, 0, 1, 1], [], []>} : vector<16x1024xbf16>, vector<1024x128xbf16>, vector<16x128xf32> -> vector<16x128xf32>
    %c0_13 = arith.constant 0 : index
    %c128_14 = arith.constant 128 : index
    %17 = vector.load %arg4[%c0_13, %c128_14] : memref<1024x640xbf16, #tpu.memory_space<vmem>>, vector<1024x128xbf16>
    %cst_15 = arith.constant dense<0.000000e+00> : vector<16x128xf32>
    %18 = tpu.matmul %1, %17, %cst_15 {dimension_numbers = #tpu.dot_dimension_numbers<[1], [0], [0], [1], [0, 0, 1, 1], [], []>} : vector<16x1024xbf16>, vector<1024x128xbf16>, vector<16x128xf32> -> vector<16x128xf32>
    %19 = arith.mulf %16, %16 : vector<16x128xf32>
    %20 = arith.mulf %18, %18 : vector<16x128xf32>
    %21 = arith.addf %19, %20 : vector<16x128xf32>
    %22 = math.sqrt %21 : vector<16x128xf32>
    %23 = arith.truncf %22 : vector<16x128xf32> to vector<16x128xbf16>
    %c128_16 = arith.constant 128 : index
    %c0_17 = arith.constant 0 : index
    %24 = vector.load %arg5[%c128_16, %c0_17] : memref<640x128xbf16, #tpu.memory_space<vmem>>, vector<128x128xbf16>
    %cst_18 = arith.constant dense<0.000000e+00> : vector<16x128xf32>
    %25 = tpu.matmul %23, %24, %cst_18 {dimension_numbers = #tpu.dot_dimension_numbers<[1], [0], [0], [1], [0, 0, 1, 1], [], []>} : vector<16x128xbf16>, vector<128x128xbf16>, vector<16x128xf32> -> vector<16x128xf32>
    %26 = arith.addf %14, %25 : vector<16x128xf32>
    %c0_19 = arith.constant 0 : index
    %c256 = arith.constant 256 : index
    %27 = vector.load %arg3[%c0_19, %c256] : memref<1024x640xbf16, #tpu.memory_space<vmem>>, vector<1024x128xbf16>
    %cst_20 = arith.constant dense<0.000000e+00> : vector<16x128xf32>
    %28 = tpu.matmul %1, %27, %cst_20 {dimension_numbers = #tpu.dot_dimension_numbers<[1], [0], [0], [1], [0, 0, 1, 1], [], []>} : vector<16x1024xbf16>, vector<1024x128xbf16>, vector<16x128xf32> -> vector<16x128xf32>
    %c0_21 = arith.constant 0 : index
    %c256_22 = arith.constant 256 : index
    %29 = vector.load %arg4[%c0_21, %c256_22] : memref<1024x640xbf16, #tpu.memory_space<vmem>>, vector<1024x128xbf16>
    %cst_23 = arith.constant dense<0.000000e+00> : vector<16x128xf32>
    %30 = tpu.matmul %1, %29, %cst_23 {dimension_numbers = #tpu.dot_dimension_numbers<[1], [0], [0], [1], [0, 0, 1, 1], [], []>} : vector<16x1024xbf16>, vector<1024x128xbf16>, vector<16x128xf32> -> vector<16x128xf32>
    %31 = arith.mulf %28, %28 : vector<16x128xf32>
    %32 = arith.mulf %30, %30 : vector<16x128xf32>
    %33 = arith.addf %31, %32 : vector<16x128xf32>
    %34 = math.sqrt %33 : vector<16x128xf32>
    %35 = arith.truncf %34 : vector<16x128xf32> to vector<16x128xbf16>
    %c256_24 = arith.constant 256 : index
    %c0_25 = arith.constant 0 : index
    %36 = vector.load %arg5[%c256_24, %c0_25] : memref<640x128xbf16, #tpu.memory_space<vmem>>, vector<128x128xbf16>
    %cst_26 = arith.constant dense<0.000000e+00> : vector<16x128xf32>
    %37 = tpu.matmul %35, %36, %cst_26 {dimension_numbers = #tpu.dot_dimension_numbers<[1], [0], [0], [1], [0, 0, 1, 1], [], []>} : vector<16x128xbf16>, vector<128x128xbf16>, vector<16x128xf32> -> vector<16x128xf32>
    %38 = arith.addf %26, %37 : vector<16x128xf32>
    %c0_27 = arith.constant 0 : index
    %c384 = arith.constant 384 : index
    %39 = vector.load %arg3[%c0_27, %c384] : memref<1024x640xbf16, #tpu.memory_space<vmem>>, vector<1024x128xbf16>
    %cst_28 = arith.constant dense<0.000000e+00> : vector<16x128xf32>
    %40 = tpu.matmul %1, %39, %cst_28 {dimension_numbers = #tpu.dot_dimension_numbers<[1], [0], [0], [1], [0, 0, 1, 1], [], []>} : vector<16x1024xbf16>, vector<1024x128xbf16>, vector<16x128xf32> -> vector<16x128xf32>
    %c0_29 = arith.constant 0 : index
    %c384_30 = arith.constant 384 : index
    %41 = vector.load %arg4[%c0_29, %c384_30] : memref<1024x640xbf16, #tpu.memory_space<vmem>>, vector<1024x128xbf16>
    %cst_31 = arith.constant dense<0.000000e+00> : vector<16x128xf32>
    %42 = tpu.matmul %1, %41, %cst_31 {dimension_numbers = #tpu.dot_dimension_numbers<[1], [0], [0], [1], [0, 0, 1, 1], [], []>} : vector<16x1024xbf16>, vector<1024x128xbf16>, vector<16x128xf32> -> vector<16x128xf32>
    %43 = arith.mulf %40, %40 : vector<16x128xf32>
    %44 = arith.mulf %42, %42 : vector<16x128xf32>
    %45 = arith.addf %43, %44 : vector<16x128xf32>
    %46 = math.sqrt %45 : vector<16x128xf32>
    %47 = arith.truncf %46 : vector<16x128xf32> to vector<16x128xbf16>
    %c384_32 = arith.constant 384 : index
    %c0_33 = arith.constant 0 : index
    %48 = vector.load %arg5[%c384_32, %c0_33] : memref<640x128xbf16, #tpu.memory_space<vmem>>, vector<128x128xbf16>
    %cst_34 = arith.constant dense<0.000000e+00> : vector<16x128xf32>
    %49 = tpu.matmul %47, %48, %cst_34 {dimension_numbers = #tpu.dot_dimension_numbers<[1], [0], [0], [1], [0, 0, 1, 1], [], []>} : vector<16x128xbf16>, vector<128x128xbf16>, vector<16x128xf32> -> vector<16x128xf32>
    %50 = arith.addf %38, %49 : vector<16x128xf32>
    %c0_35 = arith.constant 0 : index
    %c512 = arith.constant 512 : index
    %51 = vector.load %arg3[%c0_35, %c512] : memref<1024x640xbf16, #tpu.memory_space<vmem>>, vector<1024x128xbf16>
    %cst_36 = arith.constant dense<0.000000e+00> : vector<16x128xf32>
    %52 = tpu.matmul %1, %51, %cst_36 {dimension_numbers = #tpu.dot_dimension_numbers<[1], [0], [0], [1], [0, 0, 1, 1], [], []>} : vector<16x1024xbf16>, vector<1024x128xbf16>, vector<16x128xf32> -> vector<16x128xf32>
    %c0_37 = arith.constant 0 : index
    %c512_38 = arith.constant 512 : index
    %53 = vector.load %arg4[%c0_37, %c512_38] : memref<1024x640xbf16, #tpu.memory_space<vmem>>, vector<1024x128xbf16>
    %cst_39 = arith.constant dense<0.000000e+00> : vector<16x128xf32>
    %54 = tpu.matmul %1, %53, %cst_39 {dimension_numbers = #tpu.dot_dimension_numbers<[1], [0], [0], [1], [0, 0, 1, 1], [], []>} : vector<16x1024xbf16>, vector<1024x128xbf16>, vector<16x128xf32> -> vector<16x128xf32>
    %55 = arith.mulf %52, %52 : vector<16x128xf32>
    %56 = arith.mulf %54, %54 : vector<16x128xf32>
    %57 = arith.addf %55, %56 : vector<16x128xf32>
    %58 = math.sqrt %57 : vector<16x128xf32>
    %59 = arith.truncf %58 : vector<16x128xf32> to vector<16x128xbf16>
    %c512_40 = arith.constant 512 : index
    %c0_41 = arith.constant 0 : index
    %60 = vector.load %arg5[%c512_40, %c0_41] : memref<640x128xbf16, #tpu.memory_space<vmem>>, vector<128x128xbf16>
    %cst_42 = arith.constant dense<0.000000e+00> : vector<16x128xf32>
    %61 = tpu.matmul %59, %60, %cst_42 {dimension_numbers = #tpu.dot_dimension_numbers<[1], [0], [0], [1], [0, 0, 1, 1], [], []>} : vector<16x128xbf16>, vector<128x128xbf16>, vector<16x128xf32> -> vector<16x128xf32>
    %62 = arith.addf %50, %61 : vector<16x128xf32>
    %cst_43 = arith.constant 9.99999974E-6 : f32
    %63 = vector.broadcast %cst_43 : f32 to vector<16x128xf32>
    %64 = arith.maximumf %62, %63 : vector<16x128xf32>
    %65 = math.log %64 : vector<16x128xf32>
    %c0_44 = arith.constant 0 : index
    %c0_45 = arith.constant 0 : index
    %c0_46 = arith.constant 0 : index
    %66 = vector.load %arg6[%c0_44, %c0_45, %c0_46] : memref<1x16x128xf32, #tpu.memory_space<vmem>>, vector<1x16x128xf32>
    %67 = vector.shape_cast %66 : vector<1x16x128xf32> to vector<16x128xf32>
    %68 = vector.shape_cast %65 : vector<16x128xf32> to vector<1x16x128xf32>
    tpu.vector_store %arg6[%c0_44, %c0_45, %c0_46], %68 {strides = array<i32>} : memref<1x16x128xf32, #tpu.memory_space<vmem>>, vector<1x16x128xf32>,
    return
  }
  func.func @transform_0(%arg0: i32, %arg1: i32) -> (i32, i32, i32) {
    %c0_i32 = arith.constant 0 : i32
    %c0_i32_0 = arith.constant 0 : i32
    return %arg0, %arg1, %c0_i32 : i32, i32, i32
  }
  func.func @transform_1(%arg0: i32, %arg1: i32) -> (i32, i32) {
    %c0_i32 = arith.constant 0 : i32
    %c0_i32_0 = arith.constant 0 : i32
    %c0_i32_1 = arith.constant 0 : i32
    return %c0_i32, %c0_i32_0 : i32, i32
  }
  func.func @transform_2(%arg0: i32, %arg1: i32) -> (i32, i32) {
    %c0_i32 = arith.constant 0 : i32
    %c0_i32_0 = arith.constant 0 : i32
    %c0_i32_1 = arith.constant 0 : i32
    return %c0_i32, %c0_i32_0 : i32, i32
  }
  func.func @transform_3(%arg0: i32, %arg1: i32) -> (i32, i32) {
    %c0_i32 = arith.constant 0 : i32
    %c0_i32_0 = arith.constant 0 : i32
    %c0_i32_1 = arith.constant 0 : i32
    return %c0_i32, %c0_i32_0 : i32, i32
  }
  func.func @transform_4(%arg0: i32, %arg1: i32) -> (i32, i32, i32) {
    %c0_i32 = arith.constant 0 : i32
    %c0_i32_0 = arith.constant 0 : i32
    return %arg0, %arg1, %c0_i32 : i32, i32, i32
  }
}

</mosaic_0001>

<llo_original>
// kernel: mel_spectrogram_forward.1
$region0: #{mel_spectrogram_forward.1}
  #allocation0 [shape = 'u32[]', space=smem, size = 0x4, offset = 0x4, fixed_abs, tag = 'smem constant byte address 0x4 - core index']
  #allocation1 [shape = 'u32[144,128]{1,0:T(1,128)}', space=vmem, size = 0x12000, scoped, tag = 'internal scratch']
  %s0 = inlined_call_operand.vmem [shape: bf16[2,16,1024], index: 0, kind: input, shape index: {}]
  %s1 = inlined_call_operand.vmem [shape: bf16[1024,640], index: 1, kind: input, shape index: {}]
  %s2 = inlined_call_operand.vmem [shape: bf16[1024,640], index: 2, kind: input, shape index: {}]
  %s3 = inlined_call_operand.vmem [shape: bf16[640,128], index: 3, kind: input, shape index: {}]
  %s4 = inlined_call_operand.vmem [shape: f32[2,16,128], index: 4, kind: output, shape index: {}]
  %s5 = sld [smem:[#allocation0]]
  $region49: #{mel_spectrogram_forward.1} parent=0
    _
  %s7 = ssub.s32 1, %s5
  %s8 = scalar_select 0, %s7, %s5
  loop: start=0, step=1, limit=4
  $region2: #{mel_spectrogram_forward.1} parent=0 // loop_pre_header
    _
  $region3: #{mel_spectrogram_forward.1} parent=0 // loop_header
    %s10 = sphi 0, %s14
    %p11 = scmp.ge.s32.totalorder %s10, 4
    %s17 = sphi 0, %s29
    %s18 = sphi 0, %s25
    %s19 = sphi 0, %s17
    %s20 = sphi 0, %s18
    %s21 = sphi 0, %s19
    %s22 = sphi 0, %s20
    %s34 = sphi 0, %s36
    %s37 = sphi 0, %s34
    %s38 = sphi 0, %s37
    %s54 = sphi 0, %s38
    %s58 = sphi 0, %s58
    %s60 = sphi 0, %s58
    %s61 = sphi 0, %s60
    %s75 = sphi 0, %s61
    %s79 = sphi 0, %s79
    %s81 = sphi 0, %s79
    %s82 = sphi 0, %s81
    %s96 = sphi 0, %s82
    %s100 = sphi 0, %s100
    %s102 = sphi 0, %s100
    %s103 = sphi 0, %s102
    %s117 = sphi 0, %s103
    %s125 = sphi 0, %s127
    %s128 = sphi 0, %s125
    %s129 = sphi 0, %s128
    %s145 = sphi 0, %s129
  $region4: #{mel_spectrogram_forward.1} parent=0 // loop_header_branch
    %13 = sbr.rel (%p11) target = $region8
  $region5: #{mel_spectrogram_forward.1} parent=0 // loop_body
    %s15 = ssub.s32 %s10, 1
    %s16 = ssub.s32 %s10, 2
    %s23 = sadd.s32 1, %s18
    %p24 = scmp.ge.s32.totalorder %s23, 1
    %s25 = scalar_select %p24, 0, %s23
    %s26 = sadd.s32 1, %s17
    %s27 = scalar_select %p24, %s26, %s17
    %p28 = scmp.ge.s32.totalorder %s27, 2
    %s29 = scalar_select %p28, 0, %s27
    %s30 = ssub.s32 %s17, %s29
    %s31 = ssub.s32 %s18, %s25
    %s32 = sor.u32 %s30, %s31
    %p33 = scmp.eq.s32.totalorder %s32, 0
    %s35 = sadd.s32 %s34, 1
    %s36 = scalar_select %p33, %s34, %s35
    %p39 = pneg %p33
    %p40 = scmp.eq.s32.totalorder %s10, 1
    %p41 = por %p39, %p40
    %p42 = scmp.ne.s32.totalorder %s34, %s37
    %p43 = scmp.eq.s32.totalorder %s10, 0
    %p44 = por %p42, %p43
    %p45 = scmp.ne.s32.totalorder %s34, %s37
    %p46 = scmp.eq.s32.totalorder %s15, 1
    %p47 = por %p45, %p46
    %p48 = scmp.ne.s32.totalorder %s37, %s38
    %p49 = scmp.eq.s32.totalorder %s15, 0
    %p50 = por %p48, %p49
    %p51 = scmp.ne.s32.totalorder %s37, %s38
    %p52 = scmp.eq.s32.totalorder %s16, 1
    %p53 = por %p51, %p52
    %p55 = scmp.ne.s32.totalorder %s38, %s54
    %p56 = scmp.eq.s32.totalorder %s16, 0
    %p57 = por %p55, %p56
    %s59 = sadd.s32 %s58, 1
    %p62 = scmp.eq.s32.totalorder %s10, 1
    %p63 = scmp.ne.s32.totalorder %s58, %s60
    %p64 = scmp.eq.s32.totalorder %s10, 0
    %p65 = por %p63, %p64
    %p66 = scmp.ne.s32.totalorder %s58, %s60
    %p67 = scmp.eq.s32.totalorder %s15, 1
    %p68 = por %p66, %p67
    %p69 = scmp.ne.s32.totalorder %s60, %s61
    %p70 = scmp.eq.s32.totalorder %s15, 0
    %p71 = por %p69, %p70
    %p72 = scmp.ne.s32.totalorder %s60, %s61
    %p73 = scmp.eq.s32.totalorder %s16, 1
    %p74 = por %p72, %p73
    %p76 = scmp.ne.s32.totalorder %s61, %s75
    %p77 = scmp.eq.s32.totalorder %s16, 0
    %p78 = por %p76, %p77
    %s80 = sadd.s32 %s79, 1
    %p83 = scmp.eq.s32.totalorder %s10, 1
    %p84 = scmp.ne.s32.totalorder %s79, %s81
    %p85 = scmp.eq.s32.totalorder %s10, 0
    %p86 = por %p84, %p85
    %p87 = scmp.ne.s32.totalorder %s79, %s81
    %p88 = scmp.eq.s32.totalorder %s15, 1
    %p89 = por %p87, %p88
    %p90 = scmp.ne.s32.totalorder %s81, %s82
    %p91 = scmp.eq.s32.totalorder %s15, 0
    %p92 = por %p90, %p91
    %p93 = scmp.ne.s32.totalorder %s81, %s82
    %p94 = scmp.eq.s32.totalorder %s16, 1
    %p95 = por %p93, %p94
    %p97 = scmp.ne.s32.totalorder %s82, %s96
    %p98 = scmp.eq.s32.totalorder %s16, 0
    %p99 = por %p97, %p98
    %s101 = sadd.s32 %s100, 1
    %p104 = scmp.eq.s32.totalorder %s10, 1
    %p105 = scmp.ne.s32.totalorder %s100, %s102
    %p106 = scmp.eq.s32.totalorder %s10, 0
    %p107 = por %p105, %p106
    %p108 = scmp.ne.s32.totalorder %s100, %s102
    %p109 = scmp.eq.s32.totalorder %s15, 1
    %p110 = por %p108, %p109
    %p111 = scmp.ne.s32.totalorder %s102, %s103
    %p112 = scmp.eq.s32.totalorder %s15, 0
    %p113 = por %p111, %p112
    %p114 = scmp.ne.s32.totalorder %s102, %s103
    %p115 = scmp.eq.s32.totalorder %s16, 1
    %p116 = por %p114, %p115
    %p118 = scmp.ne.s32.totalorder %s103, %s117
    %p119 = scmp.eq.s32.totalorder %s16, 0
    %p120 = por %p118, %p119
    %s121 = ssub.s32 %s17, %s29
    %s122 = ssub.s32 %s18, %s25
    %s123 = sor.u32 %s121, %s122
    %p124 = scmp.eq.s32.totalorder %s123, 0
    %s126 = sadd.s32 %s125, 1
    %s127 = scalar_select %p124, %s125, %s126
    %p130 = pneg %p124
    %p131 = scmp.eq.s32.totalorder %s10, 1
    %p132 = por %p130, %p131
    %p133 = scmp.ne.s32.totalorder %s125, %s128
    %p134 = scmp.eq.s32.totalorder %s10, 0
    %p135 = por %p133, %p134
    %p136 = scmp.ne.s32.totalorder %s125, %s128
    %p137 = scmp.eq.s32.totalorder %s15, 1
    %p138 = por %p136, %p137
    %p139 = scmp.ne.s32.totalorder %s128, %s129
    %p140 = scmp.eq.s32.totalorder %s15, 0
    %p141 = por %p139, %p140
    %p142 = scmp.ne.s32.totalorder %s128, %s129
    %p143 = scmp.eq.s32.totalorder %s16, 1
    %p144 = por %p142, %p143
    %p146 = scmp.ne.s32.totalorder %s129, %s145
    %p147 = scmp.eq.s32.totalorder %s16, 0
    %p148 = por %p146, %p147
    %p149 = scmp.le.s32.totalorder 1, %s10
    %p150 = scmp.lt.s32.totalorder %s10, 3
    %p151 = pnand %p149, %p150
    %p152 = pneg %p151
    // Predicated region
    $region9: #{mel_spectrogram_forward.1} parent=5 // pred_check
      _
    $region10: #{mel_spectrogram_forward.1} parent=5 // pred_check_branch
      %154 = sbr.rel (%p151) target = $region12
    $region11: #{mel_spectrogram_forward.1} parent=5 // pred_region
      %s155 = ssub.s32 %s10, 1
      // Predicated region
      $region13: #{mel_spectrogram_forward.1} parent=11 // pred_check
        %p156 = pneg %p71
      $region14: #{mel_spectrogram_forward.1} parent=11 // pred_check_branch
        %158 = sbr.rel (%p156) target = $region16
      $region15: #{mel_spectrogram_forward.1} parent=11 // pred_region
        _
      $region16: #{mel_spectrogram_forward.1} parent=11 // pred_fallthru
        _
      // Predicated region
      $region17: #{mel_spectrogram_forward.1} parent=11 // pred_check
        %p159 = pneg %p92
      $region18: #{mel_spectrogram_forward.1} parent=11 // pred_check_branch
        %161 = sbr.rel (%p159) target = $region20
      $region19: #{mel_spectrogram_forward.1} parent=11 // pred_region
        _
      $region20: #{mel_spectrogram_forward.1} parent=11 // pred_fallthru
        _
      // Predicated region
      $region21: #{mel_spectrogram_forward.1} parent=11 // pred_check
        %p162 = pneg %p113
      $region22: #{mel_spectrogram_forward.1} parent=11 // pred_check_branch
        %164 = sbr.rel (%p162) target = $region24
      $region23: #{mel_spectrogram_forward.1} parent=11 // pred_region
        _
      $region24: #{mel_spectrogram_forward.1} parent=11 // pred_fallthru
        _
    $region12: #{mel_spectrogram_forward.1} parent=5 // pred_fallthru
      _
    %p165 = scmp.lt.s32.totalorder %s10, 2
    // Predicated region
    $region25: #{mel_spectrogram_forward.1} parent=5 // pred_check
      %p166 = pneg %p165
    $region26: #{mel_spectrogram_forward.1} parent=5 // pred_check_branch
      %168 = sbr.rel (%p166) target = $region28
    $region27: #{mel_spectrogram_forward.1} parent=5 // pred_region
      // Predicated region
      $region29: #{mel_spectrogram_forward.1} parent=27 // pred_check
        %p169 = pneg %p44
      $region30: #{mel_spectrogram_forward.1} parent=27 // pred_check_branch
        %171 = sbr.rel (%p169) target = $region32
      $region31: #{mel_spectrogram_forward.1} parent=27 // pred_region
        %s172 = smul.u32 2, %s18
        %p173 = scmp.lt.s32.totalorder %s17, 1
        %s174 = scalar_select %p173, %s17, 1
        %p175 = scmp.lt.s32.totalorder %s172, 1
        %s176 = scalar_select %p175, %s172, 1
        %s177 = smul.addr %s176, 8
        %s178 = smul.addr %s174, 16
        %s179 = sadd.s32 %s177, %s178
        %s180 = smul.addr %s179, 4
        %s181 = scalar_lea.vmem %s0, %s180
        %s182 = smul.u32 2, %s18
      $region32: #{mel_spectrogram_forward.1} parent=27 // pred_fallthru
        _
    $region28: #{mel_spectrogram_forward.1} parent=5 // pred_fallthru
      _
    %p183 = scmp.le.s32.totalorder 1, %s10
    %p184 = scmp.lt.s32.totalorder %s10, 3
    %p185 = pnand %p183, %p184
    %p186 = pneg %p185
    // Predicated region
    $region33: #{mel_spectrogram_forward.1} parent=5 // pred_check
      _
    $region34: #{mel_spectrogram_forward.1} parent=5 // pred_check_branch
      %188 = sbr.rel (%p185) target = $region36
    $region35: #{mel_spectrogram_forward.1} parent=5 // pred_region
      %s189 = ssub.s32 %s10, 1
      %s190 = smul.u32 2, %s20
      %p191 = scmp.lt.s32.totalorder %s19, 1
      %s192 = scalar_select %p191, %s19, 1
      %p193 = scmp.lt.s32.totalorder %s190, 1
      %s194 = scalar_select %p193, %s190, 1
      %s195 = smul.addr %s194, 8
      %s196 = smul.addr %s192, 16
      %s197 = sadd.s32 %s195, %s196
      %s198 = smul.addr %s197, 4
      %s199 = scalar_lea.vmem %s0, %s198
      %p200 = pneg %p50
      %p201 = pneg %p47
      %p202 = pneg %p71
      %p203 = pneg %p68
      %p204 = pneg %p92
      %p205 = pneg %p89
      %p206 = pneg %p113
      %p207 = pneg %p110
      %p208 = pneg %p141
      %p209 = pneg %p138
      %s210 = smul.u32 2, %s20
      %p211 = scmp.lt.s32.totalorder %s19, 1
      %s212 = scalar_select %p211, %s19, 1
      %p213 = scmp.lt.s32.totalorder %s210, 1
      %s214 = scalar_select %p213, %s210, 1
      %s215 = smul.addr %s212, 2
      %s216 = sadd.s32 %s214, %s215
      %s217 = smul.addr %s216, 8
      %s218 = scalar_lea.vmem %s4, %s217
      %s219 = smul.u32 2, %s20
      %p220 = scmp.lt.s32.totalorder %s19, 1
      %s221 = scalar_select %p220, %s19, 1
      %p222 = scmp.lt.s32.totalorder %s219, 1
      %s223 = scalar_select %p222, %s219, 1
      %s224 = smul.addr %s223, 8
      %s225 = smul.addr %s221, 16
      %s226 = sadd.s32 %s224, %s225
      %s227 = smul.addr %s226, 4
      %s228 = scalar_lea.vmem %s0, %s227
      %s229 = smul.u32 2, %s20
      %s230 = smul.u32 2, %s20
      %p231 = scmp.lt.s32.totalorder %s19, 1
      %s232 = scalar_select %p231, %s19, 1
      %p233 = scmp.lt.s32.totalorder %s230, 1
      %s234 = scalar_select %p233, %s230, 1
      %s235 = smul.addr %s232, 2
      %s236 = sadd.s32 %s234, %s235
      %s237 = smul.addr %s236, 8
      %s238 = scalar_lea.vmem %s4, %s237
      %s239 = smul.u32 2, %s20
      %v241 = vld [vmem:[%s228] sm:$0xff]
      %v242 = vld [vmem:[%s228 + $0x8] sm:$0xff]
      %v243 = vld [vmem:[%s228 + $0x10] sm:$0xff]
      %v244 = vld [vmem:[%s228 + $0x18] sm:$0xff]
      %v245 = vld [vmem:[%s228 + $0x20] sm:$0xff]
      %v246 = vld [vmem:[%s228 + $0x28] sm:$0xff]
      %v247 = vld [vmem:[%s228 + $0x30] sm:$0xff]
      %v248 = vld [vmem:[%s228 + $0x38] sm:$0xff]
      %v249 = vld [vmem:[%s1] sm:$0xf]
      %v250 = vld [vmem:[%s1 + $0x14] sm:$0xf]
      %v251 = vld [vmem:[%s1 + $0x28] sm:$0xf]
      %v252 = vld [vmem:[%s1 + $0x3c] sm:$0xf]
      %v253 = vld [vmem:[%s1 + $0x50] sm:$0xf]
      %v254 = vld [vmem:[%s1 + $0x64] sm:$0xf]
      %v255 = vld [vmem:[%s1 + $0x78] sm:$0xf]
      %v256 = vld [vmem:[%s1 + $0x8c] sm:$0xf]
      %v257 = vld [vmem:[%s1 + $0xa0] sm:$0xf]
      %v258 = vld [vmem:[%s1 + $0xb4] sm:$0xf]
      %v259 = vld [vmem:[%s1 + $0xc8] sm:$0xf]
      %v260 = vld [vmem:[%s1 + $0xdc] sm:$0xf]
      %v261 = vld [vmem:[%s1 + $0xf0] sm:$0xf]
      %v262 = vld [vmem:[%s1 + $0x104] sm:$0xf]
      %v263 = vld [vmem:[%s1 + $0x118] sm:$0xf]
      %v264 = vld [vmem:[%s1 + $0x12c] sm:$0xf]
      %v265 = vld [vmem:[%s1 + $0x140] sm:$0xf]
      %v266 = vld [vmem:[%s1 + $0x154] sm:$0xf]
      %v267 = vld [vmem:[%s1 + $0x168] sm:$0xf]
      %v268 = vld [vmem:[%s1 + $0x17c] sm:$0xf]
      %v269 = vld [vmem:[%s1 + $0x190] sm:$0xf]
      %v270 = vld [vmem:[%s1 + $0x1a4] sm:$0xf]
      %v271 = vld [vmem:[%s1 + $0x1b8] sm:$0xf]
      %v272 = vld [vmem:[%s1 + $0x1cc] sm:$0xf]
      %v273 = vld [vmem:[%s1 + $0x1e0] sm:$0xf]
      %v274 = vld [vmem:[%s1 + $0x1f4] sm:$0xf]
      %v275 = vld [vmem:[%s1 + $0x208] sm:$0xf]
      %v276 = vld [vmem:[%s1 + $0x21c] sm:$0xf]
      %v277 = vld [vmem:[%s1 + $0x230] sm:$0xf]
      %v278 = vld [vmem:[%s1 + $0x244] sm:$0xf]
      %v279 = vld [vmem:[%s1 + $0x258] sm:$0xf]
      %v280 = vld [vmem:[%s1 + $0x26c] sm:$0xf]
      %v281 = vld [vmem:[%s1 + $0x280] sm:$0xf]
      %v282 = vld [vmem:[%s1 + $0x294] sm:$0xf]
      %v283 = vld [vmem:[%s1 + $0x2a8] sm:$0xf]
      %v284 = vld [vmem:[%s1 + $0x2bc] sm:$0xf]
      %v285 = vld [vmem:[%s1 + $0x2d0] sm:$0xf]
      %v286 = vld [vmem:[%s1 + $0x2e4] sm:$0xf]
      %v287 = vld [vmem:[%s1 + $0x2f8] sm:$0xf]
      %v288 = vld [vmem:[%s1 + $0x30c] sm:$0xf]
      %v289 = vld [vmem:[%s1 + $0x320] sm:$0xf]
      %v290 = vld [vmem:[%s1 + $0x334] sm:$0xf]
      %v291 = vld [vmem:[%s1 + $0x348] sm:$0xf]
      %v292 = vld [vmem:[%s1 + $0x35c] sm:$0xf]
      %v293 = vld [vmem:[%s1 + $0x370] sm:$0xf]
      %v294 = vld [vmem:[%s1 + $0x384] sm:$0xf]
      %v295 = vld [vmem:[%s1 + $0x398] sm:$0xf]
      %v296 = vld [vmem:[%s1 + $0x3ac] sm:$0xf]
      %v297 = vld [vmem:[%s1 + $0x3c0] sm:$0xf]
      %v298 = vld [vmem:[%s1 + $0x3d4] sm:$0xf]
      %v299 = vld [vmem:[%s1 + $0x3e8] sm:$0xf]
      %v300 = vld [vmem:[%s1 + $0x3fc] sm:$0xf]
      %v301 = vld [vmem:[%s1 + $0x410] sm:$0xf]
      %v302 = vld [vmem:[%s1 + $0x424] sm:$0xf]
      %v303 = vld [vmem:[%s1 + $0x438] sm:$0xf]
      %v304 = vld [vmem:[%s1 + $0x44c] sm:$0xf]
      %v305 = vld [vmem:[%s1 + $0x460] sm:$0xf]
      %v306 = vld [vmem:[%s1 + $0x474] sm:$0xf]
      %v307 = vld [vmem:[%s1 + $0x488] sm:$0xf]
      %v308 = vld [vmem:[%s1 + $0x49c] sm:$0xf]
      %v309 = vld [vmem:[%s1 + $0x4b0] sm:$0xf]
      %v310 = vld [vmem:[%s1 + $0x4c4] sm:$0xf]
      %v311 = vld [vmem:[%s1 + $0x4d8] sm:$0xf]
      %v312 = vld [vmem:[%s1 + $0x4ec] sm:$0xf]
      %v313 = vld [vmem:[%s1 + $0x500] sm:$0xf]
      %v314 = vld [vmem:[%s1 + $0x514] sm:$0xf]
      %v315 = vld [vmem:[%s1 + $0x528] sm:$0xf]
      %v316 = vld [vmem:[%s1 + $0x53c] sm:$0xf]
      %v317 = vld [vmem:[%s1 + $0x550] sm:$0xf]
      %v318 = vld [vmem:[%s1 + $0x564] sm:$0xf]
      %v319 = vld [vmem:[%s1 + $0x578] sm:$0xf]
      %v320 = vld [vmem:[%s1 + $0x58c] sm:$0xf]
      %v321 = vld [vmem:[%s1 + $0x5a0] sm:$0xf]
      %v322 = vld [vmem:[%s1 + $0x5b4] sm:$0xf]
      %v323 = vld [vmem:[%s1 + $0x5c8] sm:$0xf]
      %v324 = vld [vmem:[%s1 + $0x5dc] sm:$0xf]
      %v325 = vld [vmem:[%s1 + $0x5f0] sm:$0xf]
      %v326 = vld [vmem:[%s1 + $0x604] sm:$0xf]
      %v327 = vld [vmem:[%s1 + $0x618] sm:$0xf]
      %v328 = vld [vmem:[%s1 + $0x62c] sm:$0xf]
      %v329 = vld [vmem:[%s1 + $0x640] sm:$0xf]
      %v330 = vld [vmem:[%s1 + $0x654] sm:$0xf]
      %v331 = vld [vmem:[%s1 + $0x668] sm:$0xf]
      %v332 = vld [vmem:[%s1 + $0x67c] sm:$0xf]
      %v333 = vld [vmem:[%s1 + $0x690] sm:$0xf]
      %v334 = vld [vmem:[%s1 + $0x6a4] sm:$0xf]
      %v335 = vld [vmem:[%s1 + $0x6b8] sm:$0xf]
      %v336 = vld [vmem:[%s1 + $0x6cc] sm:$0xf]
      %v337 = vld [vmem:[%s1 + $0x6e0] sm:$0xf]
      %v338 = vld [vmem:[%s1 + $0x6f4] sm:$0xf]
      %v339 = vld [vmem:[%s1 + $0x708] sm:$0xf]
      %v340 = vld [vmem:[%s1 + $0x71c] sm:$0xf]
      %v341 = vld [vmem:[%s1 + $0x730] sm:$0xf]
      %v342 = vld [vmem:[%s1 + $0x744] sm:$0xf]
      %v343 = vld [vmem:[%s1 + $0x758] sm:$0xf]
      %v344 = vld [vmem:[%s1 + $0x76c] sm:$0xf]
      %v345 = vld [vmem:[%s1 + $0x780] sm:$0xf]
      %v346 = vld [vmem:[%s1 + $0x794] sm:$0xf]
      %v347 = vld [vmem:[%s1 + $0x7a8] sm:$0xf]
      %v348 = vld [vmem:[%s1 + $0x7bc] sm:$0xf]
      %v349 = vld [vmem:[%s1 + $0x7d0] sm:$0xf]
      %v350 = vld [vmem:[%s1 + $0x7e4] sm:$0xf]
      %v351 = vld [vmem:[%s1 + $0x7f8] sm:$0xf]
      %v352 = vld [vmem:[%s1 + $0x80c] sm:$0xf]
      %v353 = vld [vmem:[%s1 + $0x820] sm:$0xf]
      %v354 = vld [vmem:[%s1 + $0x834] sm:$0xf]
      %v355 = vld [vmem:[%s1 + $0x848] sm:$0xf]
      %v356 = vld [vmem:[%s1 + $0x85c] sm:$0xf]
      %v357 = vld [vmem:[%s1 + $0x870] sm:$0xf]
      %v358 = vld [vmem:[%s1 + $0x884] sm:$0xf]
      %v359 = vld [vmem:[%s1 + $0x898] sm:$0xf]
      %v360 = vld [vmem:[%s1 + $0x8ac] sm:$0xf]
      %v361 = vld [vmem:[%s1 + $0x8c0] sm:$0xf]
      %v362 = vld [vmem:[%s1 + $0x8d4] sm:$0xf]
      %v363 = vld [vmem:[%s1 + $0x8e8] sm:$0xf]
      %v364 = vld [vmem:[%s1 + $0x8fc] sm:$0xf]
      %v365 = vld [vmem:[%s1 + $0x910] sm:$0xf]
      %v366 = vld [vmem:[%s1 + $0x924] sm:$0xf]
      %v367 = vld [vmem:[%s1 + $0x938] sm:$0xf]
      %v368 = vld [vmem:[%s1 + $0x94c] sm:$0xf]
      %v369 = vld [vmem:[%s1 + $0x960] sm:$0xf]
      %v370 = vld [vmem:[%s1 + $0x974] sm:$0xf]
      %v371 = vld [vmem:[%s1 + $0x988] sm:$0xf]
      %v372 = vld [vmem:[%s1 + $0x99c] sm:$0xf]
      %v373 = vld [vmem:[%s1 + $0x9b0] sm:$0xf]
      %v374 = vld [vmem:[%s1 + $0x9c4] sm:$0xf]
      %v375 = vld [vmem:[%s1 + $0x9d8] sm:$0xf]
      %v376 = vld [vmem:[%s1 + $0x9ec] sm:$0xf]
      %v385 = vunpack.c.l.b16 %v241
      %v386 = vunpack.c.h.b16 %v241
      %v387 = vunpack.c.l.b16 %v242
      %v388 = vunpack.c.h.b16 %v242
      %v389 = vunpack.c.l.b16 %v243
      %v390 = vunpack.c.h.b16 %v243
      %v391 = vunpack.c.l.b16 %v244
      %v392 = vunpack.c.h.b16 %v244
      %v393 = vunpack.c.l.b16 %v245
      %v394 = vunpack.c.h.b16 %v245
      %v395 = vunpack.c.l.b16 %v246
      %v396 = vunpack.c.h.b16 %v246
      %v397 = vunpack.c.l.b16 %v247
      %v398 = vunpack.c.h.b16 %v247
      %v399 = vunpack.c.l.b16 %v248
      %v400 = vunpack.c.h.b16 %v248
      %v401 = vpack.c.b16 %v393, %v385
      %v402 = vpack.c.b16 %v394, %v386
      %v403 = vpack.c.b16 %v395, %v387
      %v404 = vpack.c.b16 %v396, %v388
      %v405 = vpack.c.b16 %v397, %v389
      %v406 = vpack.c.b16 %v398, %v390
      %v407 = vpack.c.b16 %v399, %v391
      %v408 = vpack.c.b16 %v400, %v392
      %v545 = vunpack.c.l.b16 %v249
      %v546 = vunpack.c.l.b16 %v250
      %v547 = vunpack.c.l.b16 %v251
      %v548 = vunpack.c.l.b16 %v252
      %v549 = vunpack.c.l.b16 %v253
      %v550 = vunpack.c.l.b16 %v254
      %v551 = vunpack.c.l.b16 %v255
      %v552 = vunpack.c.l.b16 %v256
      %v553 = vunpack.c.l.b16 %v257
      %v554 = vunpack.c.l.b16 %v258
      %v555 = vunpack.c.l.b16 %v259
      %v556 = vunpack.c.l.b16 %v260
      %v557 = vunpack.c.l.b16 %v261
      %v558 = vunpack.c.l.b16 %v262
      %v559 = vunpack.c.l.b16 %v263
      %v560 = vunpack.c.l.b16 %v264
      %v561 = vunpack.c.l.b16 %v265
      %v562 = vunpack.c.l.b16 %v266
      %v563 = vunpack.c.l.b16 %v267
      %v564 = vunpack.c.l.b16 %v268
      %v565 = vunpack.c.l.b16 %v269
      %v566 = vunpack.c.l.b16 %v270
      %v567 = vunpack.c.l.b16 %v271
      %v568 = vunpack.c.l.b16 %v272
      %v569 = vunpack.c.l.b16 %v273
      %v570 = vunpack.c.l.b16 %v274
      %v571 = vunpack.c.l.b16 %v275
      %v572 = vunpack.c.l.b16 %v276
      %v573 = vunpack.c.l.b16 %v277
      %v574 = vunpack.c.l.b16 %v278
      %v575 = vunpack.c.l.b16 %v279
      %v576 = vunpack.c.l.b16 %v280
      %v577 = vunpack.c.l.b16 %v281
      %v578 = vunpack.c.l.b16 %v282
      %v579 = vunpack.c.l.b16 %v283
      %v580 = vunpack.c.l.b16 %v284
      %v581 = vunpack.c.l.b16 %v285
      %v582 = vunpack.c.l.b16 %v286
      %v583 = vunpack.c.l.b16 %v287
      %v584 = vunpack.c.l.b16 %v288
      %v585 = vunpack.c.l.b16 %v289
      %v586 = vunpack.c.l.b16 %v290
      %v587 = vunpack.c.l.b16 %v291
      %v588 = vunpack.c.l.b16 %v292
      %v589 = vunpack.c.l.b16 %v293
      %v590 = vunpack.c.l.b16 %v294
      %v591 = vunpack.c.l.b16 %v295
      %v592 = vunpack.c.l.b16 %v296
      %v593 = vunpack.c.l.b16 %v297
      %v594 = vunpack.c.l.b16 %v298
      %v595 = vunpack.c.l.b16 %v299
      %v596 = vunpack.c.l.b16 %v300
      %v597 = vunpack.c.l.b16 %v301
      %v598 = vunpack.c.l.b16 %v302
      %v599 = vunpack.c.l.b16 %v303
      %v600 = vunpack.c.l.b16 %v304
      %v601 = vunpack.c.l.b16 %v305
      %v602 = vunpack.c.l.b16 %v306
      %v603 = vunpack.c.l.b16 %v307
      %v604 = vunpack.c.l.b16 %v308
      %v605 = vunpack.c.l.b16 %v309
      %v606 = vunpack.c.l.b16 %v310
      %v607 = vunpack.c.l.b16 %v311
      %v608 = vunpack.c.l.b16 %v312
      %v609 = vunpack.c.l.b16 %v313
      %v610 = vunpack.c.l.b16 %v314
      %v611 = vunpack.c.l.b16 %v315
      %v612 = vunpack.c.l.b16 %v316
      %v613 = vunpack.c.l.b16 %v317
      %v614 = vunpack.c.l.b16 %v318
      %v615 = vunpack.c.l.b16 %v319
      %v616 = vunpack.c.l.b16 %v320
      %v617 = vunpack.c.l.b16 %v321
      %v618 = vunpack.c.l.b16 %v322
      %v619 = vunpack.c.l.b16 %v323
      %v620 = vunpack.c.l.b16 %v324
      %v621 = vunpack.c.l.b16 %v325
      %v622 = vunpack.c.l.b16 %v326
      %v623 = vunpack.c.l.b16 %v327
      %v624 = vunpack.c.l.b16 %v328
      %v625 = vunpack.c.l.b16 %v329
      %v626 = vunpack.c.l.b16 %v330
      %v627 = vunpack.c.l.b16 %v331
      %v628 = vunpack.c.l.b16 %v332
      %v629 = vunpack.c.l.b16 %v333
      %v630 = vunpack.c.l.b16 %v334
      %v631 = vunpack.c.l.b16 %v335
      %v632 = vunpack.c.l.b16 %v336
      %v633 = vunpack.c.l.b16 %v337
      %v634 = vunpack.c.l.b16 %v338
      %v635 = vunpack.c.l.b16 %v339
      %v636 = vunpack.c.l.b16 %v340
      %v637 = vunpack.c.l.b16 %v341
      %v638 = vunpack.c.l.b16 %v342
      %v639 = vunpack.c.l.b16 %v343
      %v640 = vunpack.c.l.b16 %v344
      %v641 = vunpack.c.l.b16 %v345
      %v642 = vunpack.c.l.b16 %v346
      %v643 = vunpack.c.l.b16 %v347
      %v644 = vunpack.c.l.b16 %v348
      %v645 = vunpack.c.l.b16 %v349
      %v646 = vunpack.c.l.b16 %v350
      %v647 = vunpack.c.l.b16 %v351
      %v648 = vunpack.c.l.b16 %v352
      %v649 = vunpack.c.l.b16 %v353
      %v650 = vunpack.c.l.b16 %v354
      %v651 = vunpack.c.l.b16 %v355
      %v652 = vunpack.c.l.b16 %v356
      %v653 = vunpack.c.l.b16 %v357
      %v654 = vunpack.c.l.b16 %v358
      %v655 = vunpack.c.l.b16 %v359
      %v656 = vunpack.c.l.b16 %v360
      %v657 = vunpack.c.l.b16 %v361
      %v658 = vunpack.c.l.b16 %v362
      %v659 = vunpack.c.l.b16 %v363
      %v660 = vunpack.c.l.b16 %v364
      %v661 = vunpack.c.l.b16 %v365
      %v662 = vunpack.c.l.b16 %v366
      %v663 = vunpack.c.l.b16 %v367
      %v664 = vunpack.c.l.b16 %v368
      %v665 = vunpack.c.l.b16 %v369
      %v666 = vunpack.c.l.b16 %v370
      %v667 = vunpack.c.l.b16 %v371
      %v668 = vunpack.c.l.b16 %v372
      %v669 = vunpack.c.l.b16 %v373
      %v670 = vunpack.c.l.b16 %v374
      %v671 = vunpack.c.l.b16 %v375
      %v672 = vunpack.c.l.b16 %v376
      %v673 = vpack.c.b16 %v546, %v545
      %v674 = vpack.c.b16 %v548, %v547
      %v675 = vpack.c.b16 %v550, %v549
      %v676 = vpack.c.b16 %v552, %v551
      %v677 = vpack.c.b16 %v554, %v553
      %v678 = vpack.c.b16 %v556, %v555
      %v679 = vpack.c.b16 %v558, %v557
      %v680 = vpack.c.b16 %v560, %v559
      %v681 = vpack.c.b16 %v562, %v561
      %v682 = vpack.c.b16 %v564, %v563
      %v683 = vpack.c.b16 %v566, %v565
      %v684 = vpack.c.b16 %v568, %v567
      %v685 = vpack.c.b16 %v570, %v569
      %v686 = vpack.c.b16 %v572, %v571
      %v687 = vpack.c.b16 %v574, %v573
      %v688 = vpack.c.b16 %v576, %v575
      %v689 = vpack.c.b16 %v578, %v577
      %v690 = vpack.c.b16 %v580, %v579
      %v691 = vpack.c.b16 %v582, %v581
      %v692 = vpack.c.b16 %v584, %v583
      %v693 = vpack.c.b16 %v586, %v585
      %v694 = vpack.c.b16 %v588, %v587
      %v695 = vpack.c.b16 %v590, %v589
      %v696 = vpack.c.b16 %v592, %v591
      %v697 = vpack.c.b16 %v594, %v593
      %v698 = vpack.c.b16 %v596, %v595
      %v699 = vpack.c.b16 %v598, %v597
      %v700 = vpack.c.b16 %v600, %v599
      %v701 = vpack.c.b16 %v602, %v601
      %v702 = vpack.c.b16 %v604, %v603
      %v703 = vpack.c.b16 %v606, %v605
      %v704 = vpack.c.b16 %v608, %v607
      %v705 = vpack.c.b16 %v610, %v609
      %v706 = vpack.c.b16 %v612, %v611
      %v707 = vpack.c.b16 %v614, %v613
      %v708 = vpack.c.b16 %v616, %v615
      %v709 = vpack.c.b16 %v618, %v617
      %v710 = vpack.c.b16 %v620, %v619
      %v711 = vpack.c.b16 %v622, %v621
      %v712 = vpack.c.b16 %v624, %v623
      %v713 = vpack.c.b16 %v626, %v625
      %v714 = vpack.c.b16 %v628, %v627
      %v715 = vpack.c.b16 %v630, %v629
      %v716 = vpack.c.b16 %v632, %v631
      %v717 = vpack.c.b16 %v634, %v633
      %v718 = vpack.c.b16 %v636, %v635
      %v719 = vpack.c.b16 %v638, %v637
      %v720 = vpack.c.b16 %v640, %v639
      %v721 = vpack.c.b16 %v642, %v641
      %v722 = vpack.c.b16 %v644, %v643
      %v723 = vpack.c.b16 %v646, %v645
      %v724 = vpack.c.b16 %v648, %v647
      %v725 = vpack.c.b16 %v650, %v649
      %v726 = vpack.c.b16 %v652, %v651
      %v727 = vpack.c.b16 %v654, %v653
      %v728 = vpack.c.b16 %v656, %v655
      %v729 = vpack.c.b16 %v658, %v657
      %v730 = vpack.c.b16 %v660, %v659
      %v731 = vpack.c.b16 %v662, %v661
      %v732 = vpack.c.b16 %v664, %v663
      %v733 = vpack.c.b16 %v666, %v665
      %v734 = vpack.c.b16 %v668, %v667
      %v735 = vpack.c.b16 %v670, %v669
      %v736 = vpack.c.b16 %v672, %v671
      %801 = vmatprep.subr.bf16.mxu0 0
      %802 = vmatpush1.bf16.msra.mxu0 %v673
      %803 = vmatprep.subr.bf16.mxu0 0
      %804 = vmatpush1.bf16.msra.mxu0 %v674
      %805 = vmatprep.subr.bf16.mxu0 0
      %806 = vmatpush1.bf16.msra.mxu0 %v675
      %807 = vmatprep.subr.bf16.mxu0 0
      %808 = vmatpush1.bf16.msra.mxu0 %v676
      %809 = vmatprep.subr.bf16.mxu0 0
      %810 = vmatpush1.bf16.msra.mxu0 %v677
      %811 = vmatprep.subr.bf16.mxu0 0
      %812 = vmatpush1.bf16.msra.mxu0 %v678
      %813 = vmatprep.subr.bf16.mxu0 0
      %814 = vmatpush1.bf16.msra.mxu0 %v679
      %815 = vmatprep.subr.bf16.mxu0 0
      %816 = vmatpush1.bf16.msra.mxu0 %v680
      %817 = vmatprep.subr.bf16.mxu0 0
      %818 = vmatpush1.bf16.msra.mxu0 %v681
      %819 = vmatprep.subr.bf16.mxu0 0
      %820 = vmatpush1.bf16.msra.mxu0 %v682
      %821 = vmatprep.subr.bf16.mxu0 0
      %822 = vmatpush1.bf16.msra.mxu0 %v683
      %823 = vmatprep.subr.bf16.mxu0 0
      %824 = vmatpush1.bf16.msra.mxu0 %v684
      %825 = vmatprep.subr.bf16.mxu0 0
      %826 = vmatpush1.bf16.msra.mxu0 %v685
      %827 = vmatprep.subr.bf16.mxu0 0
      %828 = vmatpush1.bf16.msra.mxu0 %v686
      %829 = vmatprep.subr.bf16.mxu0 0
      %830 = vmatpush1.bf16.msra.mxu0 %v687
      %831 = vmatprep.subr.bf16.mxu0 0
      %832 = vmatpush1.bf16.msra.mxu0 %v688
      %833 = vmatprep.mubr.bf16.mxu0 %v402
      %834 = vmatmul.mubr.bf16.gmra.mrb[0].mxu0 %v401
      %v835 = vpop.f32.mrb[0].mxu0
      %v836 = vadd.f32 0.0, %v835
      %v837 = vpop.f32.mrb[0].mxu0
      %v838 = vpop.f32.mrb[0].mxu0
      %v839 = vadd.f32 0.0, %v838
      %v840 = vpop.f32.mrb[0].mxu0
      %841 = vdwg.mxu0
      %842 = vmatprep.subr.bf16.mxu0 0
      %843 = vmatpush1.bf16.msra.mxu0 %v689
      %844 = vmatprep.subr.bf16.mxu0 0
      %845 = vmatpush1.bf16.msra.mxu0 %v690
      %846 = vmatprep.subr.bf16.mxu0 0
      %847 = vmatpush1.bf16.msra.mxu0 %v691
      %848 = vmatprep.subr.bf16.mxu0 0
      %849 = vmatpush1.bf16.msra.mxu0 %v692
      %850 = vmatprep.subr.bf16.mxu0 0
      %851 = vmatpush1.bf16.msra.mxu0 %v693
      %852 = vmatprep.subr.bf16.mxu0 0
      %853 = vmatpush1.bf16.msra.mxu0 %v694
      %854 = vmatprep.subr.bf16.mxu0 0
      %855 = vmatpush1.bf16.msra.mxu0 %v695
      %856 = vmatprep.subr.bf16.mxu0 0
      %857 = vmatpush1.bf16.msra.mxu0 %v696
      %858 = vmatprep.subr.bf16.mxu0 0
      %859 = vmatpush1.bf16.msra.mxu0 %v697
      %860 = vmatprep.subr.bf16.mxu0 0
      %861 = vmatpush1.bf16.msra.mxu0 %v698
      %862 = vmatprep.subr.bf16.mxu0 0
      %863 = vmatpush1.bf16.msra.mxu0 %v699
      %864 = vmatprep.subr.bf16.mxu0 0
      %865 = vmatpush1.bf16.msra.mxu0 %v700
      %866 = vmatprep.subr.bf16.mxu0 0
      %867 = vmatpush1.bf16.msra.mxu0 %v701
      %868 = vmatprep.subr.bf16.mxu0 0
      %869 = vmatpush1.bf16.msra.mxu0 %v702
      %870 = vmatprep.subr.bf16.mxu0 0
      %871 = vmatpush1.bf16.msra.mxu0 %v703
      %872 = vmatprep.subr.bf16.mxu0 0
      %873 = vmatpush1.bf16.msra.mxu0 %v704
      %874 = vmatprep.mubr.bf16.mxu0 %v404
      %875 = vmatmul.mubr.bf16.gmra.mrb[0].mxu0 %v403
      %v876 = vpop.f32.mrb[0].mxu0
      %v877 = vadd.f32 %v836, %v876
      %v878 = vpop.f32.mrb[0].mxu0
      %v879 = vpop.f32.mrb[0].mxu0
      %v880 = vadd.f32 %v839, %v879
      %v881 = vpop.f32.mrb[0].mxu0
      %882 = vdwg.mxu0
      %883 = vmatprep.subr.bf16.mxu0 0
      %884 = vmatpush1.bf16.msra.mxu0 %v705
      %885 = vmatprep.subr.bf16.mxu0 0
      %886 = vmatpush1.bf16.msra.mxu0 %v706
      %887 = vmatprep.subr.bf16.mxu0 0
      %888 = vmatpush1.bf16.msra.mxu0 %v707
      %889 = vmatprep.subr.bf16.mxu0 0
      %890 = vmatpush1.bf16.msra.mxu0 %v708
      %891 = vmatprep.subr.bf16.mxu0 0
      %892 = vmatpush1.bf16.msra.mxu0 %v709
      %893 = vmatprep.subr.bf16.mxu0 0
      %894 = vmatpush1.bf16.msra.mxu0 %v710
      %895 = vmatprep.subr.bf16.mxu0 0
      %896 = vmatpush1.bf16.msra.mxu0 %v711
      %897 = vmatprep.subr.bf16.mxu0 0
      %898 = vmatpush1.bf16.msra.mxu0 %v712
      %899 = vmatprep.subr.bf16.mxu0 0
      %900 = vmatpush1.bf16.msra.mxu0 %v713
      %901 = vmatprep.subr.bf16.mxu0 0
      %902 = vmatpush1.bf16.msra.mxu0 %v714
      %903 = vmatprep.subr.bf16.mxu0 0
      %904 = vmatpush1.bf16.msra.mxu0 %v715
      %905 = vmatprep.subr.bf16.mxu0 0
      %906 = vmatpush1.bf16.msra.mxu0 %v716
      %907 = vmatprep.subr.bf16.mxu0 0
      %908 = vmatpush1.bf16.msra.mxu0 %v717
      %909 = vmatprep.subr.bf16.mxu0 0
      %910 = vmatpush1.bf16.msra.mxu0 %v718
      %911 = vmatprep.subr.bf16.mxu0 0
      %912 = vmatpush1.bf16.msra.mxu0 %v719
      %913 = vmatprep.subr.bf16.mxu0 0
      %914 = vmatpush1.bf16.msra.mxu0 %v720
      %915 = vmatprep.mubr.bf16.mxu0 %v406
      %916 = vmatmul.mubr.bf16.gmra.mrb[0].mxu0 %v405
      %v917 = vpop.f32.mrb[0].mxu0
      %v918 = vadd.f32 %v877, %v917
      %v919 = vpop.f32.mrb[0].mxu0
      %v920 = vpop.f32.mrb[0].mxu0
      %v921 = vadd.f32 %v880, %v920
      %v922 = vpop.f32.mrb[0].mxu0
      %923 = vdwg.mxu0
      %924 = vmatprep.subr.bf16.mxu0 0
      %925 = vmatpush1.bf16.msra.mxu0 %v721
      %926 = vmatprep.subr.bf16.mxu0 0
      %927 = vmatpush1.bf16.msra.mxu0 %v722
      %928 = vmatprep.subr.bf16.mxu0 0
      %929 = vmatpush1.bf16.msra.mxu0 %v723
      %930 = vmatprep.subr.bf16.mxu0 0
      %931 = vmatpush1.bf16.msra.mxu0 %v724
      %932 = vmatprep.subr.bf16.mxu0 0
      %933 = vmatpush1.bf16.msra.mxu0 %v725
      %934 = vmatprep.subr.bf16.mxu0 0
      %935 = vmatpush1.bf16.msra.mxu0 %v726
      %936 = vmatprep.subr.bf16.mxu0 0
      %937 = vmatpush1.bf16.msra.mxu0 %v727
      %938 = vmatprep.subr.bf16.mxu0 0
      %939 = vmatpush1.bf16.msra.mxu0 %v728
      %940 = vmatprep.subr.bf16.mxu0 0
      %941 = vmatpush1.bf16.msra.mxu0 %v729
      %942 = vmatprep.subr.bf16.mxu0 0
      %943 = vmatpush1.bf16.msra.mxu0 %v730
      %944 = vmatprep.subr.bf16.mxu0 0
      %945 = vmatpush1.bf16.msra.mxu0 %v731
      %946 = vmatprep.subr.bf16.mxu0 0
      %947 = vmatpush1.bf16.msra.mxu0 %v732
      %948 = vmatprep.subr.bf16.mxu0 0
      %949 = vmatpush1.bf16.msra.mxu0 %v733
      %950 = vmatprep.subr.bf16.mxu0 0
      %951 = vmatpush1.bf16.msra.mxu0 %v734
      %952 = vmatprep.subr.bf16.mxu0 0
      %953 = vmatpush1.bf16.msra.mxu0 %v735
      %954 = vmatprep.subr.bf16.mxu0 0
      %955 = vmatpush1.bf16.msra.mxu0 %v736
      %956 = vmatprep.mubr.bf16.mxu0 %v408
      %957 = vmatmul.mubr.bf16.gmra.mrb[0].mxu0 %v407
      %v958 = vpop.f32.mrb[0].mxu0
      %v959 = vadd.f32 %v918, %v958
      %v960 = vpop.f32.mrb[0].mxu0
      %v961 = vpop.f32.mrb[0].mxu0
      %v962 = vadd.f32 %v921, %v961
      %v963 = vpop.f32.mrb[0].mxu0
      %964 = vdwg.mxu0
      %v965 = vld [vmem:[%s2] sm:$0xf]
      %v966 = vld [vmem:[%s2 + $0x14] sm:$0xf]
      %v967 = vld [vmem:[%s2 + $0x28] sm:$0xf]
      %v968 = vld [vmem:[%s2 + $0x3c] sm:$0xf]
      %v969 = vld [vmem:[%s2 + $0x50] sm:$0xf]
      %v970 = vld [vmem:[%s2 + $0x64] sm:$0xf]
      %v971 = vld [vmem:[%s2 + $0x78] sm:$0xf]
      %v972 = vld [vmem:[%s2 + $0x8c] sm:$0xf]
      %v973 = vld [vmem:[%s2 + $0xa0] sm:$0xf]
      %v974 = vld [vmem:[%s2 + $0xb4] sm:$0xf]
      %v975 = vld [vmem:[%s2 + $0xc8] sm:$0xf]
      %v976 = vld [vmem:[%s2 + $0xdc] sm:$0xf]
      %v977 = vld [vmem:[%s2 + $0xf0] sm:$0xf]
      %v978 = vld [vmem:[%s2 + $0x104] sm:$0xf]
      %v979 = vld [vmem:[%s2 + $0x118] sm:$0xf]
      %v980 = vld [vmem:[%s2 + $0x12c] sm:$0xf]
      %v981 = vld [vmem:[%s2 + $0x140] sm:$0xf]
      %v982 = vld [vmem:[%s2 + $0x154] sm:$0xf]
      %v983 = vld [vmem:[%s2 + $0x168] sm:$0xf]
      %v984 = vld [vmem:[%s2 + $0x17c] sm:$0xf]
      %v985 = vld [vmem:[%s2 + $0x190] sm:$0xf]
      %v986 = vld [vmem:[%s2 + $0x1a4] sm:$0xf]
      %v987 = vld [vmem:[%s2 + $0x1b8] sm:$0xf]
      %v988 = vld [vmem:[%s2 + $0x1cc] sm:$0xf]
      %v989 = vld [vmem:[%s2 + $0x1e0] sm:$0xf]
      %v990 = vld [vmem:[%s2 + $0x1f4] sm:$0xf]
      %v991 = vld [vmem:[%s2 + $0x208] sm:$0xf]
      %v992 = vld [vmem:[%s2 + $0x21c] sm:$0xf]
      %v993 = vld [vmem:[%s2 + $0x230] sm:$0xf]
      %v994 = vld [vmem:[%s2 + $0x244] sm:$0xf]
      %v995 = vld [vmem:[%s2 + $0x258] sm:$0xf]
      %v996 = vld [vmem:[%s2 + $0x26c] sm:$0xf]
      %v997 = vld [vmem:[%s2 + $0x280] sm:$0xf]
      %v998 = vld [vmem:[%s2 + $0x294] sm:$0xf]
      %v999 = vld [vmem:[%s2 + $0x2a8] sm:$0xf]
      %v1000 = vld [vmem:[%s2 + $0x2bc] sm:$0xf]
      %v1001 = vld [vmem:[%s2 + $0x2d0] sm:$0xf]
      %v1002 = vld [vmem:[%s2 + $0x2e4] sm:$0xf]
      %v1003 = vld [vmem:[%s2 + $0x2f8] sm:$0xf]
      %v1004 = vld [vmem:[%s2 + $0x30c] sm:$0xf]
      %v1005 = vld [vmem:[%s2 + $0x320] sm:$0xf]
      %v1006 = vld [vmem:[%s2 + $0x334] sm:$0xf]
      %v1007 = vld [vmem:[%s2 + $0x348] sm:$0xf]
      %v1008 = vld [vmem:[%s2 + $0x35c] sm:$0xf]
      %v1009 = vld [vmem:[%s2 + $0x370] sm:$0xf]
      %v1010 = vld [vmem:[%s2 + $0x384] sm:$0xf]
      %v1011 = vld [vmem:[%s2 + $0x398] sm:$0xf]
      %v1012 = vld [vmem:[%s2 + $0x3ac] sm:$0xf]
      %v1013 = vld [vmem:[%s2 + $0x3c0] sm:$0xf]
      %v1014 = vld [vmem:[%s2 + $0x3d4] sm:$0xf]
      %v1015 = vld [vmem:[%s2 + $0x3e8] sm:$0xf]
      %v1016 = vld [vmem:[%s2 + $0x3fc] sm:$0xf]
      %v1017 = vld [vmem:[%s2 + $0x410] sm:$0xf]
      %v1018 = vld [vmem:[%s2 + $0x424] sm:$0xf]
      %v1019 = vld [vmem:[%s2 + $0x438] sm:$0xf]
      %v1020 = vld [vmem:[%s2 + $0x44c] sm:$0xf]
      %v1021 = vld [vmem:[%s2 + $0x460] sm:$0xf]
      %v1022 = vld [vmem:[%s2 + $0x474] sm:$0xf]
      %v1023 = vld [vmem:[%s2 + $0x488] sm:$0xf]
      %v1024 = vld [vmem:[%s2 + $0x49c] sm:$0xf]
      %v1025 = vld [vmem:[%s2 + $0x4b0] sm:$0xf]
      %v1026 = vld [vmem:[%s2 + $0x4c4] sm:$0xf]
      %v1027 = vld [vmem:[%s2 + $0x4d8] sm:$0xf]
      %v1028 = vld [vmem:[%s2 + $0x4ec] sm:$0xf]
      %v1029 = vld [vmem:[%s2 + $0x500] sm:$0xf]
      %v1030 = vld [vmem:[%s2 + $0x514] sm:$0xf]
      %v1031 = vld [vmem:[%s2 + $0x528] sm:$0xf]
      %v1032 = vld [vmem:[%s2 + $0x53c] sm:$0xf]
      %v1033 = vld [vmem:[%s2 + $0x550] sm:$0xf]
      %v1034 = vld [vmem:[%s2 + $0x564] sm:$0xf]
      %v1035 = vld [vmem:[%s2 + $0x578] sm:$0xf]
      %v1036 = vld [vmem:[%s2 + $0x58c] sm:$0xf]
      %v1037 = vld [vmem:[%s2 + $0x5a0] sm:$0xf]
      %v1038 = vld [vmem:[%s2 + $0x5b4] sm:$0xf]
      %v1039 = vld [vmem:[%s2 + $0x5c8] sm:$0xf]
      %v1040 = vld [vmem:[%s2 + $0x5dc] sm:$0xf]
      %v1041 = vld [vmem:[%s2 + $0x5f0] sm:$0xf]
      %v1042 = vld [vmem:[%s2 + $0x604] sm:$0xf]
      %v1043 = vld [vmem:[%s2 + $0x618] sm:$0xf]
      %v1044 = vld [vmem:[%s2 + $0x62c] sm:$0xf]
      %v1045 = vld [vmem:[%s2 + $0x640] sm:$0xf]
      %v1046 = vld [vmem:[%s2 + $0x654] sm:$0xf]
      %v1047 = vld [vmem:[%s2 + $0x668] sm:$0xf]
      %v1048 = vld [vmem:[%s2 + $0x67c] sm:$0xf]
      %v1049 = vld [vmem:[%s2 + $0x690] sm:$0xf]
      %v1050 = vld [vmem:[%s2 + $0x6a4] sm:$0xf]
      %v1051 = vld [vmem:[%s2 + $0x6b8] sm:$0xf]
      %v1052 = vld [vmem:[%s2 + $0x6cc] sm:$0xf]
      %v1053 = vld [vmem:[%s2 + $0x6e0] sm:$0xf]
      %v1054 = vld [vmem:[%s2 + $0x6f4] sm:$0xf]
      %v1055 = vld [vmem:[%s2 + $0x708] sm:$0xf]
      %v1056 = vld [vmem:[%s2 + $0x71c] sm:$0xf]
      %v1057 = vld [vmem:[%s2 + $0x730] sm:$0xf]
      %v1058 = vld [vmem:[%s2 + $0x744] sm:$0xf]
      %v1059 = vld [vmem:[%s2 + $0x758] sm:$0xf]
      %v1060 = vld [vmem:[%s2 + $0x76c] sm:$0xf]
      %v1061 = vld [vmem:[%s2 + $0x780] sm:$0xf]
      %v1062 = vld [vmem:[%s2 + $0x794] sm:$0xf]
      %v1063 = vld [vmem:[%s2 + $0x7a8] sm:$0xf]
      %v1064 = vld [vmem:[%s2 + $0x7bc] sm:$0xf]
      %v1065 = vld [vmem:[%s2 + $0x7d0] sm:$0xf]
      %v1066 = vld [vmem:[%s2 + $0x7e4] sm:$0xf]
      %v1067 = vld [vmem:[%s2 + $0x7f8] sm:$0xf]
      %v1068 = vld [vmem:[%s2 + $0x80c] sm:$0xf]
      %v1069 = vld [vmem:[%s2 + $0x820] sm:$0xf]
      %v1070 = vld [vmem:[%s2 + $0x834] sm:$0xf]
      %v1071 = vld [vmem:[%s2 + $0x848] sm:$0xf]
      %v1072 = vld [vmem:[%s2 + $0x85c] sm:$0xf]
      %v1073 = vld [vmem:[%s2 + $0x870] sm:$0xf]
      %v1074 = vld [vmem:[%s2 + $0x884] sm:$0xf]
      %v1075 = vld [vmem:[%s2 + $0x898] sm:$0xf]
      %v1076 = vld [vmem:[%s2 + $0x8ac] sm:$0xf]
      %v1077 = vld [vmem:[%s2 + $0x8c0] sm:$0xf]
      %v1078 = vld [vmem:[%s2 + $0x8d4] sm:$0xf]
      %v1079 = vld [vmem:[%s2 + $0x8e8] sm:$0xf]
      %v1080 = vld [vmem:[%s2 + $0x8fc] sm:$0xf]
      %v1081 = vld [vmem:[%s2 + $0x910] sm:$0xf]
      %v1082 = vld [vmem:[%s2 + $0x924] sm:$0xf]
      %v1083 = vld [vmem:[%s2 + $0x938] sm:$0xf]
      %v1084 = vld [vmem:[%s2 + $0x94c] sm:$0xf]
      %v1085 = vld [vmem:[%s2 + $0x960] sm:$0xf]
      %v1086 = vld [vmem:[%s2 + $0x974] sm:$0xf]
      %v1087 = vld [vmem:[%s2 + $0x988] sm:$0xf]
      %v1088 = vld [vmem:[%s2 + $0x99c] sm:$0xf]
      %v1089 = vld [vmem:[%s2 + $0x9b0] sm:$0xf]
      %v1090 = vld [vmem:[%s2 + $0x9c4] sm:$0xf]
      %v1091 = vld [vmem:[%s2 + $0x9d8] sm:$0xf]
      %v1092 = vld [vmem:[%s2 + $0x9ec] sm:$0xf]
      %v1221 = vunpack.c.l.b16 %v965
      %v1222 = vunpack.c.l.b16 %v966
      %v1223 = vunpack.c.l.b16 %v967
      %v1224 = vunpack.c.l.b16 %v968
      %v1225 = vunpack.c.l.b16 %v969
      %v1226 = vunpack.c.l.b16 %v970
      %v1227 = vunpack.c.l.b16 %v971
      %v1228 = vunpack.c.l.b16 %v972
      %v1229 = vunpack.c.l.b16 %v973
      %v1230 = vunpack.c.l.b16 %v974
      %v1231 = vunpack.c.l.b16 %v975
      %v1232 = vunpack.c.l.b16 %v976
      %v1233 = vunpack.c.l.b16 %v977
      %v1234 = vunpack.c.l.b16 %v978
      %v1235 = vunpack.c.l.b16 %v979
      %v1236 = vunpack.c.l.b16 %v980
      %v1237 = vunpack.c.l.b16 %v981
      %v1238 = vunpack.c.l.b16 %v982
      %v1239 = vunpack.c.l.b16 %v983
      %v1240 = vunpack.c.l.b16 %v984
      %v1241 = vunpack.c.l.b16 %v985
      %v1242 = vunpack.c.l.b16 %v986
      %v1243 = vunpack.c.l.b16 %v987
      %v1244 = vunpack.c.l.b16 %v988
      %v1245 = vunpack.c.l.b16 %v989
      %v1246 = vunpack.c.l.b16 %v990
      %v1247 = vunpack.c.l.b16 %v991
      %v1248 = vunpack.c.l.b16 %v992
      %v1249 = vunpack.c.l.b16 %v993
      %v1250 = vunpack.c.l.b16 %v994
      %v1251 = vunpack.c.l.b16 %v995
      %v1252 = vunpack.c.l.b16 %v996
      %v1253 = vunpack.c.l.b16 %v997
      %v1254 = vunpack.c.l.b16 %v998
      %v1255 = vunpack.c.l.b16 %v999
      %v1256 = vunpack.c.l.b16 %v1000
      %v1257 = vunpack.c.l.b16 %v1001
      %v1258 = vunpack.c.l.b16 %v1002
      %v1259 = vunpack.c.l.b16 %v1003
      %v1260 = vunpack.c.l.b16 %v1004
      %v1261 = vunpack.c.l.b16 %v1005
      %v1262 = vunpack.c.l.b16 %v1006
      %v1263 = vunpack.c.l.b16 %v1007
      %v1264 = vunpack.c.l.b16 %v1008
      %v1265 = vunpack.c.l.b16 %v1009
      %v1266 = vunpack.c.l.b16 %v1010
      %v1267 = vunpack.c.l.b16 %v1011
      %v1268 = vunpack.c.l.b16 %v1012
      %v1269 = vunpack.c.l.b16 %v1013
      %v1270 = vunpack.c.l.b16 %v1014
      %v1271 = vunpack.c.l.b16 %v1015
      %v1272 = vunpack.c.l.b16 %v1016
      %v1273 = vunpack.c.l.b16 %v1017
      %v1274 = vunpack.c.l.b16 %v1018
      %v1275 = vunpack.c.l.b16 %v1019
      %v1276 = vunpack.c.l.b16 %v1020
      %v1277 = vunpack.c.l.b16 %v1021
      %v1278 = vunpack.c.l.b16 %v1022
      %v1279 = vunpack.c.l.b16 %v1023
      %v1280 = vunpack.c.l.b16 %v1024
      %v1281 = vunpack.c.l.b16 %v1025
      %v1282 = vunpack.c.l.b16 %v1026
      %v1283 = vunpack.c.l.b16 %v1027
      %v1284 = vunpack.c.l.b16 %v1028
      %v1285 = vunpack.c.l.b16 %v1029
      %v1286 = vunpack.c.l.b16 %v1030
      %v1287 = vunpack.c.l.b16 %v1031
      %v1288 = vunpack.c.l.b16 %v1032
      %v1289 = vunpack.c.l.b16 %v1033
      %v1290 = vunpack.c.l.b16 %v1034
      %v1291 = vunpack.c.l.b16 %v1035
      %v1292 = vunpack.c.l.b16 %v1036
      %v1293 = vunpack.c.l.b16 %v1037
      %v1294 = vunpack.c.l.b16 %v1038
      %v1295 = vunpack.c.l.b16 %v1039
      %v1296 = vunpack.c.l.b16 %v1040
      %v1297 = vunpack.c.l.b16 %v1041
      %v1298 = vunpack.c.l.b16 %v1042
      %v1299 = vunpack.c.l.b16 %v1043
      %v1300 = vunpack.c.l.b16 %v1044
      %v1301 = vunpack.c.l.b16 %v1045
      %v1302 = vunpack.c.l.b16 %v1046
      %v1303 = vunpack.c.l.b16 %v1047
      %v1304 = vunpack.c.l.b16 %v1048
      %v1305 = vunpack.c.l.b16 %v1049
      %v1306 = vunpack.c.l.b16 %v1050
      %v1307 = vunpack.c.l.b16 %v1051
      %v1308 = vunpack.c.l.b16 %v1052
      %v1309 = vunpack.c.l.b16 %v1053
      %v1310 = vunpack.c.l.b16 %v1054
      %v1311 = vunpack.c.l.b16 %v1055
      %v1312 = vunpack.c.l.b16 %v1056
      %v1313 = vunpack.c.l.b16 %v1057
      %v1314 = vunpack.c.l.b16 %v1058
      %v1315 = vunpack.c.l.b16 %v1059
      %v1316 = vunpack.c.l.b16 %v1060
      %v1317 = vunpack.c.l.b16 %v1061
      %v1318 = vunpack.c.l.b16 %v1062
      %v1319 = vunpack.c.l.b16 %v1063
      %v1320 = vunpack.c.l.b16 %v1064
      %v1321 = vunpack.c.l.b16 %v1065
      %v1322 = vunpack.c.l.b16 %v1066
      %v1323 = vunpack.c.l.b16 %v1067
      %v1324 = vunpack.c.l.b16 %v1068
      %v1325 = vunpack.c.l.b16 %v1069
      %v1326 = vunpack.c.l.b16 %v1070
      %v1327 = vunpack.c.l.b16 %v1071
      %v1328 = vunpack.c.l.b16 %v1072
      %v1329 = vunpack.c.l.b16 %v1073
      %v1330 = vunpack.c.l.b16 %v1074
      %v1331 = vunpack.c.l.b16 %v1075
      %v1332 = vunpack.c.l.b16 %v1076
      %v1333 = vunpack.c.l.b16 %v1077
      %v1334 = vunpack.c.l.b16 %v1078
      %v1335 = vunpack.c.l.b16 %v1079
      %v1336 = vunpack.c.l.b16 %v1080
      %v1337 = vunpack.c.l.b16 %v1081
      %v1338 = vunpack.c.l.b16 %v1082
      %v1339 = vunpack.c.l.b16 %v1083
      %v1340 = vunpack.c.l.b16 %v1084
      %v1341 = vunpack.c.l.b16 %v1085
      %v1342 = vunpack.c.l.b16 %v1086
      %v1343 = vunpack.c.l.b16 %v1087
      %v1344 = vunpack.c.l.b16 %v1088
      %v1345 = vunpack.c.l.b16 %v1089
      %v1346 = vunpack.c.l.b16 %v1090
      %v1347 = vunpack.c.l.b16 %v1091
      %v1348 = vunpack.c.l.b16 %v1092
      %v1349 = vpack.c.b16 %v1222, %v1221
      %v1350 = vpack.c.b16 %v1224, %v1223
      %v1351 = vpack.c.b16 %v1226, %v1225
      %v1352 = vpack.c.b16 %v1228, %v1227
      %v1353 = vpack.c.b16 %v1230, %v1229
      %v1354 = vpack.c.b16 %v1232, %v1231
      %v1355 = vpack.c.b16 %v1234, %v1233
      %v1356 = vpack.c.b16 %v1236, %v1235
      %v1357 = vpack.c.b16 %v1238, %v1237
      %v1358 = vpack.c.b16 %v1240, %v1239
      %v1359 = vpack.c.b16 %v1242, %v1241
      %v1360 = vpack.c.b16 %v1244, %v1243
      %v1361 = vpack.c.b16 %v1246, %v1245
      %v1362 = vpack.c.b16 %v1248, %v1247
      %v1363 = vpack.c.b16 %v1250, %v1249
      %v1364 = vpack.c.b16 %v1252, %v1251
      %v1365 = vpack.c.b16 %v1254, %v1253
      %v1366 = vpack.c.b16 %v1256, %v1255
      %v1367 = vpack.c.b16 %v1258, %v1257
      %v1368 = vpack.c.b16 %v1260, %v1259
      %v1369 = vpack.c.b16 %v1262, %v1261
      %v1370 = vpack.c.b16 %v1264, %v1263
      %v1371 = vpack.c.b16 %v1266, %v1265
      %v1372 = vpack.c.b16 %v1268, %v1267
      %v1373 = vpack.c.b16 %v1270, %v1269
      %v1374 = vpack.c.b16 %v1272, %v1271
      %v1375 = vpack.c.b16 %v1274, %v1273
      %v1376 = vpack.c.b16 %v1276, %v1275
      %v1377 = vpack.c.b16 %v1278, %v1277
      %v1378 = vpack.c.b16 %v1280, %v1279
      %v1379 = vpack.c.b16 %v1282, %v1281
      %v1380 = vpack.c.b16 %v1284, %v1283
      %v1381 = vpack.c.b16 %v1286, %v1285
      %v1382 = vpack.c.b16 %v1288, %v1287
      %v1383 = vpack.c.b16 %v1290, %v1289
      %v1384 = vpack.c.b16 %v1292, %v1291
      %v1385 = vpack.c.b16 %v1294, %v1293
      %v1386 = vpack.c.b16 %v1296, %v1295
      %v1387 = vpack.c.b16 %v1298, %v1297
      %v1388 = vpack.c.b16 %v1300, %v1299
      %v1389 = vpack.c.b16 %v1302, %v1301
      %v1390 = vpack.c.b16 %v1304, %v1303
      %v1391 = vpack.c.b16 %v1306, %v1305
      %v1392 = vpack.c.b16 %v1308, %v1307
      %v1393 = vpack.c.b16 %v1310, %v1309
      %v1394 = vpack.c.b16 %v1312, %v1311
      %v1395 = vpack.c.b16 %v1314, %v1313
      %v1396 = vpack.c.b16 %v1316, %v1315
      %v1397 = vpack.c.b16 %v1318, %v1317
      %v1398 = vpack.c.b16 %v1320, %v1319
      %v1399 = vpack.c.b16 %v1322, %v1321
      %v1400 = vpack.c.b16 %v1324, %v1323
      %v1401 = vpack.c.b16 %v1326, %v1325
      %v1402 = vpack.c.b16 %v1328, %v1327
      %v1403 = vpack.c.b16 %v1330, %v1329
      %v1404 = vpack.c.b16 %v1332, %v1331
      %v1405 = vpack.c.b16 %v1334, %v1333
      %v1406 = vpack.c.b16 %v1336, %v1335
      %v1407 = vpack.c.b16 %v1338, %v1337
      %v1408 = vpack.c.b16 %v1340, %v1339
      %v1409 = vpack.c.b16 %v1342, %v1341
      %v1410 = vpack.c.b16 %v1344, %v1343
      %v1411 = vpack.c.b16 %v1346, %v1345
      %v1412 = vpack.c.b16 %v1348, %v1347
      %1477 = vmatprep.subr.bf16.mxu0 0
      %1478 = vmatpush1.bf16.msra.mxu0 %v1349
      %1479 = vmatprep.subr.bf16.mxu0 0
      %1480 = vmatpush1.bf16.msra.mxu0 %v1350
      %1481 = vmatprep.subr.bf16.mxu0 0
      %1482 = vmatpush1.bf16.msra.mxu0 %v1351
      %1483 = vmatprep.subr.bf16.mxu0 0
      %1484 = vmatpush1.bf16.msra.mxu0 %v1352
      %1485 = vmatprep.subr.bf16.mxu0 0
      %1486 = vmatpush1.bf16.msra.mxu0 %v1353
      %1487 = vmatprep.subr.bf16.mxu0 0
      %1488 = vmatpush1.bf16.msra.mxu0 %v1354
      %1489 = vmatprep.subr.bf16.mxu0 0
      %1490 = vmatpush1.bf16.msra.mxu0 %v1355
      %1491 = vmatprep.subr.bf16.mxu0 0
      %1492 = vmatpush1.bf16.msra.mxu0 %v1356
      %1493 = vmatprep.subr.bf16.mxu0 0
      %1494 = vmatpush1.bf16.msra.mxu0 %v1357
      %1495 = vmatprep.subr.bf16.mxu0 0
      %1496 = vmatpush1.bf16.msra.mxu0 %v1358
      %1497 = vmatprep.subr.bf16.mxu0 0
      %1498 = vmatpush1.bf16.msra.mxu0 %v1359
      %1499 = vmatprep.subr.bf16.mxu0 0
      %1500 = vmatpush1.bf16.msra.mxu0 %v1360
      %1501 = vmatprep.subr.bf16.mxu0 0
      %1502 = vmatpush1.bf16.msra.mxu0 %v1361
      %1503 = vmatprep.subr.bf16.mxu0 0
      %1504 = vmatpush1.bf16.msra.mxu0 %v1362
      %1505 = vmatprep.subr.bf16.mxu0 0
      %1506 = vmatpush1.bf16.msra.mxu0 %v1363
      %1507 = vmatprep.subr.bf16.mxu0 0
      %1508 = vmatpush1.bf16.msra.mxu0 %v1364
      %1509 = vmatprep.mubr.bf16.mxu0 %v402
      %1510 = vmatmul.mubr.bf16.gmra.mrb[0].mxu0 %v401
      %v1511 = vpop.f32.mrb[0].mxu0
      %v1512 = vadd.f32 0.0, %v1511
      %v1513 = vpop.f32.mrb[0].mxu0
      %v1514 = vpop.f32.mrb[0].mxu0
      %v1515 = vadd.f32 0.0, %v1514
      %v1516 = vpop.f32.mrb[0].mxu0
      %1517 = vdwg.mxu0
      %1518 = vmatprep.subr.bf16.mxu0 0
      %1519 = vmatpush1.bf16.msra.mxu0 %v1365
      %1520 = vmatprep.subr.bf16.mxu0 0
      %1521 = vmatpush1.bf16.msra.mxu0 %v1366
      %1522 = vmatprep.subr.bf16.mxu0 0
      %1523 = vmatpush1.bf16.msra.mxu0 %v1367
      %1524 = vmatprep.subr.bf16.mxu0 0
      %1525 = vmatpush1.bf16.msra.mxu0 %v1368
      %1526 = vmatprep.subr.bf16.mxu0 0
      %1527 = vmatpush1.bf16.msra.mxu0 %v1369
      %1528 = vmatprep.subr.bf16.mxu0 0
      %1529 = vmatpush1.bf16.msra.mxu0 %v1370
      %1530 = vmatprep.subr.bf16.mxu0 0
      %1531 = vmatpush1.bf16.msra.mxu0 %v1371
      %1532 = vmatprep.subr.bf16.mxu0 0
      %1533 = vmatpush1.bf16.msra.mxu0 %v1372
      %1534 = vmatprep.subr.bf16.mxu0 0
      %1535 = vmatpush1.bf16.msra.mxu0 %v1373
      %1536 = vmatprep.subr.bf16.mxu0 0
      %1537 = vmatpush1.bf16.msra.mxu0 %v1374
      %1538 = vmatprep.subr.bf16.mxu0 0
      %1539 = vmatpush1.bf16.msra.mxu0 %v1375
      %1540 = vmatprep.subr.bf16.mxu0 0
      %1541 = vmatpush1.bf16.msra.mxu0 %v1376
      %1542 = vmatprep.subr.bf16.mxu0 0
      %1543 = vmatpush1.bf16.msra.mxu0 %v1377
      %1544 = vmatprep.subr.bf16.mxu0 0
      %1545 = vmatpush1.bf16.msra.mxu0 %v1378
      %1546 = vmatprep.subr.bf16.mxu0 0
      %1547 = vmatpush1.bf16.msra.mxu0 %v1379
      %1548 = vmatprep.subr.bf16.mxu0 0
      %1549 = vmatpush1.bf16.msra.mxu0 %v1380
      %1550 = vmatprep.mubr.bf16.mxu0 %v404
      %1551 = vmatmul.mubr.bf16.gmra.mrb[0].mxu0 %v403
      %v1552 = vpop.f32.mrb[0].mxu0
      %v1553 = vadd.f32 %v1512, %v1552
      %v1554 = vpop.f32.mrb[0].mxu0
      %v1555 = vpop.f32.mrb[0].mxu0
      %v1556 = vadd.f32 %v1515, %v1555
      %v1557 = vpop.f32.mrb[0].mxu0
      %1558 = vdwg.mxu0
      %1559 = vmatprep.subr.bf16.mxu0 0
      %1560 = vmatpush1.bf16.msra.mxu0 %v1381
      %1561 = vmatprep.subr.bf16.mxu0 0
      %1562 = vmatpush1.bf16.msra.mxu0 %v1382
      %1563 = vmatprep.subr.bf16.mxu0 0
      %1564 = vmatpush1.bf16.msra.mxu0 %v1383
      %1565 = vmatprep.subr.bf16.mxu0 0
      %1566 = vmatpush1.bf16.msra.mxu0 %v1384
      %1567 = vmatprep.subr.bf16.mxu0 0
      %1568 = vmatpush1.bf16.msra.mxu0 %v1385
      %1569 = vmatprep.subr.bf16.mxu0 0
      %1570 = vmatpush1.bf16.msra.mxu0 %v1386
      %1571 = vmatprep.subr.bf16.mxu0 0
      %1572 = vmatpush1.bf16.msra.mxu0 %v1387
      %1573 = vmatprep.subr.bf16.mxu0 0
      %1574 = vmatpush1.bf16.msra.mxu0 %v1388
      %1575 = vmatprep.subr.bf16.mxu0 0
      %1576 = vmatpush1.bf16.msra.mxu0 %v1389
      %1577 = vmatprep.subr.bf16.mxu0 0
      %1578 = vmatpush1.bf16.msra.mxu0 %v1390
      %1579 = vmatprep.subr.bf16.mxu0 0
      %1580 = vmatpush1.bf16.msra.mxu0 %v1391
      %1581 = vmatprep.subr.bf16.mxu0 0
      %1582 = vmatpush1.bf16.msra.mxu0 %v1392
      %1583 = vmatprep.subr.bf16.mxu0 0
      %1584 = vmatpush1.bf16.msra.mxu0 %v1393
      %1585 = vmatprep.subr.bf16.mxu0 0
      %1586 = vmatpush1.bf16.msra.mxu0 %v1394
      %1587 = vmatprep.subr.bf16.mxu0 0
      %1588 = vmatpush1.bf16.msra.mxu0 %v1395
      %1589 = vmatprep.subr.bf16.mxu0 0
      %1590 = vmatpush1.bf16.msra.mxu0 %v1396
      %1591 = vmatprep.mubr.bf16.mxu0 %v406
      %1592 = vmatmul.mubr.bf16.gmra.mrb[0].mxu0 %v405
      %v1593 = vpop.f32.mrb[0].mxu0
      %v1594 = vadd.f32 %v1553, %v1593
      %v1595 = vpop.f32.mrb[0].mxu0
      %v1596 = vpop.f32.mrb[0].mxu0
      %v1597 = vadd.f32 %v1556, %v1596
      %v1598 = vpop.f32.mrb[0].mxu0
      %1599 = vdwg.mxu0
      %1600 = vmatprep.subr.bf16.mxu0 0
      %1601 = vmatpush1.bf16.msra.mxu0 %v1397
      %1602 = vmatprep.subr.bf16.mxu0 0
      %1603 = vmatpush1.bf16.msra.mxu0 %v1398
      %1604 = vmatprep.subr.bf16.mxu0 0
      %1605 = vmatpush1.bf16.msra.mxu0 %v1399
      %1606 = vmatprep.subr.bf16.mxu0 0
      %1607 = vmatpush1.bf16.msra.mxu0 %v1400
      %1608 = vmatprep.subr.bf16.mxu0 0
      %1609 = vmatpush1.bf16.msra.mxu0 %v1401
      %1610 = vmatprep.subr.bf16.mxu0 0
      %1611 = vmatpush1.bf16.msra.mxu0 %v1402
      %1612 = vmatprep.subr.bf16.mxu0 0
      %1613 = vmatpush1.bf16.msra.mxu0 %v1403
      %1614 = vmatprep.subr.bf16.mxu0 0
      %1615 = vmatpush1.bf16.msra.mxu0 %v1404
      %1616 = vmatprep.subr.bf16.mxu0 0
      %1617 = vmatpush1.bf16.msra.mxu0 %v1405
      %1618 = vmatprep.subr.bf16.mxu0 0
      %1619 = vmatpush1.bf16.msra.mxu0 %v1406
      %1620 = vmatprep.subr.bf16.mxu0 0
      %1621 = vmatpush1.bf16.msra.mxu0 %v1407
      %1622 = vmatprep.subr.bf16.mxu0 0
      %1623 = vmatpush1.bf16.msra.mxu0 %v1408
      %1624 = vmatprep.subr.bf16.mxu0 0
      %1625 = vmatpush1.bf16.msra.mxu0 %v1409
      %1626 = vmatprep.subr.bf16.mxu0 0
      %1627 = vmatpush1.bf16.msra.mxu0 %v1410
      %1628 = vmatprep.subr.bf16.mxu0 0
      %1629 = vmatpush1.bf16.msra.mxu0 %v1411
      %1630 = vmatprep.subr.bf16.mxu0 0
      %1631 = vmatpush1.bf16.msra.mxu0 %v1412
      %1632 = vmatprep.mubr.bf16.mxu0 %v408
      %1633 = vmatmul.mubr.bf16.gmra.mrb[0].mxu0 %v407
      %v1634 = vpop.f32.mrb[0].mxu0
      %v1635 = vadd.f32 %v1594, %v1634
      %v1636 = vpop.f32.mrb[0].mxu0
      %v1637 = vpop.f32.mrb[0].mxu0
      %v1638 = vadd.f32 %v1597, %v1637
      %v1639 = vpop.f32.mrb[0].mxu0
      %1640 = vdwg.mxu0
      %v1641 = vmul.f32 %v959, %v959
      %v1642 = vmul.f32 %v962, %v962
      %v1643 = vmul.f32 %v1635, %v1635
      %v1644 = vmul.f32 %v1638, %v1638
      %v1645 = vadd.f32 %v1641, %v1643
      %v1646 = vadd.f32 %v1642, %v1644
      %v1647 = vrsqrt.pop %v1645
      %v1648 = vmul.f32 %v1645, %v1647
      %vm1649 = vcmp.eq.f32.partialorder %v1645, inf
      %v1650 = vsel %vm1649, %v1645, %v1648
      %vm1651 = vcmp.eq.f32.partialorder %v1645, 0.0
      %v1652 = vand.u32 %v1645, 2147483648
      %v1653 = vsel %vm1651, %v1652, %v1650
      %v1654 = vrsqrt.pop %v1646
      %v1655 = vmul.f32 %v1646, %v1654
      %vm1656 = vcmp.eq.f32.partialorder %v1646, inf
      %v1657 = vsel %vm1656, %v1646, %v1655
      %vm1658 = vcmp.eq.f32.partialorder %v1646, 0.0
      %v1659 = vand.u32 %v1646, 2147483648
      %v1660 = vsel %vm1658, %v1659, %v1657
      %v1661 = vpack.c.bf16 %v1660, %v1653
      %v1662 = vld [vmem:[%s3] sm:$0xf]
      %v1663 = vld [vmem:[%s3 + $0x4] sm:$0xf]
      %v1664 = vld [vmem:[%s3 + $0x8] sm:$0xf]
      %v1665 = vld [vmem:[%s3 + $0xc] sm:$0xf]
      %v1666 = vld [vmem:[%s3 + $0x10] sm:$0xf]
      %v1667 = vld [vmem:[%s3 + $0x14] sm:$0xf]
      %v1668 = vld [vmem:[%s3 + $0x18] sm:$0xf]
      %v1669 = vld [vmem:[%s3 + $0x1c] sm:$0xf]
      %v1670 = vld [vmem:[%s3 + $0x20] sm:$0xf]
      %v1671 = vld [vmem:[%s3 + $0x24] sm:$0xf]
      %v1672 = vld [vmem:[%s3 + $0x28] sm:$0xf]
      %v1673 = vld [vmem:[%s3 + $0x2c] sm:$0xf]
      %v1674 = vld [vmem:[%s3 + $0x30] sm:$0xf]
      %v1675 = vld [vmem:[%s3 + $0x34] sm:$0xf]
      %v1676 = vld [vmem:[%s3 + $0x38] sm:$0xf]
      %v1677 = vld [vmem:[%s3 + $0x3c] sm:$0xf]
      %v1678 = vld [vmem:[%s1 + $0x4] sm:$0xf]
      %v1679 = vld [vmem:[%s1 + $0x18] sm:$0xf]
      %v1680 = vld [vmem:[%s1 + $0x2c] sm:$0xf]
      %v1681 = vld [vmem:[%s1 + $0x40] sm:$0xf]
      %v1682 = vld [vmem:[%s1 + $0x54] sm:$0xf]
      %v1683 = vld [vmem:[%s1 + $0x68] sm:$0xf]
      %v1684 = vld [vmem:[%s1 + $0x7c] sm:$0xf]
      %v1685 = vld [vmem:[%s1 + $0x90] sm:$0xf]
      %v1686 = vld [vmem:[%s1 + $0xa4] sm:$0xf]
      %v1687 = vld [vmem:[%s1 + $0xb8] sm:$0xf]
      %v1688 = vld [vmem:[%s1 + $0xcc] sm:$0xf]
      %v1689 = vld [vmem:[%s1 + $0xe0] sm:$0xf]
      %v1690 = vld [vmem:[%s1 + $0xf4] sm:$0xf]
      %v1691 = vld [vmem:[%s1 + $0x108] sm:$0xf]
      %v1692 = vld [vmem:[%s1 + $0x11c] sm:$0xf]
      %v1693 = vld [vmem:[%s1 + $0x130] sm:$0xf]
      %v1694 = vld [vmem:[%s1 + $0x144] sm:$0xf]
      %v1695 = vld [vmem:[%s1 + $0x158] sm:$0xf]
      %v1696 = vld [vmem:[%s1 + $0x16c] sm:$0xf]
      %v1697 = vld [vmem:[%s1 + $0x180] sm:$0xf]
      %v1698 = vld [vmem:[%s1 + $0x194] sm:$0xf]
      %v1699 = vld [vmem:[%s1 + $0x1a8] sm:$0xf]
      %v1700 = vld [vmem:[%s1 + $0x1bc] sm:$0xf]
      %v1701 = vld [vmem:[%s1 + $0x1d0] sm:$0xf]
      %v1702 = vld [vmem:[%s1 + $0x1e4] sm:$0xf]
      %v1703 = vld [vmem:[%s1 + $0x1f8] sm:$0xf]
      %v1704 = vld [vmem:[%s1 + $0x20c] sm:$0xf]
      %v1705 = vld [vmem:[%s1 + $0x220] sm:$0xf]
      %v1706 = vld [vmem:[%s1 + $0x234] sm:$0xf]
      %v1707 = vld [vmem:[%s1 + $0x248] sm:$0xf]
      %v1708 = vld [vmem:[%s1 + $0x25c] sm:$0xf]
      %v1709 = vld [vmem:[%s1 + $0x270] sm:$0xf]
      %v1710 = vld [vmem:[%s1 + $0x284] sm:$0xf]
      %v1711 = vld [vmem:[%s1 + $0x298] sm:$0xf]
      %v1712 = vld [vmem:[%s1 + $0x2ac] sm:$0xf]
      %v1713 = vld [vmem:[%s1 + $0x2c0] sm:$0xf]
      %v1714 = vld [vmem:[%s1 + $0x2d4] sm:$0xf]
      %v1715 = vld [vmem:[%s1 + $0x2e8] sm:$0xf]
      %v1716 = vld [vmem:[%s1 + $0x2fc] sm:$0xf]
      %v1717 = vld [vmem:[%s1 + $0x310] sm:$0xf]
      %v1718 = vld [vmem:[%s1 + $0x324] sm:$0xf]
      %v1719 = vld [vmem:[%s1 + $0x338] sm:$0xf]
      %v1720 = vld [vmem:[%s1 + $0x34c] sm:$0xf]
      %v1721 = vld [vmem:[%s1 + $0x360] sm:$0xf]
      %v1722 = vld [vmem:[%s1 + $0x374] sm:$0xf]
      %v1723 = vld [vmem:[%s1 + $0x388] sm:$0xf]
      %v1724 = vld [vmem:[%s1 + $0x39c] sm:$0xf]
      %v1725 = vld [vmem:[%s1 + $0x3b0] sm:$0xf]
      %v1726 = vld [vmem:[%s1 + $0x3c4] sm:$0xf]
      %v1727 = vld [vmem:[%s1 + $0x3d8] sm:$0xf]
      %v1728 = vld [vmem:[%s1 + $0x3ec] sm:$0xf]
      %v1729 = vld [vmem:[%s1 + $0x400] sm:$0xf]
      %v1730 = vld [vmem:[%s1 + $0x414] sm:$0xf]
      %v1731 = vld [vmem:[%s1 + $0x428] sm:$0xf]
      %v1732 = vld [vmem:[%s1 + $0x43c] sm:$0xf]
      %v1733 = vld [vmem:[%s1 + $0x450] sm:$0xf]
      %v1734 = vld [vmem:[%s1 + $0x464] sm:$0xf]
      %v1735 = vld [vmem:[%s1 + $0x478] sm:$0xf]
      %v1736 = vld [vmem:[%s1 + $0x48c] sm:$0xf]
      %v1737 = vld [vmem:[%s1 + $0x4a0] sm:$0xf]
      %v1738 = vld [vmem:[%s1 + $0x4b4] sm:$0xf]
      %v1739 = vld [vmem:[%s1 + $0x4c8] sm:$0xf]
      %v1740 = vld [vmem:[%s1 + $0x4dc] sm:$0xf]
      %v1741 = vld [vmem:[%s1 + $0x4f0] sm:$0xf]
      %v1742 = vld [vmem:[%s1 + $0x504] sm:$0xf]
      %v1743 = vld [vmem:[%s1 + $0x518] sm:$0xf]
      %v1744 = vld [vmem:[%s1 + $0x52c] sm:$0xf]
      %v1745 = vld [vmem:[%s1 + $0x540] sm:$0xf]
      %v1746 = vld [vmem:[%s1 + $0x554] sm:$0xf]
      %v1747 = vld [vmem:[%s1 + $0x568] sm:$0xf]
      %v1748 = vld [vmem:[%s1 + $0x57c] sm:$0xf]
      %v1749 = vld [vmem:[%s1 + $0x590] sm:$0xf]
      %v1750 = vld [vmem:[%s1 + $0x5a4] sm:$0xf]
      %v1751 = vld [vmem:[%s1 + $0x5b8] sm:$0xf]
      %v1752 = vld [vmem:[%s1 + $0x5cc] sm:$0xf]
      %v1753 = vld [vmem:[%s1 + $0x5e0] sm:$0xf]
      %v1754 = vld [vmem:[%s1 + $0x5f4] sm:$0xf]
      %v1755 = vld [vmem:[%s1 + $0x608] sm:$0xf]
      %v1756 = vld [vmem:[%s1 + $0x61c] sm:$0xf]
      %v1757 = vld [vmem:[%s1 + $0x630] sm:$0xf]
      %v1758 = vld [vmem:[%s1 + $0x644] sm:$0xf]
      %v1759 = vld [vmem:[%s1 + $0x658] sm:$0xf]
      %v1760 = vld [vmem:[%s1 + $0x66c] sm:$0xf]
      %v1761 = vld [vmem:[%s1 + $0x680] sm:$0xf]
      %v1762 = vld [vmem:[%s1 + $0x694] sm:$0xf]
      %v1763 = vld [vmem:[%s1 + $0x6a8] sm:$0xf]
      %v1764 = vld [vmem:[%s1 + $0x6bc] sm:$0xf]
      %v1765 = vld [vmem:[%s1 + $0x6d0] sm:$0xf]
      %v1766 = vld [vmem:[%s1 + $0x6e4] sm:$0xf]
      %v1767 = vld [vmem:[%s1 + $0x6f8] sm:$0xf]
      %v1768 = vld [vmem:[%s1 + $0x70c] sm:$0xf]
      %v1769 = vld [vmem:[%s1 + $0x720] sm:$0xf]
      %v1770 = vld [vmem:[%s1 + $0x734] sm:$0xf]
      %v1771 = vld [vmem:[%s1 + $0x748] sm:$0xf]
      %v1772 = vld [vmem:[%s1 + $0x75c] sm:$0xf]
      %v1773 = vld [vmem:[%s1 + $0x770] sm:$0xf]
      %v1774 = vld [vmem:[%s1 + $0x784] sm:$0xf]
      %v1775 = vld [vmem:[%s1 + $0x798] sm:$0xf]
      %v1776 = vld [vmem:[%s1 + $0x7ac] sm:$0xf]
      %v1777 = vld [vmem:[%s1 + $0x7c0] sm:$0xf]
      %v1778 = vld [vmem:[%s1 + $0x7d4] sm:$0xf]
      %v1779 = vld [vmem:[%s1 + $0x7e8] sm:$0xf]
      %v1780 = vld [vmem:[%s1 + $0x7fc] sm:$0xf]
      %v1781 = vld [vmem:[%s1 + $0x810] sm:$0xf]
      %v1782 = vld [vmem:[%s1 + $0x824] sm:$0xf]
      %v1783 = vld [vmem:[%s1 + $0x838] sm:$0xf]
      %v1784 = vld [vmem:[%s1 + $0x84c] sm:$0xf]
      %v1785 = vld [vmem:[%s1 + $0x860] sm:$0xf]
      %v1786 = vld [vmem:[%s1 + $0x874] sm:$0xf]
      %v1787 = vld [vmem:[%s1 + $0x888] sm:$0xf]
      %v1788 = vld [vmem:[%s1 + $0x89c] sm:$0xf]
      %v1789 = vld [vmem:[%s1 + $0x8b0] sm:$0xf]
      %v1790 = vld [vmem:[%s1 + $0x8c4] sm:$0xf]
      %v1791 = vld [vmem:[%s1 + $0x8d8] sm:$0xf]
      %v1792 = vld [vmem:[%s1 + $0x8ec] sm:$0xf]
      %v1793 = vld [vmem:[%s1 + $0x900] sm:$0xf]
      %v1794 = vld [vmem:[%s1 + $0x914] sm:$0xf]
      %v1795 = vld [vmem:[%s1 + $0x928] sm:$0xf]
      %v1796 = vld [vmem:[%s1 + $0x93c] sm:$0xf]
      %v1797 = vld [vmem:[%s1 + $0x950] sm:$0xf]
      %v1798 = vld [vmem:[%s1 + $0x964] sm:$0xf]
      %v1799 = vld [vmem:[%s1 + $0x978] sm:$0xf]
      %v1800 = vld [vmem:[%s1 + $0x98c] sm:$0xf]
      %v1801 = vld [vmem:[%s1 + $0x9a0] sm:$0xf]
      %v1802 = vld [vmem:[%s1 + $0x9b4] sm:$0xf]
      %v1803 = vld [vmem:[%s1 + $0x9c8] sm:$0xf]
      %v1804 = vld [vmem:[%s1 + $0x9dc] sm:$0xf]
      %v1805 = vld [vmem:[%s1 + $0x9f0] sm:$0xf]
      %v1934 = vunpack.c.l.b16 %v1678
      %v1935 = vunpack.c.l.b16 %v1679
      %v1936 = vunpack.c.l.b16 %v1680
      %v1937 = vunpack.c.l.b16 %v1681
      %v1938 = vunpack.c.l.b16 %v1682
      %v1939 = vunpack.c.l.b16 %v1683
      %v1940 = vunpack.c.l.b16 %v1684
      %v1941 = vunpack.c.l.b16 %v1685
      %v1942 = vunpack.c.l.b16 %v1686
      %v1943 = vunpack.c.l.b16 %v1687
      %v1944 = vunpack.c.l.b16 %v1688
      %v1945 = vunpack.c.l.b16 %v1689
      %v1946 = vunpack.c.l.b16 %v1690
      %v1947 = vunpack.c.l.b16 %v1691
      %v1948 = vunpack.c.l.b16 %v1692
      %v1949 = vunpack.c.l.b16 %v1693
      %v1950 = vunpack.c.l.b16 %v1694
      %v1951 = vunpack.c.l.b16 %v1695
      %v1952 = vunpack.c.l.b16 %v1696
      %v1953 = vunpack.c.l.b16 %v1697
      %v1954 = vunpack.c.l.b16 %v1698
      %v1955 = vunpack.c.l.b16 %v1699
      %v1956 = vunpack.c.l.b16 %v1700
      %v1957 = vunpack.c.l.b16 %v1701
      %v1958 = vunpack.c.l.b16 %v1702
      %v1959 = vunpack.c.l.b16 %v1703
      %v1960 = vunpack.c.l.b16 %v1704
      %v1961 = vunpack.c.l.b16 %v1705
      %v1962 = vunpack.c.l.b16 %v1706
      %v1963 = vunpack.c.l.b16 %v1707
      %v1964 = vunpack.c.l.b16 %v1708
      %v1965 = vunpack.c.l.b16 %v1709
      %v1966 = vunpack.c.l.b16 %v1710
      %v1967 = vunpack.c.l.b16 %v1711
      %v1968 = vunpack.c.l.b16 %v1712
      %v1969 = vunpack.c.l.b16 %v1713
      %v1970 = vunpack.c.l.b16 %v1714
      %v1971 = vunpack.c.l.b16 %v1715
      %v1972 = vunpack.c.l.b16 %v1716
      %v1973 = vunpack.c.l.b16 %v1717
      %v1974 = vunpack.c.l.b16 %v1718
      %v1975 = vunpack.c.l.b16 %v1719
      %v1976 = vunpack.c.l.b16 %v1720
      %v1977 = vunpack.c.l.b16 %v1721
      %v1978 = vunpack.c.l.b16 %v1722
      %v1979 = vunpack.c.l.b16 %v1723
      %v1980 = vunpack.c.l.b16 %v1724
      %v1981 = vunpack.c.l.b16 %v1725
      %v1982 = vunpack.c.l.b16 %v1726
      %v1983 = vunpack.c.l.b16 %v1727
      %v1984 = vunpack.c.l.b16 %v1728
      %v1985 = vunpack.c.l.b16 %v1729
      %v1986 = vunpack.c.l.b16 %v1730
      %v1987 = vunpack.c.l.b16 %v1731
      %v1988 = vunpack.c.l.b16 %v1732
      %v1989 = vunpack.c.l.b16 %v1733
      %v1990 = vunpack.c.l.b16 %v1734
      %v1991 = vunpack.c.l.b16 %v1735
      %v1992 = vunpack.c.l.b16 %v1736
      %v1993 = vunpack.c.l.b16 %v1737
      %v1994 = vunpack.c.l.b16 %v1738
      %v1995 = vunpack.c.l.b16 %v1739
      %v1996 = vunpack.c.l.b16 %v1740
      %v1997 = vunpack.c.l.b16 %v1741
      %v1998 = vunpack.c.l.b16 %v1742
      %v1999 = vunpack.c.l.b16 %v1743
      %v2000 = vunpack.c.l.b16 %v1744
      %v2001 = vunpack.c.l.b16 %v1745
      %v2002 = vunpack.c.l.b16 %v1746
      %v2003 = vunpack.c.l.b16 %v1747
      %v2004 = vunpack.c.l.b16 %v1748
      %v2005 = vunpack.c.l.b16 %v1749
      %v2006 = vunpack.c.l.b16 %v1750
      %v2007 = vunpack.c.l.b16 %v1751
      %v2008 = vunpack.c.l.b16 %v1752
      %v2009 = vunpack.c.l.b16 %v1753
      %v2010 = vunpack.c.l.b16 %v1754
      %v2011 = vunpack.c.l.b16 %v1755
      %v2012 = vunpack.c.l.b16 %v1756
      %v2013 = vunpack.c.l.b16 %v1757
      %v2014 = vunpack.c.l.b16 %v1758
      %v2015 = vunpack.c.l.b16 %v1759
      %v2016 = vunpack.c.l.b16 %v1760
      %v2017 = vunpack.c.l.b16 %v1761
      %v2018 = vunpack.c.l.b16 %v1762
      %v2019 = vunpack.c.l.b16 %v1763
      %v2020 = vunpack.c.l.b16 %v1764
      %v2021 = vunpack.c.l.b16 %v1765
      %v2022 = vunpack.c.l.b16 %v1766
      %v2023 = vunpack.c.l.b16 %v1767
      %v2024 = vunpack.c.l.b16 %v1768
      %v2025 = vunpack.c.l.b16 %v1769
      %v2026 = vunpack.c.l.b16 %v1770
      %v2027 = vunpack.c.l.b16 %v1771
      %v2028 = vunpack.c.l.b16 %v1772
      %v2029 = vunpack.c.l.b16 %v1773
      %v2030 = vunpack.c.l.b16 %v1774
      %v2031 = vunpack.c.l.b16 %v1775
      %v2032 = vunpack.c.l.b16 %v1776
      %v2033 = vunpack.c.l.b16 %v1777
      %v2034 = vunpack.c.l.b16 %v1778
      %v2035 = vunpack.c.l.b16 %v1779
      %v2036 = vunpack.c.l.b16 %v1780
      %v2037 = vunpack.c.l.b16 %v1781
      %v2038 = vunpack.c.l.b16 %v1782
      %v2039 = vunpack.c.l.b16 %v1783
      %v2040 = vunpack.c.l.b16 %v1784
      %v2041 = vunpack.c.l.b16 %v1785
      %v2042 = vunpack.c.l.b16 %v1786
      %v2043 = vunpack.c.l.b16 %v1787
      %v2044 = vunpack.c.l.b16 %v1788
      %v2045 = vunpack.c.l.b16 %v1789
      %v2046 = vunpack.c.l.b16 %v1790
      %v2047 = vunpack.c.l.b16 %v1791
      %v2048 = vunpack.c.l.b16 %v1792
      %v2049 = vunpack.c.l.b16 %v1793
      %v2050 = vunpack.c.l.b16 %v1794
      %v2051 = vunpack.c.l.b16 %v1795
      %v2052 = vunpack.c.l.b16 %v1796
      %v2053 = vunpack.c.l.b16 %v1797
      %v2054 = vunpack.c.l.b16 %v1798
      %v2055 = vunpack.c.l.b16 %v1799
      %v2056 = vunpack.c.l.b16 %v1800
      %v2057 = vunpack.c.l.b16 %v1801
      %v2058 = vunpack.c.l.b16 %v1802
      %v2059 = vunpack.c.l.b16 %v1803
      %v2060 = vunpack.c.l.b16 %v1804
      %v2061 = vunpack.c.l.b16 %v1805
      %v2062 = vpack.c.b16 %v1935, %v1934
      %v2063 = vpack.c.b16 %v1937, %v1936
      %v2064 = vpack.c.b16 %v1939, %v1938
      %v2065 = vpack.c.b16 %v1941, %v1940
      %v2066 = vpack.c.b16 %v1943, %v1942
      %v2067 = vpack.c.b16 %v1945, %v1944
      %v2068 = vpack.c.b16 %v1947, %v1946
      %v2069 = vpack.c.b16 %v1949, %v1948
      %v2070 = vpack.c.b16 %v1951, %v1950
      %v2071 = vpack.c.b16 %v1953, %v1952
      %v2072 = vpack.c.b16 %v1955, %v1954
      %v2073 = vpack.c.b16 %v1957, %v1956
      %v2074 = vpack.c.b16 %v1959, %v1958
      %v2075 = vpack.c.b16 %v1961, %v1960
      %v2076 = vpack.c.b16 %v1963, %v1962
      %v2077 = vpack.c.b16 %v1965, %v1964
      %v2078 = vpack.c.b16 %v1967, %v1966
      %v2079 = vpack.c.b16 %v1969, %v1968
      %v2080 = vpack.c.b16 %v1971, %v1970
      %v2081 = vpack.c.b16 %v1973, %v1972
      %v2082 = vpack.c.b16 %v1975, %v1974
      %v2083 = vpack.c.b16 %v1977, %v1976
      %v2084 = vpack.c.b16 %v1979, %v1978
      %v2085 = vpack.c.b16 %v1981, %v1980
      %v2086 = vpack.c.b16 %v1983, %v1982
      %v2087 = vpack.c.b16 %v1985, %v1984
      %v2088 = vpack.c.b16 %v1987, %v1986
      %v2089 = vpack.c.b16 %v1989, %v1988
      %v2090 = vpack.c.b16 %v1991, %v1990
      %v2091 = vpack.c.b16 %v1993, %v1992
      %v2092 = vpack.c.b16 %v1995, %v1994
      %v2093 = vpack.c.b16 %v1997, %v1996
      %v2094 = vpack.c.b16 %v1999, %v1998
      %v2095 = vpack.c.b16 %v2001, %v2000
      %v2096 = vpack.c.b16 %v2003, %v2002
      %v2097 = vpack.c.b16 %v2005, %v2004
      %v2098 = vpack.c.b16 %v2007, %v2006
      %v2099 = vpack.c.b16 %v2009, %v2008
      %v2100 = vpack.c.b16 %v2011, %v2010
      %v2101 = vpack.c.b16 %v2013, %v2012
      %v2102 = vpack.c.b16 %v2015, %v2014
      %v2103 = vpack.c.b16 %v2017, %v2016
      %v2104 = vpack.c.b16 %v2019, %v2018
      %v2105 = vpack.c.b16 %v2021, %v2020
      %v2106 = vpack.c.b16 %v2023, %v2022
      %v2107 = vpack.c.b16 %v2025, %v2024
      %v2108 = vpack.c.b16 %v2027, %v2026
      %v2109 = vpack.c.b16 %v2029, %v2028
      %v2110 = vpack.c.b16 %v2031, %v2030
      %v2111 = vpack.c.b16 %v2033, %v2032
      %v2112 = vpack.c.b16 %v2035, %v2034
      %v2113 = vpack.c.b16 %v2037, %v2036
      %v2114 = vpack.c.b16 %v2039, %v2038
      %v2115 = vpack.c.b16 %v2041, %v2040
      %v2116 = vpack.c.b16 %v2043, %v2042
      %v2117 = vpack.c.b16 %v2045, %v2044
      %v2118 = vpack.c.b16 %v2047, %v2046
      %v2119 = vpack.c.b16 %v2049, %v2048
      %v2120 = vpack.c.b16 %v2051, %v2050
      %v2121 = vpack.c.b16 %v2053, %v2052
      %v2122 = vpack.c.b16 %v2055, %v2054
      %v2123 = vpack.c.b16 %v2057, %v2056
      %v2124 = vpack.c.b16 %v2059, %v2058
      %v2125 = vpack.c.b16 %v2061, %v2060
      %2190 = vmatprep.subr.bf16.mxu0 0
      %2191 = vmatpush1.bf16.msra.mxu0 %v2062
      %2192 = vmatprep.subr.bf16.mxu0 0
      %2193 = vmatpush1.bf16.msra.mxu0 %v2063
      %2194 = vmatprep.subr.bf16.mxu0 0
      %2195 = vmatpush1.bf16.msra.mxu0 %v2064
      %2196 = vmatprep.subr.bf16.mxu0 0
      %2197 = vmatpush1.bf16.msra.mxu0 %v2065
      %2198 = vmatprep.subr.bf16.mxu0 0
      %2199 = vmatpush1.bf16.msra.mxu0 %v2066
      %2200 = vmatprep.subr.bf16.mxu0 0
      %2201 = vmatpush1.bf16.msra.mxu0 %v2067
      %2202 = vmatprep.subr.bf16.mxu0 0
      %2203 = vmatpush1.bf16.msra.mxu0 %v2068
      %2204 = vmatprep.subr.bf16.mxu0 0
      %2205 = vmatpush1.bf16.msra.mxu0 %v2069
      %2206 = vmatprep.subr.bf16.mxu0 0
      %2207 = vmatpush1.bf16.msra.mxu0 %v2070
      %2208 = vmatprep.subr.bf16.mxu0 0
      %2209 = vmatpush1.bf16.msra.mxu0 %v2071
      %2210 = vmatprep.subr.bf16.mxu0 0
      %2211 = vmatpush1.bf16.msra.mxu0 %v2072
      %2212 = vmatprep.subr.bf16.mxu0 0
      %2213 = vmatpush1.bf16.msra.mxu0 %v2073
      %2214 = vmatprep.subr.bf16.mxu0 0
      %2215 = vmatpush1.bf16.msra.mxu0 %v2074
      %2216 = vmatprep.subr.bf16.mxu0 0
      %2217 = vmatpush1.bf16.msra.mxu0 %v2075
      %2218 = vmatprep.subr.bf16.mxu0 0
      %2219 = vmatpush1.bf16.msra.mxu0 %v2076
      %2220 = vmatprep.subr.bf16.mxu0 0
      %2221 = vmatpush1.bf16.msra.mxu0 %v2077
      %2222 = vmatprep.mubr.bf16.mxu0 %v402
      %2223 = vmatmul.mubr.bf16.gmra.mrb[0].mxu0 %v401
      %v2224 = vpop.f32.mrb[0].mxu0
      %v2225 = vadd.f32 0.0, %v2224
      %v2226 = vpop.f32.mrb[0].mxu0
      %v2227 = vpop.f32.mrb[0].mxu0
      %v2228 = vadd.f32 0.0, %v2227
      %v2229 = vpop.f32.mrb[0].mxu0
      %2230 = vdwg.mxu0
      %2231 = vmatprep.subr.bf16.mxu0 0
      %2232 = vmatpush1.bf16.msra.mxu0 %v2078
      %2233 = vmatprep.subr.bf16.mxu0 0
      %2234 = vmatpush1.bf16.msra.mxu0 %v2079
      %2235 = vmatprep.subr.bf16.mxu0 0
      %2236 = vmatpush1.bf16.msra.mxu0 %v2080
      %2237 = vmatprep.subr.bf16.mxu0 0
      %2238 = vmatpush1.bf16.msra.mxu0 %v2081
      %2239 = vmatprep.subr.bf16.mxu0 0
      %2240 = vmatpush1.bf16.msra.mxu0 %v2082
      %2241 = vmatprep.subr.bf16.mxu0 0
      %2242 = vmatpush1.bf16.msra.mxu0 %v2083
      %2243 = vmatprep.subr.bf16.mxu0 0
      %2244 = vmatpush1.bf16.msra.mxu0 %v2084
      %2245 = vmatprep.subr.bf16.mxu0 0
      %2246 = vmatpush1.bf16.msra.mxu0 %v2085
      %2247 = vmatprep.subr.bf16.mxu0 0
      %2248 = vmatpush1.bf16.msra.mxu0 %v2086
      %2249 = vmatprep.subr.bf16.mxu0 0
      %2250 = vmatpush1.bf16.msra.mxu0 %v2087
      %2251 = vmatprep.subr.bf16.mxu0 0
      %2252 = vmatpush1.bf16.msra.mxu0 %v2088
      %2253 = vmatprep.subr.bf16.mxu0 0
      %2254 = vmatpush1.bf16.msra.mxu0 %v2089
      %2255 = vmatprep.subr.bf16.mxu0 0
      %2256 = vmatpush1.bf16.msra.mxu0 %v2090
      %2257 = vmatprep.subr.bf16.mxu0 0
      %2258 = vmatpush1.bf16.msra.mxu0 %v2091
      %2259 = vmatprep.subr.bf16.mxu0 0
      %2260 = vmatpush1.bf16.msra.mxu0 %v2092
      %2261 = vmatprep.subr.bf16.mxu0 0
      %2262 = vmatpush1.bf16.msra.mxu0 %v2093
      %2263 = vmatprep.mubr.bf16.mxu0 %v404
      %2264 = vmatmul.mubr.bf16.gmra.mrb[0].mxu0 %v403
      %v2265 = vpop.f32.mrb[0].mxu0
      %v2266 = vadd.f32 %v2225, %v2265
      %v2267 = vpop.f32.mrb[0].mxu0
      %v2268 = vpop.f32.mrb[0].mxu0
      %v2269 = vadd.f32 %v2228, %v2268
      %v2270 = vpop.f32.mrb[0].mxu0
      %2271 = vdwg.mxu0
      %2272 = vmatprep.subr.bf16.mxu0 0
      %2273 = vmatpush1.bf16.msra.mxu0 %v2094
      %2274 = vmatprep.subr.bf16.mxu0 0
      %2275 = vmatpush1.bf16.msra.mxu0 %v2095
      %2276 = vmatprep.subr.bf16.mxu0 0
      %2277 = vmatpush1.bf16.msra.mxu0 %v2096
      %2278 = vmatprep.subr.bf16.mxu0 0
      %2279 = vmatpush1.bf16.msra.mxu0 %v2097
      %2280 = vmatprep.subr.bf16.mxu0 0
      %2281 = vmatpush1.bf16.msra.mxu0 %v2098
      %2282 = vmatprep.subr.bf16.mxu0 0
      %2283 = vmatpush1.bf16.msra.mxu0 %v2099
      %2284 = vmatprep.subr.bf16.mxu0 0
      %2285 = vmatpush1.bf16.msra.mxu0 %v2100
      %2286 = vmatprep.subr.bf16.mxu0 0
      %2287 = vmatpush1.bf16.msra.mxu0 %v2101
      %2288 = vmatprep.subr.bf16.mxu0 0
      %2289 = vmatpush1.bf16.msra.mxu0 %v2102
      %2290 = vmatprep.subr.bf16.mxu0 0
      %2291 = vmatpush1.bf16.msra.mxu0 %v2103
      %2292 = vmatprep.subr.bf16.mxu0 0
      %2293 = vmatpush1.bf16.msra.mxu0 %v2104
      %2294 = vmatprep.subr.bf16.mxu0 0
      %2295 = vmatpush1.bf16.msra.mxu0 %v2105
      %2296 = vmatprep.subr.bf16.mxu0 0
      %2297 = vmatpush1.bf16.msra.mxu0 %v2106
      %2298 = vmatprep.subr.bf16.mxu0 0
      %2299 = vmatpush1.bf16.msra.mxu0 %v2107
      %2300 = vmatprep.subr.bf16.mxu0 0
      %2301 = vmatpush1.bf16.msra.mxu0 %v2108
      %2302 = vmatprep.subr.bf16.mxu0 0
      %2303 = vmatpush1.bf16.msra.mxu0 %v2109
      %2304 = vmatprep.mubr.bf16.mxu0 %v406
      %2305 = vmatmul.mubr.bf16.gmra.mrb[0].mxu0 %v405
      %v2306 = vpop.f32.mrb[0].mxu0
      %v2307 = vadd.f32 %v2266, %v2306
      %v2308 = vpop.f32.mrb[0].mxu0
      %v2309 = vpop.f32.mrb[0].mxu0
      %v2310 = vadd.f32 %v2269, %v2309
      %v2311 = vpop.f32.mrb[0].mxu0
      %2312 = vdwg.mxu0
      %2313 = vmatprep.subr.bf16.mxu0 0
      %2314 = vmatpush1.bf16.msra.mxu0 %v2110
      %2315 = vmatprep.subr.bf16.mxu0 0
      %2316 = vmatpush1.bf16.msra.mxu0 %v2111
      %2317 = vmatprep.subr.bf16.mxu0 0
      %2318 = vmatpush1.bf16.msra.mxu0 %v2112
      %2319 = vmatprep.subr.bf16.mxu0 0
      %2320 = vmatpush1.bf16.msra.mxu0 %v2113
      %2321 = vmatprep.subr.bf16.mxu0 0
      %2322 = vmatpush1.bf16.msra.mxu0 %v2114
      %2323 = vmatprep.subr.bf16.mxu0 0
      %2324 = vmatpush1.bf16.msra.mxu0 %v2115
      %2325 = vmatprep.subr.bf16.mxu0 0
      %2326 = vmatpush1.bf16.msra.mxu0 %v2116
      %2327 = vmatprep.subr.bf16.mxu0 0
      %2328 = vmatpush1.bf16.msra.mxu0 %v2117
      %2329 = vmatprep.subr.bf16.mxu0 0
      %2330 = vmatpush1.bf16.msra.mxu0 %v2118
      %2331 = vmatprep.subr.bf16.mxu0 0
      %2332 = vmatpush1.bf16.msra.mxu0 %v2119
      %2333 = vmatprep.subr.bf16.mxu0 0
      %2334 = vmatpush1.bf16.msra.mxu0 %v2120
      %2335 = vmatprep.subr.bf16.mxu0 0
      %2336 = vmatpush1.bf16.msra.mxu0 %v2121
      %2337 = vmatprep.subr.bf16.mxu0 0
      %2338 = vmatpush1.bf16.msra.mxu0 %v2122
      %2339 = vmatprep.subr.bf16.mxu0 0
      %2340 = vmatpush1.bf16.msra.mxu0 %v2123
      %2341 = vmatprep.subr.bf16.mxu0 0
      %2342 = vmatpush1.bf16.msra.mxu0 %v2124
      %2343 = vmatprep.subr.bf16.mxu0 0
      %2344 = vmatpush1.bf16.msra.mxu0 %v2125
      %2345 = vmatprep.mubr.bf16.mxu0 %v408
      %2346 = vmatmul.mubr.bf16.gmra.mrb[0].mxu0 %v407
      %v2347 = vpop.f32.mrb[0].mxu0
      %v2348 = vadd.f32 %v2307, %v2347
      %v2349 = vpop.f32.mrb[0].mxu0
      %v2350 = vpop.f32.mrb[0].mxu0
      %v2351 = vadd.f32 %v2310, %v2350
      %v2352 = vpop.f32.mrb[0].mxu0
      %2353 = vdwg.mxu0
      %v2354 = vld [vmem:[%s2 + $0x4] sm:$0xf]
      %v2355 = vld [vmem:[%s2 + $0x18] sm:$0xf]
      %v2356 = vld [vmem:[%s2 + $0x2c] sm:$0xf]
      %v2357 = vld [vmem:[%s2 + $0x40] sm:$0xf]
      %v2358 = vld [vmem:[%s2 + $0x54] sm:$0xf]
      %v2359 = vld [vmem:[%s2 + $0x68] sm:$0xf]
      %v2360 = vld [vmem:[%s2 + $0x7c] sm:$0xf]
      %v2361 = vld [vmem:[%s2 + $0x90] sm:$0xf]
      %v2362 = vld [vmem:[%s2 + $0xa4] sm:$0xf]
      %v2363 = vld [vmem:[%s2 + $0xb8] sm:$0xf]
      %v2364 = vld [vmem:[%s2 + $0xcc] sm:$0xf]
      %v2365 = vld [vmem:[%s2 + $0xe0] sm:$0xf]
      %v2366 = vld [vmem:[%s2 + $0xf4] sm:$0xf]
      %v2367 = vld [vmem:[%s2 + $0x108] sm:$0xf]
      %v2368 = vld [vmem:[%s2 + $0x11c] sm:$0xf]
      %v2369 = vld [vmem:[%s2 + $0x130] sm:$0xf]
      %v2370 = vld [vmem:[%s2 + $0x144] sm:$0xf]
      %v2371 = vld [vmem:[%s2 + $0x158] sm:$0xf]
      %v2372 = vld [vmem:[%s2 + $0x16c] sm:$0xf]
      %v2373 = vld [vmem:[%s2 + $0x180] sm:$0xf]
      %v2374 = vld [vmem:[%s2 + $0x194] sm:$0xf]
      %v2375 = vld [vmem:[%s2 + $0x1a8] sm:$0xf]
      %v2376 = vld [vmem:[%s2 + $0x1bc] sm:$0xf]
      %v2377 = vld [vmem:[%s2 + $0x1d0] sm:$0xf]
      %v2378 = vld [vmem:[%s2 + $0x1e4] sm:$0xf]
      %v2379 = vld [vmem:[%s2 + $0x1f8] sm:$0xf]
      %v2380 = vld [vmem:[%s2 + $0x20c] sm:$0xf]
      %v2381 = vld [vmem:[%s2 + $0x220] sm:$0xf]
      %v2382 = vld [vmem:[%s2 + $0x234] sm:$0xf]
      %v2383 = vld [vmem:[%s2 + $0x248] sm:$0xf]
      %v2384 = vld [vmem:[%s2 + $0x25c] sm:$0xf]
      %v2385 = vld [vmem:[%s2 + $0x270] sm:$0xf]
      %v2386 = vld [vmem:[%s2 + $0x284] sm:$0xf]
      %v2387 = vld [vmem:[%s2 + $0x298] sm:$0xf]
      %v2388 = vld [vmem:[%s2 + $0x2ac] sm:$0xf]
      %v2389 = vld [vmem:[%s2 + $0x2c0] sm:$0xf]
      %v2390 = vld [vmem:[%s2 + $0x2d4] sm:$0xf]
      %v2391 = vld [vmem:[%s2 + $0x2e8] sm:$0xf]
      %v2392 = vld [vmem:[%s2 + $0x2fc] sm:$0xf]
      %v2393 = vld [vmem:[%s2 + $0x310] sm:$0xf]
      %v2394 = vld [vmem:[%s2 + $0x324] sm:$0xf]
      %v2395 = vld [vmem:[%s2 + $0x338] sm:$0xf]
      %v2396 = vld [vmem:[%s2 + $0x34c] sm:$0xf]
      %v2397 = vld [vmem:[%s2 + $0x360] sm:$0xf]
      %v2398 = vld [vmem:[%s2 + $0x374] sm:$0xf]
      %v2399 = vld [vmem:[%s2 + $0x388] sm:$0xf]
      %v2400 = vld [vmem:[%s2 + $0x39c] sm:$0xf]
      %v2401 = vld [vmem:[%s2 + $0x3b0] sm:$0xf]
      %v2402 = vld [vmem:[%s2 + $0x3c4] sm:$0xf]
      %v2403 = vld [vmem:[%s2 + $0x3d8] sm:$0xf]
      %v2404 = vld [vmem:[%s2 + $0x3ec] sm:$0xf]
      %v2405 = vld [vmem:[%s2 + $0x400] sm:$0xf]
      %v2406 = vld [vmem:[%s2 + $0x414] sm:$0xf]
      %v2407 = vld [vmem:[%s2 + $0x428] sm:$0xf]
      %v2408 = vld [vmem:[%s2 + $0x43c] sm:$0xf]
      %v2409 = vld [vmem:[%s2 + $0x450] sm:$0xf]
      %v2410 = vld [vmem:[%s2 + $0x464] sm:$0xf]
      %v2411 = vld [vmem:[%s2 + $0x478] sm:$0xf]
      %v2412 = vld [vmem:[%s2 + $0x48c] sm:$0xf]
      %v2413 = vld [vmem:[%s2 + $0x4a0] sm:$0xf]
      %v2414 = vld [vmem:[%s2 + $0x4b4] sm:$0xf]
      %v2415 = vld [vmem:[%s2 + $0x4c8] sm:$0xf]
      %v2416 = vld [vmem:[%s2 + $0x4dc] sm:$0xf]
      %v2417 = vld [vmem:[%s2 + $0x4f0] sm:$0xf]
      %v2418 = vld [vmem:[%s2 + $0x504] sm:$0xf]
      %v2419 = vld [vmem:[%s2 + $0x518] sm:$0xf]
      %v2420 = vld [vmem:[%s2 + $0x52c] sm:$0xf]
      %v2421 = vld [vmem:[%s2 + $0x540] sm:$0xf]
      %v2422 = vld [vmem:[%s2 + $0x554] sm:$0xf]
      %v2423 = vld [vmem:[%s2 + $0x568] sm:$0xf]
      %v2424 = vld [vmem:[%s2 + $0x57c] sm:$0xf]
      %v2425 = vld [vmem:[%s2 + $0x590] sm:$0xf]
      %v2426 = vld [vmem:[%s2 + $0x5a4] sm:$0xf]
      %v2427 = vld [vmem:[%s2 + $0x5b8] sm:$0xf]
      %v2428 = vld [vmem:[%s2 + $0x5cc] sm:$0xf]
      %v2429 = vld [vmem:[%s2 + $0x5e0] sm:$0xf]
      %v2430 = vld [vmem:[%s2 + $0x5f4] sm:$0xf]
      %v2431 = vld [vmem:[%s2 + $0x608] sm:$0xf]
      %v2432 = vld [vmem:[%s2 + $0x61c] sm:$0xf]
      %v2433 = vld [vmem:[%s2 + $0x630] sm:$0xf]
      %v2434 = vld [vmem:[%s2 + $0x644] sm:$0xf]
      %v2435 = vld [vmem:[%s2 + $0x658] sm:$0xf]
      %v2436 = vld [vmem:[%s2 + $0x66c] sm:$0xf]
      %v2437 = vld [vmem:[%s2 + $0x680] sm:$0xf]
      %v2438 = vld [vmem:[%s2 + $0x694] sm:$0xf]
      %v2439 = vld [vmem:[%s2 + $0x6a8] sm:$0xf]
      %v2440 = vld [vmem:[%s2 + $0x6bc] sm:$0xf]
      %v2441 = vld [vmem:[%s2 + $0x6d0] sm:$0xf]
      %v2442 = vld [vmem:[%s2 + $0x6e4] sm:$0xf]
      %v2443 = vld [vmem:[%s2 + $0x6f8] sm:$0xf]
      %v2444 = vld [vmem:[%s2 + $0x70c] sm:$0xf]
      %v2445 = vld [vmem:[%s2 + $0x720] sm:$0xf]
      %v2446 = vld [vmem:[%s2 + $0x734] sm:$0xf]
      %v2447 = vld [vmem:[%s2 + $0x748] sm:$0xf]
      %v2448 = vld [vmem:[%s2 + $0x75c] sm:$0xf]
      %v2449 = vld [vmem:[%s2 + $0x770] sm:$0xf]
      %v2450 = vld [vmem:[%s2 + $0x784] sm:$0xf]
      %v2451 = vld [vmem:[%s2 + $0x798] sm:$0xf]
      %v2452 = vld [vmem:[%s2 + $0x7ac] sm:$0xf]
      %v2453 = vld [vmem:[%s2 + $0x7c0] sm:$0xf]
      %v2454 = vld [vmem:[%s2 + $0x7d4] sm:$0xf]
      %v2455 = vld [vmem:[%s2 + $0x7e8] sm:$0xf]
      %v2456 = vld [vmem:[%s2 + $0x7fc] sm:$0xf]
      %v2457 = vld [vmem:[%s2 + $0x810] sm:$0xf]
      %v2458 = vld [vmem:[%s2 + $0x824] sm:$0xf]
      %v2459 = vld [vmem:[%s2 + $0x838] sm:$0xf]
      %v2460 = vld [vmem:[%s2 + $0x84c] sm:$0xf]
      %v2461 = vld [vmem:[%s2 + $0x860] sm:$0xf]
      %v2462 = vld [vmem:[%s2 + $0x874] sm:$0xf]
      %v2463 = vld [vmem:[%s2 + $0x888] sm:$0xf]
      %v2464 = vld [vmem:[%s2 + $0x89c] sm:$0xf]
      %v2465 = vld [vmem:[%s2 + $0x8b0] sm:$0xf]
      %v2466 = vld [vmem:[%s2 + $0x8c4] sm:$0xf]
      %v2467 = vld [vmem:[%s2 + $0x8d8] sm:$0xf]
      %v2468 = vld [vmem:[%s2 + $0x8ec] sm:$0xf]
      %v2469 = vld [vmem:[%s2 + $0x900] sm:$0xf]
      %v2470 = vld [vmem:[%s2 + $0x914] sm:$0xf]
      %v2471 = vld [vmem:[%s2 + $0x928] sm:$0xf]
      %v2472 = vld [vmem:[%s2 + $0x93c] sm:$0xf]
      %v2473 = vld [vmem:[%s2 + $0x950] sm:$0xf]
      %v2474 = vld [vmem:[%s2 + $0x964] sm:$0xf]
      %v2475 = vld [vmem:[%s2 + $0x978] sm:$0xf]
      %v2476 = vld [vmem:[%s2 + $0x98c] sm:$0xf]
      %v2477 = vld [vmem:[%s2 + $0x9a0] sm:$0xf]
      %v2478 = vld [vmem:[%s2 + $0x9b4] sm:$0xf]
      %v2479 = vld [vmem:[%s2 + $0x9c8] sm:$0xf]
      %v2480 = vld [vmem:[%s2 + $0x9dc] sm:$0xf]
      %v2481 = vld [vmem:[%s2 + $0x9f0] sm:$0xf]
      %v2610 = vunpack.c.l.b16 %v2354
      %v2611 = vunpack.c.l.b16 %v2355
      %v2612 = vunpack.c.l.b16 %v2356
      %v2613 = vunpack.c.l.b16 %v2357
      %v2614 = vunpack.c.l.b16 %v2358
      %v2615 = vunpack.c.l.b16 %v2359
      %v2616 = vunpack.c.l.b16 %v2360
      %v2617 = vunpack.c.l.b16 %v2361
      %v2618 = vunpack.c.l.b16 %v2362
      %v2619 = vunpack.c.l.b16 %v2363
      %v2620 = vunpack.c.l.b16 %v2364
      %v2621 = vunpack.c.l.b16 %v2365
      %v2622 = vunpack.c.l.b16 %v2366
      %v2623 = vunpack.c.l.b16 %v2367
      %v2624 = vunpack.c.l.b16 %v2368
      %v2625 = vunpack.c.l.b16 %v2369
      %v2626 = vunpack.c.l.b16 %v2370
      %v2627 = vunpack.c.l.b16 %v2371
      %v2628 = vunpack.c.l.b16 %v2372
      %v2629 = vunpack.c.l.b16 %v2373
      %v2630 = vunpack.c.l.b16 %v2374
      %v2631 = vunpack.c.l.b16 %v2375
      %v2632 = vunpack.c.l.b16 %v2376
      %v2633 = vunpack.c.l.b16 %v2377
      %v2634 = vunpack.c.l.b16 %v2378
      %v2635 = vunpack.c.l.b16 %v2379
      %v2636 = vunpack.c.l.b16 %v2380
      %v2637 = vunpack.c.l.b16 %v2381
      %v2638 = vunpack.c.l.b16 %v2382
      %v2639 = vunpack.c.l.b16 %v2383
      %v2640 = vunpack.c.l.b16 %v2384
      %v2641 = vunpack.c.l.b16 %v2385
      %v2642 = vunpack.c.l.b16 %v2386
      %v2643 = vunpack.c.l.b16 %v2387
      %v2644 = vunpack.c.l.b16 %v2388
      %v2645 = vunpack.c.l.b16 %v2389
      %v2646 = vunpack.c.l.b16 %v2390
      %v2647 = vunpack.c.l.b16 %v2391
      %v2648 = vunpack.c.l.b16 %v2392
      %v2649 = vunpack.c.l.b16 %v2393
      %v2650 = vunpack.c.l.b16 %v2394
      %v2651 = vunpack.c.l.b16 %v2395
      %v2652 = vunpack.c.l.b16 %v2396
      %v2653 = vunpack.c.l.b16 %v2397
      %v2654 = vunpack.c.l.b16 %v2398
      %v2655 = vunpack.c.l.b16 %v2399
      %v2656 = vunpack.c.l.b16 %v2400
      %v2657 = vunpack.c.l.b16 %v2401
      %v2658 = vunpack.c.l.b16 %v2402
      %v2659 = vunpack.c.l.b16 %v2403
      %v2660 = vunpack.c.l.b16 %v2404
      %v2661 = vunpack.c.l.b16 %v2405
      %v2662 = vunpack.c.l.b16 %v2406
      %v2663 = vunpack.c.l.b16 %v2407
      %v2664 = vunpack.c.l.b16 %v2408
      %v2665 = vunpack.c.l.b16 %v2409
      %v2666 = vunpack.c.l.b16 %v2410
      %v2667 = vunpack.c.l.b16 %v2411
      %v2668 = vunpack.c.l.b16 %v2412
      %v2669 = vunpack.c.l.b16 %v2413
      %v2670 = vunpack.c.l.b16 %v2414
      %v2671 = vunpack.c.l.b16 %v2415
      %v2672 = vunpack.c.l.b16 %v2416
      %v2673 = vunpack.c.l.b16 %v2417
      %v2674 = vunpack.c.l.b16 %v2418
      %v2675 = vunpack.c.l.b16 %v2419
      %v2676 = vunpack.c.l.b16 %v2420
      %v2677 = vunpack.c.l.b16 %v2421
      %v2678 = vunpack.c.l.b16 %v2422
      %v2679 = vunpack.c.l.b16 %v2423
      %v2680 = vunpack.c.l.b16 %v2424
      %v2681 = vunpack.c.l.b16 %v2425
      %v2682 = vunpack.c.l.b16 %v2426
      %v2683 = vunpack.c.l.b16 %v2427
      %v2684 = vunpack.c.l.b16 %v2428
      %v2685 = vunpack.c.l.b16 %v2429
      %v2686 = vunpack.c.l.b16 %v2430
      %v2687 = vunpack.c.l.b16 %v2431
      %v2688 = vunpack.c.l.b16 %v2432
      %v2689 = vunpack.c.l.b16 %v2433
      %v2690 = vunpack.c.l.b16 %v2434
      %v2691 = vunpack.c.l.b16 %v2435
      %v2692 = vunpack.c.l.b16 %v2436
      %v2693 = vunpack.c.l.b16 %v2437
      %v2694 = vunpack.c.l.b16 %v2438
      %v2695 = vunpack.c.l.b16 %v2439
      %v2696 = vunpack.c.l.b16 %v2440
      %v2697 = vunpack.c.l.b16 %v2441
      %v2698 = vunpack.c.l.b16 %v2442
      %v2699 = vunpack.c.l.b16 %v2443
      %v2700 = vunpack.c.l.b16 %v2444
      %v2701 = vunpack.c.l.b16 %v2445
      %v2702 = vunpack.c.l.b16 %v2446
      %v2703 = vunpack.c.l.b16 %v2447
      %v2704 = vunpack.c.l.b16 %v2448
      %v2705 = vunpack.c.l.b16 %v2449
      %v2706 = vunpack.c.l.b16 %v2450
      %v2707 = vunpack.c.l.b16 %v2451
      %v2708 = vunpack.c.l.b16 %v2452
      %v2709 = vunpack.c.l.b16 %v2453
      %v2710 = vunpack.c.l.b16 %v2454
      %v2711 = vunpack.c.l.b16 %v2455
      %v2712 = vunpack.c.l.b16 %v2456
      %v2713 = vunpack.c.l.b16 %v2457
      %v2714 = vunpack.c.l.b16 %v2458
      %v2715 = vunpack.c.l.b16 %v2459
      %v2716 = vunpack.c.l.b16 %v2460
      %v2717 = vunpack.c.l.b16 %v2461
      %v2718 = vunpack.c.l.b16 %v2462
      %v2719 = vunpack.c.l.b16 %v2463
      %v2720 = vunpack.c.l.b16 %v2464
      %v2721 = vunpack.c.l.b16 %v2465
      %v2722 = vunpack.c.l.b16 %v2466
      %v2723 = vunpack.c.l.b16 %v2467
      %v2724 = vunpack.c.l.b16 %v2468
      %v2725 = vunpack.c.l.b16 %v2469
      %v2726 = vunpack.c.l.b16 %v2470
      %v2727 = vunpack.c.l.b16 %v2471
      %v2728 = vunpack.c.l.b16 %v2472
      %v2729 = vunpack.c.l.b16 %v2473
      %v2730 = vunpack.c.l.b16 %v2474
      %v2731 = vunpack.c.l.b16 %v2475
      %v2732 = vunpack.c.l.b16 %v2476
      %v2733 = vunpack.c.l.b16 %v2477
      %v2734 = vunpack.c.l.b16 %v2478
      %v2735 = vunpack.c.l.b16 %v2479
      %v2736 = vunpack.c.l.b16 %v2480
      %v2737 = vunpack.c.l.b16 %v2481
      %v2738 = vpack.c.b16 %v2611, %v2610
      %v2739 = vpack.c.b16 %v2613, %v2612
      %v2740 = vpack.c.b16 %v2615, %v2614
      %v2741 = vpack.c.b16 %v2617, %v2616
      %v2742 = vpack.c.b16 %v2619, %v2618
      %v2743 = vpack.c.b16 %v2621, %v2620
      %v2744 = vpack.c.b16 %v2623, %v2622
      %v2745 = vpack.c.b16 %v2625, %v2624
      %v2746 = vpack.c.b16 %v2627, %v2626
      %v2747 = vpack.c.b16 %v2629, %v2628
      %v2748 = vpack.c.b16 %v2631, %v2630
      %v2749 = vpack.c.b16 %v2633, %v2632
      %v2750 = vpack.c.b16 %v2635, %v2634
      %v2751 = vpack.c.b16 %v2637, %v2636
      %v2752 = vpack.c.b16 %v2639, %v2638
      %v2753 = vpack.c.b16 %v2641, %v2640
      %v2754 = vpack.c.b16 %v2643, %v2642
      %v2755 = vpack.c.b16 %v2645, %v2644
      %v2756 = vpack.c.b16 %v2647, %v2646
      %v2757 = vpack.c.b16 %v2649, %v2648
      %v2758 = vpack.c.b16 %v2651, %v2650
      %v2759 = vpack.c.b16 %v2653, %v2652
      %v2760 = vpack.c.b16 %v2655, %v2654
      %v2761 = vpack.c.b16 %v2657, %v2656
      %v2762 = vpack.c.b16 %v2659, %v2658
      %v2763 = vpack.c.b16 %v2661, %v2660
      %v2764 = vpack.c.b16 %v2663, %v2662
      %v2765 = vpack.c.b16 %v2665, %v2664
      %v2766 = vpack.c.b16 %v2667, %v2666
      %v2767 = vpack.c.b16 %v2669, %v2668
      %v2768 = vpack.c.b16 %v2671, %v2670
      %v2769 = vpack.c.b16 %v2673, %v2672
      %v2770 = vpack.c.b16 %v2675, %v2674
      %v2771 = vpack.c.b16 %v2677, %v2676
      %v2772 = vpack.c.b16 %v2679, %v2678
      %v2773 = vpack.c.b16 %v2681, %v2680
      %v2774 = vpack.c.b16 %v2683, %v2682
      %v2775 = vpack.c.b16 %v2685, %v2684
      %v2776 = vpack.c.b16 %v2687, %v2686
      %v2777 = vpack.c.b16 %v2689, %v2688
      %v2778 = vpack.c.b16 %v2691, %v2690
      %v2779 = vpack.c.b16 %v2693, %v2692
      %v2780 = vpack.c.b16 %v2695, %v2694
      %v2781 = vpack.c.b16 %v2697, %v2696
      %v2782 = vpack.c.b16 %v2699, %v2698
      %v2783 = vpack.c.b16 %v2701, %v2700
      %v2784 = vpack.c.b16 %v2703, %v2702
      %v2785 = vpack.c.b16 %v2705, %v2704
      %v2786 = vpack.c.b16 %v2707, %v2706
      %v2787 = vpack.c.b16 %v2709, %v2708
      %v2788 = vpack.c.b16 %v2711, %v2710
      %v2789 = vpack.c.b16 %v2713, %v2712
      %v2790 = vpack.c.b16 %v2715, %v2714
      %v2791 = vpack.c.b16 %v2717, %v2716
      %v2792 = vpack.c.b16 %v2719, %v2718
      %v2793 = vpack.c.b16 %v2721, %v2720
      %v2794 = vpack.c.b16 %v2723, %v2722
      %v2795 = vpack.c.b16 %v2725, %v2724
      %v2796 = vpack.c.b16 %v2727, %v2726
      %v2797 = vpack.c.b16 %v2729, %v2728
      %v2798 = vpack.c.b16 %v2731, %v2730
      %v2799 = vpack.c.b16 %v2733, %v2732
      %v2800 = vpack.c.b16 %v2735, %v2734
      %v2801 = vpack.c.b16 %v2737, %v2736
      %2866 = vmatprep.subr.bf16.mxu0 0
      %2867 = vmatpush1.bf16.msra.mxu0 %v2738
      %2868 = vmatprep.subr.bf16.mxu0 0
      %2869 = vmatpush1.bf16.msra.mxu0 %v2739
      %2870 = vmatprep.subr.bf16.mxu0 0
      %2871 = vmatpush1.bf16.msra.mxu0 %v2740
      %2872 = vmatprep.subr.bf16.mxu0 0
      %2873 = vmatpush1.bf16.msra.mxu0 %v2741
      %2874 = vmatprep.subr.bf16.mxu0 0
      %2875 = vmatpush1.bf16.msra.mxu0 %v2742
      %2876 = vmatprep.subr.bf16.mxu0 0
      %2877 = vmatpush1.bf16.msra.mxu0 %v2743
      %2878 = vmatprep.subr.bf16.mxu0 0
      %2879 = vmatpush1.bf16.msra.mxu0 %v2744
      %2880 = vmatprep.subr.bf16.mxu0 0
      %2881 = vmatpush1.bf16.msra.mxu0 %v2745
      %2882 = vmatprep.subr.bf16.mxu0 0
      %2883 = vmatpush1.bf16.msra.mxu0 %v2746
      %2884 = vmatprep.subr.bf16.mxu0 0
      %2885 = vmatpush1.bf16.msra.mxu0 %v2747
      %2886 = vmatprep.subr.bf16.mxu0 0
      %2887 = vmatpush1.bf16.msra.mxu0 %v2748
      %2888 = vmatprep.subr.bf16.mxu0 0
      %2889 = vmatpush1.bf16.msra.mxu0 %v2749
      %2890 = vmatprep.subr.bf16.mxu0 0
      %2891 = vmatpush1.bf16.msra.mxu0 %v2750
      %2892 = vmatprep.subr.bf16.mxu0 0
      %2893 = vmatpush1.bf16.msra.mxu0 %v2751
      %2894 = vmatprep.subr.bf16.mxu0 0
      %2895 = vmatpush1.bf16.msra.mxu0 %v2752
      %2896 = vmatprep.subr.bf16.mxu0 0
      %2897 = vmatpush1.bf16.msra.mxu0 %v2753
      %2898 = vmatprep.mubr.bf16.mxu0 %v402
      %2899 = vmatmul.mubr.bf16.gmra.mrb[0].mxu0 %v401
      %v2900 = vpop.f32.mrb[0].mxu0
      %v2901 = vadd.f32 0.0, %v2900
      %v2902 = vpop.f32.mrb[0].mxu0
      %v2903 = vpop.f32.mrb[0].mxu0
      %v2904 = vadd.f32 0.0, %v2903
      %v2905 = vpop.f32.mrb[0].mxu0
      %2906 = vdwg.mxu0
      %2907 = vmatprep.subr.bf16.mxu0 0
      %2908 = vmatpush1.bf16.msra.mxu0 %v2754
      %2909 = vmatprep.subr.bf16.mxu0 0
      %2910 = vmatpush1.bf16.msra.mxu0 %v2755
      %2911 = vmatprep.subr.bf16.mxu0 0
      %2912 = vmatpush1.bf16.msra.mxu0 %v2756
      %2913 = vmatprep.subr.bf16.mxu0 0
      %2914 = vmatpush1.bf16.msra.mxu0 %v2757
      %2915 = vmatprep.subr.bf16.mxu0 0
      %2916 = vmatpush1.bf16.msra.mxu0 %v2758
      %2917 = vmatprep.subr.bf16.mxu0 0
      %2918 = vmatpush1.bf16.msra.mxu0 %v2759
      %2919 = vmatprep.subr.bf16.mxu0 0
      %2920 = vmatpush1.bf16.msra.mxu0 %v2760
      %2921 = vmatprep.subr.bf16.mxu0 0
      %2922 = vmatpush1.bf16.msra.mxu0 %v2761
      %2923 = vmatprep.subr.bf16.mxu0 0
      %2924 = vmatpush1.bf16.msra.mxu0 %v2762
      %2925 = vmatprep.subr.bf16.mxu0 0
      %2926 = vmatpush1.bf16.msra.mxu0 %v2763
      %2927 = vmatprep.subr.bf16.mxu0 0
      %2928 = vmatpush1.bf16.msra.mxu0 %v2764
      %2929 = vmatprep.subr.bf16.mxu0 0
      %2930 = vmatpush1.bf16.msra.mxu0 %v2765
      %2931 = vmatprep.subr.bf16.mxu0 0
      %2932 = vmatpush1.bf16.msra.mxu0 %v2766
      %2933 = vmatprep.subr.bf16.mxu0 0
      %2934 = vmatpush1.bf16.msra.mxu0 %v2767
      %2935 = vmatprep.subr.bf16.mxu0 0
      %2936 = vmatpush1.bf16.msra.mxu0 %v2768
      %2937 = vmatprep.subr.bf16.mxu0 0
      %2938 = vmatpush1.bf16.msra.mxu0 %v2769
      %2939 = vmatprep.mubr.bf16.mxu0 %v404
      %2940 = vmatmul.mubr.bf16.gmra.mrb[0].mxu0 %v403
      %v2941 = vpop.f32.mrb[0].mxu0
      %v2942 = vadd.f32 %v2901, %v2941
      %v2943 = vpop.f32.mrb[0].mxu0
      %v2944 = vpop.f32.mrb[0].mxu0
      %v2945 = vadd.f32 %v2904, %v2944
      %v2946 = vpop.f32.mrb[0].mxu0
      %2947 = vdwg.mxu0
      %2948 = vmatprep.subr.bf16.mxu0 0
      %2949 = vmatpush1.bf16.msra.mxu0 %v2770
      %2950 = vmatprep.subr.bf16.mxu0 0
      %2951 = vmatpush1.bf16.msra.mxu0 %v2771
      %2952 = vmatprep.subr.bf16.mxu0 0
      %2953 = vmatpush1.bf16.msra.mxu0 %v2772
      %2954 = vmatprep.subr.bf16.mxu0 0
      %2955 = vmatpush1.bf16.msra.mxu0 %v2773
      %2956 = vmatprep.subr.bf16.mxu0 0
      %2957 = vmatpush1.bf16.msra.mxu0 %v2774
      %2958 = vmatprep.subr.bf16.mxu0 0
      %2959 = vmatpush1.bf16.msra.mxu0 %v2775
      %2960 = vmatprep.subr.bf16.mxu0 0
      %2961 = vmatpush1.bf16.msra.mxu0 %v2776
      %2962 = vmatprep.subr.bf16.mxu0 0
      %2963 = vmatpush1.bf16.msra.mxu0 %v2777
      %2964 = vmatprep.subr.bf16.mxu0 0
      %2965 = vmatpush1.bf16.msra.mxu0 %v2778
      %2966 = vmatprep.subr.bf16.mxu0 0
      %2967 = vmatpush1.bf16.msra.mxu0 %v2779
      %2968 = vmatprep.subr.bf16.mxu0 0
      %2969 = vmatpush1.bf16.msra.mxu0 %v2780
      %2970 = vmatprep.subr.bf16.mxu0 0
      %2971 = vmatpush1.bf16.msra.mxu0 %v2781
      %2972 = vmatprep.subr.bf16.mxu0 0
      %2973 = vmatpush1.bf16.msra.mxu0 %v2782
      %2974 = vmatprep.subr.bf16.mxu0 0
      %2975 = vmatpush1.bf16.msra.mxu0 %v2783
      %2976 = vmatprep.subr.bf16.mxu0 0
      %2977 = vmatpush1.bf16.msra.mxu0 %v2784
      %2978 = vmatprep.subr.bf16.mxu0 0
      %2979 = vmatpush1.bf16.msra.mxu0 %v2785
      %2980 = vmatprep.mubr.bf16.mxu0 %v406
      %2981 = vmatmul.mubr.bf16.gmra.mrb[0].mxu0 %v405
      %v2982 = vpop.f32.mrb[0].mxu0
      %v2983 = vadd.f32 %v2942, %v2982
      %v2984 = vpop.f32.mrb[0].mxu0
      %v2985 = vpop.f32.mrb[0].mxu0
      %v2986 = vadd.f32 %v2945, %v2985
      %v2987 = vpop.f32.mrb[0].mxu0
      %2988 = vdwg.mxu0
      %2989 = vmatprep.subr.bf16.mxu0 0
      %2990 = vmatpush1.bf16.msra.mxu0 %v2786
      %2991 = vmatprep.subr.bf16.mxu0 0
      %2992 = vmatpush1.bf16.msra.mxu0 %v2787
      %2993 = vmatprep.subr.bf16.mxu0 0
      %2994 = vmatpush1.bf16.msra.mxu0 %v2788
      %2995 = vmatprep.subr.bf16.mxu0 0
      %2996 = vmatpush1.bf16.msra.mxu0 %v2789
      %2997 = vmatprep.subr.bf16.mxu0 0
      %2998 = vmatpush1.bf16.msra.mxu0 %v2790
      %2999 = vmatprep.subr.bf16.mxu0 0
      %3000 = vmatpush1.bf16.msra.mxu0 %v2791
      %3001 = vmatprep.subr.bf16.mxu0 0
      %3002 = vmatpush1.bf16.msra.mxu0 %v2792
      %3003 = vmatprep.subr.bf16.mxu0 0
      %3004 = vmatpush1.bf16.msra.mxu0 %v2793
      %3005 = vmatprep.subr.bf16.mxu0 0
      %3006 = vmatpush1.bf16.msra.mxu0 %v2794
      %3007 = vmatprep.subr.bf16.mxu0 0
      %3008 = vmatpush1.bf16.msra.mxu0 %v2795
      %3009 = vmatprep.subr.bf16.mxu0 0
      %3010 = vmatpush1.bf16.msra.mxu0 %v2796
      %3011 = vmatprep.subr.bf16.mxu0 0
      %3012 = vmatpush1.bf16.msra.mxu0 %v2797
      %3013 = vmatprep.subr.bf16.mxu0 0
      %3014 = vmatpush1.bf16.msra.mxu0 %v2798
      %3015 = vmatprep.subr.bf16.mxu0 0
      %3016 = vmatpush1.bf16.msra.mxu0 %v2799
      %3017 = vmatprep.subr.bf16.mxu0 0
      %3018 = vmatpush1.bf16.msra.mxu0 %v2800
      %3019 = vmatprep.subr.bf16.mxu0 0
      %3020 = vmatpush1.bf16.msra.mxu0 %v2801
      %3021 = vmatprep.mubr.bf16.mxu0 %v408
      %3022 = vmatmul.mubr.bf16.gmra.mrb[0].mxu0 %v407
      %v3023 = vpop.f32.mrb[0].mxu0
      %v3024 = vadd.f32 %v2983, %v3023
      %v3025 = vpop.f32.mrb[0].mxu0
      %v3026 = vpop.f32.mrb[0].mxu0
      %v3027 = vadd.f32 %v2986, %v3026
      %v3028 = vpop.f32.mrb[0].mxu0
      %3029 = vdwg.mxu0
      %v3030 = vmul.f32 %v2348, %v2348
      %v3031 = vmul.f32 %v2351, %v2351
      %v3032 = vmul.f32 %v3024, %v3024
      %v3033 = vmul.f32 %v3027, %v3027
      %v3034 = vadd.f32 %v3030, %v3032
      %v3035 = vadd.f32 %v3031, %v3033
      %v3036 = vrsqrt.pop %v3034
      %v3037 = vmul.f32 %v3034, %v3036
      %vm3038 = vcmp.eq.f32.partialorder %v3034, inf
      %v3039 = vsel %vm3038, %v3034, %v3037
      %vm3040 = vcmp.eq.f32.partialorder %v3034, 0.0
      %v3041 = vand.u32 %v3034, 2147483648
      %v3042 = vsel %vm3040, %v3041, %v3039
      %v3043 = vrsqrt.pop %v3035
      %v3044 = vmul.f32 %v3035, %v3043
      %vm3045 = vcmp.eq.f32.partialorder %v3035, inf
      %v3046 = vsel %vm3045, %v3035, %v3044
      %vm3047 = vcmp.eq.f32.partialorder %v3035, 0.0
      %v3048 = vand.u32 %v3035, 2147483648
      %v3049 = vsel %vm3047, %v3048, %v3046
      %v3050 = vpack.c.bf16 %v3049, %v3042
      %v3051 = vld [vmem:[%s3 + $0x40] sm:$0xf]
      %v3052 = vld [vmem:[%s3 + $0x44] sm:$0xf]
      %v3053 = vld [vmem:[%s3 + $0x48] sm:$0xf]
      %v3054 = vld [vmem:[%s3 + $0x4c] sm:$0xf]
      %v3055 = vld [vmem:[%s3 + $0x50] sm:$0xf]
      %v3056 = vld [vmem:[%s3 + $0x54] sm:$0xf]
      %v3057 = vld [vmem:[%s3 + $0x58] sm:$0xf]
      %v3058 = vld [vmem:[%s3 + $0x5c] sm:$0xf]
      %v3059 = vld [vmem:[%s3 + $0x60] sm:$0xf]
      %v3060 = vld [vmem:[%s3 + $0x64] sm:$0xf]
      %v3061 = vld [vmem:[%s3 + $0x68] sm:$0xf]
      %v3062 = vld [vmem:[%s3 + $0x6c] sm:$0xf]
      %v3063 = vld [vmem:[%s3 + $0x70] sm:$0xf]
      %v3064 = vld [vmem:[%s3 + $0x74] sm:$0xf]
      %v3065 = vld [vmem:[%s3 + $0x78] sm:$0xf]
      %v3066 = vld [vmem:[%s3 + $0x7c] sm:$0xf]
      %v3083 = vunpack.c.l.b16 %v3051
      %v3084 = vunpack.c.l.b16 %v3052
      %v3085 = vunpack.c.l.b16 %v3053
      %v3086 = vunpack.c.l.b16 %v3054
      %v3087 = vunpack.c.l.b16 %v3055
      %v3088 = vunpack.c.l.b16 %v3056
      %v3089 = vunpack.c.l.b16 %v3057
      %v3090 = vunpack.c.l.b16 %v3058
      %v3091 = vunpack.c.l.b16 %v3059
      %v3092 = vunpack.c.l.b16 %v3060
      %v3093 = vunpack.c.l.b16 %v3061
      %v3094 = vunpack.c.l.b16 %v3062
      %v3095 = vunpack.c.l.b16 %v3063
      %v3096 = vunpack.c.l.b16 %v3064
      %v3097 = vunpack.c.l.b16 %v3065
      %v3098 = vunpack.c.l.b16 %v3066
      %v3099 = vpack.c.b16 %v3084, %v3083
      %v3100 = vpack.c.b16 %v3086, %v3085
      %v3101 = vpack.c.b16 %v3088, %v3087
      %v3102 = vpack.c.b16 %v3090, %v3089
      %v3103 = vpack.c.b16 %v3092, %v3091
      %v3104 = vpack.c.b16 %v3094, %v3093
      %v3105 = vpack.c.b16 %v3096, %v3095
      %v3106 = vpack.c.b16 %v3098, %v3097
      %3115 = vmatprep.subr.bf16.mxu0 0
      %3116 = vmatpush1.bf16.msra.mxu0 %v3099
      %3117 = vmatprep.subr.bf16.mxu0 0
      %3118 = vmatpush1.bf16.msra.mxu0 %v3100
      %3119 = vmatprep.subr.bf16.mxu0 0
      %3120 = vmatpush1.bf16.msra.mxu0 %v3101
      %3121 = vmatprep.subr.bf16.mxu0 0
      %3122 = vmatpush1.bf16.msra.mxu0 %v3102
      %3123 = vmatprep.subr.bf16.mxu0 0
      %3124 = vmatpush1.bf16.msra.mxu0 %v3103
      %3125 = vmatprep.subr.bf16.mxu0 0
      %3126 = vmatpush1.bf16.msra.mxu0 %v3104
      %3127 = vmatprep.subr.bf16.mxu0 0
      %3128 = vmatpush1.bf16.msra.mxu0 %v3105
      %3129 = vmatprep.subr.bf16.mxu0 0
      %3130 = vmatpush1.bf16.msra.mxu0 %v3106
      %3131 = vmatprep.subr.bf16.mxu0 0
      %3132 = vmatpush1.bf16.msra.mxu0 0
      %3133 = vmatprep.subr.bf16.mxu0 0
      %3134 = vmatpush1.bf16.msra.mxu0 0
      %3135 = vmatprep.subr.bf16.mxu0 0
      %3136 = vmatpush1.bf16.msra.mxu0 0
      %3137 = vmatprep.subr.bf16.mxu0 0
      %3138 = vmatpush1.bf16.msra.mxu0 0
      %3139 = vmatprep.subr.bf16.mxu0 0
      %3140 = vmatpush1.bf16.msra.mxu0 0
      %3141 = vmatprep.subr.bf16.mxu0 0
      %3142 = vmatpush1.bf16.msra.mxu0 0
      %3143 = vmatprep.subr.bf16.mxu0 0
      %3144 = vmatpush1.bf16.msra.mxu0 0
      %3145 = vmatprep.subr.bf16.mxu0 0
      %3146 = vmatpush1.bf16.msra.mxu0 0
      %3147 = vmatprep.mubr.bf16.mxu0 0
      %3148 = vmatmul.mubr.bf16.gmra.mrb[0].mxu0 %v3050
      %v3149 = vpop.f32.mrb[0].mxu0
      %v3150 = vadd.f32 0.0, %v3149
      %v3151 = vpop.f32.mrb[0].mxu0
      %v3152 = vpop.f32.mrb[0].mxu0
      %v3153 = vadd.f32 0.0, %v3152
      %v3154 = vpop.f32.mrb[0].mxu0
      %3155 = vdwg.mxu0
      %v3172 = vunpack.c.l.b16 %v1662
      %v3173 = vunpack.c.l.b16 %v1663
      %v3174 = vunpack.c.l.b16 %v1664
      %v3175 = vunpack.c.l.b16 %v1665
      %v3176 = vunpack.c.l.b16 %v1666
      %v3177 = vunpack.c.l.b16 %v1667
      %v3178 = vunpack.c.l.b16 %v1668
      %v3179 = vunpack.c.l.b16 %v1669
      %v3180 = vunpack.c.l.b16 %v1670
      %v3181 = vunpack.c.l.b16 %v1671
      %v3182 = vunpack.c.l.b16 %v1672
      %v3183 = vunpack.c.l.b16 %v1673
      %v3184 = vunpack.c.l.b16 %v1674
      %v3185 = vunpack.c.l.b16 %v1675
      %v3186 = vunpack.c.l.b16 %v1676
      %v3187 = vunpack.c.l.b16 %v1677
      %v3188 = vpack.c.b16 %v3173, %v3172
      %v3189 = vpack.c.b16 %v3175, %v3174
      %v3190 = vpack.c.b16 %v3177, %v3176
      %v3191 = vpack.c.b16 %v3179, %v3178
      %v3192 = vpack.c.b16 %v3181, %v3180
      %v3193 = vpack.c.b16 %v3183, %v3182
      %v3194 = vpack.c.b16 %v3185, %v3184
      %v3195 = vpack.c.b16 %v3187, %v3186
      %3204 = vmatprep.subr.bf16.mxu0 0
      %3205 = vmatpush1.bf16.msra.mxu0 %v3188
      %3206 = vmatprep.subr.bf16.mxu0 0
      %3207 = vmatpush1.bf16.msra.mxu0 %v3189
      %3208 = vmatprep.subr.bf16.mxu0 0
      %3209 = vmatpush1.bf16.msra.mxu0 %v3190
      %3210 = vmatprep.subr.bf16.mxu0 0
      %3211 = vmatpush1.bf16.msra.mxu0 %v3191
      %3212 = vmatprep.subr.bf16.mxu0 0
      %3213 = vmatpush1.bf16.msra.mxu0 %v3192
      %3214 = vmatprep.subr.bf16.mxu0 0
      %3215 = vmatpush1.bf16.msra.mxu0 %v3193
      %3216 = vmatprep.subr.bf16.mxu0 0
      %3217 = vmatpush1.bf16.msra.mxu0 %v3194
      %3218 = vmatprep.subr.bf16.mxu0 0
      %3219 = vmatpush1.bf16.msra.mxu0 %v3195
      %3220 = vmatprep.subr.bf16.mxu0 0
      %3221 = vmatpush1.bf16.msra.mxu0 0
      %3222 = vmatprep.subr.bf16.mxu0 0
      %3223 = vmatpush1.bf16.msra.mxu0 0
      %3224 = vmatprep.subr.bf16.mxu0 0
      %3225 = vmatpush1.bf16.msra.mxu0 0
      %3226 = vmatprep.subr.bf16.mxu0 0
      %3227 = vmatpush1.bf16.msra.mxu0 0
      %3228 = vmatprep.subr.bf16.mxu0 0
      %3229 = vmatpush1.bf16.msra.mxu0 0
      %3230 = vmatprep.subr.bf16.mxu0 0
      %3231 = vmatpush1.bf16.msra.mxu0 0
      %3232 = vmatprep.subr.bf16.mxu0 0
      %3233 = vmatpush1.bf16.msra.mxu0 0
      %3234 = vmatprep.subr.bf16.mxu0 0
      %3235 = vmatpush1.bf16.msra.mxu0 0
      %3236 = vmatprep.mubr.bf16.mxu0 0
      %3237 = vmatmul.mubr.bf16.gmra.mrb[0].mxu0 %v1661
      %v3238 = vpop.f32.mrb[0].mxu0
      %v3239 = vadd.f32 %v3150, %v3238
      %v3240 = vpop.f32.mrb[0].mxu0
      %v3241 = vpop.f32.mrb[0].mxu0
      %v3242 = vadd.f32 %v3153, %v3241
      %v3243 = vpop.f32.mrb[0].mxu0
      %3244 = vdwg.mxu0
      %v3245 = vld [vmem:[%s1 + $0x8] sm:$0xf]
      %v3246 = vld [vmem:[%s1 + $0x1c] sm:$0xf]
      %v3247 = vld [vmem:[%s1 + $0x30] sm:$0xf]
      %v3248 = vld [vmem:[%s1 + $0x44] sm:$0xf]
      %v3249 = vld [vmem:[%s1 + $0x58] sm:$0xf]
      %v3250 = vld [vmem:[%s1 + $0x6c] sm:$0xf]
      %v3251 = vld [vmem:[%s1 + $0x80] sm:$0xf]
      %v3252 = vld [vmem:[%s1 + $0x94] sm:$0xf]
      %v3253 = vld [vmem:[%s1 + $0xa8] sm:$0xf]
      %v3254 = vld [vmem:[%s1 + $0xbc] sm:$0xf]
      %v3255 = vld [vmem:[%s1 + $0xd0] sm:$0xf]
      %v3256 = vld [vmem:[%s1 + $0xe4] sm:$0xf]
      %v3257 = vld [vmem:[%s1 + $0xf8] sm:$0xf]
      %v3258 = vld [vmem:[%s1 + $0x10c] sm:$0xf]
      %v3259 = vld [vmem:[%s1 + $0x120] sm:$0xf]
      %v3260 = vld [vmem:[%s1 + $0x134] sm:$0xf]
      %v3261 = vld [vmem:[%s1 + $0x148] sm:$0xf]
      %v3262 = vld [vmem:[%s1 + $0x15c] sm:$0xf]
      %v3263 = vld [vmem:[%s1 + $0x170] sm:$0xf]
      %v3264 = vld [vmem:[%s1 + $0x184] sm:$0xf]
      %v3265 = vld [vmem:[%s1 + $0x198] sm:$0xf]
      %v3266 = vld [vmem:[%s1 + $0x1ac] sm:$0xf]
      %v3267 = vld [vmem:[%s1 + $0x1c0] sm:$0xf]
      %v3268 = vld [vmem:[%s1 + $0x1d4] sm:$0xf]
      %v3269 = vld [vmem:[%s1 + $0x1e8] sm:$0xf]
      %v3270 = vld [vmem:[%s1 + $0x1fc] sm:$0xf]
      %v3271 = vld [vmem:[%s1 + $0x210] sm:$0xf]
      %v3272 = vld [vmem:[%s1 + $0x224] sm:$0xf]
      %v3273 = vld [vmem:[%s1 + $0x238] sm:$0xf]
      %v3274 = vld [vmem:[%s1 + $0x24c] sm:$0xf]
      %v3275 = vld [vmem:[%s1 + $0x260] sm:$0xf]
      %v3276 = vld [vmem:[%s1 + $0x274] sm:$0xf]
      %v3277 = vld [vmem:[%s1 + $0x288] sm:$0xf]
      %v3278 = vld [vmem:[%s1 + $0x29c] sm:$0xf]
      %v3279 = vld [vmem:[%s1 + $0x2b0] sm:$0xf]
      %v3280 = vld [vmem:[%s1 + $0x2c4] sm:$0xf]
      %v3281 = vld [vmem:[%s1 + $0x2d8] sm:$0xf]
      %v3282 = vld [vmem:[%s1 + $0x2ec] sm:$0xf]
      %v3283 = vld [vmem:[%s1 + $0x300] sm:$0xf]
      %v3284 = vld [vmem:[%s1 + $0x314] sm:$0xf]
      %v3285 = vld [vmem:[%s1 + $0x328] sm:$0xf]
      %v3286 = vld [vmem:[%s1 + $0x33c] sm:$0xf]
      %v3287 = vld [vmem:[%s1 + $0x350] sm:$0xf]
      %v3288 = vld [vmem:[%s1 + $0x364] sm:$0xf]
      %v3289 = vld [vmem:[%s1 + $0x378] sm:$0xf]
      %v3290 = vld [vmem:[%s1 + $0x38c] sm:$0xf]
      %v3291 = vld [vmem:[%s1 + $0x3a0] sm:$0xf]
      %v3292 = vld [vmem:[%s1 + $0x3b4] sm:$0xf]
      %v3293 = vld [vmem:[%s1 + $0x3c8] sm:$0xf]
      %v3294 = vld [vmem:[%s1 + $0x3dc] sm:$0xf]
      %v3295 = vld [vmem:[%s1 + $0x3f0] sm:$0xf]
      %v3296 = vld [vmem:[%s1 + $0x404] sm:$0xf]
      %v3297 = vld [vmem:[%s1 + $0x418] sm:$0xf]
      %v3298 = vld [vmem:[%s1 + $0x42c] sm:$0xf]
      %v3299 = vld [vmem:[%s1 + $0x440] sm:$0xf]
      %v3300 = vld [vmem:[%s1 + $0x454] sm:$0xf]
      %v3301 = vld [vmem:[%s1 + $0x468] sm:$0xf]
      %v3302 = vld [vmem:[%s1 + $0x47c] sm:$0xf]
      %v3303 = vld [vmem:[%s1 + $0x490] sm:$0xf]
      %v3304 = vld [vmem:[%s1 + $0x4a4] sm:$0xf]
      %v3305 = vld [vmem:[%s1 + $0x4b8] sm:$0xf]
      %v3306 = vld [vmem:[%s1 + $0x4cc] sm:$0xf]
      %v3307 = vld [vmem:[%s1 + $0x4e0] sm:$0xf]
      %v3308 = vld [vmem:[%s1 + $0x4f4] sm:$0xf]
      %v3309 = vld [vmem:[%s1 + $0x508] sm:$0xf]
      %v3310 = vld [vmem:[%s1 + $0x51c] sm:$0xf]
      %v3311 = vld [vmem:[%s1 + $0x530] sm:$0xf]
      %v3312 = vld [vmem:[%s1 + $0x544] sm:$0xf]
      %v3313 = vld [vmem:[%s1 + $0x558] sm:$0xf]
      %v3314 = vld [vmem:[%s1 + $0x56c] sm:$0xf]
      %v3315 = vld [vmem:[%s1 + $0x580] sm:$0xf]
      %v3316 = vld [vmem:[%s1 + $0x594] sm:$0xf]
      %v3317 = vld [vmem:[%s1 + $0x5a8] sm:$0xf]
      %v3318 = vld [vmem:[%s1 + $0x5bc] sm:$0xf]
      %v3319 = vld [vmem:[%s1 + $0x5d0] sm:$0xf]
      %v3320 = vld [vmem:[%s1 + $0x5e4] sm:$0xf]
      %v3321 = vld [vmem:[%s1 + $0x5f8] sm:$0xf]
      %v3322 = vld [vmem:[%s1 + $0x60c] sm:$0xf]
      %v3323 = vld [vmem:[%s1 + $0x620] sm:$0xf]
      %v3324 = vld [vmem:[%s1 + $0x634] sm:$0xf]
      %v3325 = vld [vmem:[%s1 + $0x648] sm:$0xf]
      %v3326 = vld [vmem:[%s1 + $0x65c] sm:$0xf]
      %v3327 = vld [vmem:[%s1 + $0x670] sm:$0xf]
      %v3328 = vld [vmem:[%s1 + $0x684] sm:$0xf]
      %v3329 = vld [vmem:[%s1 + $0x698] sm:$0xf]
      %v3330 = vld [vmem:[%s1 + $0x6ac] sm:$0xf]
      %v3331 = vld [vmem:[%s1 + $0x6c0] sm:$0xf]
      %v3332 = vld [vmem:[%s1 + $0x6d4] sm:$0xf]
      %v3333 = vld [vmem:[%s1 + $0x6e8] sm:$0xf]
      %v3334 = vld [vmem:[%s1 + $0x6fc] sm:$0xf]
      %v3335 = vld [vmem:[%s1 + $0x710] sm:$0xf]
      %v3336 = vld [vmem:[%s1 + $0x724] sm:$0xf]
      %v3337 = vld [vmem:[%s1 + $0x738] sm:$0xf]
      %v3338 = vld [vmem:[%s1 + $0x74c] sm:$0xf]
      %v3339 = vld [vmem:[%s1 + $0x760] sm:$0xf]
      %v3340 = vld [vmem:[%s1 + $0x774] sm:$0xf]
      %v3341 = vld [vmem:[%s1 + $0x788] sm:$0xf]
      %v3342 = vld [vmem:[%s1 + $0x79c] sm:$0xf]
      %v3343 = vld [vmem:[%s1 + $0x7b0] sm:$0xf]
      %v3344 = vld [vmem:[%s1 + $0x7c4] sm:$0xf]
      %v3345 = vld [vmem:[%s1 + $0x7d8] sm:$0xf]
      %v3346 = vld [vmem:[%s1 + $0x7ec] sm:$0xf]
      %v3347 = vld [vmem:[%s1 + $0x800] sm:$0xf]
      %v3348 = vld [vmem:[%s1 + $0x814] sm:$0xf]
      %v3349 = vld [vmem:[%s1 + $0x828] sm:$0xf]
      %v3350 = vld [vmem:[%s1 + $0x83c] sm:$0xf]
      %v3351 = vld [vmem:[%s1 + $0x850] sm:$0xf]
      %v3352 = vld [vmem:[%s1 + $0x864] sm:$0xf]
      %v3353 = vld [vmem:[%s1 + $0x878] sm:$0xf]
      %v3354 = vld [vmem:[%s1 + $0x88c] sm:$0xf]
      %v3355 = vld [vmem:[%s1 + $0x8a0] sm:$0xf]
      %v3356 = vld [vmem:[%s1 + $0x8b4] sm:$0xf]
      %v3357 = vld [vmem:[%s1 + $0x8c8] sm:$0xf]
      %v3358 = vld [vmem:[%s1 + $0x8dc] sm:$0xf]
      %v3359 = vld [vmem:[%s1 + $0x8f0] sm:$0xf]
      %v3360 = vld [vmem:[%s1 + $0x904] sm:$0xf]
      %v3361 = vld [vmem:[%s1 + $0x918] sm:$0xf]
      %v3362 = vld [vmem:[%s1 + $0x92c] sm:$0xf]
      %v3363 = vld [vmem:[%s1 + $0x940] sm:$0xf]
      %v3364 = vld [vmem:[%s1 + $0x954] sm:$0xf]
      %v3365 = vld [vmem:[%s1 + $0x968] sm:$0xf]
      %v3366 = vld [vmem:[%s1 + $0x97c] sm:$0xf]
      %v3367 = vld [vmem:[%s1 + $0x990] sm:$0xf]
      %v3368 = vld [vmem:[%s1 + $0x9a4] sm:$0xf]
      %v3369 = vld [vmem:[%s1 + $0x9b8] sm:$0xf]
      %v3370 = vld [vmem:[%s1 + $0x9cc] sm:$0xf]
      %v3371 = vld [vmem:[%s1 + $0x9e0] sm:$0xf]
      %v3372 = vld [vmem:[%s1 + $0x9f4] sm:$0xf]
      %v3501 = vunpack.c.l.b16 %v3245
      %v3502 = vunpack.c.l.b16 %v3246
      %v3503 = vunpack.c.l.b16 %v3247
      %v3504 = vunpack.c.l.b16 %v3248
      %v3505 = vunpack.c.l.b16 %v3249
      %v3506 = vunpack.c.l.b16 %v3250
      %v3507 = vunpack.c.l.b16 %v3251
      %v3508 = vunpack.c.l.b16 %v3252
      %v3509 = vunpack.c.l.b16 %v3253
      %v3510 = vunpack.c.l.b16 %v3254
      %v3511 = vunpack.c.l.b16 %v3255
      %v3512 = vunpack.c.l.b16 %v3256
      %v3513 = vunpack.c.l.b16 %v3257
      %v3514 = vunpack.c.l.b16 %v3258
      %v3515 = vunpack.c.l.b16 %v3259
      %v3516 = vunpack.c.l.b16 %v3260
      %v3517 = vunpack.c.l.b16 %v3261
      %v3518 = vunpack.c.l.b16 %v3262
      %v3519 = vunpack.c.l.b16 %v3263
      %v3520 = vunpack.c.l.b16 %v3264
      %v3521 = vunpack.c.l.b16 %v3265
      %v3522 = vunpack.c.l.b16 %v3266
      %v3523 = vunpack.c.l.b16 %v3267
      %v3524 = vunpack.c.l.b16 %v3268
      %v3525 = vunpack.c.l.b16 %v3269
      %v3526 = vunpack.c.l.b16 %v3270
      %v3527 = vunpack.c.l.b16 %v3271
      %v3528 = vunpack.c.l.b16 %v3272
      %v3529 = vunpack.c.l.b16 %v3273
      %v3530 = vunpack.c.l.b16 %v3274
      %v3531 = vunpack.c.l.b16 %v3275
      %v3532 = vunpack.c.l.b16 %v3276
      %v3533 = vunpack.c.l.b16 %v3277
      %v3534 = vunpack.c.l.b16 %v3278
      %v3535 = vunpack.c.l.b16 %v3279
      %v3536 = vunpack.c.l.b16 %v3280
      %v3537 = vunpack.c.l.b16 %v3281
      %v3538 = vunpack.c.l.b16 %v3282
      %v3539 = vunpack.c.l.b16 %v3283
      %v3540 = vunpack.c.l.b16 %v3284
      %v3541 = vunpack.c.l.b16 %v3285
      %v3542 = vunpack.c.l.b16 %v3286
      %v3543 = vunpack.c.l.b16 %v3287
      %v3544 = vunpack.c.l.b16 %v3288
      %v3545 = vunpack.c.l.b16 %v3289
      %v3546 = vunpack.c.l.b16 %v3290
      %v3547 = vunpack.c.l.b16 %v3291
      %v3548 = vunpack.c.l.b16 %v3292
      %v3549 = vunpack.c.l.b16 %v3293
      %v3550 = vunpack.c.l.b16 %v3294
      %v3551 = vunpack.c.l.b16 %v3295
      %v3552 = vunpack.c.l.b16 %v3296
      %v3553 = vunpack.c.l.b16 %v3297
      %v3554 = vunpack.c.l.b16 %v3298
      %v3555 = vunpack.c.l.b16 %v3299
      %v3556 = vunpack.c.l.b16 %v3300
      %v3557 = vunpack.c.l.b16 %v3301
      %v3558 = vunpack.c.l.b16 %v3302
      %v3559 = vunpack.c.l.b16 %v3303
      %v3560 = vunpack.c.l.b16 %v3304
      %v3561 = vunpack.c.l.b16 %v3305
      %v3562 = vunpack.c.l.b16 %v3306
      %v3563 = vunpack.c.l.b16 %v3307
      %v3564 = vunpack.c.l.b16 %v3308
      %v3565 = vunpack.c.l.b16 %v3309
      %v3566 = vunpack.c.l.b16 %v3310
      %v3567 = vunpack.c.l.b16 %v3311
      %v3568 = vunpack.c.l.b16 %v3312
      %v3569 = vunpack.c.l.b16 %v3313
      %v3570 = vunpack.c.l.b16 %v3314
      %v3571 = vunpack.c.l.b16 %v3315
      %v3572 = vunpack.c.l.b16 %v3316
      %v3573 = vunpack.c.l.b16 %v3317
      %v3574 = vunpack.c.l.b16 %v3318
      %v3575 = vunpack.c.l.b16 %v3319
      %v3576 = vunpack.c.l.b16 %v3320
      %v3577 = vunpack.c.l.b16 %v3321
      %v3578 = vunpack.c.l.b16 %v3322
      %v3579 = vunpack.c.l.b16 %v3323
      %v3580 = vunpack.c.l.b16 %v3324
      %v3581 = vunpack.c.l.b16 %v3325
      %v3582 = vunpack.c.l.b16 %v3326
      %v3583 = vunpack.c.l.b16 %v3327
      %v3584 = vunpack.c.l.b16 %v3328
      %v3585 = vunpack.c.l.b16 %v3329
      %v3586 = vunpack.c.l.b16 %v3330
      %v3587 = vunpack.c.l.b16 %v3331
      %v3588 = vunpack.c.l.b16 %v3332
      %v3589 = vunpack.c.l.b16 %v3333
      %v3590 = vunpack.c.l.b16 %v3334
      %v3591 = vunpack.c.l.b16 %v3335
      %v3592 = vunpack.c.l.b16 %v3336
      %v3593 = vunpack.c.l.b16 %v3337
      %v3594 = vunpack.c.l.b16 %v3338
      %v3595 = vunpack.c.l.b16 %v3339
      %v3596 = vunpack.c.l.b16 %v3340
      %v3597 = vunpack.c.l.b16 %v3341
      %v3598 = vunpack.c.l.b16 %v3342
      %v3599 = vunpack.c.l.b16 %v3343
      %v3600 = vunpack.c.l.b16 %v3344
      %v3601 = vunpack.c.l.b16 %v3345
      %v3602 = vunpack.c.l.b16 %v3346
      %v3603 = vunpack.c.l.b16 %v3347
      %v3604 = vunpack.c.l.b16 %v3348
      %v3605 = vunpack.c.l.b16 %v3349
      %v3606 = vunpack.c.l.b16 %v3350
      %v3607 = vunpack.c.l.b16 %v3351
      %v3608 = vunpack.c.l.b16 %v3352
      %v3609 = vunpack.c.l.b16 %v3353
      %v3610 = vunpack.c.l.b16 %v3354
      %v3611 = vunpack.c.l.b16 %v3355
      %v3612 = vunpack.c.l.b16 %v3356
      %v3613 = vunpack.c.l.b16 %v3357
      %v3614 = vunpack.c.l.b16 %v3358
      %v3615 = vunpack.c.l.b16 %v3359
      %v3616 = vunpack.c.l.b16 %v3360
      %v3617 = vunpack.c.l.b16 %v3361
      %v3618 = vunpack.c.l.b16 %v3362
      %v3619 = vunpack.c.l.b16 %v3363
      %v3620 = vunpack.c.l.b16 %v3364
      %v3621 = vunpack.c.l.b16 %v3365
      %v3622 = vunpack.c.l.b16 %v3366
      %v3623 = vunpack.c.l.b16 %v3367
      %v3624 = vunpack.c.l.b16 %v3368
      %v3625 = vunpack.c.l.b16 %v3369
      %v3626 = vunpack.c.l.b16 %v3370
      %v3627 = vunpack.c.l.b16 %v3371
      %v3628 = vunpack.c.l.b16 %v3372
      %v3629 = vpack.c.b16 %v3502, %v3501
      %v3630 = vpack.c.b16 %v3504, %v3503
      %v3631 = vpack.c.b16 %v3506, %v3505
      %v3632 = vpack.c.b16 %v3508, %v3507
      %v3633 = vpack.c.b16 %v3510, %v3509
      %v3634 = vpack.c.b16 %v3512, %v3511
      %v3635 = vpack.c.b16 %v3514, %v3513
      %v3636 = vpack.c.b16 %v3516, %v3515
      %v3637 = vpack.c.b16 %v3518, %v3517
      %v3638 = vpack.c.b16 %v3520, %v3519
      %v3639 = vpack.c.b16 %v3522, %v3521
      %v3640 = vpack.c.b16 %v3524, %v3523
      %v3641 = vpack.c.b16 %v3526, %v3525
      %v3642 = vpack.c.b16 %v3528, %v3527
      %v3643 = vpack.c.b16 %v3530, %v3529
      %v3644 = vpack.c.b16 %v3532, %v3531
      %v3645 = vpack.c.b16 %v3534, %v3533
      %v3646 = vpack.c.b16 %v3536, %v3535
      %v3647 = vpack.c.b16 %v3538, %v3537
      %v3648 = vpack.c.b16 %v3540, %v3539
      %v3649 = vpack.c.b16 %v3542, %v3541
      %v3650 = vpack.c.b16 %v3544, %v3543
      %v3651 = vpack.c.b16 %v3546, %v3545
      %v3652 = vpack.c.b16 %v3548, %v3547
      %v3653 = vpack.c.b16 %v3550, %v3549
      %v3654 = vpack.c.b16 %v3552, %v3551
      %v3655 = vpack.c.b16 %v3554, %v3553
      %v3656 = vpack.c.b16 %v3556, %v3555
      %v3657 = vpack.c.b16 %v3558, %v3557
      %v3658 = vpack.c.b16 %v3560, %v3559
      %v3659 = vpack.c.b16 %v3562, %v3561
      %v3660 = vpack.c.b16 %v3564, %v3563
      %v3661 = vpack.c.b16 %v3566, %v3565
      %v3662 = vpack.c.b16 %v3568, %v3567
      %v3663 = vpack.c.b16 %v3570, %v3569
      %v3664 = vpack.c.b16 %v3572, %v3571
      %v3665 = vpack.c.b16 %v3574, %v3573
      %v3666 = vpack.c.b16 %v3576, %v3575
      %v3667 = vpack.c.b16 %v3578, %v3577
      %v3668 = vpack.c.b16 %v3580, %v3579
      %v3669 = vpack.c.b16 %v3582, %v3581
      %v3670 = vpack.c.b16 %v3584, %v3583
      %v3671 = vpack.c.b16 %v3586, %v3585
      %v3672 = vpack.c.b16 %v3588, %v3587
      %v3673 = vpack.c.b16 %v3590, %v3589
      %v3674 = vpack.c.b16 %v3592, %v3591
      %v3675 = vpack.c.b16 %v3594, %v3593
      %v3676 = vpack.c.b16 %v3596, %v3595
      %v3677 = vpack.c.b16 %v3598, %v3597
      %v3678 = vpack.c.b16 %v3600, %v3599
      %v3679 = vpack.c.b16 %v3602, %v3601
      %v3680 = vpack.c.b16 %v3604, %v3603
      %v3681 = vpack.c.b16 %v3606, %v3605
      %v3682 = vpack.c.b16 %v3608, %v3607
      %v3683 = vpack.c.b16 %v3610, %v3609
      %v3684 = vpack.c.b16 %v3612, %v3611
      %v3685 = vpack.c.b16 %v3614, %v3613
      %v3686 = vpack.c.b16 %v3616, %v3615
      %v3687 = vpack.c.b16 %v3618, %v3617
      %v3688 = vpack.c.b16 %v3620, %v3619
      %v3689 = vpack.c.b16 %v3622, %v3621
      %v3690 = vpack.c.b16 %v3624, %v3623
      %v3691 = vpack.c.b16 %v3626, %v3625
      %v3692 = vpack.c.b16 %v3628, %v3627
      %3757 = vmatprep.subr.bf16.mxu0 0
      %3758 = vmatpush1.bf16.msra.mxu0 %v3629
      %3759 = vmatprep.subr.bf16.mxu0 0
      %3760 = vmatpush1.bf16.msra.mxu0 %v3630
      %3761 = vmatprep.subr.bf16.mxu0 0
      %3762 = vmatpush1.bf16.msra.mxu0 %v3631
      %3763 = vmatprep.subr.bf16.mxu0 0
      %3764 = vmatpush1.bf16.msra.mxu0 %v3632
      %3765 = vmatprep.subr.bf16.mxu0 0
      %3766 = vmatpush1.bf16.msra.mxu0 %v3633
      %3767 = vmatprep.subr.bf16.mxu0 0
      %3768 = vmatpush1.bf16.msra.mxu0 %v3634
      %3769 = vmatprep.subr.bf16.mxu0 0
      %3770 = vmatpush1.bf16.msra.mxu0 %v3635
      %3771 = vmatprep.subr.bf16.mxu0 0
      %3772 = vmatpush1.bf16.msra.mxu0 %v3636
      %3773 = vmatprep.subr.bf16.mxu0 0
      %3774 = vmatpush1.bf16.msra.mxu0 %v3637
      %3775 = vmatprep.subr.bf16.mxu0 0
      %3776 = vmatpush1.bf16.msra.mxu0 %v3638
      %3777 = vmatprep.subr.bf16.mxu0 0
      %3778 = vmatpush1.bf16.msra.mxu0 %v3639
      %3779 = vmatprep.subr.bf16.mxu0 0
      %3780 = vmatpush1.bf16.msra.mxu0 %v3640
      %3781 = vmatprep.subr.bf16.mxu0 0
      %3782 = vmatpush1.bf16.msra.mxu0 %v3641
      %3783 = vmatprep.subr.bf16.mxu0 0
      %3784 = vmatpush1.bf16.msra.mxu0 %v3642
      %3785 = vmatprep.subr.bf16.mxu0 0
      %3786 = vmatpush1.bf16.msra.mxu0 %v3643
      %3787 = vmatprep.subr.bf16.mxu0 0
      %3788 = vmatpush1.bf16.msra.mxu0 %v3644
      %3789 = vmatprep.mubr.bf16.mxu0 %v402
      %3790 = vmatmul.mubr.bf16.gmra.mrb[0].mxu0 %v401
      %v3791 = vpop.f32.mrb[0].mxu0
      %v3792 = vadd.f32 0.0, %v3791
      %v3793 = vpop.f32.mrb[0].mxu0
      %v3794 = vpop.f32.mrb[0].mxu0
      %v3795 = vadd.f32 0.0, %v3794
      %v3796 = vpop.f32.mrb[0].mxu0
      %3797 = vdwg.mxu0
      %3798 = vmatprep.subr.bf16.mxu0 0
      %3799 = vmatpush1.bf16.msra.mxu0 %v3645
      %3800 = vmatprep.subr.bf16.mxu0 0
      %3801 = vmatpush1.bf16.msra.mxu0 %v3646
      %3802 = vmatprep.subr.bf16.mxu0 0
      %3803 = vmatpush1.bf16.msra.mxu0 %v3647
      %3804 = vmatprep.subr.bf16.mxu0 0
      %3805 = vmatpush1.bf16.msra.mxu0 %v3648
      %3806 = vmatprep.subr.bf16.mxu0 0
      %3807 = vmatpush1.bf16.msra.mxu0 %v3649
      %3808 = vmatprep.subr.bf16.mxu0 0
      %3809 = vmatpush1.bf16.msra.mxu0 %v3650
      %3810 = vmatprep.subr.bf16.mxu0 0
      %3811 = vmatpush1.bf16.msra.mxu0 %v3651
      %3812 = vmatprep.subr.bf16.mxu0 0
      %3813 = vmatpush1.bf16.msra.mxu0 %v3652
      %3814 = vmatprep.subr.bf16.mxu0 0
      %3815 = vmatpush1.bf16.msra.mxu0 %v3653
      %3816 = vmatprep.subr.bf16.mxu0 0
      %3817 = vmatpush1.bf16.msra.mxu0 %v3654
      %3818 = vmatprep.subr.bf16.mxu0 0
      %3819 = vmatpush1.bf16.msra.mxu0 %v3655
      %3820 = vmatprep.subr.bf16.mxu0 0
      %3821 = vmatpush1.bf16.msra.mxu0 %v3656
      %3822 = vmatprep.subr.bf16.mxu0 0
      %3823 = vmatpush1.bf16.msra.mxu0 %v3657
      %3824 = vmatprep.subr.bf16.mxu0 0
      %3825 = vmatpush1.bf16.msra.mxu0 %v3658
      %3826 = vmatprep.subr.bf16.mxu0 0
      %3827 = vmatpush1.bf16.msra.mxu0 %v3659
      %3828 = vmatprep.subr.bf16.mxu0 0
      %3829 = vmatpush1.bf16.msra.mxu0 %v3660
      %3830 = vmatprep.mubr.bf16.mxu0 %v404
      %3831 = vmatmul.mubr.bf16.gmra.mrb[0].mxu0 %v403
      %v3832 = vpop.f32.mrb[0].mxu0
      %v3833 = vadd.f32 %v3792, %v3832
      %v3834 = vpop.f32.mrb[0].mxu0
      %v3835 = vpop.f32.mrb[0].mxu0
      %v3836 = vadd.f32 %v3795, %v3835
      %v3837 = vpop.f32.mrb[0].mxu0
      %3838 = vdwg.mxu0
      %3839 = vmatprep.subr.bf16.mxu0 0
      %3840 = vmatpush1.bf16.msra.mxu0 %v3661
      %3841 = vmatprep.subr.bf16.mxu0 0
      %3842 = vmatpush1.bf16.msra.mxu0 %v3662
      %3843 = vmatprep.subr.bf16.mxu0 0
      %3844 = vmatpush1.bf16.msra.mxu0 %v3663
      %3845 = vmatprep.subr.bf16.mxu0 0
      %3846 = vmatpush1.bf16.msra.mxu0 %v3664
      %3847 = vmatprep.subr.bf16.mxu0 0
      %3848 = vmatpush1.bf16.msra.mxu0 %v3665
      %3849 = vmatprep.subr.bf16.mxu0 0
      %3850 = vmatpush1.bf16.msra.mxu0 %v3666
      %3851 = vmatprep.subr.bf16.mxu0 0
      %3852 = vmatpush1.bf16.msra.mxu0 %v3667
      %3853 = vmatprep.subr.bf16.mxu0 0
      %3854 = vmatpush1.bf16.msra.mxu0 %v3668
      %3855 = vmatprep.subr.bf16.mxu0 0
      %3856 = vmatpush1.bf16.msra.mxu0 %v3669
      %3857 = vmatprep.subr.bf16.mxu0 0
      %3858 = vmatpush1.bf16.msra.mxu0 %v3670
      %3859 = vmatprep.subr.bf16.mxu0 0
      %3860 = vmatpush1.bf16.msra.mxu0 %v3671
      %3861 = vmatprep.subr.bf16.mxu0 0
      %3862 = vmatpush1.bf16.msra.mxu0 %v3672
      %3863 = vmatprep.subr.bf16.mxu0 0
      %3864 = vmatpush1.bf16.msra.mxu0 %v3673
      %3865 = vmatprep.subr.bf16.mxu0 0
      %3866 = vmatpush1.bf16.msra.mxu0 %v3674
      %3867 = vmatprep.subr.bf16.mxu0 0
      %3868 = vmatpush1.bf16.msra.mxu0 %v3675
      %3869 = vmatprep.subr.bf16.mxu0 0
      %3870 = vmatpush1.bf16.msra.mxu0 %v3676
      %3871 = vmatprep.mubr.bf16.mxu0 %v406
      %3872 = vmatmul.mubr.bf16.gmra.mrb[0].mxu0 %v405
      %v3873 = vpop.f32.mrb[0].mxu0
      %v3874 = vadd.f32 %v3833, %v3873
      %v3875 = vpop.f32.mrb[0].mxu0
      %v3876 = vpop.f32.mrb[0].mxu0
      %v3877 = vadd.f32 %v3836, %v3876
      %v3878 = vpop.f32.mrb[0].mxu0
      %3879 = vdwg.mxu0
      %3880 = vmatprep.subr.bf16.mxu0 0
      %3881 = vmatpush1.bf16.msra.mxu0 %v3677
      %3882 = vmatprep.subr.bf16.mxu0 0
      %3883 = vmatpush1.bf16.msra.mxu0 %v3678
      %3884 = vmatprep.subr.bf16.mxu0 0
      %3885 = vmatpush1.bf16.msra.mxu0 %v3679
      %3886 = vmatprep.subr.bf16.mxu0 0
      %3887 = vmatpush1.bf16.msra.mxu0 %v3680
      %3888 = vmatprep.subr.bf16.mxu0 0
      %3889 = vmatpush1.bf16.msra.mxu0 %v3681
      %3890 = vmatprep.subr.bf16.mxu0 0
      %3891 = vmatpush1.bf16.msra.mxu0 %v3682
      %3892 = vmatprep.subr.bf16.mxu0 0
      %3893 = vmatpush1.bf16.msra.mxu0 %v3683
      %3894 = vmatprep.subr.bf16.mxu0 0
      %3895 = vmatpush1.bf16.msra.mxu0 %v3684
      %3896 = vmatprep.subr.bf16.mxu0 0
      %3897 = vmatpush1.bf16.msra.mxu0 %v3685
      %3898 = vmatprep.subr.bf16.mxu0 0
      %3899 = vmatpush1.bf16.msra.mxu0 %v3686
      %3900 = vmatprep.subr.bf16.mxu0 0
      %3901 = vmatpush1.bf16.msra.mxu0 %v3687
      %3902 = vmatprep.subr.bf16.mxu0 0
      %3903 = vmatpush1.bf16.msra.mxu0 %v3688
      %3904 = vmatprep.subr.bf16.mxu0 0
      %3905 = vmatpush1.bf16.msra.mxu0 %v3689
      %3906 = vmatprep.subr.bf16.mxu0 0
      %3907 = vmatpush1.bf16.msra.mxu0 %v3690
      %3908 = vmatprep.subr.bf16.mxu0 0
      %3909 = vmatpush1.bf16.msra.mxu0 %v3691
      %3910 = vmatprep.subr.bf16.mxu0 0
      %3911 = vmatpush1.bf16.msra.mxu0 %v3692
      %3912 = vmatprep.mubr.bf16.mxu0 %v408
      %3913 = vmatmul.mubr.bf16.gmra.mrb[0].mxu0 %v407
      %v3914 = vpop.f32.mrb[0].mxu0
      %v3915 = vadd.f32 %v3874, %v3914
      %v3916 = vpop.f32.mrb[0].mxu0
      %v3917 = vpop.f32.mrb[0].mxu0
      %v3918 = vadd.f32 %v3877, %v3917
      %v3919 = vpop.f32.mrb[0].mxu0
      %3920 = vdwg.mxu0
      %v3921 = vld [vmem:[%s2 + $0x8] sm:$0xf]
      %v3922 = vld [vmem:[%s2 + $0x1c] sm:$0xf]
      %v3923 = vld [vmem:[%s2 + $0x30] sm:$0xf]
      %v3924 = vld [vmem:[%s2 + $0x44] sm:$0xf]
      %v3925 = vld [vmem:[%s2 + $0x58] sm:$0xf]
      %v3926 = vld [vmem:[%s2 + $0x6c] sm:$0xf]
      %v3927 = vld [vmem:[%s2 + $0x80] sm:$0xf]
      %v3928 = vld [vmem:[%s2 + $0x94] sm:$0xf]
      %v3929 = vld [vmem:[%s2 + $0xa8] sm:$0xf]
      %v3930 = vld [vmem:[%s2 + $0xbc] sm:$0xf]
      %v3931 = vld [vmem:[%s2 + $0xd0] sm:$0xf]
      %v3932 = vld [vmem:[%s2 + $0xe4] sm:$0xf]
      %v3933 = vld [vmem:[%s2 + $0xf8] sm:$0xf]
      %v3934 = vld [vmem:[%s2 + $0x10c] sm:$0xf]
      %v3935 = vld [vmem:[%s2 + $0x120] sm:$0xf]
      %v3936 = vld [vmem:[%s2 + $0x134] sm:$0xf]
      %v3937 = vld [vmem:[%s2 + $0x148] sm:$0xf]
      %v3938 = vld [vmem:[%s2 + $0x15c] sm:$0xf]
      %v3939 = vld [vmem:[%s2 + $0x170] sm:$0xf]
      %v3940 = vld [vmem:[%s2 + $0x184] sm:$0xf]
      %v3941 = vld [vmem:[%s2 + $0x198] sm:$0xf]
      %v3942 = vld [vmem:[%s2 + $0x1ac] sm:$0xf]
      %v3943 = vld [vmem:[%s2 + $0x1c0] sm:$0xf]
      %v3944 = vld [vmem:[%s2 + $0x1d4] sm:$0xf]
      %v3945 = vld [vmem:[%s2 + $0x1e8] sm:$0xf]
      %v3946 = vld [vmem:[%s2 + $0x1fc] sm:$0xf]
      %v3947 = vld [vmem:[%s2 + $0x210] sm:$0xf]
      %v3948 = vld [vmem:[%s2 + $0x224] sm:$0xf]
      %v3949 = vld [vmem:[%s2 + $0x238] sm:$0xf]
      %v3950 = vld [vmem:[%s2 + $0x24c] sm:$0xf]
      %v3951 = vld [vmem:[%s2 + $0x260] sm:$0xf]
      %v3952 = vld [vmem:[%s2 + $0x274] sm:$0xf]
      %v3953 = vld [vmem:[%s2 + $0x288] sm:$0xf]
      %v3954 = vld [vmem:[%s2 + $0x29c] sm:$0xf]
      %v3955 = vld [vmem:[%s2 + $0x2b0] sm:$0xf]
      %v3956 = vld [vmem:[%s2 + $0x2c4] sm:$0xf]
      %v3957 = vld [vmem:[%s2 + $0x2d8] sm:$0xf]
      %v3958 = vld [vmem:[%s2 + $0x2ec] sm:$0xf]
      %v3959 = vld [vmem:[%s2 + $0x300] sm:$0xf]
      %v3960 = vld [vmem:[%s2 + $0x314] sm:$0xf]
      %v3961 = vld [vmem:[%s2 + $0x328] sm:$0xf]
      %v3962 = vld [vmem:[%s2 + $0x33c] sm:$0xf]
      %v3963 = vld [vmem:[%s2 + $0x350] sm:$0xf]
      %v3964 = vld [vmem:[%s2 + $0x364] sm:$0xf]
      %v3965 = vld [vmem:[%s2 + $0x378] sm:$0xf]
      %v3966 = vld [vmem:[%s2 + $0x38c] sm:$0xf]
      %v3967 = vld [vmem:[%s2 + $0x3a0] sm:$0xf]
      %v3968 = vld [vmem:[%s2 + $0x3b4] sm:$0xf]
      %v3969 = vld [vmem:[%s2 + $0x3c8] sm:$0xf]
      %v3970 = vld [vmem:[%s2 + $0x3dc] sm:$0xf]
      %v3971 = vld [vmem:[%s2 + $0x3f0] sm:$0xf]
      %v3972 = vld [vmem:[%s2 + $0x404] sm:$0xf]
      %v3973 = vld [vmem:[%s2 + $0x418] sm:$0xf]
      %v3974 = vld [vmem:[%s2 + $0x42c] sm:$0xf]
      %v3975 = vld [vmem:[%s2 + $0x440] sm:$0xf]
      %v3976 = vld [vmem:[%s2 + $0x454] sm:$0xf]
      %v3977 = vld [vmem:[%s2 + $0x468] sm:$0xf]
      %v3978 = vld [vmem:[%s2 + $0x47c] sm:$0xf]
      %v3979 = vld [vmem:[%s2 + $0x490] sm:$0xf]
      %v3980 = vld [vmem:[%s2 + $0x4a4] sm:$0xf]
      %v3981 = vld [vmem:[%s2 + $0x4b8] sm:$0xf]
      %v3982 = vld [vmem:[%s2 + $0x4cc] sm:$0xf]
      %v3983 = vld [vmem:[%s2 + $0x4e0] sm:$0xf]
      %v3984 = vld [vmem:[%s2 + $0x4f4] sm:$0xf]
      %v3985 = vld [vmem:[%s2 + $0x508] sm:$0xf]
      %v3986 = vld [vmem:[%s2 + $0x51c] sm:$0xf]
      %v3987 = vld [vmem:[%s2 + $0x530] sm:$0xf]
      %v3988 = vld [vmem:[%s2 + $0x544] sm:$0xf]
      %v3989 = vld [vmem:[%s2 + $0x558] sm:$0xf]
      %v3990 = vld [vmem:[%s2 + $0x56c] sm:$0xf]
      %v3991 = vld [vmem:[%s2 + $0x580] sm:$0xf]
      %v3992 = vld [vmem:[%s2 + $0x594] sm:$0xf]
      %v3993 = vld [vmem:[%s2 + $0x5a8] sm:$0xf]
      %v3994 = vld [vmem:[%s2 + $0x5bc] sm:$0xf]
      %v3995 = vld [vmem:[%s2 + $0x5d0] sm:$0xf]
      %v3996 = vld [vmem:[%s2 + $0x5e4] sm:$0xf]
      %v3997 = vld [vmem:[%s2 + $0x5f8] sm:$0xf]
      %v3998 = vld [vmem:[%s2 + $0x60c] sm:$0xf]
      %v3999 = vld [vmem:[%s2 + $0x620] sm:$0xf]
      %v4000 = vld [vmem:[%s2 + $0x634] sm:$0xf]
      %v4001 = vld [vmem:[%s2 + $0x648] sm:$0xf]
      %v4002 = vld [vmem:[%s2 + $0x65c] sm:$0xf]
      %v4003 = vld [vmem:[%s2 + $0x670] sm:$0xf]
      %v4004 = vld [vmem:[%s2 + $0x684] sm:$0xf]
      %v4005 = vld [vmem:[%s2 + $0x698] sm:$0xf]
      %v4006 = vld [vmem:[%s2 + $0x6ac] sm:$0xf]
      %v4007 = vld [vmem:[%s2 + $0x6c0] sm:$0xf]
      %v4008 = vld [vmem:[%s2 + $0x6d4] sm:$0xf]
      %v4009 = vld [vmem:[%s2 + $0x6e8] sm:$0xf]
      %v4010 = vld [vmem:[%s2 + $0x6fc] sm:$0xf]
      %v4011 = vld [vmem:[%s2 + $0x710] sm:$0xf]
      %v4012 = vld [vmem:[%s2 + $0x724] sm:$0xf]
      %v4013 = vld [vmem:[%s2 + $0x738] sm:$0xf]
      %v4014 = vld [vmem:[%s2 + $0x74c] sm:$0xf]
      %v4015 = vld [vmem:[%s2 + $0x760] sm:$0xf]
      %v4016 = vld [vmem:[%s2 + $0x774] sm:$0xf]
      %v4017 = vld [vmem:[%s2 + $0x788] sm:$0xf]
      %v4018 = vld [vmem:[%s2 + $0x79c] sm:$0xf]
      %v4019 = vld [vmem:[%s2 + $0x7b0] sm:$0xf]
      %v4020 = vld [vmem:[%s2 + $0x7c4] sm:$0xf]
      %v4021 = vld [vmem:[%s2 + $0x7d8] sm:$0xf]
      %v4022 = vld [vmem:[%s2 + $0x7ec] sm:$0xf]
      %v4023 = vld [vmem:[%s2 + $0x800] sm:$0xf]
      %v4024 = vld [vmem:[%s2 + $0x814] sm:$0xf]
      %v4025 = vld [vmem:[%s2 + $0x828] sm:$0xf]
      %v4026 = vld [vmem:[%s2 + $0x83c] sm:$0xf]
      %v4027 = vld [vmem:[%s2 + $0x850] sm:$0xf]
      %v4028 = vld [vmem:[%s2 + $0x864] sm:$0xf]
      %v4029 = vld [vmem:[%s2 + $0x878] sm:$0xf]
      %v4030 = vld [vmem:[%s2 + $0x88c] sm:$0xf]
      %v4031 = vld [vmem:[%s2 + $0x8a0] sm:$0xf]
      %v4032 = vld [vmem:[%s2 + $0x8b4] sm:$0xf]
      %v4033 = vld [vmem:[%s2 + $0x8c8] sm:$0xf]
      %v4034 = vld [vmem:[%s2 + $0x8dc] sm:$0xf]
      %v4035 = vld [vmem:[%s2 + $0x8f0] sm:$0xf]
      %v4036 = vld [vmem:[%s2 + $0x904] sm:$0xf]
      %v4037 = vld [vmem:[%s2 + $0x918] sm:$0xf]
      %v4038 = vld [vmem:[%s2 + $0x92c] sm:$0xf]
      %v4039 = vld [vmem:[%s2 + $0x940] sm:$0xf]
      %v4040 = vld [vmem:[%s2 + $0x954] sm:$0xf]
      %v4041 = vld [vmem:[%s2 + $0x968] sm:$0xf]
      %v4042 = vld [vmem:[%s2 + $0x97c] sm:$0xf]
      %v4043 = vld [vmem:[%s2 + $0x990] sm:$0xf]
      %v4044 = vld [vmem:[%s2 + $0x9a4] sm:$0xf]
      %v4045 = vld [vmem:[%s2 + $0x9b8] sm:$0xf]
      %v4046 = vld [vmem:[%s2 + $0x9cc] sm:$0xf]
      %v4047 = vld [vmem:[%s2 + $0x9e0] sm:$0xf]
      %v4048 = vld [vmem:[%s2 + $0x9f4] sm:$0xf]
      %v4177 = vunpack.c.l.b16 %v3921
      %v4178 = vunpack.c.l.b16 %v3922
      %v4179 = vunpack.c.l.b16 %v3923
      %v4180 = vunpack.c.l.b16 %v3924
      %v4181 = vunpack.c.l.b16 %v3925
      %v4182 = vunpack.c.l.b16 %v3926
      %v4183 = vunpack.c.l.b16 %v3927
      %v4184 = vunpack.c.l.b16 %v3928
      %v4185 = vunpack.c.l.b16 %v3929
      %v4186 = vunpack.c.l.b16 %v3930
      %v4187 = vunpack.c.l.b16 %v3931
      %v4188 = vunpack.c.l.b16 %v3932
      %v4189 = vunpack.c.l.b16 %v3933
      %v4190 = vunpack.c.l.b16 %v3934
      %v4191 = vunpack.c.l.b16 %v3935
      %v4192 = vunpack.c.l.b16 %v3936
      %v4193 = vunpack.c.l.b16 %v3937
      %v4194 = vunpack.c.l.b16 %v3938
      %v4195 = vunpack.c.l.b16 %v3939
      %v4196 = vunpack.c.l.b16 %v3940
      %v4197 = vunpack.c.l.b16 %v3941
      %v4198 = vunpack.c.l.b16 %v3942
      %v4199 = vunpack.c.l.b16 %v3943
      %v4200 = vunpack.c.l.b16 %v3944
      %v4201 = vunpack.c.l.b16 %v3945
      %v4202 = vunpack.c.l.b16 %v3946
      %v4203 = vunpack.c.l.b16 %v3947
      %v4204 = vunpack.c.l.b16 %v3948
      %v4205 = vunpack.c.l.b16 %v3949
      %v4206 = vunpack.c.l.b16 %v3950
      %v4207 = vunpack.c.l.b16 %v3951
      %v4208 = vunpack.c.l.b16 %v3952
      %v4209 = vunpack.c.l.b16 %v3953
      %v4210 = vunpack.c.l.b16 %v3954
      %v4211 = vunpack.c.l.b16 %v3955
      %v4212 = vunpack.c.l.b16 %v3956
      %v4213 = vunpack.c.l.b16 %v3957
      %v4214 = vunpack.c.l.b16 %v3958
      %v4215 = vunpack.c.l.b16 %v3959
      %v4216 = vunpack.c.l.b16 %v3960
      %v4217 = vunpack.c.l.b16 %v3961
      %v4218 = vunpack.c.l.b16 %v3962
      %v4219 = vunpack.c.l.b16 %v3963
      %v4220 = vunpack.c.l.b16 %v3964
      %v4221 = vunpack.c.l.b16 %v3965
      %v4222 = vunpack.c.l.b16 %v3966
      %v4223 = vunpack.c.l.b16 %v3967
      %v4224 = vunpack.c.l.b16 %v3968
      %v4225 = vunpack.c.l.b16 %v3969
      %v4226 = vunpack.c.l.b16 %v3970
      %v4227 = vunpack.c.l.b16 %v3971
      %v4228 = vunpack.c.l.b16 %v3972
      %v4229 = vunpack.c.l.b16 %v3973
      %v4230 = vunpack.c.l.b16 %v3974
      %v4231 = vunpack.c.l.b16 %v3975
      %v4232 = vunpack.c.l.b16 %v3976
      %v4233 = vunpack.c.l.b16 %v3977
      %v4234 = vunpack.c.l.b16 %v3978
      %v4235 = vunpack.c.l.b16 %v3979
      %v4236 = vunpack.c.l.b16 %v3980
      %v4237 = vunpack.c.l.b16 %v3981
      %v4238 = vunpack.c.l.b16 %v3982
      %v4239 = vunpack.c.l.b16 %v3983
      %v4240 = vunpack.c.l.b16 %v3984
      %v4241 = vunpack.c.l.b16 %v3985
      %v4242 = vunpack.c.l.b16 %v3986
      %v4243 = vunpack.c.l.b16 %v3987
      %v4244 = vunpack.c.l.b16 %v3988
      %v4245 = vunpack.c.l.b16 %v3989
      %v4246 = vunpack.c.l.b16 %v3990
      %v4247 = vunpack.c.l.b16 %v3991
      %v4248 = vunpack.c.l.b16 %v3992
      %v4249 = vunpack.c.l.b16 %v3993
      %v4250 = vunpack.c.l.b16 %v3994
      %v4251 = vunpack.c.l.b16 %v3995
      %v4252 = vunpack.c.l.b16 %v3996
      %v4253 = vunpack.c.l.b16 %v3997
      %v4254 = vunpack.c.l.b16 %v3998
      %v4255 = vunpack.c.l.b16 %v3999
      %v4256 = vunpack.c.l.b16 %v4000
      %v4257 = vunpack.c.l.b16 %v4001
      %v4258 = vunpack.c.l.b16 %v4002
      %v4259 = vunpack.c.l.b16 %v4003
      %v4260 = vunpack.c.l.b16 %v4004
      %v4261 = vunpack.c.l.b16 %v4005
      %v4262 = vunpack.c.l.b16 %v4006
      %v4263 = vunpack.c.l.b16 %v4007
      %v4264 = vunpack.c.l.b16 %v4008
      %v4265 = vunpack.c.l.b16 %v4009
      %v4266 = vunpack.c.l.b16 %v4010
      %v4267 = vunpack.c.l.b16 %v4011
      %v4268 = vunpack.c.l.b16 %v4012
      %v4269 = vunpack.c.l.b16 %v4013
      %v4270 = vunpack.c.l.b16 %v4014
      %v4271 = vunpack.c.l.b16 %v4015
      %v4272 = vunpack.c.l.b16 %v4016
      %v4273 = vunpack.c.l.b16 %v4017
      %v4274 = vunpack.c.l.b16 %v4018
      %v4275 = vunpack.c.l.b16 %v4019
      %v4276 = vunpack.c.l.b16 %v4020
      %v4277 = vunpack.c.l.b16 %v4021
      %v4278 = vunpack.c.l.b16 %v4022
      %v4279 = vunpack.c.l.b16 %v4023
      %v4280 = vunpack.c.l.b16 %v4024
      %v4281 = vunpack.c.l.b16 %v4025
      %v4282 = vunpack.c.l.b16 %v4026
      %v4283 = vunpack.c.l.b16 %v4027
      %v4284 = vunpack.c.l.b16 %v4028
      %v4285 = vunpack.c.l.b16 %v4029
      %v4286 = vunpack.c.l.b16 %v4030
      %v4287 = vunpack.c.l.b16 %v4031
      %v4288 = vunpack.c.l.b16 %v4032
      %v4289 = vunpack.c.l.b16 %v4033
      %v4290 = vunpack.c.l.b16 %v4034
      %v4291 = vunpack.c.l.b16 %v4035
      %v4292 = vunpack.c.l.b16 %v4036
      %v4293 = vunpack.c.l.b16 %v4037
      %v4294 = vunpack.c.l.b16 %v4038
      %v4295 = vunpack.c.l.b16 %v4039
      %v4296 = vunpack.c.l.b16 %v4040
      %v4297 = vunpack.c.l.b16 %v4041
      %v4298 = vunpack.c.l.b16 %v4042
      %v4299 = vunpack.c.l.b16 %v4043
      %v4300 = vunpack.c.l.b16 %v4044
      %v4301 = vunpack.c.l.b16 %v4045
      %v4302 = vunpack.c.l.b16 %v4046
      %v4303 = vunpack.c.l.b16 %v4047
      %v4304 = vunpack.c.l.b16 %v4048
      %v4305 = vpack.c.b16 %v4178, %v4177
      %v4306 = vpack.c.b16 %v4180, %v4179
      %v4307 = vpack.c.b16 %v4182, %v4181
      %v4308 = vpack.c.b16 %v4184, %v4183
      %v4309 = vpack.c.b16 %v4186, %v4185
      %v4310 = vpack.c.b16 %v4188, %v4187
      %v4311 = vpack.c.b16 %v4190, %v4189
      %v4312 = vpack.c.b16 %v4192, %v4191
      %v4313 = vpack.c.b16 %v4194, %v4193
      %v4314 = vpack.c.b16 %v4196, %v4195
      %v4315 = vpack.c.b16 %v4198, %v4197
      %v4316 = vpack.c.b16 %v4200, %v4199
      %v4317 = vpack.c.b16 %v4202, %v4201
      %v4318 = vpack.c.b16 %v4204, %v4203
      %v4319 = vpack.c.b16 %v4206, %v4205
      %v4320 = vpack.c.b16 %v4208, %v4207
      %v4321 = vpack.c.b16 %v4210, %v4209
      %v4322 = vpack.c.b16 %v4212, %v4211
      %v4323 = vpack.c.b16 %v4214, %v4213
      %v4324 = vpack.c.b16 %v4216, %v4215
      %v4325 = vpack.c.b16 %v4218, %v4217
      %v4326 = vpack.c.b16 %v4220, %v4219
      %v4327 = vpack.c.b16 %v4222, %v4221
      %v4328 = vpack.c.b16 %v4224, %v4223
      %v4329 = vpack.c.b16 %v4226, %v4225
      %v4330 = vpack.c.b16 %v4228, %v4227
      %v4331 = vpack.c.b16 %v4230, %v4229
      %v4332 = vpack.c.b16 %v4232, %v4231
      %v4333 = vpack.c.b16 %v4234, %v4233
      %v4334 = vpack.c.b16 %v4236, %v4235
      %v4335 = vpack.c.b16 %v4238, %v4237
      %v4336 = vpack.c.b16 %v4240, %v4239
      %v4337 = vpack.c.b16 %v4242, %v4241
      %v4338 = vpack.c.b16 %v4244, %v4243
      %v4339 = vpack.c.b16 %v4246, %v4245
      %v4340 = vpack.c.b16 %v4248, %v4247
      %v4341 = vpack.c.b16 %v4250, %v4249
      %v4342 = vpack.c.b16 %v4252, %v4251
      %v4343 = vpack.c.b16 %v4254, %v4253
      %v4344 = vpack.c.b16 %v4256, %v4255
      %v4345 = vpack.c.b16 %v4258, %v4257
      %v4346 = vpack.c.b16 %v4260, %v4259
      %v4347 = vpack.c.b16 %v4262, %v4261
      %v4348 = vpack.c.b16 %v4264, %v4263
      %v4349 = vpack.c.b16 %v4266, %v4265
      %v4350 = vpack.c.b16 %v4268, %v4267
      %v4351 = vpack.c.b16 %v4270, %v4269
      %v4352 = vpack.c.b16 %v4272, %v4271
      %v4353 = vpack.c.b16 %v4274, %v4273
      %v4354 = vpack.c.b16 %v4276, %v4275
      %v4355 = vpack.c.b16 %v4278, %v4277
      %v4356 = vpack.c.b16 %v4280, %v4279
      %v4357 = vpack.c.b16 %v4282, %v4281
      %v4358 = vpack.c.b16 %v4284, %v4283
      %v4359 = vpack.c.b16 %v4286, %v4285
      %v4360 = vpack.c.b16 %v4288, %v4287
      %v4361 = vpack.c.b16 %v4290, %v4289
      %v4362 = vpack.c.b16 %v4292, %v4291
      %v4363 = vpack.c.b16 %v4294, %v4293
      %v4364 = vpack.c.b16 %v4296, %v4295
      %v4365 = vpack.c.b16 %v4298, %v4297
      %v4366 = vpack.c.b16 %v4300, %v4299
      %v4367 = vpack.c.b16 %v4302, %v4301
      %v4368 = vpack.c.b16 %v4304, %v4303
      %4433 = vmatprep.subr.bf16.mxu0 0
      %4434 = vmatpush1.bf16.msra.mxu0 %v4305
      %4435 = vmatprep.subr.bf16.mxu0 0
      %4436 = vmatpush1.bf16.msra.mxu0 %v4306
      %4437 = vmatprep.subr.bf16.mxu0 0
      %4438 = vmatpush1.bf16.msra.mxu0 %v4307
      %4439 = vmatprep.subr.bf16.mxu0 0
      %4440 = vmatpush1.bf16.msra.mxu0 %v4308
      %4441 = vmatprep.subr.bf16.mxu0 0
      %4442 = vmatpush1.bf16.msra.mxu0 %v4309
      %4443 = vmatprep.subr.bf16.mxu0 0
      %4444 = vmatpush1.bf16.msra.mxu0 %v4310
      %4445 = vmatprep.subr.bf16.mxu0 0
      %4446 = vmatpush1.bf16.msra.mxu0 %v4311
      %4447 = vmatprep.subr.bf16.mxu0 0
      %4448 = vmatpush1.bf16.msra.mxu0 %v4312
      %4449 = vmatprep.subr.bf16.mxu0 0
      %4450 = vmatpush1.bf16.msra.mxu0 %v4313
      %4451 = vmatprep.subr.bf16.mxu0 0
      %4452 = vmatpush1.bf16.msra.mxu0 %v4314
      %4453 = vmatprep.subr.bf16.mxu0 0
      %4454 = vmatpush1.bf16.msra.mxu0 %v4315
      %4455 = vmatprep.subr.bf16.mxu0 0
      %4456 = vmatpush1.bf16.msra.mxu0 %v4316
      %4457 = vmatprep.subr.bf16.mxu0 0
      %4458 = vmatpush1.bf16.msra.mxu0 %v4317
      %4459 = vmatprep.subr.bf16.mxu0 0
      %4460 = vmatpush1.bf16.msra.mxu0 %v4318
      %4461 = vmatprep.subr.bf16.mxu0 0
      %4462 = vmatpush1.bf16.msra.mxu0 %v4319
      %4463 = vmatprep.subr.bf16.mxu0 0
      %4464 = vmatpush1.bf16.msra.mxu0 %v4320
      %4465 = vmatprep.mubr.bf16.mxu0 %v402
      %4466 = vmatmul.mubr.bf16.gmra.mrb[0].mxu0 %v401
      %v4467 = vpop.f32.mrb[0].mxu0
      %v4468 = vadd.f32 0.0, %v4467
      %v4469 = vpop.f32.mrb[0].mxu0
      %v4470 = vpop.f32.mrb[0].mxu0
      %v4471 = vadd.f32 0.0, %v4470
      %v4472 = vpop.f32.mrb[0].mxu0
      %4473 = vdwg.mxu0
      %4474 = vmatprep.subr.bf16.mxu0 0
      %4475 = vmatpush1.bf16.msra.mxu0 %v4321
      %4476 = vmatprep.subr.bf16.mxu0 0
      %4477 = vmatpush1.bf16.msra.mxu0 %v4322
      %4478 = vmatprep.subr.bf16.mxu0 0
      %4479 = vmatpush1.bf16.msra.mxu0 %v4323
      %4480 = vmatprep.subr.bf16.mxu0 0
      %4481 = vmatpush1.bf16.msra.mxu0 %v4324
      %4482 = vmatprep.subr.bf16.mxu0 0
      %4483 = vmatpush1.bf16.msra.mxu0 %v4325
      %4484 = vmatprep.subr.bf16.mxu0 0
      %4485 = vmatpush1.bf16.msra.mxu0 %v4326
      %4486 = vmatprep.subr.bf16.mxu0 0
      %4487 = vmatpush1.bf16.msra.mxu0 %v4327
      %4488 = vmatprep.subr.bf16.mxu0 0
      %4489 = vmatpush1.bf16.msra.mxu0 %v4328
      %4490 = vmatprep.subr.bf16.mxu0 0
      %4491 = vmatpush1.bf16.msra.mxu0 %v4329
      %4492 = vmatprep.subr.bf16.mxu0 0
      %4493 = vmatpush1.bf16.msra.mxu0 %v4330
      %4494 = vmatprep.subr.bf16.mxu0 0
      %4495 = vmatpush1.bf16.msra.mxu0 %v4331
      %4496 = vmatprep.subr.bf16.mxu0 0
      %4497 = vmatpush1.bf16.msra.mxu0 %v4332
      %4498 = vmatprep.subr.bf16.mxu0 0
      %4499 = vmatpush1.bf16.msra.mxu0 %v4333
      %4500 = vmatprep.subr.bf16.mxu0 0
      %4501 = vmatpush1.bf16.msra.mxu0 %v4334
      %4502 = vmatprep.subr.bf16.mxu0 0
      %4503 = vmatpush1.bf16.msra.mxu0 %v4335
      %4504 = vmatprep.subr.bf16.mxu0 0
      %4505 = vmatpush1.bf16.msra.mxu0 %v4336
      %4506 = vmatprep.mubr.bf16.mxu0 %v404
      %4507 = vmatmul.mubr.bf16.gmra.mrb[0].mxu0 %v403
      %v4508 = vpop.f32.mrb[0].mxu0
      %v4509 = vadd.f32 %v4468, %v4508
      %v4510 = vpop.f32.mrb[0].mxu0
      %v4511 = vpop.f32.mrb[0].mxu0
      %v4512 = vadd.f32 %v4471, %v4511
      %v4513 = vpop.f32.mrb[0].mxu0
      %4514 = vdwg.mxu0
      %4515 = vmatprep.subr.bf16.mxu0 0
      %4516 = vmatpush1.bf16.msra.mxu0 %v4337
      %4517 = vmatprep.subr.bf16.mxu0 0
      %4518 = vmatpush1.bf16.msra.mxu0 %v4338
      %4519 = vmatprep.subr.bf16.mxu0 0
      %4520 = vmatpush1.bf16.msra.mxu0 %v4339
      %4521 = vmatprep.subr.bf16.mxu0 0
      %4522 = vmatpush1.bf16.msra.mxu0 %v4340
      %4523 = vmatprep.subr.bf16.mxu0 0
      %4524 = vmatpush1.bf16.msra.mxu0 %v4341
      %4525 = vmatprep.subr.bf16.mxu0 0
      %4526 = vmatpush1.bf16.msra.mxu0 %v4342
      %4527 = vmatprep.subr.bf16.mxu0 0
      %4528 = vmatpush1.bf16.msra.mxu0 %v4343
      %4529 = vmatprep.subr.bf16.mxu0 0
      %4530 = vmatpush1.bf16.msra.mxu0 %v4344
      %4531 = vmatprep.subr.bf16.mxu0 0
      %4532 = vmatpush1.bf16.msra.mxu0 %v4345
      %4533 = vmatprep.subr.bf16.mxu0 0
      %4534 = vmatpush1.bf16.msra.mxu0 %v4346
      %4535 = vmatprep.subr.bf16.mxu0 0
      %4536 = vmatpush1.bf16.msra.mxu0 %v4347
      %4537 = vmatprep.subr.bf16.mxu0 0
      %4538 = vmatpush1.bf16.msra.mxu0 %v4348
      %4539 = vmatprep.subr.bf16.mxu0 0
      %4540 = vmatpush1.bf16.msra.mxu0 %v4349
      %4541 = vmatprep.subr.bf16.mxu0 0
      %4542 = vmatpush1.bf16.msra.mxu0 %v4350
      %4543 = vmatprep.subr.bf16.mxu0 0
      %4544 = vmatpush1.bf16.msra.mxu0 %v4351
      %4545 = vmatprep.subr.bf16.mxu0 0
      %4546 = vmatpush1.bf16.msra.mxu0 %v4352
      %4547 = vmatprep.mubr.bf16.mxu0 %v406
      %4548 = vmatmul.mubr.bf16.gmra.mrb[0].mxu0 %v405
      %v4549 = vpop.f32.mrb[0].mxu0
      %v4550 = vadd.f32 %v4509, %v4549
      %v4551 = vpop.f32.mrb[0].mxu0
      %v4552 = vpop.f32.mrb[0].mxu0
      %v4553 = vadd.f32 %v4512, %v4552
      %v4554 = vpop.f32.mrb[0].mxu0
      %4555 = vdwg.mxu0
      %4556 = vmatprep.subr.bf16.mxu0 0
      %4557 = vmatpush1.bf16.msra.mxu0 %v4353
      %4558 = vmatprep.subr.bf16.mxu0 0
      %4559 = vmatpush1.bf16.msra.mxu0 %v4354
      %4560 = vmatprep.subr.bf16.mxu0 0
      %4561 = vmatpush1.bf16.msra.mxu0 %v4355
      %4562 = vmatprep.subr.bf16.mxu0 0
      %4563 = vmatpush1.bf16.msra.mxu0 %v4356
      %4564 = vmatprep.subr.bf16.mxu0 0
      %4565 = vmatpush1.bf16.msra.mxu0 %v4357
      %4566 = vmatprep.subr.bf16.mxu0 0
      %4567 = vmatpush1.bf16.msra.mxu0 %v4358
      %4568 = vmatprep.subr.bf16.mxu0 0
      %4569 = vmatpush1.bf16.msra.mxu0 %v4359
      %4570 = vmatprep.subr.bf16.mxu0 0
      %4571 = vmatpush1.bf16.msra.mxu0 %v4360
      %4572 = vmatprep.subr.bf16.mxu0 0
      %4573 = vmatpush1.bf16.msra.mxu0 %v4361
      %4574 = vmatprep.subr.bf16.mxu0 0
      %4575 = vmatpush1.bf16.msra.mxu0 %v4362
      %4576 = vmatprep.subr.bf16.mxu0 0
      %4577 = vmatpush1.bf16.msra.mxu0 %v4363
      %4578 = vmatprep.subr.bf16.mxu0 0
      %4579 = vmatpush1.bf16.msra.mxu0 %v4364
      %4580 = vmatprep.subr.bf16.mxu0 0
      %4581 = vmatpush1.bf16.msra.mxu0 %v4365
      %4582 = vmatprep.subr.bf16.mxu0 0
      %4583 = vmatpush1.bf16.msra.mxu0 %v4366
      %4584 = vmatprep.subr.bf16.mxu0 0
      %4585 = vmatpush1.bf16.msra.mxu0 %v4367
      %4586 = vmatprep.subr.bf16.mxu0 0
      %4587 = vmatpush1.bf16.msra.mxu0 %v4368
      %4588 = vmatprep.mubr.bf16.mxu0 %v408
      %4589 = vmatmul.mubr.bf16.gmra.mrb[0].mxu0 %v407
      %v4590 = vpop.f32.mrb[0].mxu0
      %v4591 = vadd.f32 %v4550, %v4590
      %v4592 = vpop.f32.mrb[0].mxu0
      %v4593 = vpop.f32.mrb[0].mxu0
      %v4594 = vadd.f32 %v4553, %v4593
      %v4595 = vpop.f32.mrb[0].mxu0
      %4596 = vdwg.mxu0
      %v4597 = vmul.f32 %v3915, %v3915
      %v4598 = vmul.f32 %v3918, %v3918
      %v4599 = vmul.f32 %v4591, %v4591
      %v4600 = vmul.f32 %v4594, %v4594
      %v4601 = vadd.f32 %v4597, %v4599
      %v4602 = vadd.f32 %v4598, %v4600
      %v4603 = vrsqrt.pop %v4601
      %v4604 = vmul.f32 %v4601, %v4603
      %vm4605 = vcmp.eq.f32.partialorder %v4601, inf
      %v4606 = vsel %vm4605, %v4601, %v4604
      %vm4607 = vcmp.eq.f32.partialorder %v4601, 0.0
      %v4608 = vand.u32 %v4601, 2147483648
      %v4609 = vsel %vm4607, %v4608, %v4606
      %v4610 = vrsqrt.pop %v4602
      %v4611 = vmul.f32 %v4602, %v4610
      %vm4612 = vcmp.eq.f32.partialorder %v4602, inf
      %v4613 = vsel %vm4612, %v4602, %v4611
      %vm4614 = vcmp.eq.f32.partialorder %v4602, 0.0
      %v4615 = vand.u32 %v4602, 2147483648
      %v4616 = vsel %vm4614, %v4615, %v4613
      %v4617 = vpack.c.bf16 %v4616, %v4609
      %v4618 = vld [vmem:[%s3 + $0x80] sm:$0xf]
      %v4619 = vld [vmem:[%s3 + $0x84] sm:$0xf]
      %v4620 = vld [vmem:[%s3 + $0x88] sm:$0xf]
      %v4621 = vld [vmem:[%s3 + $0x8c] sm:$0xf]
      %v4622 = vld [vmem:[%s3 + $0x90] sm:$0xf]
      %v4623 = vld [vmem:[%s3 + $0x94] sm:$0xf]
      %v4624 = vld [vmem:[%s3 + $0x98] sm:$0xf]
      %v4625 = vld [vmem:[%s3 + $0x9c] sm:$0xf]
      %v4626 = vld [vmem:[%s3 + $0xa0] sm:$0xf]
      %v4627 = vld [vmem:[%s3 + $0xa4] sm:$0xf]
      %v4628 = vld [vmem:[%s3 + $0xa8] sm:$0xf]
      %v4629 = vld [vmem:[%s3 + $0xac] sm:$0xf]
      %v4630 = vld [vmem:[%s3 + $0xb0] sm:$0xf]
      %v4631 = vld [vmem:[%s3 + $0xb4] sm:$0xf]
      %v4632 = vld [vmem:[%s3 + $0xb8] sm:$0xf]
      %v4633 = vld [vmem:[%s3 + $0xbc] sm:$0xf]
      %v4650 = vunpack.c.l.b16 %v4618
      %v4651 = vunpack.c.l.b16 %v4619
      %v4652 = vunpack.c.l.b16 %v4620
      %v4653 = vunpack.c.l.b16 %v4621
      %v4654 = vunpack.c.l.b16 %v4622
      %v4655 = vunpack.c.l.b16 %v4623
      %v4656 = vunpack.c.l.b16 %v4624
      %v4657 = vunpack.c.l.b16 %v4625
      %v4658 = vunpack.c.l.b16 %v4626
      %v4659 = vunpack.c.l.b16 %v4627
      %v4660 = vunpack.c.l.b16 %v4628
      %v4661 = vunpack.c.l.b16 %v4629
      %v4662 = vunpack.c.l.b16 %v4630
      %v4663 = vunpack.c.l.b16 %v4631
      %v4664 = vunpack.c.l.b16 %v4632
      %v4665 = vunpack.c.l.b16 %v4633
      %v4666 = vpack.c.b16 %v4651, %v4650
      %v4667 = vpack.c.b16 %v4653, %v4652
      %v4668 = vpack.c.b16 %v4655, %v4654
      %v4669 = vpack.c.b16 %v4657, %v4656
      %v4670 = vpack.c.b16 %v4659, %v4658
      %v4671 = vpack.c.b16 %v4661, %v4660
      %v4672 = vpack.c.b16 %v4663, %v4662
      %v4673 = vpack.c.b16 %v4665, %v4664
      %4682 = vmatprep.subr.bf16.mxu0 0
      %4683 = vmatpush1.bf16.msra.mxu0 %v4666
      %4684 = vmatprep.subr.bf16.mxu0 0
      %4685 = vmatpush1.bf16.msra.mxu0 %v4667
      %4686 = vmatprep.subr.bf16.mxu0 0
      %4687 = vmatpush1.bf16.msra.mxu0 %v4668
      %4688 = vmatprep.subr.bf16.mxu0 0
      %4689 = vmatpush1.bf16.msra.mxu0 %v4669
      %4690 = vmatprep.subr.bf16.mxu0 0
      %4691 = vmatpush1.bf16.msra.mxu0 %v4670
      %4692 = vmatprep.subr.bf16.mxu0 0
      %4693 = vmatpush1.bf16.msra.mxu0 %v4671
      %4694 = vmatprep.subr.bf16.mxu0 0
      %4695 = vmatpush1.bf16.msra.mxu0 %v4672
      %4696 = vmatprep.subr.bf16.mxu0 0
      %4697 = vmatpush1.bf16.msra.mxu0 %v4673
      %4698 = vmatprep.subr.bf16.mxu0 0
      %4699 = vmatpush1.bf16.msra.mxu0 0
      %4700 = vmatprep.subr.bf16.mxu0 0
      %4701 = vmatpush1.bf16.msra.mxu0 0
      %4702 = vmatprep.subr.bf16.mxu0 0
      %4703 = vmatpush1.bf16.msra.mxu0 0
      %4704 = vmatprep.subr.bf16.mxu0 0
      %4705 = vmatpush1.bf16.msra.mxu0 0
      %4706 = vmatprep.subr.bf16.mxu0 0
      %4707 = vmatpush1.bf16.msra.mxu0 0
      %4708 = vmatprep.subr.bf16.mxu0 0
      %4709 = vmatpush1.bf16.msra.mxu0 0
      %4710 = vmatprep.subr.bf16.mxu0 0
      %4711 = vmatpush1.bf16.msra.mxu0 0
      %4712 = vmatprep.subr.bf16.mxu0 0
      %4713 = vmatpush1.bf16.msra.mxu0 0
      %4714 = vmatprep.mubr.bf16.mxu0 0
      %4715 = vmatmul.mubr.bf16.gmra.mrb[0].mxu0 %v4617
      %v4716 = vpop.f32.mrb[0].mxu0
      %v4717 = vadd.f32 0.0, %v4716
      %v4718 = vpop.f32.mrb[0].mxu0
      %v4719 = vpop.f32.mrb[0].mxu0
      %v4720 = vadd.f32 0.0, %v4719
      %v4721 = vpop.f32.mrb[0].mxu0
      %4722 = vdwg.mxu0
      %v4723 = vadd.f32 %v3239, %v4717
      %v4724 = vadd.f32 %v3242, %v4720
      %v4725 = vld [vmem:[%s1 + $0xc] sm:$0xf]
      %v4726 = vld [vmem:[%s1 + $0x20] sm:$0xf]
      %v4727 = vld [vmem:[%s1 + $0x34] sm:$0xf]
      %v4728 = vld [vmem:[%s1 + $0x48] sm:$0xf]
      %v4729 = vld [vmem:[%s1 + $0x5c] sm:$0xf]
      %v4730 = vld [vmem:[%s1 + $0x70] sm:$0xf]
      %v4731 = vld [vmem:[%s1 + $0x84] sm:$0xf]
      %v4732 = vld [vmem:[%s1 + $0x98] sm:$0xf]
      %v4733 = vld [vmem:[%s1 + $0xac] sm:$0xf]
      %v4734 = vld [vmem:[%s1 + $0xc0] sm:$0xf]
      %v4735 = vld [vmem:[%s1 + $0xd4] sm:$0xf]
      %v4736 = vld [vmem:[%s1 + $0xe8] sm:$0xf]
      %v4737 = vld [vmem:[%s1 + $0xfc] sm:$0xf]
      %v4738 = vld [vmem:[%s1 + $0x110] sm:$0xf]
      %v4739 = vld [vmem:[%s1 + $0x124] sm:$0xf]
      %v4740 = vld [vmem:[%s1 + $0x138] sm:$0xf]
      %v4741 = vld [vmem:[%s1 + $0x14c] sm:$0xf]
      %v4742 = vld [vmem:[%s1 + $0x160] sm:$0xf]
      %v4743 = vld [vmem:[%s1 + $0x174] sm:$0xf]
      %v4744 = vld [vmem:[%s1 + $0x188] sm:$0xf]
      %v4745 = vld [vmem:[%s1 + $0x19c] sm:$0xf]
      %v4746 = vld [vmem:[%s1 + $0x1b0] sm:$0xf]
      %v4747 = vld [vmem:[%s1 + $0x1c4] sm:$0xf]
      %v4748 = vld [vmem:[%s1 + $0x1d8] sm:$0xf]
      %v4749 = vld [vmem:[%s1 + $0x1ec] sm:$0xf]
      %v4750 = vld [vmem:[%s1 + $0x200] sm:$0xf]
      %v4751 = vld [vmem:[%s1 + $0x214] sm:$0xf]
      %v4752 = vld [vmem:[%s1 + $0x228] sm:$0xf]
      %v4753 = vld [vmem:[%s1 + $0x23c] sm:$0xf]
      %v4754 = vld [vmem:[%s1 + $0x250] sm:$0xf]
      %v4755 = vld [vmem:[%s1 + $0x264] sm:$0xf]
      %v4756 = vld [vmem:[%s1 + $0x278] sm:$0xf]
      %v4757 = vld [vmem:[%s1 + $0x28c] sm:$0xf]
      %v4758 = vld [vmem:[%s1 + $0x2a0] sm:$0xf]
      %v4759 = vld [vmem:[%s1 + $0x2b4] sm:$0xf]
      %v4760 = vld [vmem:[%s1 + $0x2c8] sm:$0xf]
      %v4761 = vld [vmem:[%s1 + $0x2dc] sm:$0xf]
      %v4762 = vld [vmem:[%s1 + $0x2f0] sm:$0xf]
      %v4763 = vld [vmem:[%s1 + $0x304] sm:$0xf]
      %v4764 = vld [vmem:[%s1 + $0x318] sm:$0xf]
      %v4765 = vld [vmem:[%s1 + $0x32c] sm:$0xf]
      %v4766 = vld [vmem:[%s1 + $0x340] sm:$0xf]
      %v4767 = vld [vmem:[%s1 + $0x354] sm:$0xf]
      %v4768 = vld [vmem:[%s1 + $0x368] sm:$0xf]
      %v4769 = vld [vmem:[%s1 + $0x37c] sm:$0xf]
      %v4770 = vld [vmem:[%s1 + $0x390] sm:$0xf]
      %v4771 = vld [vmem:[%s1 + $0x3a4] sm:$0xf]
      %v4772 = vld [vmem:[%s1 + $0x3b8] sm:$0xf]
      %v4773 = vld [vmem:[%s1 + $0x3cc] sm:$0xf]
      %v4774 = vld [vmem:[%s1 + $0x3e0] sm:$0xf]
      %v4775 = vld [vmem:[%s1 + $0x3f4] sm:$0xf]
      %v4776 = vld [vmem:[%s1 + $0x408] sm:$0xf]
      %v4777 = vld [vmem:[%s1 + $0x41c] sm:$0xf]
      %v4778 = vld [vmem:[%s1 + $0x430] sm:$0xf]
      %v4779 = vld [vmem:[%s1 + $0x444] sm:$0xf]
      %v4780 = vld [vmem:[%s1 + $0x458] sm:$0xf]
      %v4781 = vld [vmem:[%s1 + $0x46c] sm:$0xf]
      %v4782 = vld [vmem:[%s1 + $0x480] sm:$0xf]
      %v4783 = vld [vmem:[%s1 + $0x494] sm:$0xf]
      %v4784 = vld [vmem:[%s1 + $0x4a8] sm:$0xf]
      %v4785 = vld [vmem:[%s1 + $0x4bc] sm:$0xf]
      %v4786 = vld [vmem:[%s1 + $0x4d0] sm:$0xf]
      %v4787 = vld [vmem:[%s1 + $0x4e4] sm:$0xf]
      %v4788 = vld [vmem:[%s1 + $0x4f8] sm:$0xf]
      %v4789 = vld [vmem:[%s1 + $0x50c] sm:$0xf]
      %v4790 = vld [vmem:[%s1 + $0x520] sm:$0xf]
      %v4791 = vld [vmem:[%s1 + $0x534] sm:$0xf]
      %v4792 = vld [vmem:[%s1 + $0x548] sm:$0xf]
      %v4793 = vld [vmem:[%s1 + $0x55c] sm:$0xf]
      %v4794 = vld [vmem:[%s1 + $0x570] sm:$0xf]
      %v4795 = vld [vmem:[%s1 + $0x584] sm:$0xf]
      %v4796 = vld [vmem:[%s1 + $0x598] sm:$0xf]
      %v4797 = vld [vmem:[%s1 + $0x5ac] sm:$0xf]
      %v4798 = vld [vmem:[%s1 + $0x5c0] sm:$0xf]
      %v4799 = vld [vmem:[%s1 + $0x5d4] sm:$0xf]
      %v4800 = vld [vmem:[%s1 + $0x5e8] sm:$0xf]
      %v4801 = vld [vmem:[%s1 + $0x5fc] sm:$0xf]
      %v4802 = vld [vmem:[%s1 + $0x610] sm:$0xf]
      %v4803 = vld [vmem:[%s1 + $0x624] sm:$0xf]
      %v4804 = vld [vmem:[%s1 + $0x638] sm:$0xf]
      %v4805 = vld [vmem:[%s1 + $0x64c] sm:$0xf]
      %v4806 = vld [vmem:[%s1 + $0x660] sm:$0xf]
      %v4807 = vld [vmem:[%s1 + $0x674] sm:$0xf]
      %v4808 = vld [vmem:[%s1 + $0x688] sm:$0xf]
      %v4809 = vld [vmem:[%s1 + $0x69c] sm:$0xf]
      %v4810 = vld [vmem:[%s1 + $0x6b0] sm:$0xf]
      %v4811 = vld [vmem:[%s1 + $0x6c4] sm:$0xf]
      %v4812 = vld [vmem:[%s1 + $0x6d8] sm:$0xf]
      %v4813 = vld [vmem:[%s1 + $0x6ec] sm:$0xf]
      %v4814 = vld [vmem:[%s1 + $0x700] sm:$0xf]
      %v4815 = vld [vmem:[%s1 + $0x714] sm:$0xf]
      %v4816 = vld [vmem:[%s1 + $0x728] sm:$0xf]
      %v4817 = vld [vmem:[%s1 + $0x73c] sm:$0xf]
      %v4818 = vld [vmem:[%s1 + $0x750] sm:$0xf]
      %v4819 = vld [vmem:[%s1 + $0x764] sm:$0xf]
      %v4820 = vld [vmem:[%s1 + $0x778] sm:$0xf]
      %v4821 = vld [vmem:[%s1 + $0x78c] sm:$0xf]
      %v4822 = vld [vmem:[%s1 + $0x7a0] sm:$0xf]
      %v4823 = vld [vmem:[%s1 + $0x7b4] sm:$0xf]
      %v4824 = vld [vmem:[%s1 + $0x7c8] sm:$0xf]
      %v4825 = vld [vmem:[%s1 + $0x7dc] sm:$0xf]
      %v4826 = vld [vmem:[%s1 + $0x7f0] sm:$0xf]
      %v4827 = vld [vmem:[%s1 + $0x804] sm:$0xf]
      %v4828 = vld [vmem:[%s1 + $0x818] sm:$0xf]
      %v4829 = vld [vmem:[%s1 + $0x82c] sm:$0xf]
      %v4830 = vld [vmem:[%s1 + $0x840] sm:$0xf]
      %v4831 = vld [vmem:[%s1 + $0x854] sm:$0xf]
      %v4832 = vld [vmem:[%s1 + $0x868] sm:$0xf]
      %v4833 = vld [vmem:[%s1 + $0x87c] sm:$0xf]
      %v4834 = vld [vmem:[%s1 + $0x890] sm:$0xf]
      %v4835 = vld [vmem:[%s1 + $0x8a4] sm:$0xf]
      %v4836 = vld [vmem:[%s1 + $0x8b8] sm:$0xf]
      %v4837 = vld [vmem:[%s1 + $0x8cc] sm:$0xf]
      %v4838 = vld [vmem:[%s1 + $0x8e0] sm:$0xf]
      %v4839 = vld [vmem:[%s1 + $0x8f4] sm:$0xf]
      %v4840 = vld [vmem:[%s1 + $0x908] sm:$0xf]
      %v4841 = vld [vmem:[%s1 + $0x91c] sm:$0xf]
      %v4842 = vld [vmem:[%s1 + $0x930] sm:$0xf]
      %v4843 = vld [vmem:[%s1 + $0x944] sm:$0xf]
      %v4844 = vld [vmem:[%s1 + $0x958] sm:$0xf]
      %v4845 = vld [vmem:[%s1 + $0x96c] sm:$0xf]
      %v4846 = vld [vmem:[%s1 + $0x980] sm:$0xf]
      %v4847 = vld [vmem:[%s1 + $0x994] sm:$0xf]
      %v4848 = vld [vmem:[%s1 + $0x9a8] sm:$0xf]
      %v4849 = vld [vmem:[%s1 + $0x9bc] sm:$0xf]
      %v4850 = vld [vmem:[%s1 + $0x9d0] sm:$0xf]
      %v4851 = vld [vmem:[%s1 + $0x9e4] sm:$0xf]
      %v4852 = vld [vmem:[%s1 + $0x9f8] sm:$0xf]
      %v4981 = vunpack.c.l.b16 %v4725
      %v4982 = vunpack.c.l.b16 %v4726
      %v4983 = vunpack.c.l.b16 %v4727
      %v4984 = vunpack.c.l.b16 %v4728
      %v4985 = vunpack.c.l.b16 %v4729
      %v4986 = vunpack.c.l.b16 %v4730
      %v4987 = vunpack.c.l.b16 %v4731
      %v4988 = vunpack.c.l.b16 %v4732
      %v4989 = vunpack.c.l.b16 %v4733
      %v4990 = vunpack.c.l.b16 %v4734
      %v4991 = vunpack.c.l.b16 %v4735
      %v4992 = vunpack.c.l.b16 %v4736
      %v4993 = vunpack.c.l.b16 %v4737
      %v4994 = vunpack.c.l.b16 %v4738
      %v4995 = vunpack.c.l.b16 %v4739
      %v4996 = vunpack.c.l.b16 %v4740
      %v4997 = vunpack.c.l.b16 %v4741
      %v4998 = vunpack.c.l.b16 %v4742
      %v4999 = vunpack.c.l.b16 %v4743
      %v5000 = vunpack.c.l.b16 %v4744
      %v5001 = vunpack.c.l.b16 %v4745
      %v5002 = vunpack.c.l.b16 %v4746
      %v5003 = vunpack.c.l.b16 %v4747
      %v5004 = vunpack.c.l.b16 %v4748
      %v5005 = vunpack.c.l.b16 %v4749
      %v5006 = vunpack.c.l.b16 %v4750
      %v5007 = vunpack.c.l.b16 %v4751
      %v5008 = vunpack.c.l.b16 %v4752
      %v5009 = vunpack.c.l.b16 %v4753
      %v5010 = vunpack.c.l.b16 %v4754
      %v5011 = vunpack.c.l.b16 %v4755
      %v5012 = vunpack.c.l.b16 %v4756
      %v5013 = vunpack.c.l.b16 %v4757
      %v5014 = vunpack.c.l.b16 %v4758
      %v5015 = vunpack.c.l.b16 %v4759
      %v5016 = vunpack.c.l.b16 %v4760
      %v5017 = vunpack.c.l.b16 %v4761
      %v5018 = vunpack.c.l.b16 %v4762
      %v5019 = vunpack.c.l.b16 %v4763
      %v5020 = vunpack.c.l.b16 %v4764
      %v5021 = vunpack.c.l.b16 %v4765
      %v5022 = vunpack.c.l.b16 %v4766
      %v5023 = vunpack.c.l.b16 %v4767
      %v5024 = vunpack.c.l.b16 %v4768
      %v5025 = vunpack.c.l.b16 %v4769
      %v5026 = vunpack.c.l.b16 %v4770
      %v5027 = vunpack.c.l.b16 %v4771
      %v5028 = vunpack.c.l.b16 %v4772
      %v5029 = vunpack.c.l.b16 %v4773
      %v5030 = vunpack.c.l.b16 %v4774
      %v5031 = vunpack.c.l.b16 %v4775
      %v5032 = vunpack.c.l.b16 %v4776
      %v5033 = vunpack.c.l.b16 %v4777
      %v5034 = vunpack.c.l.b16 %v4778
      %v5035 = vunpack.c.l.b16 %v4779
      %v5036 = vunpack.c.l.b16 %v4780
      %v5037 = vunpack.c.l.b16 %v4781
      %v5038 = vunpack.c.l.b16 %v4782
      %v5039 = vunpack.c.l.b16 %v4783
      %v5040 = vunpack.c.l.b16 %v4784
      %v5041 = vunpack.c.l.b16 %v4785
      %v5042 = vunpack.c.l.b16 %v4786
      %v5043 = vunpack.c.l.b16 %v4787
      %v5044 = vunpack.c.l.b16 %v4788
      %v5045 = vunpack.c.l.b16 %v4789
      %v5046 = vunpack.c.l.b16 %v4790
      %v5047 = vunpack.c.l.b16 %v4791
      %v5048 = vunpack.c.l.b16 %v4792
      %v5049 = vunpack.c.l.b16 %v4793
      %v5050 = vunpack.c.l.b16 %v4794
      %v5051 = vunpack.c.l.b16 %v4795
      %v5052 = vunpack.c.l.b16 %v4796
      %v5053 = vunpack.c.l.b16 %v4797
      %v5054 = vunpack.c.l.b16 %v4798
      %v5055 = vunpack.c.l.b16 %v4799
      %v5056 = vunpack.c.l.b16 %v4800
      %v5057 = vunpack.c.l.b16 %v4801
      %v5058 = vunpack.c.l.b16 %v4802
      %v5059 = vunpack.c.l.b16 %v4803
      %v5060 = vunpack.c.l.b16 %v4804
      %v5061 = vunpack.c.l.b16 %v4805
      %v5062 = vunpack.c.l.b16 %v4806
      %v5063 = vunpack.c.l.b16 %v4807
      %v5064 = vunpack.c.l.b16 %v4808
      %v5065 = vunpack.c.l.b16 %v4809
      %v5066 = vunpack.c.l.b16 %v4810
      %v5067 = vunpack.c.l.b16 %v4811
      %v5068 = vunpack.c.l.b16 %v4812
      %v5069 = vunpack.c.l.b16 %v4813
      %v5070 = vunpack.c.l.b16 %v4814
      %v5071 = vunpack.c.l.b16 %v4815
      %v5072 = vunpack.c.l.b16 %v4816
      %v5073 = vunpack.c.l.b16 %v4817
      %v5074 = vunpack.c.l.b16 %v4818
      %v5075 = vunpack.c.l.b16 %v4819
      %v5076 = vunpack.c.l.b16 %v4820
      %v5077 = vunpack.c.l.b16 %v4821
      %v5078 = vunpack.c.l.b16 %v4822
      %v5079 = vunpack.c.l.b16 %v4823
      %v5080 = vunpack.c.l.b16 %v4824
      %v5081 = vunpack.c.l.b16 %v4825
      %v5082 = vunpack.c.l.b16 %v4826
      %v5083 = vunpack.c.l.b16 %v4827
      %v5084 = vunpack.c.l.b16 %v4828
      %v5085 = vunpack.c.l.b16 %v4829
      %v5086 = vunpack.c.l.b16 %v4830
      %v5087 = vunpack.c.l.b16 %v4831
      %v5088 = vunpack.c.l.b16 %v4832
      %v5089 = vunpack.c.l.b16 %v4833
      %v5090 = vunpack.c.l.b16 %v4834
      %v5091 = vunpack.c.l.b16 %v4835
      %v5092 = vunpack.c.l.b16 %v4836
      %v5093 = vunpack.c.l.b16 %v4837
      %v5094 = vunpack.c.l.b16 %v4838
      %v5095 = vunpack.c.l.b16 %v4839
      %v5096 = vunpack.c.l.b16 %v4840
      %v5097 = vunpack.c.l.b16 %v4841
      %v5098 = vunpack.c.l.b16 %v4842
      %v5099 = vunpack.c.l.b16 %v4843
      %v5100 = vunpack.c.l.b16 %v4844
      %v5101 = vunpack.c.l.b16 %v4845
      %v5102 = vunpack.c.l.b16 %v4846
      %v5103 = vunpack.c.l.b16 %v4847
      %v5104 = vunpack.c.l.b16 %v4848
      %v5105 = vunpack.c.l.b16 %v4849
      %v5106 = vunpack.c.l.b16 %v4850
      %v5107 = vunpack.c.l.b16 %v4851
      %v5108 = vunpack.c.l.b16 %v4852
      %v5109 = vpack.c.b16 %v4982, %v4981
      %v5110 = vpack.c.b16 %v4984, %v4983
      %v5111 = vpack.c.b16 %v4986, %v4985
      %v5112 = vpack.c.b16 %v4988, %v4987
      %v5113 = vpack.c.b16 %v4990, %v4989
      %v5114 = vpack.c.b16 %v4992, %v4991
      %v5115 = vpack.c.b16 %v4994, %v4993
      %v5116 = vpack.c.b16 %v4996, %v4995
      %v5117 = vpack.c.b16 %v4998, %v4997
      %v5118 = vpack.c.b16 %v5000, %v4999
      %v5119 = vpack.c.b16 %v5002, %v5001
      %v5120 = vpack.c.b16 %v5004, %v5003
      %v5121 = vpack.c.b16 %v5006, %v5005
      %v5122 = vpack.c.b16 %v5008, %v5007
      %v5123 = vpack.c.b16 %v5010, %v5009
      %v5124 = vpack.c.b16 %v5012, %v5011
      %v5125 = vpack.c.b16 %v5014, %v5013
      %v5126 = vpack.c.b16 %v5016, %v5015
      %v5127 = vpack.c.b16 %v5018, %v5017
      %v5128 = vpack.c.b16 %v5020, %v5019
      %v5129 = vpack.c.b16 %v5022, %v5021
      %v5130 = vpack.c.b16 %v5024, %v5023
      %v5131 = vpack.c.b16 %v5026, %v5025
      %v5132 = vpack.c.b16 %v5028, %v5027
      %v5133 = vpack.c.b16 %v5030, %v5029
      %v5134 = vpack.c.b16 %v5032, %v5031
      %v5135 = vpack.c.b16 %v5034, %v5033
      %v5136 = vpack.c.b16 %v5036, %v5035
      %v5137 = vpack.c.b16 %v5038, %v5037
      %v5138 = vpack.c.b16 %v5040, %v5039
      %v5139 = vpack.c.b16 %v5042, %v5041
      %v5140 = vpack.c.b16 %v5044, %v5043
      %v5141 = vpack.c.b16 %v5046, %v5045
      %v5142 = vpack.c.b16 %v5048, %v5047
      %v5143 = vpack.c.b16 %v5050, %v5049
      %v5144 = vpack.c.b16 %v5052, %v5051
      %v5145 = vpack.c.b16 %v5054, %v5053
      %v5146 = vpack.c.b16 %v5056, %v5055
      %v5147 = vpack.c.b16 %v5058, %v5057
      %v5148 = vpack.c.b16 %v5060, %v5059
      %v5149 = vpack.c.b16 %v5062, %v5061
      %v5150 = vpack.c.b16 %v5064, %v5063
      %v5151 = vpack.c.b16 %v5066, %v5065
      %v5152 = vpack.c.b16 %v5068, %v5067
      %v5153 = vpack.c.b16 %v5070, %v5069
      %v5154 = vpack.c.b16 %v5072, %v5071
      %v5155 = vpack.c.b16 %v5074, %v5073
      %v5156 = vpack.c.b16 %v5076, %v5075
      %v5157 = vpack.c.b16 %v5078, %v5077
      %v5158 = vpack.c.b16 %v5080, %v5079
      %v5159 = vpack.c.b16 %v5082, %v5081
      %v5160 = vpack.c.b16 %v5084, %v5083
      %v5161 = vpack.c.b16 %v5086, %v5085
      %v5162 = vpack.c.b16 %v5088, %v5087
      %v5163 = vpack.c.b16 %v5090, %v5089
      %v5164 = vpack.c.b16 %v5092, %v5091
      %v5165 = vpack.c.b16 %v5094, %v5093
      %v5166 = vpack.c.b16 %v5096, %v5095
      %v5167 = vpack.c.b16 %v5098, %v5097
      %v5168 = vpack.c.b16 %v5100, %v5099
      %v5169 = vpack.c.b16 %v5102, %v5101
      %v5170 = vpack.c.b16 %v5104, %v5103
      %v5171 = vpack.c.b16 %v5106, %v5105
      %v5172 = vpack.c.b16 %v5108, %v5107
      %5237 = vmatprep.subr.bf16.mxu0 0
      %5238 = vmatpush1.bf16.msra.mxu0 %v5109
      %5239 = vmatprep.subr.bf16.mxu0 0
      %5240 = vmatpush1.bf16.msra.mxu0 %v5110
      %5241 = vmatprep.subr.bf16.mxu0 0
      %5242 = vmatpush1.bf16.msra.mxu0 %v5111
      %5243 = vmatprep.subr.bf16.mxu0 0
      %5244 = vmatpush1.bf16.msra.mxu0 %v5112
      %5245 = vmatprep.subr.bf16.mxu0 0
      %5246 = vmatpush1.bf16.msra.mxu0 %v5113
      %5247 = vmatprep.subr.bf16.mxu0 0
      %5248 = vmatpush1.bf16.msra.mxu0 %v5114
      %5249 = vmatprep.subr.bf16.mxu0 0
      %5250 = vmatpush1.bf16.msra.mxu0 %v5115
      %5251 = vmatprep.subr.bf16.mxu0 0
      %5252 = vmatpush1.bf16.msra.mxu0 %v5116
      %5253 = vmatprep.subr.bf16.mxu0 0
      %5254 = vmatpush1.bf16.msra.mxu0 %v5117
      %5255 = vmatprep.subr.bf16.mxu0 0
      %5256 = vmatpush1.bf16.msra.mxu0 %v5118
      %5257 = vmatprep.subr.bf16.mxu0 0
      %5258 = vmatpush1.bf16.msra.mxu0 %v5119
      %5259 = vmatprep.subr.bf16.mxu0 0
      %5260 = vmatpush1.bf16.msra.mxu0 %v5120
      %5261 = vmatprep.subr.bf16.mxu0 0
      %5262 = vmatpush1.bf16.msra.mxu0 %v5121
      %5263 = vmatprep.subr.bf16.mxu0 0
      %5264 = vmatpush1.bf16.msra.mxu0 %v5122
      %5265 = vmatprep.subr.bf16.mxu0 0
      %5266 = vmatpush1.bf16.msra.mxu0 %v5123
      %5267 = vmatprep.subr.bf16.mxu0 0
      %5268 = vmatpush1.bf16.msra.mxu0 %v5124
      %5269 = vmatprep.mubr.bf16.mxu0 %v402
      %5270 = vmatmul.mubr.bf16.gmra.mrb[0].mxu0 %v401
      %v5271 = vpop.f32.mrb[0].mxu0
      %v5272 = vadd.f32 0.0, %v5271
      %v5273 = vpop.f32.mrb[0].mxu0
      %v5274 = vpop.f32.mrb[0].mxu0
      %v5275 = vadd.f32 0.0, %v5274
      %v5276 = vpop.f32.mrb[0].mxu0
      %5277 = vdwg.mxu0
      %5278 = vmatprep.subr.bf16.mxu0 0
      %5279 = vmatpush1.bf16.msra.mxu0 %v5125
      %5280 = vmatprep.subr.bf16.mxu0 0
      %5281 = vmatpush1.bf16.msra.mxu0 %v5126
      %5282 = vmatprep.subr.bf16.mxu0 0
      %5283 = vmatpush1.bf16.msra.mxu0 %v5127
      %5284 = vmatprep.subr.bf16.mxu0 0
      %5285 = vmatpush1.bf16.msra.mxu0 %v5128
      %5286 = vmatprep.subr.bf16.mxu0 0
      %5287 = vmatpush1.bf16.msra.mxu0 %v5129
      %5288 = vmatprep.subr.bf16.mxu0 0
      %5289 = vmatpush1.bf16.msra.mxu0 %v5130
      %5290 = vmatprep.subr.bf16.mxu0 0
      %5291 = vmatpush1.bf16.msra.mxu0 %v5131
      %5292 = vmatprep.subr.bf16.mxu0 0
      %5293 = vmatpush1.bf16.msra.mxu0 %v5132
      %5294 = vmatprep.subr.bf16.mxu0 0
      %5295 = vmatpush1.bf16.msra.mxu0 %v5133
      %5296 = vmatprep.subr.bf16.mxu0 0
      %5297 = vmatpush1.bf16.msra.mxu0 %v5134
      %5298 = vmatprep.subr.bf16.mxu0 0
      %5299 = vmatpush1.bf16.msra.mxu0 %v5135
      %5300 = vmatprep.subr.bf16.mxu0 0
      %5301 = vmatpush1.bf16.msra.mxu0 %v5136
      %5302 = vmatprep.subr.bf16.mxu0 0
      %5303 = vmatpush1.bf16.msra.mxu0 %v5137
      %5304 = vmatprep.subr.bf16.mxu0 0
      %5305 = vmatpush1.bf16.msra.mxu0 %v5138
      %5306 = vmatprep.subr.bf16.mxu0 0
      %5307 = vmatpush1.bf16.msra.mxu0 %v5139
      %5308 = vmatprep.subr.bf16.mxu0 0
      %5309 = vmatpush1.bf16.msra.mxu0 %v5140
      %5310 = vmatprep.mubr.bf16.mxu0 %v404
      %5311 = vmatmul.mubr.bf16.gmra.mrb[0].mxu0 %v403
      %v5312 = vpop.f32.mrb[0].mxu0
      %v5313 = vadd.f32 %v5272, %v5312
      %v5314 = vpop.f32.mrb[0].mxu0
      %v5315 = vpop.f32.mrb[0].mxu0
      %v5316 = vadd.f32 %v5275, %v5315
      %v5317 = vpop.f32.mrb[0].mxu0
      %5318 = vdwg.mxu0
      %5319 = vmatprep.subr.bf16.mxu0 0
      %5320 = vmatpush1.bf16.msra.mxu0 %v5141
      %5321 = vmatprep.subr.bf16.mxu0 0
      %5322 = vmatpush1.bf16.msra.mxu0 %v5142
      %5323 = vmatprep.subr.bf16.mxu0 0
      %5324 = vmatpush1.bf16.msra.mxu0 %v5143
      %5325 = vmatprep.subr.bf16.mxu0 0
      %5326 = vmatpush1.bf16.msra.mxu0 %v5144
      %5327 = vmatprep.subr.bf16.mxu0 0
      %5328 = vmatpush1.bf16.msra.mxu0 %v5145
      %5329 = vmatprep.subr.bf16.mxu0 0
      %5330 = vmatpush1.bf16.msra.mxu0 %v5146
      %5331 = vmatprep.subr.bf16.mxu0 0
      %5332 = vmatpush1.bf16.msra.mxu0 %v5147
      %5333 = vmatprep.subr.bf16.mxu0 0
      %5334 = vmatpush1.bf16.msra.mxu0 %v5148
      %5335 = vmatprep.subr.bf16.mxu0 0
      %5336 = vmatpush1.bf16.msra.mxu0 %v5149
      %5337 = vmatprep.subr.bf16.mxu0 0
      %5338 = vmatpush1.bf16.msra.mxu0 %v5150
      %5339 = vmatprep.subr.bf16.mxu0 0
      %5340 = vmatpush1.bf16.msra.mxu0 %v5151
      %5341 = vmatprep.subr.bf16.mxu0 0
      %5342 = vmatpush1.bf16.msra.mxu0 %v5152
      %5343 = vmatprep.subr.bf16.mxu0 0
      %5344 = vmatpush1.bf16.msra.mxu0 %v5153
      %5345 = vmatprep.subr.bf16.mxu0 0
      %5346 = vmatpush1.bf16.msra.mxu0 %v5154
      %5347 = vmatprep.subr.bf16.mxu0 0
      %5348 = vmatpush1.bf16.msra.mxu0 %v5155
      %5349 = vmatprep.subr.bf16.mxu0 0
      %5350 = vmatpush1.bf16.msra.mxu0 %v5156
      %5351 = vmatprep.mubr.bf16.mxu0 %v406
      %5352 = vmatmul.mubr.bf16.gmra.mrb[0].mxu0 %v405
      %v5353 = vpop.f32.mrb[0].mxu0
      %v5354 = vadd.f32 %v5313, %v5353
      %v5355 = vpop.f32.mrb[0].mxu0
      %v5356 = vpop.f32.mrb[0].mxu0
      %v5357 = vadd.f32 %v5316, %v5356
      %v5358 = vpop.f32.mrb[0].mxu0
      %5359 = vdwg.mxu0
      %5360 = vmatprep.subr.bf16.mxu0 0
      %5361 = vmatpush1.bf16.msra.mxu0 %v5157
      %5362 = vmatprep.subr.bf16.mxu0 0
      %5363 = vmatpush1.bf16.msra.mxu0 %v5158
      %5364 = vmatprep.subr.bf16.mxu0 0
      %5365 = vmatpush1.bf16.msra.mxu0 %v5159
      %5366 = vmatprep.subr.bf16.mxu0 0
      %5367 = vmatpush1.bf16.msra.mxu0 %v5160
      %5368 = vmatprep.subr.bf16.mxu0 0
      %5369 = vmatpush1.bf16.msra.mxu0 %v5161
      %5370 = vmatprep.subr.bf16.mxu0 0
      %5371 = vmatpush1.bf16.msra.mxu0 %v5162
      %5372 = vmatprep.subr.bf16.mxu0 0
      %5373 = vmatpush1.bf16.msra.mxu0 %v5163
      %5374 = vmatprep.subr.bf16.mxu0 0
      %5375 = vmatpush1.bf16.msra.mxu0 %v5164
      %5376 = vmatprep.subr.bf16.mxu0 0
      %5377 = vmatpush1.bf16.msra.mxu0 %v5165
      %5378 = vmatprep.subr.bf16.mxu0 0
      %5379 = vmatpush1.bf16.msra.mxu0 %v5166
      %5380 = vmatprep.subr.bf16.mxu0 0
      %5381 = vmatpush1.bf16.msra.mxu0 %v5167
      %5382 = vmatprep.subr.bf16.mxu0 0
      %5383 = vmatpush1.bf16.msra.mxu0 %v5168
      %5384 = vmatprep.subr.bf16.mxu0 0
      %5385 = vmatpush1.bf16.msra.mxu0 %v5169
      %5386 = vmatprep.subr.bf16.mxu0 0
      %5387 = vmatpush1.bf16.msra.mxu0 %v5170
      %5388 = vmatprep.subr.bf16.mxu0 0
      %5389 = vmatpush1.bf16.msra.mxu0 %v5171
      %5390 = vmatprep.subr.bf16.mxu0 0
      %5391 = vmatpush1.bf16.msra.mxu0 %v5172
      %5392 = vmatprep.mubr.bf16.mxu0 %v408
      %5393 = vmatmul.mubr.bf16.gmra.mrb[0].mxu0 %v407
      %v5394 = vpop.f32.mrb[0].mxu0
      %v5395 = vadd.f32 %v5354, %v5394
      %v5396 = vpop.f32.mrb[0].mxu0
      %v5397 = vpop.f32.mrb[0].mxu0
      %v5398 = vadd.f32 %v5357, %v5397
      %v5399 = vpop.f32.mrb[0].mxu0
      %5400 = vdwg.mxu0
      %v5401 = vld [vmem:[%s2 + $0xc] sm:$0xf]
      %v5402 = vld [vmem:[%s2 + $0x20] sm:$0xf]
      %v5403 = vld [vmem:[%s2 + $0x34] sm:$0xf]
      %v5404 = vld [vmem:[%s2 + $0x48] sm:$0xf]
      %v5405 = vld [vmem:[%s2 + $0x5c] sm:$0xf]
      %v5406 = vld [vmem:[%s2 + $0x70] sm:$0xf]
      %v5407 = vld [vmem:[%s2 + $0x84] sm:$0xf]
      %v5408 = vld [vmem:[%s2 + $0x98] sm:$0xf]
      %v5409 = vld [vmem:[%s2 + $0xac] sm:$0xf]
      %v5410 = vld [vmem:[%s2 + $0xc0] sm:$0xf]
      %v5411 = vld [vmem:[%s2 + $0xd4] sm:$0xf]
      %v5412 = vld [vmem:[%s2 + $0xe8] sm:$0xf]
      %v5413 = vld [vmem:[%s2 + $0xfc] sm:$0xf]
      %v5414 = vld [vmem:[%s2 + $0x110] sm:$0xf]
      %v5415 = vld [vmem:[%s2 + $0x124] sm:$0xf]
      %v5416 = vld [vmem:[%s2 + $0x138] sm:$0xf]
      %v5417 = vld [vmem:[%s2 + $0x14c] sm:$0xf]
      %v5418 = vld [vmem:[%s2 + $0x160] sm:$0xf]
      %v5419 = vld [vmem:[%s2 + $0x174] sm:$0xf]
      %v5420 = vld [vmem:[%s2 + $0x188] sm:$0xf]
      %v5421 = vld [vmem:[%s2 + $0x19c] sm:$0xf]
      %v5422 = vld [vmem:[%s2 + $0x1b0] sm:$0xf]
      %v5423 = vld [vmem:[%s2 + $0x1c4] sm:$0xf]
      %v5424 = vld [vmem:[%s2 + $0x1d8] sm:$0xf]
      %v5425 = vld [vmem:[%s2 + $0x1ec] sm:$0xf]
      %v5426 = vld [vmem:[%s2 + $0x200] sm:$0xf]
      %v5427 = vld [vmem:[%s2 + $0x214] sm:$0xf]
      %v5428 = vld [vmem:[%s2 + $0x228] sm:$0xf]
      %v5429 = vld [vmem:[%s2 + $0x23c] sm:$0xf]
      %v5430 = vld [vmem:[%s2 + $0x250] sm:$0xf]
      %v5431 = vld [vmem:[%s2 + $0x264] sm:$0xf]
      %v5432 = vld [vmem:[%s2 + $0x278] sm:$0xf]
      %v5433 = vld [vmem:[%s2 + $0x28c] sm:$0xf]
      %v5434 = vld [vmem:[%s2 + $0x2a0] sm:$0xf]
      %v5435 = vld [vmem:[%s2 + $0x2b4] sm:$0xf]
      %v5436 = vld [vmem:[%s2 + $0x2c8] sm:$0xf]
      %v5437 = vld [vmem:[%s2 + $0x2dc] sm:$0xf]
      %v5438 = vld [vmem:[%s2 + $0x2f0] sm:$0xf]
      %v5439 = vld [vmem:[%s2 + $0x304] sm:$0xf]
      %v5440 = vld [vmem:[%s2 + $0x318] sm:$0xf]
      %v5441 = vld [vmem:[%s2 + $0x32c] sm:$0xf]
      %v5442 = vld [vmem:[%s2 + $0x340] sm:$0xf]
      %v5443 = vld [vmem:[%s2 + $0x354] sm:$0xf]
      %v5444 = vld [vmem:[%s2 + $0x368] sm:$0xf]
      %v5445 = vld [vmem:[%s2 + $0x37c] sm:$0xf]
      %v5446 = vld [vmem:[%s2 + $0x390] sm:$0xf]
      %v5447 = vld [vmem:[%s2 + $0x3a4] sm:$0xf]
      %v5448 = vld [vmem:[%s2 + $0x3b8] sm:$0xf]
      %v5449 = vld [vmem:[%s2 + $0x3cc] sm:$0xf]
      %v5450 = vld [vmem:[%s2 + $0x3e0] sm:$0xf]
      %v5451 = vld [vmem:[%s2 + $0x3f4] sm:$0xf]
      %v5452 = vld [vmem:[%s2 + $0x408] sm:$0xf]
      %v5453 = vld [vmem:[%s2 + $0x41c] sm:$0xf]
      %v5454 = vld [vmem:[%s2 + $0x430] sm:$0xf]
      %v5455 = vld [vmem:[%s2 + $0x444] sm:$0xf]
      %v5456 = vld [vmem:[%s2 + $0x458] sm:$0xf]
      %v5457 = vld [vmem:[%s2 + $0x46c] sm:$0xf]
      %v5458 = vld [vmem:[%s2 + $0x480] sm:$0xf]
      %v5459 = vld [vmem:[%s2 + $0x494] sm:$0xf]
      %v5460 = vld [vmem:[%s2 + $0x4a8] sm:$0xf]
      %v5461 = vld [vmem:[%s2 + $0x4bc] sm:$0xf]
      %v5462 = vld [vmem:[%s2 + $0x4d0] sm:$0xf]
      %v5463 = vld [vmem:[%s2 + $0x4e4] sm:$0xf]
      %v5464 = vld [vmem:[%s2 + $0x4f8] sm:$0xf]
      %v5465 = vld [vmem:[%s2 + $0x50c] sm:$0xf]
      %v5466 = vld [vmem:[%s2 + $0x520] sm:$0xf]
      %v5467 = vld [vmem:[%s2 + $0x534] sm:$0xf]
      %v5468 = vld [vmem:[%s2 + $0x548] sm:$0xf]
      %v5469 = vld [vmem:[%s2 + $0x55c] sm:$0xf]
      %v5470 = vld [vmem:[%s2 + $0x570] sm:$0xf]
      %v5471 = vld [vmem:[%s2 + $0x584] sm:$0xf]
      %v5472 = vld [vmem:[%s2 + $0x598] sm:$0xf]
      %v5473 = vld [vmem:[%s2 + $0x5ac] sm:$0xf]
      %v5474 = vld [vmem:[%s2 + $0x5c0] sm:$0xf]
      %v5475 = vld [vmem:[%s2 + $0x5d4] sm:$0xf]
      %v5476 = vld [vmem:[%s2 + $0x5e8] sm:$0xf]
      %v5477 = vld [vmem:[%s2 + $0x5fc] sm:$0xf]
      %v5478 = vld [vmem:[%s2 + $0x610] sm:$0xf]
      %v5479 = vld [vmem:[%s2 + $0x624] sm:$0xf]
      %v5480 = vld [vmem:[%s2 + $0x638] sm:$0xf]
      %v5481 = vld [vmem:[%s2 + $0x64c] sm:$0xf]
      %v5482 = vld [vmem:[%s2 + $0x660] sm:$0xf]
      %v5483 = vld [vmem:[%s2 + $0x674] sm:$0xf]
      %v5484 = vld [vmem:[%s2 + $0x688] sm:$0xf]
      %v5485 = vld [vmem:[%s2 + $0x69c] sm:$0xf]
      %v5486 = vld [vmem:[%s2 + $0x6b0] sm:$0xf]
      %v5487 = vld [vmem:[%s2 + $0x6c4] sm:$0xf]
      %v5488 = vld [vmem:[%s2 + $0x6d8] sm:$0xf]
      %v5489 = vld [vmem:[%s2 + $0x6ec] sm:$0xf]
      %v5490 = vld [vmem:[%s2 + $0x700] sm:$0xf]
      %v5491 = vld [vmem:[%s2 + $0x714] sm:$0xf]
      %v5492 = vld [vmem:[%s2 + $0x728] sm:$0xf]
      %v5493 = vld [vmem:[%s2 + $0x73c] sm:$0xf]
      %v5494 = vld [vmem:[%s2 + $0x750] sm:$0xf]
      %v5495 = vld [vmem:[%s2 + $0x764] sm:$0xf]
      %v5496 = vld [vmem:[%s2 + $0x778] sm:$0xf]
      %v5497 = vld [vmem:[%s2 + $0x78c] sm:$0xf]
      %v5498 = vld [vmem:[%s2 + $0x7a0] sm:$0xf]
      %v5499 = vld [vmem:[%s2 + $0x7b4] sm:$0xf]
      %v5500 = vld [vmem:[%s2 + $0x7c8] sm:$0xf]
      %v5501 = vld [vmem:[%s2 + $0x7dc] sm:$0xf]
      %v5502 = vld [vmem:[%s2 + $0x7f0] sm:$0xf]
      %v5503 = vld [vmem:[%s2 + $0x804] sm:$0xf]
      %v5504 = vld [vmem:[%s2 + $0x818] sm:$0xf]
      %v5505 = vld [vmem:[%s2 + $0x82c] sm:$0xf]
      %v5506 = vld [vmem:[%s2 + $0x840] sm:$0xf]
      %v5507 = vld [vmem:[%s2 + $0x854] sm:$0xf]
      %v5508 = vld [vmem:[%s2 + $0x868] sm:$0xf]
      %v5509 = vld [vmem:[%s2 + $0x87c] sm:$0xf]
      %v5510 = vld [vmem:[%s2 + $0x890] sm:$0xf]
      %v5511 = vld [vmem:[%s2 + $0x8a4] sm:$0xf]
      %v5512 = vld [vmem:[%s2 + $0x8b8] sm:$0xf]
      %v5513 = vld [vmem:[%s2 + $0x8cc] sm:$0xf]
      %v5514 = vld [vmem:[%s2 + $0x8e0] sm:$0xf]
      %v5515 = vld [vmem:[%s2 + $0x8f4] sm:$0xf]
      %v5516 = vld [vmem:[%s2 + $0x908] sm:$0xf]
      %v5517 = vld [vmem:[%s2 + $0x91c] sm:$0xf]
      %v5518 = vld [vmem:[%s2 + $0x930] sm:$0xf]
      %v5519 = vld [vmem:[%s2 + $0x944] sm:$0xf]
      %v5520 = vld [vmem:[%s2 + $0x958] sm:$0xf]
      %v5521 = vld [vmem:[%s2 + $0x96c] sm:$0xf]
      %v5522 = vld [vmem:[%s2 + $0x980] sm:$0xf]
      %v5523 = vld [vmem:[%s2 + $0x994] sm:$0xf]
      %v5524 = vld [vmem:[%s2 + $0x9a8] sm:$0xf]
      %v5525 = vld [vmem:[%s2 + $0x9bc] sm:$0xf]
      %v5526 = vld [vmem:[%s2 + $0x9d0] sm:$0xf]
      %v5527 = vld [vmem:[%s2 + $0x9e4] sm:$0xf]
      %v5528 = vld [vmem:[%s2 + $0x9f8] sm:$0xf]
      %v5657 = vunpack.c.l.b16 %v5401
      %v5658 = vunpack.c.l.b16 %v5402
      %v5659 = vunpack.c.l.b16 %v5403
      %v5660 = vunpack.c.l.b16 %v5404
      %v5661 = vunpack.c.l.b16 %v5405
      %v5662 = vunpack.c.l.b16 %v5406
      %v5663 = vunpack.c.l.b16 %v5407
      %v5664 = vunpack.c.l.b16 %v5408
      %v5665 = vunpack.c.l.b16 %v5409
      %v5666 = vunpack.c.l.b16 %v5410
      %v5667 = vunpack.c.l.b16 %v5411
      %v5668 = vunpack.c.l.b16 %v5412
      %v5669 = vunpack.c.l.b16 %v5413
      %v5670 = vunpack.c.l.b16 %v5414
      %v5671 = vunpack.c.l.b16 %v5415
      %v5672 = vunpack.c.l.b16 %v5416
      %v5673 = vunpack.c.l.b16 %v5417
      %v5674 = vunpack.c.l.b16 %v5418
      %v5675 = vunpack.c.l.b16 %v5419
      %v5676 = vunpack.c.l.b16 %v5420
      %v5677 = vunpack.c.l.b16 %v5421
      %v5678 = vunpack.c.l.b16 %v5422
      %v5679 = vunpack.c.l.b16 %v5423
      %v5680 = vunpack.c.l.b16 %v5424
      %v5681 = vunpack.c.l.b16 %v5425
      %v5682 = vunpack.c.l.b16 %v5426
      %v5683 = vunpack.c.l.b16 %v5427
      %v5684 = vunpack.c.l.b16 %v5428
      %v5685 = vunpack.c.l.b16 %v5429
      %v5686 = vunpack.c.l.b16 %v5430
      %v5687 = vunpack.c.l.b16 %v5431
      %v5688 = vunpack.c.l.b16 %v5432
      %v5689 = vunpack.c.l.b16 %v5433
      %v5690 = vunpack.c.l.b16 %v5434
      %v5691 = vunpack.c.l.b16 %v5435
      %v5692 = vunpack.c.l.b16 %v5436
      %v5693 = vunpack.c.l.b16 %v5437
      %v5694 = vunpack.c.l.b16 %v5438
      %v5695 = vunpack.c.l.b16 %v5439
      %v5696 = vunpack.c.l.b16 %v5440
      %v5697 = vunpack.c.l.b16 %v5441
      %v5698 = vunpack.c.l.b16 %v5442
      %v5699 = vunpack.c.l.b16 %v5443
      %v5700 = vunpack.c.l.b16 %v5444
      %v5701 = vunpack.c.l.b16 %v5445
      %v5702 = vunpack.c.l.b16 %v5446
      %v5703 = vunpack.c.l.b16 %v5447
      %v5704 = vunpack.c.l.b16 %v5448
      %v5705 = vunpack.c.l.b16 %v5449
      %v5706 = vunpack.c.l.b16 %v5450
      %v5707 = vunpack.c.l.b16 %v5451
      %v5708 = vunpack.c.l.b16 %v5452
      %v5709 = vunpack.c.l.b16 %v5453
      %v5710 = vunpack.c.l.b16 %v5454
      %v5711 = vunpack.c.l.b16 %v5455
      %v5712 = vunpack.c.l.b16 %v5456
      %v5713 = vunpack.c.l.b16 %v5457
      %v5714 = vunpack.c.l.b16 %v5458
      %v5715 = vunpack.c.l.b16 %v5459
      %v5716 = vunpack.c.l.b16 %v5460
      %v5717 = vunpack.c.l.b16 %v5461
      %v5718 = vunpack.c.l.b16 %v5462
      %v5719 = vunpack.c.l.b16 %v5463
      %v5720 = vunpack.c.l.b16 %v5464
      %v5721 = vunpack.c.l.b16 %v5465
      %v5722 = vunpack.c.l.b16 %v5466
      %v5723 = vunpack.c.l.b16 %v5467
      %v5724 = vunpack.c.l.b16 %v5468
      %v5725 = vunpack.c.l.b16 %v5469
      %v5726 = vunpack.c.l.b16 %v5470
      %v5727 = vunpack.c.l.b16 %v5471
      %v5728 = vunpack.c.l.b16 %v5472
      %v5729 = vunpack.c.l.b16 %v5473
      %v5730 = vunpack.c.l.b16 %v5474
      %v5731 = vunpack.c.l.b16 %v5475
      %v5732 = vunpack.c.l.b16 %v5476
      %v5733 = vunpack.c.l.b16 %v5477
      %v5734 = vunpack.c.l.b16 %v5478
      %v5735 = vunpack.c.l.b16 %v5479
      %v5736 = vunpack.c.l.b16 %v5480
      %v5737 = vunpack.c.l.b16 %v5481
      %v5738 = vunpack.c.l.b16 %v5482
      %v5739 = vunpack.c.l.b16 %v5483
      %v5740 = vunpack.c.l.b16 %v5484
      %v5741 = vunpack.c.l.b16 %v5485
      %v5742 = vunpack.c.l.b16 %v5486
      %v5743 = vunpack.c.l.b16 %v5487
      %v5744 = vunpack.c.l.b16 %v5488
      %v5745 = vunpack.c.l.b16 %v5489
      %v5746 = vunpack.c.l.b16 %v5490
      %v5747 = vunpack.c.l.b16 %v5491
      %v5748 = vunpack.c.l.b16 %v5492
      %v5749 = vunpack.c.l.b16 %v5493
      %v5750 = vunpack.c.l.b16 %v5494
      %v5751 = vunpack.c.l.b16 %v5495
      %v5752 = vunpack.c.l.b16 %v5496
      %v5753 = vunpack.c.l.b16 %v5497
      %v5754 = vunpack.c.l.b16 %v5498
      %v5755 = vunpack.c.l.b16 %v5499
      %v5756 = vunpack.c.l.b16 %v5500
      %v5757 = vunpack.c.l.b16 %v5501
      %v5758 = vunpack.c.l.b16 %v5502
      %v5759 = vunpack.c.l.b16 %v5503
      %v5760 = vunpack.c.l.b16 %v5504
      %v5761 = vunpack.c.l.b16 %v5505
      %v5762 = vunpack.c.l.b16 %v5506
      %v5763 = vunpack.c.l.b16 %v5507
      %v5764 = vunpack.c.l.b16 %v5508
      %v5765 = vunpack.c.l.b16 %v5509
      %v5766 = vunpack.c.l.b16 %v5510
      %v5767 = vunpack.c.l.b16 %v5511
      %v5768 = vunpack.c.l.b16 %v5512
      %v5769 = vunpack.c.l.b16 %v5513
      %v5770 = vunpack.c.l.b16 %v5514
      %v5771 = vunpack.c.l.b16 %v5515
      %v5772 = vunpack.c.l.b16 %v5516
      %v5773 = vunpack.c.l.b16 %v5517
      %v5774 = vunpack.c.l.b16 %v5518
      %v5775 = vunpack.c.l.b16 %v5519
      %v5776 = vunpack.c.l.b16 %v5520
      %v5777 = vunpack.c.l.b16 %v5521
      %v5778 = vunpack.c.l.b16 %v5522
      %v5779 = vunpack.c.l.b16 %v5523
      %v5780 = vunpack.c.l.b16 %v5524
      %v5781 = vunpack.c.l.b16 %v5525
      %v5782 = vunpack.c.l.b16 %v5526
      %v5783 = vunpack.c.l.b16 %v5527
      %v5784 = vunpack.c.l.b16 %v5528
      %v5785 = vpack.c.b16 %v5658, %v5657
      %v5786 = vpack.c.b16 %v5660, %v5659
      %v5787 = vpack.c.b16 %v5662, %v5661
      %v5788 = vpack.c.b16 %v5664, %v5663
      %v5789 = vpack.c.b16 %v5666, %v5665
      %v5790 = vpack.c.b16 %v5668, %v5667
      %v5791 = vpack.c.b16 %v5670, %v5669
      %v5792 = vpack.c.b16 %v5672, %v5671
      %v5793 = vpack.c.b16 %v5674, %v5673
      %v5794 = vpack.c.b16 %v5676, %v5675
      %v5795 = vpack.c.b16 %v5678, %v5677
      %v5796 = vpack.c.b16 %v5680, %v5679
      %v5797 = vpack.c.b16 %v5682, %v5681
      %v5798 = vpack.c.b16 %v5684, %v5683
      %v5799 = vpack.c.b16 %v5686, %v5685
      %v5800 = vpack.c.b16 %v5688, %v5687
      %v5801 = vpack.c.b16 %v5690, %v5689
      %v5802 = vpack.c.b16 %v5692, %v5691
      %v5803 = vpack.c.b16 %v5694, %v5693
      %v5804 = vpack.c.b16 %v5696, %v5695
      %v5805 = vpack.c.b16 %v5698, %v5697
      %v5806 = vpack.c.b16 %v5700, %v5699
      %v5807 = vpack.c.b16 %v5702, %v5701
      %v5808 = vpack.c.b16 %v5704, %v5703
      %v5809 = vpack.c.b16 %v5706, %v5705
      %v5810 = vpack.c.b16 %v5708, %v5707
      %v5811 = vpack.c.b16 %v5710, %v5709
      %v5812 = vpack.c.b16 %v5712, %v5711
      %v5813 = vpack.c.b16 %v5714, %v5713
      %v5814 = vpack.c.b16 %v5716, %v5715
      %v5815 = vpack.c.b16 %v5718, %v5717
      %v5816 = vpack.c.b16 %v5720, %v5719
      %v5817 = vpack.c.b16 %v5722, %v5721
      %v5818 = vpack.c.b16 %v5724, %v5723
      %v5819 = vpack.c.b16 %v5726, %v5725
      %v5820 = vpack.c.b16 %v5728, %v5727
      %v5821 = vpack.c.b16 %v5730, %v5729
      %v5822 = vpack.c.b16 %v5732, %v5731
      %v5823 = vpack.c.b16 %v5734, %v5733
      %v5824 = vpack.c.b16 %v5736, %v5735
      %v5825 = vpack.c.b16 %v5738, %v5737
      %v5826 = vpack.c.b16 %v5740, %v5739
      %v5827 = vpack.c.b16 %v5742, %v5741
      %v5828 = vpack.c.b16 %v5744, %v5743
      %v5829 = vpack.c.b16 %v5746, %v5745
      %v5830 = vpack.c.b16 %v5748, %v5747
      %v5831 = vpack.c.b16 %v5750, %v5749
      %v5832 = vpack.c.b16 %v5752, %v5751
      %v5833 = vpack.c.b16 %v5754, %v5753
      %v5834 = vpack.c.b16 %v5756, %v5755
      %v5835 = vpack.c.b16 %v5758, %v5757
      %v5836 = vpack.c.b16 %v5760, %v5759
      %v5837 = vpack.c.b16 %v5762, %v5761
      %v5838 = vpack.c.b16 %v5764, %v5763
      %v5839 = vpack.c.b16 %v5766, %v5765
      %v5840 = vpack.c.b16 %v5768, %v5767
      %v5841 = vpack.c.b16 %v5770, %v5769
      %v5842 = vpack.c.b16 %v5772, %v5771
      %v5843 = vpack.c.b16 %v5774, %v5773
      %v5844 = vpack.c.b16 %v5776, %v5775
      %v5845 = vpack.c.b16 %v5778, %v5777
      %v5846 = vpack.c.b16 %v5780, %v5779
      %v5847 = vpack.c.b16 %v5782, %v5781
      %v5848 = vpack.c.b16 %v5784, %v5783
      %5913 = vmatprep.subr.bf16.mxu0 0
      %5914 = vmatpush1.bf16.msra.mxu0 %v5785
      %5915 = vmatprep.subr.bf16.mxu0 0
      %5916 = vmatpush1.bf16.msra.mxu0 %v5786
      %5917 = vmatprep.subr.bf16.mxu0 0
      %5918 = vmatpush1.bf16.msra.mxu0 %v5787
      %5919 = vmatprep.subr.bf16.mxu0 0
      %5920 = vmatpush1.bf16.msra.mxu0 %v5788
      %5921 = vmatprep.subr.bf16.mxu0 0
      %5922 = vmatpush1.bf16.msra.mxu0 %v5789
      %5923 = vmatprep.subr.bf16.mxu0 0
      %5924 = vmatpush1.bf16.msra.mxu0 %v5790
      %5925 = vmatprep.subr.bf16.mxu0 0
      %5926 = vmatpush1.bf16.msra.mxu0 %v5791
      %5927 = vmatprep.subr.bf16.mxu0 0
      %5928 = vmatpush1.bf16.msra.mxu0 %v5792
      %5929 = vmatprep.subr.bf16.mxu0 0
      %5930 = vmatpush1.bf16.msra.mxu0 %v5793
      %5931 = vmatprep.subr.bf16.mxu0 0
      %5932 = vmatpush1.bf16.msra.mxu0 %v5794
      %5933 = vmatprep.subr.bf16.mxu0 0
      %5934 = vmatpush1.bf16.msra.mxu0 %v5795
      %5935 = vmatprep.subr.bf16.mxu0 0
      %5936 = vmatpush1.bf16.msra.mxu0 %v5796
      %5937 = vmatprep.subr.bf16.mxu0 0
      %5938 = vmatpush1.bf16.msra.mxu0 %v5797
      %5939 = vmatprep.subr.bf16.mxu0 0
      %5940 = vmatpush1.bf16.msra.mxu0 %v5798
      %5941 = vmatprep.subr.bf16.mxu0 0
      %5942 = vmatpush1.bf16.msra.mxu0 %v5799
      %5943 = vmatprep.subr.bf16.mxu0 0
      %5944 = vmatpush1.bf16.msra.mxu0 %v5800
      %5945 = vmatprep.mubr.bf16.mxu0 %v402
      %5946 = vmatmul.mubr.bf16.gmra.mrb[0].mxu0 %v401
      %v5947 = vpop.f32.mrb[0].mxu0
      %v5948 = vadd.f32 0.0, %v5947
      %v5949 = vpop.f32.mrb[0].mxu0
      %v5950 = vpop.f32.mrb[0].mxu0
      %v5951 = vadd.f32 0.0, %v5950
      %v5952 = vpop.f32.mrb[0].mxu0
      %5953 = vdwg.mxu0
      %5954 = vmatprep.subr.bf16.mxu0 0
      %5955 = vmatpush1.bf16.msra.mxu0 %v5801
      %5956 = vmatprep.subr.bf16.mxu0 0
      %5957 = vmatpush1.bf16.msra.mxu0 %v5802
      %5958 = vmatprep.subr.bf16.mxu0 0
      %5959 = vmatpush1.bf16.msra.mxu0 %v5803
      %5960 = vmatprep.subr.bf16.mxu0 0
      %5961 = vmatpush1.bf16.msra.mxu0 %v5804
      %5962 = vmatprep.subr.bf16.mxu0 0
      %5963 = vmatpush1.bf16.msra.mxu0 %v5805
      %5964 = vmatprep.subr.bf16.mxu0 0
      %5965 = vmatpush1.bf16.msra.mxu0 %v5806
      %5966 = vmatprep.subr.bf16.mxu0 0
      %5967 = vmatpush1.bf16.msra.mxu0 %v5807
      %5968 = vmatprep.subr.bf16.mxu0 0
      %5969 = vmatpush1.bf16.msra.mxu0 %v5808
      %5970 = vmatprep.subr.bf16.mxu0 0
      %5971 = vmatpush1.bf16.msra.mxu0 %v5809
      %5972 = vmatprep.subr.bf16.mxu0 0
      %5973 = vmatpush1.bf16.msra.mxu0 %v5810
      %5974 = vmatprep.subr.bf16.mxu0 0
      %5975 = vmatpush1.bf16.msra.mxu0 %v5811
      %5976 = vmatprep.subr.bf16.mxu0 0
      %5977 = vmatpush1.bf16.msra.mxu0 %v5812
      %5978 = vmatprep.subr.bf16.mxu0 0
      %5979 = vmatpush1.bf16.msra.mxu0 %v5813
      %5980 = vmatprep.subr.bf16.mxu0 0
      %5981 = vmatpush1.bf16.msra.mxu0 %v5814
      %5982 = vmatprep.subr.bf16.mxu0 0
      %5983 = vmatpush1.bf16.msra.mxu0 %v5815
      %5984 = vmatprep.subr.bf16.mxu0 0
      %5985 = vmatpush1.bf16.msra.mxu0 %v5816
      %5986 = vmatprep.mubr.bf16.mxu0 %v404
      %5987 = vmatmul.mubr.bf16.gmra.mrb[0].mxu0 %v403
      %v5988 = vpop.f32.mrb[0].mxu0
      %v5989 = vadd.f32 %v5948, %v5988
      %v5990 = vpop.f32.mrb[0].mxu0
      %v5991 = vpop.f32.mrb[0].mxu0
      %v5992 = vadd.f32 %v5951, %v5991
      %v5993 = vpop.f32.mrb[0].mxu0
      %5994 = vdwg.mxu0
      %5995 = vmatprep.subr.bf16.mxu0 0
      %5996 = vmatpush1.bf16.msra.mxu0 %v5817
      %5997 = vmatprep.subr.bf16.mxu0 0
      %5998 = vmatpush1.bf16.msra.mxu0 %v5818
      %5999 = vmatprep.subr.bf16.mxu0 0
      %6000 = vmatpush1.bf16.msra.mxu0 %v5819
      %6001 = vmatprep.subr.bf16.mxu0 0
      %6002 = vmatpush1.bf16.msra.mxu0 %v5820
      %6003 = vmatprep.subr.bf16.mxu0 0
      %6004 = vmatpush1.bf16.msra.mxu0 %v5821
      %6005 = vmatprep.subr.bf16.mxu0 0
      %6006 = vmatpush1.bf16.msra.mxu0 %v5822
      %6007 = vmatprep.subr.bf16.mxu0 0
      %6008 = vmatpush1.bf16.msra.mxu0 %v5823
      %6009 = vmatprep.subr.bf16.mxu0 0
      %6010 = vmatpush1.bf16.msra.mxu0 %v5824
      %6011 = vmatprep.subr.bf16.mxu0 0
      %6012 = vmatpush1.bf16.msra.mxu0 %v5825
      %6013 = vmatprep.subr.bf16.mxu0 0
      %6014 = vmatpush1.bf16.msra.mxu0 %v5826
      %6015 = vmatprep.subr.bf16.mxu0 0
      %6016 = vmatpush1.bf16.msra.mxu0 %v5827
      %6017 = vmatprep.subr.bf16.mxu0 0
      %6018 = vmatpush1.bf16.msra.mxu0 %v5828
      %6019 = vmatprep.subr.bf16.mxu0 0
      %6020 = vmatpush1.bf16.msra.mxu0 %v5829
      %6021 = vmatprep.subr.bf16.mxu0 0
      %6022 = vmatpush1.bf16.msra.mxu0 %v5830
      %6023 = vmatprep.subr.bf16.mxu0 0
      %6024 = vmatpush1.bf16.msra.mxu0 %v5831
      %6025 = vmatprep.subr.bf16.mxu0 0
      %6026 = vmatpush1.bf16.msra.mxu0 %v5832
      %6027 = vmatprep.mubr.bf16.mxu0 %v406
      %6028 = vmatmul.mubr.bf16.gmra.mrb[0].mxu0 %v405
      %v6029 = vpop.f32.mrb[0].mxu0
      %v6030 = vadd.f32 %v5989, %v6029
      %v6031 = vpop.f32.mrb[0].mxu0
      %v6032 = vpop.f32.mrb[0].mxu0
      %v6033 = vadd.f32 %v5992, %v6032
      %v6034 = vpop.f32.mrb[0].mxu0
      %6035 = vdwg.mxu0
      %6036 = vmatprep.subr.bf16.mxu0 0
      %6037 = vmatpush1.bf16.msra.mxu0 %v5833
      %6038 = vmatprep.subr.bf16.mxu0 0
      %6039 = vmatpush1.bf16.msra.mxu0 %v5834
      %6040 = vmatprep.subr.bf16.mxu0 0
      %6041 = vmatpush1.bf16.msra.mxu0 %v5835
      %6042 = vmatprep.subr.bf16.mxu0 0
      %6043 = vmatpush1.bf16.msra.mxu0 %v5836
      %6044 = vmatprep.subr.bf16.mxu0 0
      %6045 = vmatpush1.bf16.msra.mxu0 %v5837
      %6046 = vmatprep.subr.bf16.mxu0 0
      %6047 = vmatpush1.bf16.msra.mxu0 %v5838
      %6048 = vmatprep.subr.bf16.mxu0 0
      %6049 = vmatpush1.bf16.msra.mxu0 %v5839
      %6050 = vmatprep.subr.bf16.mxu0 0
      %6051 = vmatpush1.bf16.msra.mxu0 %v5840
      %6052 = vmatprep.subr.bf16.mxu0 0
      %6053 = vmatpush1.bf16.msra.mxu0 %v5841
      %6054 = vmatprep.subr.bf16.mxu0 0
      %6055 = vmatpush1.bf16.msra.mxu0 %v5842
      %6056 = vmatprep.subr.bf16.mxu0 0
      %6057 = vmatpush1.bf16.msra.mxu0 %v5843
      %6058 = vmatprep.subr.bf16.mxu0 0
      %6059 = vmatpush1.bf16.msra.mxu0 %v5844
      %6060 = vmatprep.subr.bf16.mxu0 0
      %6061 = vmatpush1.bf16.msra.mxu0 %v5845
      %6062 = vmatprep.subr.bf16.mxu0 0
      %6063 = vmatpush1.bf16.msra.mxu0 %v5846
      %6064 = vmatprep.subr.bf16.mxu0 0
      %6065 = vmatpush1.bf16.msra.mxu0 %v5847
      %6066 = vmatprep.subr.bf16.mxu0 0
      %6067 = vmatpush1.bf16.msra.mxu0 %v5848
      %6068 = vmatprep.mubr.bf16.mxu0 %v408
      %6069 = vmatmul.mubr.bf16.gmra.mrb[0].mxu0 %v407
      %v6070 = vpop.f32.mrb[0].mxu0
      %v6071 = vadd.f32 %v6030, %v6070
      %v6072 = vpop.f32.mrb[0].mxu0
      %v6073 = vpop.f32.mrb[0].mxu0
      %v6074 = vadd.f32 %v6033, %v6073
      %v6075 = vpop.f32.mrb[0].mxu0
      %6076 = vdwg.mxu0
      %v6077 = vmul.f32 %v5395, %v5395
      %v6078 = vmul.f32 %v5398, %v5398
      %v6079 = vmul.f32 %v6071, %v6071
      %v6080 = vmul.f32 %v6074, %v6074
      %v6081 = vadd.f32 %v6077, %v6079
      %v6082 = vadd.f32 %v6078, %v6080
      %v6083 = vrsqrt.pop %v6081
      %v6084 = vmul.f32 %v6081, %v6083
      %vm6085 = vcmp.eq.f32.partialorder %v6081, inf
      %v6086 = vsel %vm6085, %v6081, %v6084
      %vm6087 = vcmp.eq.f32.partialorder %v6081, 0.0
      %v6088 = vand.u32 %v6081, 2147483648
      %v6089 = vsel %vm6087, %v6088, %v6086
      %v6090 = vrsqrt.pop %v6082
      %v6091 = vmul.f32 %v6082, %v6090
      %vm6092 = vcmp.eq.f32.partialorder %v6082, inf
      %v6093 = vsel %vm6092, %v6082, %v6091
      %vm6094 = vcmp.eq.f32.partialorder %v6082, 0.0
      %v6095 = vand.u32 %v6082, 2147483648
      %v6096 = vsel %vm6094, %v6095, %v6093
      %v6097 = vpack.c.bf16 %v6096, %v6089
      %v6098 = vld [vmem:[%s3 + $0xc0] sm:$0xf]
      %v6099 = vld [vmem:[%s3 + $0xc4] sm:$0xf]
      %v6100 = vld [vmem:[%s3 + $0xc8] sm:$0xf]
      %v6101 = vld [vmem:[%s3 + $0xcc] sm:$0xf]
      %v6102 = vld [vmem:[%s3 + $0xd0] sm:$0xf]
      %v6103 = vld [vmem:[%s3 + $0xd4] sm:$0xf]
      %v6104 = vld [vmem:[%s3 + $0xd8] sm:$0xf]
      %v6105 = vld [vmem:[%s3 + $0xdc] sm:$0xf]
      %v6106 = vld [vmem:[%s3 + $0xe0] sm:$0xf]
      %v6107 = vld [vmem:[%s3 + $0xe4] sm:$0xf]
      %v6108 = vld [vmem:[%s3 + $0xe8] sm:$0xf]
      %v6109 = vld [vmem:[%s3 + $0xec] sm:$0xf]
      %v6110 = vld [vmem:[%s3 + $0xf0] sm:$0xf]
      %v6111 = vld [vmem:[%s3 + $0xf4] sm:$0xf]
      %v6112 = vld [vmem:[%s3 + $0xf8] sm:$0xf]
      %v6113 = vld [vmem:[%s3 + $0xfc] sm:$0xf]
      %v6130 = vunpack.c.l.b16 %v6098
      %v6131 = vunpack.c.l.b16 %v6099
      %v6132 = vunpack.c.l.b16 %v6100
      %v6133 = vunpack.c.l.b16 %v6101
      %v6134 = vunpack.c.l.b16 %v6102
      %v6135 = vunpack.c.l.b16 %v6103
      %v6136 = vunpack.c.l.b16 %v6104
      %v6137 = vunpack.c.l.b16 %v6105
      %v6138 = vunpack.c.l.b16 %v6106
      %v6139 = vunpack.c.l.b16 %v6107
      %v6140 = vunpack.c.l.b16 %v6108
      %v6141 = vunpack.c.l.b16 %v6109
      %v6142 = vunpack.c.l.b16 %v6110
      %v6143 = vunpack.c.l.b16 %v6111
      %v6144 = vunpack.c.l.b16 %v6112
      %v6145 = vunpack.c.l.b16 %v6113
      %v6146 = vpack.c.b16 %v6131, %v6130
      %v6147 = vpack.c.b16 %v6133, %v6132
      %v6148 = vpack.c.b16 %v6135, %v6134
      %v6149 = vpack.c.b16 %v6137, %v6136
      %v6150 = vpack.c.b16 %v6139, %v6138
      %v6151 = vpack.c.b16 %v6141, %v6140
      %v6152 = vpack.c.b16 %v6143, %v6142
      %v6153 = vpack.c.b16 %v6145, %v6144
      %6162 = vmatprep.subr.bf16.mxu0 0
      %6163 = vmatpush1.bf16.msra.mxu0 %v6146
      %6164 = vmatprep.subr.bf16.mxu0 0
      %6165 = vmatpush1.bf16.msra.mxu0 %v6147
      %6166 = vmatprep.subr.bf16.mxu0 0
      %6167 = vmatpush1.bf16.msra.mxu0 %v6148
      %6168 = vmatprep.subr.bf16.mxu0 0
      %6169 = vmatpush1.bf16.msra.mxu0 %v6149
      %6170 = vmatprep.subr.bf16.mxu0 0
      %6171 = vmatpush1.bf16.msra.mxu0 %v6150
      %6172 = vmatprep.subr.bf16.mxu0 0
      %6173 = vmatpush1.bf16.msra.mxu0 %v6151
      %6174 = vmatprep.subr.bf16.mxu0 0
      %6175 = vmatpush1.bf16.msra.mxu0 %v6152
      %6176 = vmatprep.subr.bf16.mxu0 0
      %6177 = vmatpush1.bf16.msra.mxu0 %v6153
      %6178 = vmatprep.subr.bf16.mxu0 0
      %6179 = vmatpush1.bf16.msra.mxu0 0
      %6180 = vmatprep.subr.bf16.mxu0 0
      %6181 = vmatpush1.bf16.msra.mxu0 0
      %6182 = vmatprep.subr.bf16.mxu0 0
      %6183 = vmatpush1.bf16.msra.mxu0 0
      %6184 = vmatprep.subr.bf16.mxu0 0
      %6185 = vmatpush1.bf16.msra.mxu0 0
      %6186 = vmatprep.subr.bf16.mxu0 0
      %6187 = vmatpush1.bf16.msra.mxu0 0
      %6188 = vmatprep.subr.bf16.mxu0 0
      %6189 = vmatpush1.bf16.msra.mxu0 0
      %6190 = vmatprep.subr.bf16.mxu0 0
      %6191 = vmatpush1.bf16.msra.mxu0 0
      %6192 = vmatprep.subr.bf16.mxu0 0
      %6193 = vmatpush1.bf16.msra.mxu0 0
      %6194 = vmatprep.mubr.bf16.mxu0 0
      %6195 = vmatmul.mubr.bf16.gmra.mrb[0].mxu0 %v6097
      %v6196 = vpop.f32.mrb[0].mxu0
      %v6197 = vadd.f32 0.0, %v6196
      %v6198 = vpop.f32.mrb[0].mxu0
      %v6199 = vpop.f32.mrb[0].mxu0
      %v6200 = vadd.f32 0.0, %v6199
      %v6201 = vpop.f32.mrb[0].mxu0
      %6202 = vdwg.mxu0
      %v6203 = vadd.f32 %v4723, %v6197
      %v6204 = vadd.f32 %v4724, %v6200
      %v6205 = vld [vmem:[%s1 + $0x10] sm:$0xf]
      %v6206 = vld [vmem:[%s1 + $0x24] sm:$0xf]
      %v6207 = vld [vmem:[%s1 + $0x38] sm:$0xf]
      %v6208 = vld [vmem:[%s1 + $0x4c] sm:$0xf]
      %v6209 = vld [vmem:[%s1 + $0x60] sm:$0xf]
      %v6210 = vld [vmem:[%s1 + $0x74] sm:$0xf]
      %v6211 = vld [vmem:[%s1 + $0x88] sm:$0xf]
      %v6212 = vld [vmem:[%s1 + $0x9c] sm:$0xf]
      %v6213 = vld [vmem:[%s1 + $0xb0] sm:$0xf]
      %v6214 = vld [vmem:[%s1 + $0xc4] sm:$0xf]
      %v6215 = vld [vmem:[%s1 + $0xd8] sm:$0xf]
      %v6216 = vld [vmem:[%s1 + $0xec] sm:$0xf]
      %v6217 = vld [vmem:[%s1 + $0x100] sm:$0xf]
      %v6218 = vld [vmem:[%s1 + $0x114] sm:$0xf]
      %v6219 = vld [vmem:[%s1 + $0x128] sm:$0xf]
      %v6220 = vld [vmem:[%s1 + $0x13c] sm:$0xf]
      %v6221 = vld [vmem:[%s1 + $0x150] sm:$0xf]
      %v6222 = vld [vmem:[%s1 + $0x164] sm:$0xf]
      %v6223 = vld [vmem:[%s1 + $0x178] sm:$0xf]
      %v6224 = vld [vmem:[%s1 + $0x18c] sm:$0xf]
      %v6225 = vld [vmem:[%s1 + $0x1a0] sm:$0xf]
      %v6226 = vld [vmem:[%s1 + $0x1b4] sm:$0xf]
      %v6227 = vld [vmem:[%s1 + $0x1c8] sm:$0xf]
      %v6228 = vld [vmem:[%s1 + $0x1dc] sm:$0xf]
      %v6229 = vld [vmem:[%s1 + $0x1f0] sm:$0xf]
      %v6230 = vld [vmem:[%s1 + $0x204] sm:$0xf]
      %v6231 = vld [vmem:[%s1 + $0x218] sm:$0xf]
      %v6232 = vld [vmem:[%s1 + $0x22c] sm:$0xf]
      %v6233 = vld [vmem:[%s1 + $0x240] sm:$0xf]
      %v6234 = vld [vmem:[%s1 + $0x254] sm:$0xf]
      %v6235 = vld [vmem:[%s1 + $0x268] sm:$0xf]
      %v6236 = vld [vmem:[%s1 + $0x27c] sm:$0xf]
      %v6237 = vld [vmem:[%s1 + $0x290] sm:$0xf]
      %v6238 = vld [vmem:[%s1 + $0x2a4] sm:$0xf]
      %v6239 = vld [vmem:[%s1 + $0x2b8] sm:$0xf]
      %v6240 = vld [vmem:[%s1 + $0x2cc] sm:$0xf]
      %v6241 = vld [vmem:[%s1 + $0x2e0] sm:$0xf]
      %v6242 = vld [vmem:[%s1 + $0x2f4] sm:$0xf]
      %v6243 = vld [vmem:[%s1 + $0x308] sm:$0xf]
      %v6244 = vld [vmem:[%s1 + $0x31c] sm:$0xf]
      %v6245 = vld [vmem:[%s1 + $0x330] sm:$0xf]
      %v6246 = vld [vmem:[%s1 + $0x344] sm:$0xf]
      %v6247 = vld [vmem:[%s1 + $0x358] sm:$0xf]
      %v6248 = vld [vmem:[%s1 + $0x36c] sm:$0xf]
      %v6249 = vld [vmem:[%s1 + $0x380] sm:$0xf]
      %v6250 = vld [vmem:[%s1 + $0x394] sm:$0xf]
      %v6251 = vld [vmem:[%s1 + $0x3a8] sm:$0xf]
      %v6252 = vld [vmem:[%s1 + $0x3bc] sm:$0xf]
      %v6253 = vld [vmem:[%s1 + $0x3d0] sm:$0xf]
      %v6254 = vld [vmem:[%s1 + $0x3e4] sm:$0xf]
      %v6255 = vld [vmem:[%s1 + $0x3f8] sm:$0xf]
      %v6256 = vld [vmem:[%s1 + $0x40c] sm:$0xf]
      %v6257 = vld [vmem:[%s1 + $0x420] sm:$0xf]
      %v6258 = vld [vmem:[%s1 + $0x434] sm:$0xf]
      %v6259 = vld [vmem:[%s1 + $0x448] sm:$0xf]
      %v6260 = vld [vmem:[%s1 + $0x45c] sm:$0xf]
      %v6261 = vld [vmem:[%s1 + $0x470] sm:$0xf]
      %v6262 = vld [vmem:[%s1 + $0x484] sm:$0xf]
      %v6263 = vld [vmem:[%s1 + $0x498] sm:$0xf]
      %v6264 = vld [vmem:[%s1 + $0x4ac] sm:$0xf]
      %v6265 = vld [vmem:[%s1 + $0x4c0] sm:$0xf]
      %v6266 = vld [vmem:[%s1 + $0x4d4] sm:$0xf]
      %v6267 = vld [vmem:[%s1 + $0x4e8] sm:$0xf]
      %v6268 = vld [vmem:[%s1 + $0x4fc] sm:$0xf]
      %v6269 = vld [vmem:[%s1 + $0x510] sm:$0xf]
      %v6270 = vld [vmem:[%s1 + $0x524] sm:$0xf]
      %v6271 = vld [vmem:[%s1 + $0x538] sm:$0xf]
      %v6272 = vld [vmem:[%s1 + $0x54c] sm:$0xf]
      %v6273 = vld [vmem:[%s1 + $0x560] sm:$0xf]
      %v6274 = vld [vmem:[%s1 + $0x574] sm:$0xf]
      %v6275 = vld [vmem:[%s1 + $0x588] sm:$0xf]
      %v6276 = vld [vmem:[%s1 + $0x59c] sm:$0xf]
      %v6277 = vld [vmem:[%s1 + $0x5b0] sm:$0xf]
      %v6278 = vld [vmem:[%s1 + $0x5c4] sm:$0xf]
      %v6279 = vld [vmem:[%s1 + $0x5d8] sm:$0xf]
      %v6280 = vld [vmem:[%s1 + $0x5ec] sm:$0xf]
      %v6281 = vld [vmem:[%s1 + $0x600] sm:$0xf]
      %v6282 = vld [vmem:[%s1 + $0x614] sm:$0xf]
      %v6283 = vld [vmem:[%s1 + $0x628] sm:$0xf]
      %v6284 = vld [vmem:[%s1 + $0x63c] sm:$0xf]
      %v6285 = vld [vmem:[%s1 + $0x650] sm:$0xf]
      %v6286 = vld [vmem:[%s1 + $0x664] sm:$0xf]
      %v6287 = vld [vmem:[%s1 + $0x678] sm:$0xf]
      %v6288 = vld [vmem:[%s1 + $0x68c] sm:$0xf]
      %v6289 = vld [vmem:[%s1 + $0x6a0] sm:$0xf]
      %v6290 = vld [vmem:[%s1 + $0x6b4] sm:$0xf]
      %v6291 = vld [vmem:[%s1 + $0x6c8] sm:$0xf]
      %v6292 = vld [vmem:[%s1 + $0x6dc] sm:$0xf]
      %v6293 = vld [vmem:[%s1 + $0x6f0] sm:$0xf]
      %v6294 = vld [vmem:[%s1 + $0x704] sm:$0xf]
      %v6295 = vld [vmem:[%s1 + $0x718] sm:$0xf]
      %v6296 = vld [vmem:[%s1 + $0x72c] sm:$0xf]
      %v6297 = vld [vmem:[%s1 + $0x740] sm:$0xf]
      %v6298 = vld [vmem:[%s1 + $0x754] sm:$0xf]
      %v6299 = vld [vmem:[%s1 + $0x768] sm:$0xf]
      %v6300 = vld [vmem:[%s1 + $0x77c] sm:$0xf]
      %v6301 = vld [vmem:[%s1 + $0x790] sm:$0xf]
      %v6302 = vld [vmem:[%s1 + $0x7a4] sm:$0xf]
      %v6303 = vld [vmem:[%s1 + $0x7b8] sm:$0xf]
      %v6304 = vld [vmem:[%s1 + $0x7cc] sm:$0xf]
      %v6305 = vld [vmem:[%s1 + $0x7e0] sm:$0xf]
      %v6306 = vld [vmem:[%s1 + $0x7f4] sm:$0xf]
      %v6307 = vld [vmem:[%s1 + $0x808] sm:$0xf]
      %v6308 = vld [vmem:[%s1 + $0x81c] sm:$0xf]
      %v6309 = vld [vmem:[%s1 + $0x830] sm:$0xf]
      %v6310 = vld [vmem:[%s1 + $0x844] sm:$0xf]
      %v6311 = vld [vmem:[%s1 + $0x858] sm:$0xf]
      %v6312 = vld [vmem:[%s1 + $0x86c] sm:$0xf]
      %v6313 = vld [vmem:[%s1 + $0x880] sm:$0xf]
      %v6314 = vld [vmem:[%s1 + $0x894] sm:$0xf]
      %v6315 = vld [vmem:[%s1 + $0x8a8] sm:$0xf]
      %v6316 = vld [vmem:[%s1 + $0x8bc] sm:$0xf]
      %v6317 = vld [vmem:[%s1 + $0x8d0] sm:$0xf]
      %v6318 = vld [vmem:[%s1 + $0x8e4] sm:$0xf]
      %v6319 = vld [vmem:[%s1 + $0x8f8] sm:$0xf]
      %v6320 = vld [vmem:[%s1 + $0x90c] sm:$0xf]
      %v6321 = vld [vmem:[%s1 + $0x920] sm:$0xf]
      %v6322 = vld [vmem:[%s1 + $0x934] sm:$0xf]
      %v6323 = vld [vmem:[%s1 + $0x948] sm:$0xf]
      %v6324 = vld [vmem:[%s1 + $0x95c] sm:$0xf]
      %v6325 = vld [vmem:[%s1 + $0x970] sm:$0xf]
      %v6326 = vld [vmem:[%s1 + $0x984] sm:$0xf]
      %v6327 = vld [vmem:[%s1 + $0x998] sm:$0xf]
      %v6328 = vld [vmem:[%s1 + $0x9ac] sm:$0xf]
      %v6329 = vld [vmem:[%s1 + $0x9c0] sm:$0xf]
      %v6330 = vld [vmem:[%s1 + $0x9d4] sm:$0xf]
      %v6331 = vld [vmem:[%s1 + $0x9e8] sm:$0xf]
      %v6332 = vld [vmem:[%s1 + $0x9fc] sm:$0xf]
      %v6461 = vunpack.c.l.b16 %v6205
      %v6462 = vunpack.c.l.b16 %v6206
      %v6463 = vunpack.c.l.b16 %v6207
      %v6464 = vunpack.c.l.b16 %v6208
      %v6465 = vunpack.c.l.b16 %v6209
      %v6466 = vunpack.c.l.b16 %v6210
      %v6467 = vunpack.c.l.b16 %v6211
      %v6468 = vunpack.c.l.b16 %v6212
      %v6469 = vunpack.c.l.b16 %v6213
      %v6470 = vunpack.c.l.b16 %v6214
      %v6471 = vunpack.c.l.b16 %v6215
      %v6472 = vunpack.c.l.b16 %v6216
      %v6473 = vunpack.c.l.b16 %v6217
      %v6474 = vunpack.c.l.b16 %v6218
      %v6475 = vunpack.c.l.b16 %v6219
      %v6476 = vunpack.c.l.b16 %v6220
      %v6477 = vunpack.c.l.b16 %v6221
      %v6478 = vunpack.c.l.b16 %v6222
      %v6479 = vunpack.c.l.b16 %v6223
      %v6480 = vunpack.c.l.b16 %v6224
      %v6481 = vunpack.c.l.b16 %v6225
      %v6482 = vunpack.c.l.b16 %v6226
      %v6483 = vunpack.c.l.b16 %v6227
      %v6484 = vunpack.c.l.b16 %v6228
      %v6485 = vunpack.c.l.b16 %v6229
      %v6486 = vunpack.c.l.b16 %v6230
      %v6487 = vunpack.c.l.b16 %v6231
      %v6488 = vunpack.c.l.b16 %v6232
      %v6489 = vunpack.c.l.b16 %v6233
      %v6490 = vunpack.c.l.b16 %v6234
      %v6491 = vunpack.c.l.b16 %v6235
      %v6492 = vunpack.c.l.b16 %v6236
      %v6493 = vunpack.c.l.b16 %v6237
      %v6494 = vunpack.c.l.b16 %v6238
      %v6495 = vunpack.c.l.b16 %v6239
      %v6496 = vunpack.c.l.b16 %v6240
      %v6497 = vunpack.c.l.b16 %v6241
      %v6498 = vunpack.c.l.b16 %v6242
      %v6499 = vunpack.c.l.b16 %v6243
      %v6500 = vunpack.c.l.b16 %v6244
      %v6501 = vunpack.c.l.b16 %v6245
      %v6502 = vunpack.c.l.b16 %v6246
      %v6503 = vunpack.c.l.b16 %v6247
      %v6504 = vunpack.c.l.b16 %v6248
      %v6505 = vunpack.c.l.b16 %v6249
      %v6506 = vunpack.c.l.b16 %v6250
      %v6507 = vunpack.c.l.b16 %v6251
      %v6508 = vunpack.c.l.b16 %v6252
      %v6509 = vunpack.c.l.b16 %v6253
      %v6510 = vunpack.c.l.b16 %v6254
      %v6511 = vunpack.c.l.b16 %v6255
      %v6512 = vunpack.c.l.b16 %v6256
      %v6513 = vunpack.c.l.b16 %v6257
      %v6514 = vunpack.c.l.b16 %v6258
      %v6515 = vunpack.c.l.b16 %v6259
      %v6516 = vunpack.c.l.b16 %v6260
      %v6517 = vunpack.c.l.b16 %v6261
      %v6518 = vunpack.c.l.b16 %v6262
      %v6519 = vunpack.c.l.b16 %v6263
      %v6520 = vunpack.c.l.b16 %v6264
      %v6521 = vunpack.c.l.b16 %v6265
      %v6522 = vunpack.c.l.b16 %v6266
      %v6523 = vunpack.c.l.b16 %v6267
      %v6524 = vunpack.c.l.b16 %v6268
      %v6525 = vunpack.c.l.b16 %v6269
      %v6526 = vunpack.c.l.b16 %v6270
      %v6527 = vunpack.c.l.b16 %v6271
      %v6528 = vunpack.c.l.b16 %v6272
      %v6529 = vunpack.c.l.b16 %v6273
      %v6530 = vunpack.c.l.b16 %v6274
      %v6531 = vunpack.c.l.b16 %v6275
      %v6532 = vunpack.c.l.b16 %v6276
      %v6533 = vunpack.c.l.b16 %v6277
      %v6534 = vunpack.c.l.b16 %v6278
      %v6535 = vunpack.c.l.b16 %v6279
      %v6536 = vunpack.c.l.b16 %v6280
      %v6537 = vunpack.c.l.b16 %v6281
      %v6538 = vunpack.c.l.b16 %v6282
      %v6539 = vunpack.c.l.b16 %v6283
      %v6540 = vunpack.c.l.b16 %v6284
      %v6541 = vunpack.c.l.b16 %v6285
      %v6542 = vunpack.c.l.b16 %v6286
      %v6543 = vunpack.c.l.b16 %v6287
      %v6544 = vunpack.c.l.b16 %v6288
      %v6545 = vunpack.c.l.b16 %v6289
      %v6546 = vunpack.c.l.b16 %v6290
      %v6547 = vunpack.c.l.b16 %v6291
      %v6548 = vunpack.c.l.b16 %v6292
      %v6549 = vunpack.c.l.b16 %v6293
      %v6550 = vunpack.c.l.b16 %v6294
      %v6551 = vunpack.c.l.b16 %v6295
      %v6552 = vunpack.c.l.b16 %v6296
      %v6553 = vunpack.c.l.b16 %v6297
      %v6554 = vunpack.c.l.b16 %v6298
      %v6555 = vunpack.c.l.b16 %v6299
      %v6556 = vunpack.c.l.b16 %v6300
      %v6557 = vunpack.c.l.b16 %v6301
      %v6558 = vunpack.c.l.b16 %v6302
      %v6559 = vunpack.c.l.b16 %v6303
      %v6560 = vunpack.c.l.b16 %v6304
      %v6561 = vunpack.c.l.b16 %v6305
      %v6562 = vunpack.c.l.b16 %v6306
      %v6563 = vunpack.c.l.b16 %v6307
      %v6564 = vunpack.c.l.b16 %v6308
      %v6565 = vunpack.c.l.b16 %v6309
      %v6566 = vunpack.c.l.b16 %v6310
      %v6567 = vunpack.c.l.b16 %v6311
      %v6568 = vunpack.c.l.b16 %v6312
      %v6569 = vunpack.c.l.b16 %v6313
      %v6570 = vunpack.c.l.b16 %v6314
      %v6571 = vunpack.c.l.b16 %v6315
      %v6572 = vunpack.c.l.b16 %v6316
      %v6573 = vunpack.c.l.b16 %v6317
      %v6574 = vunpack.c.l.b16 %v6318
      %v6575 = vunpack.c.l.b16 %v6319
      %v6576 = vunpack.c.l.b16 %v6320
      %v6577 = vunpack.c.l.b16 %v6321
      %v6578 = vunpack.c.l.b16 %v6322
      %v6579 = vunpack.c.l.b16 %v6323
      %v6580 = vunpack.c.l.b16 %v6324
      %v6581 = vunpack.c.l.b16 %v6325
      %v6582 = vunpack.c.l.b16 %v6326
      %v6583 = vunpack.c.l.b16 %v6327
      %v6584 = vunpack.c.l.b16 %v6328
      %v6585 = vunpack.c.l.b16 %v6329
      %v6586 = vunpack.c.l.b16 %v6330
      %v6587 = vunpack.c.l.b16 %v6331
      %v6588 = vunpack.c.l.b16 %v6332
      %v6589 = vpack.c.b16 %v6462, %v6461
      %v6590 = vpack.c.b16 %v6464, %v6463
      %v6591 = vpack.c.b16 %v6466, %v6465
      %v6592 = vpack.c.b16 %v6468, %v6467
      %v6593 = vpack.c.b16 %v6470, %v6469
      %v6594 = vpack.c.b16 %v6472, %v6471
      %v6595 = vpack.c.b16 %v6474, %v6473
      %v6596 = vpack.c.b16 %v6476, %v6475
      %v6597 = vpack.c.b16 %v6478, %v6477
      %v6598 = vpack.c.b16 %v6480, %v6479
      %v6599 = vpack.c.b16 %v6482, %v6481
      %v6600 = vpack.c.b16 %v6484, %v6483
      %v6601 = vpack.c.b16 %v6486, %v6485
      %v6602 = vpack.c.b16 %v6488, %v6487
      %v6603 = vpack.c.b16 %v6490, %v6489
      %v6604 = vpack.c.b16 %v6492, %v6491
      %v6605 = vpack.c.b16 %v6494, %v6493
      %v6606 = vpack.c.b16 %v6496, %v6495
      %v6607 = vpack.c.b16 %v6498, %v6497
      %v6608 = vpack.c.b16 %v6500, %v6499
      %v6609 = vpack.c.b16 %v6502, %v6501
      %v6610 = vpack.c.b16 %v6504, %v6503
      %v6611 = vpack.c.b16 %v6506, %v6505
      %v6612 = vpack.c.b16 %v6508, %v6507
      %v6613 = vpack.c.b16 %v6510, %v6509
      %v6614 = vpack.c.b16 %v6512, %v6511
      %v6615 = vpack.c.b16 %v6514, %v6513
      %v6616 = vpack.c.b16 %v6516, %v6515
      %v6617 = vpack.c.b16 %v6518, %v6517
      %v6618 = vpack.c.b16 %v6520, %v6519
      %v6619 = vpack.c.b16 %v6522, %v6521
      %v6620 = vpack.c.b16 %v6524, %v6523
      %v6621 = vpack.c.b16 %v6526, %v6525
      %v6622 = vpack.c.b16 %v6528, %v6527
      %v6623 = vpack.c.b16 %v6530, %v6529
      %v6624 = vpack.c.b16 %v6532, %v6531
      %v6625 = vpack.c.b16 %v6534, %v6533
      %v6626 = vpack.c.b16 %v6536, %v6535
      %v6627 = vpack.c.b16 %v6538, %v6537
      %v6628 = vpack.c.b16 %v6540, %v6539
      %v6629 = vpack.c.b16 %v6542, %v6541
      %v6630 = vpack.c.b16 %v6544, %v6543
      %v6631 = vpack.c.b16 %v6546, %v6545
      %v6632 = vpack.c.b16 %v6548, %v6547
      %v6633 = vpack.c.b16 %v6550, %v6549
      %v6634 = vpack.c.b16 %v6552, %v6551
      %v6635 = vpack.c.b16 %v6554, %v6553
      %v6636 = vpack.c.b16 %v6556, %v6555
      %v6637 = vpack.c.b16 %v6558, %v6557
      %v6638 = vpack.c.b16 %v6560, %v6559
      %v6639 = vpack.c.b16 %v6562, %v6561
      %v6640 = vpack.c.b16 %v6564, %v6563
      %v6641 = vpack.c.b16 %v6566, %v6565
      %v6642 = vpack.c.b16 %v6568, %v6567
      %v6643 = vpack.c.b16 %v6570, %v6569
      %v6644 = vpack.c.b16 %v6572, %v6571
      %v6645 = vpack.c.b16 %v6574, %v6573
      %v6646 = vpack.c.b16 %v6576, %v6575
      %v6647 = vpack.c.b16 %v6578, %v6577
      %v6648 = vpack.c.b16 %v6580, %v6579
      %v6649 = vpack.c.b16 %v6582, %v6581
      %v6650 = vpack.c.b16 %v6584, %v6583
      %v6651 = vpack.c.b16 %v6586, %v6585
      %v6652 = vpack.c.b16 %v6588, %v6587
      %6717 = vmatprep.subr.bf16.mxu0 0
      %6718 = vmatpush1.bf16.msra.mxu0 %v6589
      %6719 = vmatprep.subr.bf16.mxu0 0
      %6720 = vmatpush1.bf16.msra.mxu0 %v6590
      %6721 = vmatprep.subr.bf16.mxu0 0
      %6722 = vmatpush1.bf16.msra.mxu0 %v6591
      %6723 = vmatprep.subr.bf16.mxu0 0
      %6724 = vmatpush1.bf16.msra.mxu0 %v6592
      %6725 = vmatprep.subr.bf16.mxu0 0
      %6726 = vmatpush1.bf16.msra.mxu0 %v6593
      %6727 = vmatprep.subr.bf16.mxu0 0
      %6728 = vmatpush1.bf16.msra.mxu0 %v6594
      %6729 = vmatprep.subr.bf16.mxu0 0
      %6730 = vmatpush1.bf16.msra.mxu0 %v6595
      %6731 = vmatprep.subr.bf16.mxu0 0
      %6732 = vmatpush1.bf16.msra.mxu0 %v6596
      %6733 = vmatprep.subr.bf16.mxu0 0
      %6734 = vmatpush1.bf16.msra.mxu0 %v6597
      %6735 = vmatprep.subr.bf16.mxu0 0
      %6736 = vmatpush1.bf16.msra.mxu0 %v6598
      %6737 = vmatprep.subr.bf16.mxu0 0
      %6738 = vmatpush1.bf16.msra.mxu0 %v6599
      %6739 = vmatprep.subr.bf16.mxu0 0
      %6740 = vmatpush1.bf16.msra.mxu0 %v6600
      %6741 = vmatprep.subr.bf16.mxu0 0
      %6742 = vmatpush1.bf16.msra.mxu0 %v6601
      %6743 = vmatprep.subr.bf16.mxu0 0
      %6744 = vmatpush1.bf16.msra.mxu0 %v6602
      %6745 = vmatprep.subr.bf16.mxu0 0
      %6746 = vmatpush1.bf16.msra.mxu0 %v6603
      %6747 = vmatprep.subr.bf16.mxu0 0
      %6748 = vmatpush1.bf16.msra.mxu0 %v6604
      %6749 = vmatprep.mubr.bf16.mxu0 %v402
      %6750 = vmatmul.mubr.bf16.gmra.mrb[0].mxu0 %v401
      %v6751 = vpop.f32.mrb[0].mxu0
      %v6752 = vadd.f32 0.0, %v6751
      %v6753 = vpop.f32.mrb[0].mxu0
      %v6754 = vpop.f32.mrb[0].mxu0
      %v6755 = vadd.f32 0.0, %v6754
      %v6756 = vpop.f32.mrb[0].mxu0
      %6757 = vdwg.mxu0
      %6758 = vmatprep.subr.bf16.mxu0 0
      %6759 = vmatpush1.bf16.msra.mxu0 %v6605
      %6760 = vmatprep.subr.bf16.mxu0 0
      %6761 = vmatpush1.bf16.msra.mxu0 %v6606
      %6762 = vmatprep.subr.bf16.mxu0 0
      %6763 = vmatpush1.bf16.msra.mxu0 %v6607
      %6764 = vmatprep.subr.bf16.mxu0 0
      %6765 = vmatpush1.bf16.msra.mxu0 %v6608
      %6766 = vmatprep.subr.bf16.mxu0 0
      %6767 = vmatpush1.bf16.msra.mxu0 %v6609
      %6768 = vmatprep.subr.bf16.mxu0 0
      %6769 = vmatpush1.bf16.msra.mxu0 %v6610
      %6770 = vmatprep.subr.bf16.mxu0 0
      %6771 = vmatpush1.bf16.msra.mxu0 %v6611
      %6772 = vmatprep.subr.bf16.mxu0 0
      %6773 = vmatpush1.bf16.msra.mxu0 %v6612
      %6774 = vmatprep.subr.bf16.mxu0 0
      %6775 = vmatpush1.bf16.msra.mxu0 %v6613
      %6776 = vmatprep.subr.bf16.mxu0 0
      %6777 = vmatpush1.bf16.msra.mxu0 %v6614
      %6778 = vmatprep.subr.bf16.mxu0 0
      %6779 = vmatpush1.bf16.msra.mxu0 %v6615
      %6780 = vmatprep.subr.bf16.mxu0 0
      %6781 = vmatpush1.bf16.msra.mxu0 %v6616
      %6782 = vmatprep.subr.bf16.mxu0 0
      %6783 = vmatpush1.bf16.msra.mxu0 %v6617
      %6784 = vmatprep.subr.bf16.mxu0 0
      %6785 = vmatpush1.bf16.msra.mxu0 %v6618
      %6786 = vmatprep.subr.bf16.mxu0 0
      %6787 = vmatpush1.bf16.msra.mxu0 %v6619
      %6788 = vmatprep.subr.bf16.mxu0 0
      %6789 = vmatpush1.bf16.msra.mxu0 %v6620
      %6790 = vmatprep.mubr.bf16.mxu0 %v404
      %6791 = vmatmul.mubr.bf16.gmra.mrb[0].mxu0 %v403
      %v6792 = vpop.f32.mrb[0].mxu0
      %v6793 = vadd.f32 %v6752, %v6792
      %v6794 = vpop.f32.mrb[0].mxu0
      %v6795 = vpop.f32.mrb[0].mxu0
      %v6796 = vadd.f32 %v6755, %v6795
      %v6797 = vpop.f32.mrb[0].mxu0
      %6798 = vdwg.mxu0
      %6799 = vmatprep.subr.bf16.mxu0 0
      %6800 = vmatpush1.bf16.msra.mxu0 %v6621
      %6801 = vmatprep.subr.bf16.mxu0 0
      %6802 = vmatpush1.bf16.msra.mxu0 %v6622
      %6803 = vmatprep.subr.bf16.mxu0 0
      %6804 = vmatpush1.bf16.msra.mxu0 %v6623
      %6805 = vmatprep.subr.bf16.mxu0 0
      %6806 = vmatpush1.bf16.msra.mxu0 %v6624
      %6807 = vmatprep.subr.bf16.mxu0 0
      %6808 = vmatpush1.bf16.msra.mxu0 %v6625
      %6809 = vmatprep.subr.bf16.mxu0 0
      %6810 = vmatpush1.bf16.msra.mxu0 %v6626
      %6811 = vmatprep.subr.bf16.mxu0 0
      %6812 = vmatpush1.bf16.msra.mxu0 %v6627
      %6813 = vmatprep.subr.bf16.mxu0 0
      %6814 = vmatpush1.bf16.msra.mxu0 %v6628
      %6815 = vmatprep.subr.bf16.mxu0 0
      %6816 = vmatpush1.bf16.msra.mxu0 %v6629
      %6817 = vmatprep.subr.bf16.mxu0 0
      %6818 = vmatpush1.bf16.msra.mxu0 %v6630
      %6819 = vmatprep.subr.bf16.mxu0 0
      %6820 = vmatpush1.bf16.msra.mxu0 %v6631
      %6821 = vmatprep.subr.bf16.mxu0 0
      %6822 = vmatpush1.bf16.msra.mxu0 %v6632
      %6823 = vmatprep.subr.bf16.mxu0 0
      %6824 = vmatpush1.bf16.msra.mxu0 %v6633
      %6825 = vmatprep.subr.bf16.mxu0 0
      %6826 = vmatpush1.bf16.msra.mxu0 %v6634
      %6827 = vmatprep.subr.bf16.mxu0 0
      %6828 = vmatpush1.bf16.msra.mxu0 %v6635
      %6829 = vmatprep.subr.bf16.mxu0 0
      %6830 = vmatpush1.bf16.msra.mxu0 %v6636
      %6831 = vmatprep.mubr.bf16.mxu0 %v406
      %6832 = vmatmul.mubr.bf16.gmra.mrb[0].mxu0 %v405
      %v6833 = vpop.f32.mrb[0].mxu0
      %v6834 = vadd.f32 %v6793, %v6833
      %v6835 = vpop.f32.mrb[0].mxu0
      %v6836 = vpop.f32.mrb[0].mxu0
      %v6837 = vadd.f32 %v6796, %v6836
      %v6838 = vpop.f32.mrb[0].mxu0
      %6839 = vdwg.mxu0
      %6840 = vmatprep.subr.bf16.mxu0 0
      %6841 = vmatpush1.bf16.msra.mxu0 %v6637
      %6842 = vmatprep.subr.bf16.mxu0 0
      %6843 = vmatpush1.bf16.msra.mxu0 %v6638
      %6844 = vmatprep.subr.bf16.mxu0 0
      %6845 = vmatpush1.bf16.msra.mxu0 %v6639
      %6846 = vmatprep.subr.bf16.mxu0 0
      %6847 = vmatpush1.bf16.msra.mxu0 %v6640
      %6848 = vmatprep.subr.bf16.mxu0 0
      %6849 = vmatpush1.bf16.msra.mxu0 %v6641
      %6850 = vmatprep.subr.bf16.mxu0 0
      %6851 = vmatpush1.bf16.msra.mxu0 %v6642
      %6852 = vmatprep.subr.bf16.mxu0 0
      %6853 = vmatpush1.bf16.msra.mxu0 %v6643
      %6854 = vmatprep.subr.bf16.mxu0 0
      %6855 = vmatpush1.bf16.msra.mxu0 %v6644
      %6856 = vmatprep.subr.bf16.mxu0 0
      %6857 = vmatpush1.bf16.msra.mxu0 %v6645
      %6858 = vmatprep.subr.bf16.mxu0 0
      %6859 = vmatpush1.bf16.msra.mxu0 %v6646
      %6860 = vmatprep.subr.bf16.mxu0 0
      %6861 = vmatpush1.bf16.msra.mxu0 %v6647
      %6862 = vmatprep.subr.bf16.mxu0 0
      %6863 = vmatpush1.bf16.msra.mxu0 %v6648
      %6864 = vmatprep.subr.bf16.mxu0 0
      %6865 = vmatpush1.bf16.msra.mxu0 %v6649
      %6866 = vmatprep.subr.bf16.mxu0 0
      %6867 = vmatpush1.bf16.msra.mxu0 %v6650
      %6868 = vmatprep.subr.bf16.mxu0 0
      %6869 = vmatpush1.bf16.msra.mxu0 %v6651
      %6870 = vmatprep.subr.bf16.mxu0 0
      %6871 = vmatpush1.bf16.msra.mxu0 %v6652
      %6872 = vmatprep.mubr.bf16.mxu0 %v408
      %6873 = vmatmul.mubr.bf16.gmra.mrb[0].mxu0 %v407
      %v6874 = vpop.f32.mrb[0].mxu0
      %v6875 = vadd.f32 %v6834, %v6874
      %v6876 = vpop.f32.mrb[0].mxu0
      %v6877 = vpop.f32.mrb[0].mxu0
      %v6878 = vadd.f32 %v6837, %v6877
      %v6879 = vpop.f32.mrb[0].mxu0
      %6880 = vdwg.mxu0
      %v6881 = vld [vmem:[%s2 + $0x10] sm:$0xf]
      %v6882 = vld [vmem:[%s2 + $0x24] sm:$0xf]
      %v6883 = vld [vmem:[%s2 + $0x38] sm:$0xf]
      %v6884 = vld [vmem:[%s2 + $0x4c] sm:$0xf]
      %v6885 = vld [vmem:[%s2 + $0x60] sm:$0xf]
      %v6886 = vld [vmem:[%s2 + $0x74] sm:$0xf]
      %v6887 = vld [vmem:[%s2 + $0x88] sm:$0xf]
      %v6888 = vld [vmem:[%s2 + $0x9c] sm:$0xf]
      %v6889 = vld [vmem:[%s2 + $0xb0] sm:$0xf]
      %v6890 = vld [vmem:[%s2 + $0xc4] sm:$0xf]
      %v6891 = vld [vmem:[%s2 + $0xd8] sm:$0xf]
      %v6892 = vld [vmem:[%s2 + $0xec] sm:$0xf]
      %v6893 = vld [vmem:[%s2 + $0x100] sm:$0xf]
      %v6894 = vld [vmem:[%s2 + $0x114] sm:$0xf]
      %v6895 = vld [vmem:[%s2 + $0x128] sm:$0xf]
      %v6896 = vld [vmem:[%s2 + $0x13c] sm:$0xf]
      %v6897 = vld [vmem:[%s2 + $0x150] sm:$0xf]
      %v6898 = vld [vmem:[%s2 + $0x164] sm:$0xf]
      %v6899 = vld [vmem:[%s2 + $0x178] sm:$0xf]
      %v6900 = vld [vmem:[%s2 + $0x18c] sm:$0xf]
      %v6901 = vld [vmem:[%s2 + $0x1a0] sm:$0xf]
      %v6902 = vld [vmem:[%s2 + $0x1b4] sm:$0xf]
      %v6903 = vld [vmem:[%s2 + $0x1c8] sm:$0xf]
      %v6904 = vld [vmem:[%s2 + $0x1dc] sm:$0xf]
      %v6905 = vld [vmem:[%s2 + $0x1f0] sm:$0xf]
      %v6906 = vld [vmem:[%s2 + $0x204] sm:$0xf]
      %v6907 = vld [vmem:[%s2 + $0x218] sm:$0xf]
      %v6908 = vld [vmem:[%s2 + $0x22c] sm:$0xf]
      %v6909 = vld [vmem:[%s2 + $0x240] sm:$0xf]
      %v6910 = vld [vmem:[%s2 + $0x254] sm:$0xf]
      %v6911 = vld [vmem:[%s2 + $0x268] sm:$0xf]
      %v6912 = vld [vmem:[%s2 + $0x27c] sm:$0xf]
      %v6913 = vld [vmem:[%s2 + $0x290] sm:$0xf]
      %v6914 = vld [vmem:[%s2 + $0x2a4] sm:$0xf]
      %v6915 = vld [vmem:[%s2 + $0x2b8] sm:$0xf]
      %v6916 = vld [vmem:[%s2 + $0x2cc] sm:$0xf]
      %v6917 = vld [vmem:[%s2 + $0x2e0] sm:$0xf]
      %v6918 = vld [vmem:[%s2 + $0x2f4] sm:$0xf]
      %v6919 = vld [vmem:[%s2 + $0x308] sm:$0xf]
      %v6920 = vld [vmem:[%s2 + $0x31c] sm:$0xf]
      %v6921 = vld [vmem:[%s2 + $0x330] sm:$0xf]
      %v6922 = vld [vmem:[%s2 + $0x344] sm:$0xf]
      %v6923 = vld [vmem:[%s2 + $0x358] sm:$0xf]
      %v6924 = vld [vmem:[%s2 + $0x36c] sm:$0xf]
      %v6925 = vld [vmem:[%s2 + $0x380] sm:$0xf]
      %v6926 = vld [vmem:[%s2 + $0x394] sm:$0xf]
      %v6927 = vld [vmem:[%s2 + $0x3a8] sm:$0xf]
      %v6928 = vld [vmem:[%s2 + $0x3bc] sm:$0xf]
      %v6929 = vld [vmem:[%s2 + $0x3d0] sm:$0xf]
      %v6930 = vld [vmem:[%s2 + $0x3e4] sm:$0xf]
      %v6931 = vld [vmem:[%s2 + $0x3f8] sm:$0xf]
      %v6932 = vld [vmem:[%s2 + $0x40c] sm:$0xf]
      %v6933 = vld [vmem:[%s2 + $0x420] sm:$0xf]
      %v6934 = vld [vmem:[%s2 + $0x434] sm:$0xf]
      %v6935 = vld [vmem:[%s2 + $0x448] sm:$0xf]
      %v6936 = vld [vmem:[%s2 + $0x45c] sm:$0xf]
      %v6937 = vld [vmem:[%s2 + $0x470] sm:$0xf]
      %v6938 = vld [vmem:[%s2 + $0x484] sm:$0xf]
      %v6939 = vld [vmem:[%s2 + $0x498] sm:$0xf]
      %v6940 = vld [vmem:[%s2 + $0x4ac] sm:$0xf]
      %v6941 = vld [vmem:[%s2 + $0x4c0] sm:$0xf]
      %v6942 = vld [vmem:[%s2 + $0x4d4] sm:$0xf]
      %v6943 = vld [vmem:[%s2 + $0x4e8] sm:$0xf]
      %v6944 = vld [vmem:[%s2 + $0x4fc] sm:$0xf]
      %v6945 = vld [vmem:[%s2 + $0x510] sm:$0xf]
      %v6946 = vld [vmem:[%s2 + $0x524] sm:$0xf]
      %v6947 = vld [vmem:[%s2 + $0x538] sm:$0xf]
      %v6948 = vld [vmem:[%s2 + $0x54c] sm:$0xf]
      %v6949 = vld [vmem:[%s2 + $0x560] sm:$0xf]
      %v6950 = vld [vmem:[%s2 + $0x574] sm:$0xf]
      %v6951 = vld [vmem:[%s2 + $0x588] sm:$0xf]
      %v6952 = vld [vmem:[%s2 + $0x59c] sm:$0xf]
      %v6953 = vld [vmem:[%s2 + $0x5b0] sm:$0xf]
      %v6954 = vld [vmem:[%s2 + $0x5c4] sm:$0xf]
      %v6955 = vld [vmem:[%s2 + $0x5d8] sm:$0xf]
      %v6956 = vld [vmem:[%s2 + $0x5ec] sm:$0xf]
      %v6957 = vld [vmem:[%s2 + $0x600] sm:$0xf]
      %v6958 = vld [vmem:[%s2 + $0x614] sm:$0xf]
      %v6959 = vld [vmem:[%s2 + $0x628] sm:$0xf]
      %v6960 = vld [vmem:[%s2 + $0x63c] sm:$0xf]
      %v6961 = vld [vmem:[%s2 + $0x650] sm:$0xf]
      %v6962 = vld [vmem:[%s2 + $0x664] sm:$0xf]
      %v6963 = vld [vmem:[%s2 + $0x678] sm:$0xf]
      %v6964 = vld [vmem:[%s2 + $0x68c] sm:$0xf]
      %v6965 = vld [vmem:[%s2 + $0x6a0] sm:$0xf]
      %v6966 = vld [vmem:[%s2 + $0x6b4] sm:$0xf]
      %v6967 = vld [vmem:[%s2 + $0x6c8] sm:$0xf]
      %v6968 = vld [vmem:[%s2 + $0x6dc] sm:$0xf]
      %v6969 = vld [vmem:[%s2 + $0x6f0] sm:$0xf]
      %v6970 = vld [vmem:[%s2 + $0x704] sm:$0xf]
      %v6971 = vld [vmem:[%s2 + $0x718] sm:$0xf]
      %v6972 = vld [vmem:[%s2 + $0x72c] sm:$0xf]
      %v6973 = vld [vmem:[%s2 + $0x740] sm:$0xf]
      %v6974 = vld [vmem:[%s2 + $0x754] sm:$0xf]
      %v6975 = vld [vmem:[%s2 + $0x768] sm:$0xf]
      %v6976 = vld [vmem:[%s2 + $0x77c] sm:$0xf]
      %v6977 = vld [vmem:[%s2 + $0x790] sm:$0xf]
      %v6978 = vld [vmem:[%s2 + $0x7a4] sm:$0xf]
      %v6979 = vld [vmem:[%s2 + $0x7b8] sm:$0xf]
      %v6980 = vld [vmem:[%s2 + $0x7cc] sm:$0xf]
      %v6981 = vld [vmem:[%s2 + $0x7e0] sm:$0xf]
      %v6982 = vld [vmem:[%s2 + $0x7f4] sm:$0xf]
      %v6983 = vld [vmem:[%s2 + $0x808] sm:$0xf]
      %v6984 = vld [vmem:[%s2 + $0x81c] sm:$0xf]
      %v6985 = vld [vmem:[%s2 + $0x830] sm:$0xf]
      %v6986 = vld [vmem:[%s2 + $0x844] sm:$0xf]
      %v6987 = vld [vmem:[%s2 + $0x858] sm:$0xf]
      %v6988 = vld [vmem:[%s2 + $0x86c] sm:$0xf]
      %v6989 = vld [vmem:[%s2 + $0x880] sm:$0xf]
      %v6990 = vld [vmem:[%s2 + $0x894] sm:$0xf]
      %v6991 = vld [vmem:[%s2 + $0x8a8] sm:$0xf]
      %v6992 = vld [vmem:[%s2 + $0x8bc] sm:$0xf]
      %v6993 = vld [vmem:[%s2 + $0x8d0] sm:$0xf]
      %v6994 = vld [vmem:[%s2 + $0x8e4] sm:$0xf]
      %v6995 = vld [vmem:[%s2 + $0x8f8] sm:$0xf]
      %v6996 = vld [vmem:[%s2 + $0x90c] sm:$0xf]
      %v6997 = vld [vmem:[%s2 + $0x920] sm:$0xf]
      %v6998 = vld [vmem:[%s2 + $0x934] sm:$0xf]
      %v6999 = vld [vmem:[%s2 + $0x948] sm:$0xf]
      %v7000 = vld [vmem:[%s2 + $0x95c] sm:$0xf]
      %v7001 = vld [vmem:[%s2 + $0x970] sm:$0xf]
      %v7002 = vld [vmem:[%s2 + $0x984] sm:$0xf]
      %v7003 = vld [vmem:[%s2 + $0x998] sm:$0xf]
      %v7004 = vld [vmem:[%s2 + $0x9ac] sm:$0xf]
      %v7005 = vld [vmem:[%s2 + $0x9c0] sm:$0xf]
      %v7006 = vld [vmem:[%s2 + $0x9d4] sm:$0xf]
      %v7007 = vld [vmem:[%s2 + $0x9e8] sm:$0xf]
      %v7008 = vld [vmem:[%s2 + $0x9fc] sm:$0xf]
      %v7137 = vunpack.c.l.b16 %v6881
      %v7138 = vunpack.c.l.b16 %v6882
      %v7139 = vunpack.c.l.b16 %v6883
      %v7140 = vunpack.c.l.b16 %v6884
      %v7141 = vunpack.c.l.b16 %v6885
      %v7142 = vunpack.c.l.b16 %v6886
      %v7143 = vunpack.c.l.b16 %v6887
      %v7144 = vunpack.c.l.b16 %v6888
      %v7145 = vunpack.c.l.b16 %v6889
      %v7146 = vunpack.c.l.b16 %v6890
      %v7147 = vunpack.c.l.b16 %v6891
      %v7148 = vunpack.c.l.b16 %v6892
      %v7149 = vunpack.c.l.b16 %v6893
      %v7150 = vunpack.c.l.b16 %v6894
      %v7151 = vunpack.c.l.b16 %v6895
      %v7152 = vunpack.c.l.b16 %v6896
      %v7153 = vunpack.c.l.b16 %v6897
      %v7154 = vunpack.c.l.b16 %v6898
      %v7155 = vunpack.c.l.b16 %v6899
      %v7156 = vunpack.c.l.b16 %v6900
      %v7157 = vunpack.c.l.b16 %v6901
      %v7158 = vunpack.c.l.b16 %v6902
      %v7159 = vunpack.c.l.b16 %v6903
      %v7160 = vunpack.c.l.b16 %v6904
      %v7161 = vunpack.c.l.b16 %v6905
      %v7162 = vunpack.c.l.b16 %v6906
      %v7163 = vunpack.c.l.b16 %v6907
      %v7164 = vunpack.c.l.b16 %v6908
      %v7165 = vunpack.c.l.b16 %v6909
      %v7166 = vunpack.c.l.b16 %v6910
      %v7167 = vunpack.c.l.b16 %v6911
      %v7168 = vunpack.c.l.b16 %v6912
      %v7169 = vunpack.c.l.b16 %v6913
      %v7170 = vunpack.c.l.b16 %v6914
      %v7171 = vunpack.c.l.b16 %v6915
      %v7172 = vunpack.c.l.b16 %v6916
      %v7173 = vunpack.c.l.b16 %v6917
      %v7174 = vunpack.c.l.b16 %v6918
      %v7175 = vunpack.c.l.b16 %v6919
      %v7176 = vunpack.c.l.b16 %v6920
      %v7177 = vunpack.c.l.b16 %v6921
      %v7178 = vunpack.c.l.b16 %v6922
      %v7179 = vunpack.c.l.b16 %v6923
      %v7180 = vunpack.c.l.b16 %v6924
      %v7181 = vunpack.c.l.b16 %v6925
      %v7182 = vunpack.c.l.b16 %v6926
      %v7183 = vunpack.c.l.b16 %v6927
      %v7184 = vunpack.c.l.b16 %v6928
      %v7185 = vunpack.c.l.b16 %v6929
      %v7186 = vunpack.c.l.b16 %v6930
      %v7187 = vunpack.c.l.b16 %v6931
      %v7188 = vunpack.c.l.b16 %v6932
      %v7189 = vunpack.c.l.b16 %v6933
      %v7190 = vunpack.c.l.b16 %v6934
      %v7191 = vunpack.c.l.b16 %v6935
      %v7192 = vunpack.c.l.b16 %v6936
      %v7193 = vunpack.c.l.b16 %v6937
      %v7194 = vunpack.c.l.b16 %v6938
      %v7195 = vunpack.c.l.b16 %v6939
      %v7196 = vunpack.c.l.b16 %v6940
      %v7197 = vunpack.c.l.b16 %v6941
      %v7198 = vunpack.c.l.b16 %v6942
      %v7199 = vunpack.c.l.b16 %v6943
      %v7200 = vunpack.c.l.b16 %v6944
      %v7201 = vunpack.c.l.b16 %v6945
      %v7202 = vunpack.c.l.b16 %v6946
      %v7203 = vunpack.c.l.b16 %v6947
      %v7204 = vunpack.c.l.b16 %v6948
      %v7205 = vunpack.c.l.b16 %v6949
      %v7206 = vunpack.c.l.b16 %v6950
      %v7207 = vunpack.c.l.b16 %v6951
      %v7208 = vunpack.c.l.b16 %v6952
      %v7209 = vunpack.c.l.b16 %v6953
      %v7210 = vunpack.c.l.b16 %v6954
      %v7211 = vunpack.c.l.b16 %v6955
      %v7212 = vunpack.c.l.b16 %v6956
      %v7213 = vunpack.c.l.b16 %v6957
      %v7214 = vunpack.c.l.b16 %v6958
      %v7215 = vunpack.c.l.b16 %v6959
      %v7216 = vunpack.c.l.b16 %v6960
      %v7217 = vunpack.c.l.b16 %v6961
      %v7218 = vunpack.c.l.b16 %v6962
      %v7219 = vunpack.c.l.b16 %v6963
      %v7220 = vunpack.c.l.b16 %v6964
      %v7221 = vunpack.c.l.b16 %v6965
      %v7222 = vunpack.c.l.b16 %v6966
      %v7223 = vunpack.c.l.b16 %v6967
      %v7224 = vunpack.c.l.b16 %v6968
      %v7225 = vunpack.c.l.b16 %v6969
      %v7226 = vunpack.c.l.b16 %v6970
      %v7227 = vunpack.c.l.b16 %v6971
      %v7228 = vunpack.c.l.b16 %v6972
      %v7229 = vunpack.c.l.b16 %v6973
      %v7230 = vunpack.c.l.b16 %v6974
      %v7231 = vunpack.c.l.b16 %v6975
      %v7232 = vunpack.c.l.b16 %v6976
      %v7233 = vunpack.c.l.b16 %v6977
      %v7234 = vunpack.c.l.b16 %v6978
      %v7235 = vunpack.c.l.b16 %v6979
      %v7236 = vunpack.c.l.b16 %v6980
      %v7237 = vunpack.c.l.b16 %v6981
      %v7238 = vunpack.c.l.b16 %v6982
      %v7239 = vunpack.c.l.b16 %v6983
      %v7240 = vunpack.c.l.b16 %v6984
      %v7241 = vunpack.c.l.b16 %v6985
      %v7242 = vunpack.c.l.b16 %v6986
      %v7243 = vunpack.c.l.b16 %v6987
      %v7244 = vunpack.c.l.b16 %v6988
      %v7245 = vunpack.c.l.b16 %v6989
      %v7246 = vunpack.c.l.b16 %v6990
      %v7247 = vunpack.c.l.b16 %v6991
      %v7248 = vunpack.c.l.b16 %v6992
      %v7249 = vunpack.c.l.b16 %v6993
      %v7250 = vunpack.c.l.b16 %v6994
      %v7251 = vunpack.c.l.b16 %v6995
      %v7252 = vunpack.c.l.b16 %v6996
      %v7253 = vunpack.c.l.b16 %v6997
      %v7254 = vunpack.c.l.b16 %v6998
      %v7255 = vunpack.c.l.b16 %v6999
      %v7256 = vunpack.c.l.b16 %v7000
      %v7257 = vunpack.c.l.b16 %v7001
      %v7258 = vunpack.c.l.b16 %v7002
      %v7259 = vunpack.c.l.b16 %v7003
      %v7260 = vunpack.c.l.b16 %v7004
      %v7261 = vunpack.c.l.b16 %v7005
      %v7262 = vunpack.c.l.b16 %v7006
      %v7263 = vunpack.c.l.b16 %v7007
      %v7264 = vunpack.c.l.b16 %v7008
      %v7265 = vpack.c.b16 %v7138, %v7137
      %v7266 = vpack.c.b16 %v7140, %v7139
      %v7267 = vpack.c.b16 %v7142, %v7141
      %v7268 = vpack.c.b16 %v7144, %v7143
      %v7269 = vpack.c.b16 %v7146, %v7145
      %v7270 = vpack.c.b16 %v7148, %v7147
      %v7271 = vpack.c.b16 %v7150, %v7149
      %v7272 = vpack.c.b16 %v7152, %v7151
      %v7273 = vpack.c.b16 %v7154, %v7153
      %v7274 = vpack.c.b16 %v7156, %v7155
      %v7275 = vpack.c.b16 %v7158, %v7157
      %v7276 = vpack.c.b16 %v7160, %v7159
      %v7277 = vpack.c.b16 %v7162, %v7161
      %v7278 = vpack.c.b16 %v7164, %v7163
      %v7279 = vpack.c.b16 %v7166, %v7165
      %v7280 = vpack.c.b16 %v7168, %v7167
      %v7281 = vpack.c.b16 %v7170, %v7169
      %v7282 = vpack.c.b16 %v7172, %v7171
      %v7283 = vpack.c.b16 %v7174, %v7173
      %v7284 = vpack.c.b16 %v7176, %v7175
      %v7285 = vpack.c.b16 %v7178, %v7177
      %v7286 = vpack.c.b16 %v7180, %v7179
      %v7287 = vpack.c.b16 %v7182, %v7181
      %v7288 = vpack.c.b16 %v7184, %v7183
      %v7289 = vpack.c.b16 %v7186, %v7185
      %v7290 = vpack.c.b16 %v7188, %v7187
      %v7291 = vpack.c.b16 %v7190, %v7189
      %v7292 = vpack.c.b16 %v7192, %v7191
      %v7293 = vpack.c.b16 %v7194, %v7193
      %v7294 = vpack.c.b16 %v7196, %v7195
      %v7295 = vpack.c.b16 %v7198, %v7197
      %v7296 = vpack.c.b16 %v7200, %v7199
      %v7297 = vpack.c.b16 %v7202, %v7201
      %v7298 = vpack.c.b16 %v7204, %v7203
      %v7299 = vpack.c.b16 %v7206, %v7205
      %v7300 = vpack.c.b16 %v7208, %v7207
      %v7301 = vpack.c.b16 %v7210, %v7209
      %v7302 = vpack.c.b16 %v7212, %v7211
      %v7303 = vpack.c.b16 %v7214, %v7213
      %v7304 = vpack.c.b16 %v7216, %v7215
      %v7305 = vpack.c.b16 %v7218, %v7217
      %v7306 = vpack.c.b16 %v7220, %v7219
      %v7307 = vpack.c.b16 %v7222, %v7221
      %v7308 = vpack.c.b16 %v7224, %v7223
      %v7309 = vpack.c.b16 %v7226, %v7225
      %v7310 = vpack.c.b16 %v7228, %v7227
      %v7311 = vpack.c.b16 %v7230, %v7229
      %v7312 = vpack.c.b16 %v7232, %v7231
      %v7313 = vpack.c.b16 %v7234, %v7233
      %v7314 = vpack.c.b16 %v7236, %v7235
      %v7315 = vpack.c.b16 %v7238, %v7237
      %v7316 = vpack.c.b16 %v7240, %v7239
      %v7317 = vpack.c.b16 %v7242, %v7241
      %v7318 = vpack.c.b16 %v7244, %v7243
      %v7319 = vpack.c.b16 %v7246, %v7245
      %v7320 = vpack.c.b16 %v7248, %v7247
      %v7321 = vpack.c.b16 %v7250, %v7249
      %v7322 = vpack.c.b16 %v7252, %v7251
      %v7323 = vpack.c.b16 %v7254, %v7253
      %v7324 = vpack.c.b16 %v7256, %v7255
      %v7325 = vpack.c.b16 %v7258, %v7257
      %v7326 = vpack.c.b16 %v7260, %v7259
      %v7327 = vpack.c.b16 %v7262, %v7261
      %v7328 = vpack.c.b16 %v7264, %v7263
      %7393 = vmatprep.subr.bf16.mxu0 0
      %7394 = vmatpush1.bf16.msra.mxu0 %v7265
      %7395 = vmatprep.subr.bf16.mxu0 0
      %7396 = vmatpush1.bf16.msra.mxu0 %v7266
      %7397 = vmatprep.subr.bf16.mxu0 0
      %7398 = vmatpush1.bf16.msra.mxu0 %v7267
      %7399 = vmatprep.subr.bf16.mxu0 0
      %7400 = vmatpush1.bf16.msra.mxu0 %v7268
      %7401 = vmatprep.subr.bf16.mxu0 0
      %7402 = vmatpush1.bf16.msra.mxu0 %v7269
      %7403 = vmatprep.subr.bf16.mxu0 0
      %7404 = vmatpush1.bf16.msra.mxu0 %v7270
      %7405 = vmatprep.subr.bf16.mxu0 0
      %7406 = vmatpush1.bf16.msra.mxu0 %v7271
      %7407 = vmatprep.subr.bf16.mxu0 0
      %7408 = vmatpush1.bf16.msra.mxu0 %v7272
      %7409 = vmatprep.subr.bf16.mxu0 0
      %7410 = vmatpush1.bf16.msra.mxu0 %v7273
      %7411 = vmatprep.subr.bf16.mxu0 0
      %7412 = vmatpush1.bf16.msra.mxu0 %v7274
      %7413 = vmatprep.subr.bf16.mxu0 0
      %7414 = vmatpush1.bf16.msra.mxu0 %v7275
      %7415 = vmatprep.subr.bf16.mxu0 0
      %7416 = vmatpush1.bf16.msra.mxu0 %v7276
      %7417 = vmatprep.subr.bf16.mxu0 0
      %7418 = vmatpush1.bf16.msra.mxu0 %v7277
      %7419 = vmatprep.subr.bf16.mxu0 0
      %7420 = vmatpush1.bf16.msra.mxu0 %v7278
      %7421 = vmatprep.subr.bf16.mxu0 0
      %7422 = vmatpush1.bf16.msra.mxu0 %v7279
      %7423 = vmatprep.subr.bf16.mxu0 0
      %7424 = vmatpush1.bf16.msra.mxu0 %v7280
      %7425 = vmatprep.mubr.bf16.mxu0 %v402
      %7426 = vmatmul.mubr.bf16.gmra.mrb[0].mxu0 %v401
      %v7427 = vpop.f32.mrb[0].mxu0
      %v7428 = vadd.f32 0.0, %v7427
      %v7429 = vpop.f32.mrb[0].mxu0
      %v7430 = vpop.f32.mrb[0].mxu0
      %v7431 = vadd.f32 0.0, %v7430
      %v7432 = vpop.f32.mrb[0].mxu0
      %7433 = vdwg.mxu0
      %7434 = vmatprep.subr.bf16.mxu0 0
      %7435 = vmatpush1.bf16.msra.mxu0 %v7281
      %7436 = vmatprep.subr.bf16.mxu0 0
      %7437 = vmatpush1.bf16.msra.mxu0 %v7282
      %7438 = vmatprep.subr.bf16.mxu0 0
      %7439 = vmatpush1.bf16.msra.mxu0 %v7283
      %7440 = vmatprep.subr.bf16.mxu0 0
      %7441 = vmatpush1.bf16.msra.mxu0 %v7284
      %7442 = vmatprep.subr.bf16.mxu0 0
      %7443 = vmatpush1.bf16.msra.mxu0 %v7285
      %7444 = vmatprep.subr.bf16.mxu0 0
      %7445 = vmatpush1.bf16.msra.mxu0 %v7286
      %7446 = vmatprep.subr.bf16.mxu0 0
      %7447 = vmatpush1.bf16.msra.mxu0 %v7287
      %7448 = vmatprep.subr.bf16.mxu0 0
      %7449 = vmatpush1.bf16.msra.mxu0 %v7288
      %7450 = vmatprep.subr.bf16.mxu0 0
      %7451 = vmatpush1.bf16.msra.mxu0 %v7289
      %7452 = vmatprep.subr.bf16.mxu0 0
      %7453 = vmatpush1.bf16.msra.mxu0 %v7290
      %7454 = vmatprep.subr.bf16.mxu0 0
      %7455 = vmatpush1.bf16.msra.mxu0 %v7291
      %7456 = vmatprep.subr.bf16.mxu0 0
      %7457 = vmatpush1.bf16.msra.mxu0 %v7292
      %7458 = vmatprep.subr.bf16.mxu0 0
      %7459 = vmatpush1.bf16.msra.mxu0 %v7293
      %7460 = vmatprep.subr.bf16.mxu0 0
      %7461 = vmatpush1.bf16.msra.mxu0 %v7294
      %7462 = vmatprep.subr.bf16.mxu0 0
      %7463 = vmatpush1.bf16.msra.mxu0 %v7295
      %7464 = vmatprep.subr.bf16.mxu0 0
      %7465 = vmatpush1.bf16.msra.mxu0 %v7296
      %7466 = vmatprep.mubr.bf16.mxu0 %v404
      %7467 = vmatmul.mubr.bf16.gmra.mrb[0].mxu0 %v403
      %v7468 = vpop.f32.mrb[0].mxu0
      %v7469 = vadd.f32 %v7428, %v7468
      %v7470 = vpop.f32.mrb[0].mxu0
      %v7471 = vpop.f32.mrb[0].mxu0
      %v7472 = vadd.f32 %v7431, %v7471
      %v7473 = vpop.f32.mrb[0].mxu0
      %7474 = vdwg.mxu0
      %7475 = vmatprep.subr.bf16.mxu0 0
      %7476 = vmatpush1.bf16.msra.mxu0 %v7297
      %7477 = vmatprep.subr.bf16.mxu0 0
      %7478 = vmatpush1.bf16.msra.mxu0 %v7298
      %7479 = vmatprep.subr.bf16.mxu0 0
      %7480 = vmatpush1.bf16.msra.mxu0 %v7299
      %7481 = vmatprep.subr.bf16.mxu0 0
      %7482 = vmatpush1.bf16.msra.mxu0 %v7300
      %7483 = vmatprep.subr.bf16.mxu0 0
      %7484 = vmatpush1.bf16.msra.mxu0 %v7301
      %7485 = vmatprep.subr.bf16.mxu0 0
      %7486 = vmatpush1.bf16.msra.mxu0 %v7302
      %7487 = vmatprep.subr.bf16.mxu0 0
      %7488 = vmatpush1.bf16.msra.mxu0 %v7303
      %7489 = vmatprep.subr.bf16.mxu0 0
      %7490 = vmatpush1.bf16.msra.mxu0 %v7304
      %7491 = vmatprep.subr.bf16.mxu0 0
      %7492 = vmatpush1.bf16.msra.mxu0 %v7305
      %7493 = vmatprep.subr.bf16.mxu0 0
      %7494 = vmatpush1.bf16.msra.mxu0 %v7306
      %7495 = vmatprep.subr.bf16.mxu0 0
      %7496 = vmatpush1.bf16.msra.mxu0 %v7307
      %7497 = vmatprep.subr.bf16.mxu0 0
      %7498 = vmatpush1.bf16.msra.mxu0 %v7308
      %7499 = vmatprep.subr.bf16.mxu0 0
      %7500 = vmatpush1.bf16.msra.mxu0 %v7309
      %7501 = vmatprep.subr.bf16.mxu0 0
      %7502 = vmatpush1.bf16.msra.mxu0 %v7310
      %7503 = vmatprep.subr.bf16.mxu0 0
      %7504 = vmatpush1.bf16.msra.mxu0 %v7311
      %7505 = vmatprep.subr.bf16.mxu0 0
      %7506 = vmatpush1.bf16.msra.mxu0 %v7312
      %7507 = vmatprep.mubr.bf16.mxu0 %v406
      %7508 = vmatmul.mubr.bf16.gmra.mrb[0].mxu0 %v405
      %v7509 = vpop.f32.mrb[0].mxu0
      %v7510 = vadd.f32 %v7469, %v7509
      %v7511 = vpop.f32.mrb[0].mxu0
      %v7512 = vpop.f32.mrb[0].mxu0
      %v7513 = vadd.f32 %v7472, %v7512
      %v7514 = vpop.f32.mrb[0].mxu0
      %7515 = vdwg.mxu0
      %7516 = vmatprep.subr.bf16.mxu0 0
      %7517 = vmatpush1.bf16.msra.mxu0 %v7313
      %7518 = vmatprep.subr.bf16.mxu0 0
      %7519 = vmatpush1.bf16.msra.mxu0 %v7314
      %7520 = vmatprep.subr.bf16.mxu0 0
      %7521 = vmatpush1.bf16.msra.mxu0 %v7315
      %7522 = vmatprep.subr.bf16.mxu0 0
      %7523 = vmatpush1.bf16.msra.mxu0 %v7316
      %7524 = vmatprep.subr.bf16.mxu0 0
      %7525 = vmatpush1.bf16.msra.mxu0 %v7317
      %7526 = vmatprep.subr.bf16.mxu0 0
      %7527 = vmatpush1.bf16.msra.mxu0 %v7318
      %7528 = vmatprep.subr.bf16.mxu0 0
      %7529 = vmatpush1.bf16.msra.mxu0 %v7319
      %7530 = vmatprep.subr.bf16.mxu0 0
      %7531 = vmatpush1.bf16.msra.mxu0 %v7320
      %7532 = vmatprep.subr.bf16.mxu0 0
      %7533 = vmatpush1.bf16.msra.mxu0 %v7321
      %7534 = vmatprep.subr.bf16.mxu0 0
      %7535 = vmatpush1.bf16.msra.mxu0 %v7322
      %7536 = vmatprep.subr.bf16.mxu0 0
      %7537 = vmatpush1.bf16.msra.mxu0 %v7323
      %7538 = vmatprep.subr.bf16.mxu0 0
      %7539 = vmatpush1.bf16.msra.mxu0 %v7324
      %7540 = vmatprep.subr.bf16.mxu0 0
      %7541 = vmatpush1.bf16.msra.mxu0 %v7325
      %7542 = vmatprep.subr.bf16.mxu0 0
      %7543 = vmatpush1.bf16.msra.mxu0 %v7326
      %7544 = vmatprep.subr.bf16.mxu0 0
      %7545 = vmatpush1.bf16.msra.mxu0 %v7327
      %7546 = vmatprep.subr.bf16.mxu0 0
      %7547 = vmatpush1.bf16.msra.mxu0 %v7328
      %7548 = vmatprep.mubr.bf16.mxu0 %v408
      %7549 = vmatmul.mubr.bf16.gmra.mrb[0].mxu0 %v407
      %v7550 = vpop.f32.mrb[0].mxu0
      %v7551 = vadd.f32 %v7510, %v7550
      %v7552 = vpop.f32.mrb[0].mxu0
      %v7553 = vpop.f32.mrb[0].mxu0
      %v7554 = vadd.f32 %v7513, %v7553
      %v7555 = vpop.f32.mrb[0].mxu0
      %7556 = vdwg.mxu0
      %v7557 = vmul.f32 %v6875, %v6875
      %v7558 = vmul.f32 %v6878, %v6878
      %v7559 = vmul.f32 %v7551, %v7551
      %v7560 = vmul.f32 %v7554, %v7554
      %v7561 = vadd.f32 %v7557, %v7559
      %v7562 = vadd.f32 %v7558, %v7560
      %v7563 = vrsqrt.pop %v7561
      %v7564 = vmul.f32 %v7561, %v7563
      %vm7565 = vcmp.eq.f32.partialorder %v7561, inf
      %v7566 = vsel %vm7565, %v7561, %v7564
      %vm7567 = vcmp.eq.f32.partialorder %v7561, 0.0
      %v7568 = vand.u32 %v7561, 2147483648
      %v7569 = vsel %vm7567, %v7568, %v7566
      %v7570 = vrsqrt.pop %v7562
      %v7571 = vmul.f32 %v7562, %v7570
      %vm7572 = vcmp.eq.f32.partialorder %v7562, inf
      %v7573 = vsel %vm7572, %v7562, %v7571
      %vm7574 = vcmp.eq.f32.partialorder %v7562, 0.0
      %v7575 = vand.u32 %v7562, 2147483648
      %v7576 = vsel %vm7574, %v7575, %v7573
      %v7577 = vpack.c.bf16 %v7576, %v7569
      %v7578 = vld [vmem:[%s3 + $0x100] sm:$0xf]
      %v7579 = vld [vmem:[%s3 + $0x104] sm:$0xf]
      %v7580 = vld [vmem:[%s3 + $0x108] sm:$0xf]
      %v7581 = vld [vmem:[%s3 + $0x10c] sm:$0xf]
      %v7582 = vld [vmem:[%s3 + $0x110] sm:$0xf]
      %v7583 = vld [vmem:[%s3 + $0x114] sm:$0xf]
      %v7584 = vld [vmem:[%s3 + $0x118] sm:$0xf]
      %v7585 = vld [vmem:[%s3 + $0x11c] sm:$0xf]
      %v7586 = vld [vmem:[%s3 + $0x120] sm:$0xf]
      %v7587 = vld [vmem:[%s3 + $0x124] sm:$0xf]
      %v7588 = vld [vmem:[%s3 + $0x128] sm:$0xf]
      %v7589 = vld [vmem:[%s3 + $0x12c] sm:$0xf]
      %v7590 = vld [vmem:[%s3 + $0x130] sm:$0xf]
      %v7591 = vld [vmem:[%s3 + $0x134] sm:$0xf]
      %v7592 = vld [vmem:[%s3 + $0x138] sm:$0xf]
      %v7593 = vld [vmem:[%s3 + $0x13c] sm:$0xf]
      %v7610 = vunpack.c.l.b16 %v7578
      %v7611 = vunpack.c.l.b16 %v7579
      %v7612 = vunpack.c.l.b16 %v7580
      %v7613 = vunpack.c.l.b16 %v7581
      %v7614 = vunpack.c.l.b16 %v7582
      %v7615 = vunpack.c.l.b16 %v7583
      %v7616 = vunpack.c.l.b16 %v7584
      %v7617 = vunpack.c.l.b16 %v7585
      %v7618 = vunpack.c.l.b16 %v7586
      %v7619 = vunpack.c.l.b16 %v7587
      %v7620 = vunpack.c.l.b16 %v7588
      %v7621 = vunpack.c.l.b16 %v7589
      %v7622 = vunpack.c.l.b16 %v7590
      %v7623 = vunpack.c.l.b16 %v7591
      %v7624 = vunpack.c.l.b16 %v7592
      %v7625 = vunpack.c.l.b16 %v7593
      %v7626 = vpack.c.b16 %v7611, %v7610
      %v7627 = vpack.c.b16 %v7613, %v7612
      %v7628 = vpack.c.b16 %v7615, %v7614
      %v7629 = vpack.c.b16 %v7617, %v7616
      %v7630 = vpack.c.b16 %v7619, %v7618
      %v7631 = vpack.c.b16 %v7621, %v7620
      %v7632 = vpack.c.b16 %v7623, %v7622
      %v7633 = vpack.c.b16 %v7625, %v7624
      %7642 = vmatprep.subr.bf16.mxu0 0
      %7643 = vmatpush1.bf16.msra.mxu0 %v7626
      %7644 = vmatprep.subr.bf16.mxu0 0
      %7645 = vmatpush1.bf16.msra.mxu0 %v7627
      %7646 = vmatprep.subr.bf16.mxu0 0
      %7647 = vmatpush1.bf16.msra.mxu0 %v7628
      %7648 = vmatprep.subr.bf16.mxu0 0
      %7649 = vmatpush1.bf16.msra.mxu0 %v7629
      %7650 = vmatprep.subr.bf16.mxu0 0
      %7651 = vmatpush1.bf16.msra.mxu0 %v7630
      %7652 = vmatprep.subr.bf16.mxu0 0
      %7653 = vmatpush1.bf16.msra.mxu0 %v7631
      %7654 = vmatprep.subr.bf16.mxu0 0
      %7655 = vmatpush1.bf16.msra.mxu0 %v7632
      %7656 = vmatprep.subr.bf16.mxu0 0
      %7657 = vmatpush1.bf16.msra.mxu0 %v7633
      %7658 = vmatprep.subr.bf16.mxu0 0
      %7659 = vmatpush1.bf16.msra.mxu0 0
      %7660 = vmatprep.subr.bf16.mxu0 0
      %7661 = vmatpush1.bf16.msra.mxu0 0
      %7662 = vmatprep.subr.bf16.mxu0 0
      %7663 = vmatpush1.bf16.msra.mxu0 0
      %7664 = vmatprep.subr.bf16.mxu0 0
      %7665 = vmatpush1.bf16.msra.mxu0 0
      %7666 = vmatprep.subr.bf16.mxu0 0
      %7667 = vmatpush1.bf16.msra.mxu0 0
      %7668 = vmatprep.subr.bf16.mxu0 0
      %7669 = vmatpush1.bf16.msra.mxu0 0
      %7670 = vmatprep.subr.bf16.mxu0 0
      %7671 = vmatpush1.bf16.msra.mxu0 0
      %7672 = vmatprep.subr.bf16.mxu0 0
      %7673 = vmatpush1.bf16.msra.mxu0 0
      %7674 = vmatprep.mubr.bf16.mxu0 0
      %7675 = vmatmul.mubr.bf16.gmra.mrb[0].mxu0 %v7577
      %v7676 = vpop.f32.mrb[0].mxu0
      %v7677 = vadd.f32 0.0, %v7676
      %v7678 = vpop.f32.mrb[0].mxu0
      %v7679 = vpop.f32.mrb[0].mxu0
      %v7680 = vadd.f32 0.0, %v7679
      %v7681 = vpop.f32.mrb[0].mxu0
      %7682 = vdwg.mxu0
      %v7683 = vadd.f32 %v6203, %v7677
      %v7684 = vadd.f32 %v6204, %v7680
      %v7685 = vmax.f32 %v7683, 1e-05
      %v7686 = vmax.f32 %v7684, 1e-05
      %v7687 = vlog2.pop %v7685
      %v7688 = vmul.f32 %v7687, 0.6931472
      %v7689 = vlog2.pop %v7686
      %v7690 = vmul.f32 %v7689, 0.6931472
      %7691 = vst [vmem:[%s238] sm:$0xff] %v7688
      %7692 = vst [vmem:[%s238 + $0x8] sm:$0xff] %v7690
      %s7693 = smul.u32 2, %s20
      %p7694 = scmp.lt.s32.totalorder %s19, 1
      %s7695 = scalar_select %p7694, %s19, 1
      %p7696 = scmp.lt.s32.totalorder %s7693, 1
      %s7697 = scalar_select %p7696, %s7693, 1
      %s7698 = smul.addr %s7695, 2
      %s7699 = sadd.s32 %s7697, %s7698
      %s7700 = smul.addr %s7699, 8
      %s7701 = scalar_lea.vmem %s4, %s7700
      // Predicated region
      $region37: #{mel_spectrogram_forward.1} parent=35 // pred_check
        %p7702 = pneg %p138
      $region38: #{mel_spectrogram_forward.1} parent=35 // pred_check_branch
        %7704 = sbr.rel (%p7702) target = $region40
      $region39: #{mel_spectrogram_forward.1} parent=35 // pred_region
        %s7705 = smul.u32 2, %s20
      $region40: #{mel_spectrogram_forward.1} parent=35 // pred_fallthru
        _
    $region36: #{mel_spectrogram_forward.1} parent=5 // pred_fallthru
      _
    %p7706 = scmp.le.s32.totalorder 2, %s10
    // Predicated region
    $region41: #{mel_spectrogram_forward.1} parent=5 // pred_check
      %p7707 = pneg %p7706
    $region42: #{mel_spectrogram_forward.1} parent=5 // pred_check_branch
      %7709 = sbr.rel (%p7707) target = $region44
    $region43: #{mel_spectrogram_forward.1} parent=5 // pred_region
      %s7710 = ssub.s32 %s10, 2
      // Predicated region
      $region45: #{mel_spectrogram_forward.1} parent=43 // pred_check
        %p7711 = pneg %p144
      $region46: #{mel_spectrogram_forward.1} parent=43 // pred_check_branch
        %7713 = sbr.rel (%p7711) target = $region48
      $region47: #{mel_spectrogram_forward.1} parent=43 // pred_region
        %s7714 = smul.u32 2, %s22
        %p7715 = scmp.lt.s32.totalorder %s21, 1
        %s7716 = scalar_select %p7715, %s21, 1
        %p7717 = scmp.lt.s32.totalorder %s7714, 1
        %s7718 = scalar_select %p7717, %s7714, 1
        %s7719 = smul.addr %s7716, 2
        %s7720 = sadd.s32 %s7718, %s7719
        %s7721 = smul.addr %s7720, 8
        %s7722 = scalar_lea.vmem %s4, %s7721
      $region48: #{mel_spectrogram_forward.1} parent=43 // pred_fallthru
        _
    $region44: #{mel_spectrogram_forward.1} parent=5 // pred_fallthru
      _
  $region6: #{mel_spectrogram_forward.1} parent=0 // loop_footer
    %s14 = sadd.s32 1, %s10
  $region7: #{mel_spectrogram_forward.1} parent=0 // loop_footer_branch
    %9 = sbr.rel target = $region3
  $region8: #{mel_spectrogram_forward.1} parent=0 // loop_exit
    _

</llo_original>
